<compile_context>
chip_gen: v6e
topology: v6e:2x2x1
jax: 0.10.0
libtpu: 0.0.40
codegen_flags: <defaults>
</compile_context>

<pallas_src>
import math
import functools
import numpy as np

import jax
import jax.numpy as jnp
from jax.experimental import pallas as pl
from jax.experimental.pallas import tpu as pltpu

_INV_SQRT2 = 0.7071067811865476


def _derive_vmem_limit():
    """Per-generation scoped-VMEM budget: ~3/4 of physical, safe fallback 64 MiB."""
    try:
        info = pltpu.get_tpu_info()
        cap = getattr(info, "vmem_capacity_bytes", None)
        if cap:
            return int(cap) * 3 // 4
    except Exception:
        pass
    return 64 * 1024 * 1024


_VMEM_LIMIT_BYTES = _derive_vmem_limit()


def _cparams(dimension_semantics):
    return pltpu.CompilerParams(
        dimension_semantics=dimension_semantics,
        vmem_limit_bytes=_VMEM_LIMIT_BYTES,
    )


def _row_tile(m, max_tile=256):
    """Largest MXU-friendly row tile: full M when small, else max_tile (8-aligned)."""
    if m <= max_tile:
        return m            # full dim -> exempt from the 8-divisibility rule
    return max_tile


def _col_tile(n, max_tile=512):
    """Tile output features only when it divides evenly (keeps stores lane-dense)."""
    if n <= max_tile:
        return n
    for t in (512, 256, 128):
        if n % t == 0:
            return t
    return n


# ----------------------------- Pallas kernels ------------------------------ #

def _linear_kernel(*refs, activation, has_bias, has_ln, eps):
    it = iter(refs)
    x_ref = next(it)
    if has_ln:
        g_ref = next(it)
        bln_ref = next(it)
    w_ref = next(it)
    if has_bias:
        b_ref = next(it)
    o_ref = next(it)

    x = x_ref[...].astype(jnp.float32)
    if has_ln:
        # TODO(synk): when out_dim spans many column tiles, the LN prologue is
        # recomputed per j tile; it is VPU filler under the MXU so left as-is.
        mu = jnp.mean(x, axis=-1, keepdims=True)
        var = jnp.mean((x - mu) ** 2, axis=-1, keepdims=True)
        x = (x - mu) * jax.lax.rsqrt(var + eps)
        x = x * g_ref[...] + bln_ref[...]
    acc = jnp.dot(x.astype(jnp.bfloat16), w_ref[...],
                  preferred_element_type=jnp.float32)
    if has_bias:
        acc = acc + b_ref[...]
    if activation == "gelu":
        acc = 0.5 * acc * (1.0 + jax.lax.erf(acc * _INV_SQRT2))   # exact GELU
    o_ref[...] = acc.astype(o_ref.dtype)


def pallas_linear(x, w, b=None, activation=None, ln=None, eps=1e-5):
    """y = act(LN?(x) @ w + b).  x: (M, K) f32, w: (K, N) bf16, b: (N,) f32 or None.
    ln: optional (gamma, beta), each (K,), applied row-wise before the matmul."""
    M, K = x.shape
    N = w.shape[1]
    tm = _row_tile(M, max_tile=512)
    tn = _col_tile(N)
    grid = (pl.cdiv(M, tm), pl.cdiv(N, tn))

    args = [x]
    in_specs = [pl.BlockSpec((tm, K), lambda i, j: (i, 0))]
    if ln is not None:
        g, bt = ln
        args.append(g.reshape(1, K).astype(jnp.float32))
        args.append(bt.reshape(1, K).astype(jnp.float32))
        in_specs.append(pl.BlockSpec((1, K), lambda i, j: (0, 0)))
        in_specs.append(pl.BlockSpec((1, K), lambda i, j: (0, 0)))
    args.append(w)
    in_specs.append(pl.BlockSpec((K, tn), lambda i, j: (0, j)))
    if b is not None:
        args.append(b.reshape(1, N).astype(jnp.float32))
        in_specs.append(pl.BlockSpec((1, tn), lambda i, j: (0, j)))

    kernel = functools.partial(_linear_kernel, activation=activation,
                               has_bias=b is not None, has_ln=ln is not None, eps=eps)
    return pl.pallas_call(
        kernel,
        out_shape=jax.ShapeDtypeStruct((M, N), x.dtype),
        grid=grid,
        in_specs=in_specs,
        out_specs=pl.BlockSpec((tm, tn), lambda i, j: (i, j)),
        compiler_params=_cparams(("parallel", "parallel")),
    )(*args)


def _patch_embed_kernel(x_ref, w_ref, b_ref, pos_ref, o_ref):
    x = x_ref[0].astype(jnp.bfloat16)                              # (tn_tok, P)
    acc = jnp.dot(x, w_ref[...], preferred_element_type=jnp.float32)
    o_ref[0] = (acc + b_ref[...] + pos_ref[0]).astype(o_ref.dtype)


def pallas_patch_embed(x, w, b, pos):
    """tokens = x @ w + b + pos.  x: (B, Ntok, P) f32, w: (P, D) bf16,
    b: (D,) f32, pos: (1, Ntok, D) f32."""
    B, Ntok, P = x.shape
    D = w.shape[1]
    tn_tok = _row_tile(Ntok)
    grid = (B, pl.cdiv(Ntok, tn_tok))
    return pl.pallas_call(
        _patch_embed_kernel,
        out_shape=jax.ShapeDtypeStruct((B, Ntok, D), x.dtype),
        grid=grid,
        in_specs=[
            pl.BlockSpec((1, tn_tok, P), lambda bi, ti: (bi, ti, 0)),
            pl.BlockSpec((P, D), lambda bi, ti: (0, 0)),
            pl.BlockSpec((1, D), lambda bi, ti: (0, 0)),
            pl.BlockSpec((1, tn_tok, D), lambda bi, ti: (0, ti, 0)),
        ],
        out_specs=pl.BlockSpec((1, tn_tok, D), lambda bi, ti: (bi, ti, 0)),
        compiler_params=_cparams(("parallel", "parallel")),
    )(x, w, b.reshape(1, D).astype(jnp.float32), pos.astype(jnp.float32))


def _mlp_block_kernel(x_ref, g_ref, b_ref, w1_ref, b1_ref, w2_ref, b2_ref, o_ref, *, eps):
    x = x_ref[...].astype(jnp.float32)
    mu = jnp.mean(x, axis=-1, keepdims=True)
    var = jnp.mean((x - mu) ** 2, axis=-1, keepdims=True)
    h = (x - mu) * jax.lax.rsqrt(var + eps) * g_ref[...] + b_ref[...]
    h1 = jnp.dot(h.astype(jnp.bfloat16), w1_ref[...],
                 preferred_element_type=jnp.float32) + b1_ref[...]
    h1 = 0.5 * h1 * (1.0 + jax.lax.erf(h1 * _INV_SQRT2))           # exact GELU, f32
    h2 = jnp.dot(h1.astype(jnp.bfloat16), w2_ref[...],
                 preferred_element_type=jnp.float32) + b2_ref[...]
    o_ref[...] = (x + h2).astype(o_ref.dtype)


def pallas_mlp_block(x, ln_g, ln_b, w1, b1, w2, b2, eps=1e-5):
    """Residual MLP half of a transformer block: x + fc2(gelu(fc1(LN(x)))).
    Weights w1/w2 are bf16; activations stay f32 in HBM."""
    M, D = x.shape
    Dh = w1.shape[1]
    tm = _row_tile(M)
    grid = (pl.cdiv(M, tm),)
    # TODO(synk): on v7x with very large hidden dims, add a hidden-dim grid axis
    # (K-tiled fc2 accumulator) instead of keeping w1/w2 fully resident.
    return pl.pallas_call(
        functools.partial(_mlp_block_kernel, eps=eps),
        out_shape=jax.ShapeDtypeStruct((M, D), x.dtype),
        grid=grid,
        in_specs=[
            pl.BlockSpec((tm, D), lambda i: (i, 0)),
            pl.BlockSpec((1, D), lambda i: (0, 0)),
            pl.BlockSpec((1, D), lambda i: (0, 0)),
            pl.BlockSpec((D, Dh), lambda i: (0, 0)),
            pl.BlockSpec((1, Dh), lambda i: (0, 0)),
            pl.BlockSpec((Dh, D), lambda i: (0, 0)),
            pl.BlockSpec((1, D), lambda i: (0, 0)),
        ],
        out_specs=pl.BlockSpec((tm, D), lambda i: (i, 0)),
        compiler_params=_cparams(("parallel",)),
    )(x,
      ln_g.reshape(1, D).astype(jnp.float32), ln_b.reshape(1, D).astype(jnp.float32),
      w1, b1.reshape(1, Dh).astype(jnp.float32),
      w2, b2.reshape(1, D).astype(jnp.float32))


def _attn_block_kernel(x_ref, g_ref, b_ref, qw_ref, kw_ref, vw_ref, pw_ref, pb_ref,
                       o_ref, ln_ref, acc_ref, *, eps):
    h_idx = pl.program_id(1)
    last = pl.num_programs(1) - 1

    @pl.when(h_idx == 0)
    def _():
        x = x_ref[0].astype(jnp.float32)                            # (N, D)
        mu = jnp.mean(x, axis=-1, keepdims=True)
        var = jnp.mean((x - mu) ** 2, axis=-1, keepdims=True)
        ln = (x - mu) * jax.lax.rsqrt(var + eps) * g_ref[...] + b_ref[...]
        ln_ref[...] = ln.astype(ln_ref.dtype)                       # bf16 MXU input
        acc_ref[...] = x + pb_ref[...]                              # residual + proj bias

    ln16 = ln_ref[...]                                              # (N, D) bf16
    # per-head projections from contiguous (D, hd) weight slices (scale folded
    # into the q weight at the wrapper level).
    q = jnp.dot(ln16, qw_ref[0], preferred_element_type=jnp.float32)   # (N, hd)
    k = jnp.dot(ln16, kw_ref[0], preferred_element_type=jnp.float32)
    v = jnp.dot(ln16, vw_ref[0], preferred_element_type=jnp.float32)

    # TODO(synk): for very large token counts switch to a flash-style KV-chunked
    # online softmax to bound the (N, N) score matrix on v7x (64 MiB VMEM).
    s = jax.lax.dot_general(q.astype(jnp.bfloat16), k.astype(jnp.bfloat16),
                            (((1,), (1,)), ((), ())),
                            preferred_element_type=jnp.float32)     # (N, N)
    s = s - jnp.max(s, axis=-1, keepdims=True)
    p = jnp.exp(s)
    p = p / jnp.sum(p, axis=-1, keepdims=True)                      # exact softmax (f32)

    head = jnp.dot(p.astype(jnp.bfloat16), v.astype(jnp.bfloat16),
                   preferred_element_type=jnp.float32)              # (N, hd)
    acc_ref[...] += jnp.dot(head.astype(jnp.bfloat16), pw_ref[0],
                            preferred_element_type=jnp.float32)     # (N, D)

    @pl.when(h_idx == last)
    def _():
        o_ref[0] = acc_ref[...].astype(o_ref.dtype)


def pallas_attention_block(x, ln_g, ln_b, qw, kw, vw, pw, proj_b, eps=1e-5):
    """Residual attention half of a transformer block: x + proj(MHSA(LN(x))).
    qw/kw/vw: (H, D, hd) bf16 (scale folded into qw), pw: (H, hd, D) bf16."""
    B, N, D = x.shape
    H, _, hd = qw.shape
    vec = lambda a: a.reshape(1, D).astype(jnp.float32)
    return pl.pallas_call(
        functools.partial(_attn_block_kernel, eps=eps),
        out_shape=jax.ShapeDtypeStruct((B, N, D), x.dtype),
        grid=(B, H),
        in_specs=[
            pl.BlockSpec((1, N, D), lambda b, h: (b, 0, 0)),
            pl.BlockSpec((1, D), lambda b, h: (0, 0)),
            pl.BlockSpec((1, D), lambda b, h: (0, 0)),
            pl.BlockSpec((1, D, hd), lambda b, h: (h, 0, 0)),
            pl.BlockSpec((1, D, hd), lambda b, h: (h, 0, 0)),
            pl.BlockSpec((1, D, hd), lambda b, h: (h, 0, 0)),
            pl.BlockSpec((1, hd, D), lambda b, h: (h, 0, 0)),
            pl.BlockSpec((1, D), lambda b, h: (0, 0)),
        ],
        out_specs=pl.BlockSpec((1, N, D), lambda b, h: (b, 0, 0)),
        scratch_shapes=[
            pltpu.VMEM((N, D), jnp.bfloat16),   # LN(x), computed once per batch elem
            pltpu.VMEM((N, D), jnp.float32),    # resident output accumulator
        ],
        compiler_params=_cparams(("parallel", "arbitrary")),
    )(x, vec(ln_g), vec(ln_b), qw, kw, vw, pw, vec(proj_b))


# ----------------------------- model pieces -------------------------------- #

def get_sinusoid_encoding_table(n_position, d_hid):
    def get_vec(pos):
        return [pos / np.power(10000, 2 * (i // 2) / d_hid) for i in range(d_hid)]
    table = np.array([get_vec(p) for p in range(n_position)], dtype=np.float64)
    table[:, 0::2] = np.sin(table[:, 0::2])
    table[:, 1::2] = np.cos(table[:, 1::2])
    return jnp.asarray(table[None], dtype=jnp.float32)   # (1, N, D)


def transformer_block(x, p):
    """x: (B, N, D).  Dropout / drop-path are identity (rates == 0)."""
    B, N, D = x.shape
    x = pallas_attention_block(x, p["ln1_g"], p["ln1_b"],
                               p["qw"], p["kw"], p["vw"], p["pw"], p["proj_b"])
    x2 = pallas_mlp_block(x.reshape(B * N, D), p["ln2_g"], p["ln2_b"],
                          p["fc1_w"], p["fc1_b"], p["fc2_w"], p["fc2_b"])
    return x2.reshape(B, N, D)


def pretrain_vit_forward(x, params, cfg):
    """x: (T, B, C, X, Y, Z) float32 -> (B, C, X, Y, Z)."""
    T, B, C, X, Y, Z = x.shape
    tt = cfg["tubelet"]
    px, py, pz = cfg["patch_size"]
    assert T == cfg["num_frames"], "initial_step mismatch"

    # input normalization stats (torch.std_mean: unbiased std) -- plain JAX glue
    mean = jnp.mean(x, axis=(0, 3, 4, 5), keepdims=True)           # (1,B,C,1,1,1)
    n = T * X * Y * Z
    var = jnp.sum((x - mean) ** 2, axis=(0, 3, 4, 5), keepdims=True) / (n - 1)
    std = jnp.sqrt(var) + 1e-7
    xn = (x - mean) / std
    xb = jnp.transpose(xn, (1, 2, 0, 3, 4, 5))                     # (B, C, T, X, Y, Z)

    # --- PatchEmbed3D (replicates PyTorch view/pad/rearrange semantics) ---
    gx = math.ceil(X / px) * px
    gy = math.ceil(Y / py) * py
    gz = math.ceil(Z / pz) * pz
    pad_x, pad_y, pad_z = gx - X, gy - Y, gz - Z
    h = jnp.transpose(xb, (0, 1, 3, 4, 5, 2)).reshape(B, C * T, X, Y, Z)
    if pad_x or pad_y or pad_z:
        h = jnp.pad(h, ((0, 0), (0, 0), (0, pad_x), (0, pad_y), (0, pad_z)), mode="edge")
    Xp, Yp, Zp = X + pad_x, Y + pad_y, Z + pad_z
    h = h.reshape(B, C, T, Xp, Yp, Zp)
    nt, nx, ny, nz = T // tt, Xp // px, Yp // py, Zp // pz
    h = h.reshape(B, C, nt, tt, nx, px, ny, py, nz, pz)
    h = jnp.transpose(h, (0, 2, 4, 6, 8, 3, 5, 7, 9, 1))           # b t x y z tt px py pz c
    Ntok = nt * nx * ny * nz
    patch_dim = tt * px * py * pz * C
    h = h.reshape(B, Ntok, patch_dim)

    # patch embedding with bias + sinusoid positional embedding fused in-kernel
    tokens = pallas_patch_embed(h, params["patch_w"], params["patch_b"],
                                params["pos_embed"])
    D_enc = params["patch_w"].shape[1]

    # encoder blocks; final encoder norm is fused into the enc->dec projection
    xe = tokens
    for bp in params["enc_blocks"]:
        xe = transformer_block(xe, bp)

    # fused: LayerNorm(enc_norm) + encoder_to_decoder (no bias)
    D_dec = params["e2d_w"].shape[1]
    xd = pallas_linear(xe.reshape(B * Ntok, D_enc), params["e2d_w"], None,
                       ln=(params["enc_norm_g"], params["enc_norm_b"]))
    xd = xd.reshape(B, Ntok, D_dec)

    # decoder blocks; final decoder norm fused into the head projection
    for bp in params["dec_blocks"]:
        xd = transformer_block(xd, bp)
    out = pallas_linear(xd.reshape(B * Ntok, D_dec), params["head_w"], params["head_b"],
                        ln=(params["dec_norm_g"], params["dec_norm_b"]))
    out = out.reshape(B, Ntok, -1)

    # rearrange 'b (t x y z) (tt px py pz c) -> b c (t tt) (x px) (y py) (z pz)'
    out = out.reshape(B, nt, nx, ny, nz, tt, px, py, pz, C)
    out = jnp.transpose(out, (0, 9, 1, 5, 2, 6, 3, 7, 4, 8))
    out = out.reshape(B, C, nt * tt, nx * px, ny * py, nz * pz)
    out = out[:, :, :, :X, :Y, :Z]

    # last timestep, de-normalize
    y_hat = out[:, :, -1] * std[0] + mean[0]                       # (B, C, X, Y, Z)
    return y_hat


# ----------------------------- parameter init ------------------------------ #

def _dense(key, shape, scale=0.02):
    return scale * jax.random.normal(key, shape, dtype=jnp.float32)


def _init_block(key, dim, mlp_ratio):
    hidden = int(dim * mlp_ratio)
    k = jax.random.split(key, 4)
    return dict(
        ln1_g=jnp.ones((dim,), jnp.float32), ln1_b=jnp.zeros((dim,), jnp.float32),
        qkv_w=_dense(k[0], (dim, 3 * dim)),                       # qkv_bias=False
        proj_w=_dense(k[1], (dim, dim)), proj_b=jnp.zeros((dim,), jnp.float32),
        ln2_g=jnp.ones((dim,), jnp.float32), ln2_b=jnp.zeros((dim,), jnp.float32),
        fc1_w=_dense(k[2], (dim, hidden)), fc1_b=jnp.zeros((hidden,), jnp.float32),
        fc2_w=_dense(k[3], (hidden, dim)), fc2_b=jnp.zeros((dim,), jnp.float32),
    )


def init_params(key, cfg):
    C, tt = cfg["in_chans"], cfg["tubelet"]
    px, py, pz = cfg["patch_size"]
    D_enc, D_dec = cfg["enc_dim"], cfg["dec_dim"]
    in_dim = C * tt * px * py * pz
    out_dim = in_dim

    X, Y, Z = cfg["img_size"]
    gx = math.ceil(X / px) * px
    gy = math.ceil(Y / py) * py
    gz = math.ceil(Z / pz) * pz
    nt = cfg["num_frames"] // tt
    n_patches = nt * (gx // px) * (gy // py) * (gz // pz)

    keys = jax.random.split(key, 3 + cfg["enc_depth"] + cfg["dec_depth"])
    it = iter(keys)
    params = dict(
        patch_w=_dense(next(it), (in_dim, D_enc)),
        patch_b=jnp.zeros((D_enc,), jnp.float32),
        pos_embed=get_sinusoid_encoding_table(n_patches, D_enc),
        enc_blocks=[_init_block(next(it), D_enc, cfg["mlp_ratio"])
                    for _ in range(cfg["enc_depth"])],
        enc_norm_g=jnp.ones((D_enc,), jnp.float32),
        enc_norm_b=jnp.zeros((D_enc,), jnp.float32),
        e2d_w=_dense(next(it), (D_enc, D_dec)),                    # no bias
        dec_blocks=[_init_block(next(it), D_dec, cfg["mlp_ratio"])
                    for _ in range(cfg["dec_depth"])],
        dec_norm_g=jnp.ones((D_dec,), jnp.float32),
        dec_norm_b=jnp.zeros((D_dec,), jnp.float32),
        head_w=_dense(next(it), (D_dec, out_dim)),
        head_b=jnp.zeros((out_dim,), jnp.float32),
    )
    # NOTE: mask_token from the PyTorch module is never used in forward -> omitted.
    return params


def prepare_params(raw, cfg):
    """Convert PyTorch-layout f32 params into kernel-ready form:
    bf16 matmul weights, per-head (H, D, hd)/(H, hd, D) attention weight slices
    with the softmax scale folded into q.  LN params / biases / pos stay f32."""
    bf16 = jnp.bfloat16

    def prep_block(p, dim, heads):
        hd = dim // heads
        scale = hd ** (-0.5)
        qkv_w = p["qkv_w"]                                        # (dim, 3*dim)
        def per_head(w2d):
            return jnp.transpose(w2d.reshape(dim, heads, hd), (1, 0, 2))
        qw = per_head(qkv_w[:, 0 * dim:1 * dim]) * scale
        kw = per_head(qkv_w[:, 1 * dim:2 * dim])
        vw = per_head(qkv_w[:, 2 * dim:3 * dim])
        pw = p["proj_w"].reshape(heads, hd, dim)
        return dict(
            ln1_g=p["ln1_g"], ln1_b=p["ln1_b"],
            qw=qw.astype(bf16), kw=kw.astype(bf16), vw=vw.astype(bf16),
            pw=pw.astype(bf16), proj_b=p["proj_b"],
            ln2_g=p["ln2_g"], ln2_b=p["ln2_b"],
            fc1_w=p["fc1_w"].astype(bf16), fc1_b=p["fc1_b"],
            fc2_w=p["fc2_w"].astype(bf16), fc2_b=p["fc2_b"],
        )

    return dict(
        patch_w=raw["patch_w"].astype(bf16),
        patch_b=raw["patch_b"],
        pos_embed=raw["pos_embed"],
        enc_blocks=[prep_block(p, cfg["enc_dim"], cfg["enc_heads"])
                    for p in raw["enc_blocks"]],
        enc_norm_g=raw["enc_norm_g"], enc_norm_b=raw["enc_norm_b"],
        e2d_w=raw["e2d_w"].astype(bf16),
        dec_blocks=[prep_block(p, cfg["dec_dim"], cfg["dec_heads"])
                    for p in raw["dec_blocks"]],
        dec_norm_g=raw["dec_norm_g"], dec_norm_b=raw["dec_norm_b"],
        head_w=raw["head_w"].astype(bf16),
        head_b=raw["head_b"],
    )


# --------------------------------- demo ------------------------------------ #

if __name__ == "__main__":
    cfg = dict(
        img_size=(8, 8, 8), patch_size=(4, 4, 4), tubelet=2, num_frames=4,
        in_chans=2,
        enc_dim=128, enc_depth=2, enc_heads=4,
        dec_dim=128, dec_depth=2, dec_heads=4,       # lane-aligned decoder dim
        mlp_ratio=4.0,
    )
    key = jax.random.PRNGKey(0)
    pkey, xkey = jax.random.split(key)
    raw_params = init_params(pkey, cfg)
    params = prepare_params(raw_params, cfg)

    T = cfg["num_frames"]
    B, C = 2, cfg["in_chans"]
    X, Y, Z = cfg["img_size"]
    x = jax.random.normal(xkey, (T, B, C, X, Y, Z), dtype=jnp.float32)

    fwd = jax.jit(functools.partial(pretrain_vit_forward, cfg=cfg))
    y = fwd(x, params)
    jax.block_until_ready(y)
    assert y.shape == (B, C, X, Y, Z), y.shape
    assert bool(jnp.all(jnp.isfinite(y)))
    print("KERNEL_OK")
</pallas_src>

<mosaic_0001>
module attributes {stable_mosaic.version = 11 : i64} {
  func.func @_patch_embed_kernel(%arg0: i32, %arg1: i32, %arg2: memref<1x16x256xf32, #tpu.memory_space<vmem>>, %arg3: memref<256x128xbf16, #tpu.memory_space<vmem>>, %arg4: memref<1x128xf32, #tpu.memory_space<vmem>>, %arg5: memref<1x16x128xf32, #tpu.memory_space<vmem>>, %arg6: memref<1x16x128xf32, #tpu.memory_space<vmem>>) attributes {dimension_semantics = [#tpu.dimension_semantics<parallel>, #tpu.dimension_semantics<parallel>], iteration_bounds = array<i64: 2, 1>, scalar_prefetch = 0 : i64, scratch_operands = 0 : i64, tpu.core_type = #tpu.core_type<tc>, window_params = [{transform_indices = @transform_0, window_bounds = array<i64: 1, 16, 256>}, {pipeline_mode = #tpu.pipeline_mode<synchronous>, transform_indices = @transform_1, window_bounds = array<i64: 256, 128>}, {pipeline_mode = #tpu.pipeline_mode<synchronous>, transform_indices = @transform_2, window_bounds = array<i64: 1, 128>}, {transform_indices = @transform_3, window_bounds = array<i64: 1, 16, 128>}, {transform_indices = @transform_4, window_bounds = array<i64: 1, 16, 128>}]} {
    %c0 = arith.constant 0 : index
    %c0_0 = arith.constant 0 : index
    %c0_1 = arith.constant 0 : index
    %0 = vector.load %arg2[%c0, %c0_0, %c0_1] : memref<1x16x256xf32, #tpu.memory_space<vmem>>, vector<1x16x256xf32>
    %1 = vector.shape_cast %0 : vector<1x16x256xf32> to vector<16x256xf32>
    %2 = arith.truncf %1 : vector<16x256xf32> to vector<16x256xbf16>
    %c0_2 = arith.constant 0 : index
    %c0_3 = arith.constant 0 : index
    %3 = vector.load %arg3[%c0_2, %c0_3] : memref<256x128xbf16, #tpu.memory_space<vmem>>, vector<256x128xbf16>
    %cst = arith.constant dense<0.000000e+00> : vector<16x128xf32>
    %4 = tpu.matmul %2, %3, %cst {dimension_numbers = #tpu.dot_dimension_numbers<[1], [0], [0], [1], [0, 0, 1, 1], [], []>} : vector<16x256xbf16>, vector<256x128xbf16>, vector<16x128xf32> -> vector<16x128xf32>
    %c0_4 = arith.constant 0 : index
    %c0_5 = arith.constant 0 : index
    %5 = vector.load %arg4[%c0_4, %c0_5] : memref<1x128xf32, #tpu.memory_space<vmem>>, vector<1x128xf32>
    %6 = vector.broadcast %5 : vector<1x128xf32> to vector<16x128xf32>
    %7 = arith.addf %4, %6 : vector<16x128xf32>
    %c0_6 = arith.constant 0 : index
    %c0_7 = arith.constant 0 : index
    %c0_8 = arith.constant 0 : index
    %8 = vector.load %arg5[%c0_6, %c0_7, %c0_8] : memref<1x16x128xf32, #tpu.memory_space<vmem>>, vector<1x16x128xf32>
    %9 = vector.shape_cast %8 : vector<1x16x128xf32> to vector<16x128xf32>
    %10 = arith.addf %7, %9 : vector<16x128xf32>
    %c0_9 = arith.constant 0 : index
    %c0_10 = arith.constant 0 : index
    %c0_11 = arith.constant 0 : index
    %11 = vector.load %arg6[%c0_9, %c0_10, %c0_11] : memref<1x16x128xf32, #tpu.memory_space<vmem>>, vector<1x16x128xf32>
    %12 = vector.shape_cast %11 : vector<1x16x128xf32> to vector<16x128xf32>
    %13 = vector.shape_cast %10 : vector<16x128xf32> to vector<1x16x128xf32>
    tpu.vector_store %arg6[%c0_9, %c0_10, %c0_11], %13 {strides = array<i32>} : memref<1x16x128xf32, #tpu.memory_space<vmem>>, vector<1x16x128xf32>,
    return
  }
  func.func @transform_0(%arg0: i32, %arg1: i32) -> (i32, i32, i32) {
    %c0_i32 = arith.constant 0 : i32
    %c0_i32_0 = arith.constant 0 : i32
    return %arg0, %arg1, %c0_i32 : i32, i32, i32
  }
  func.func @transform_1(%arg0: i32, %arg1: i32) -> (i32, i32) {
    %c0_i32 = arith.constant 0 : i32
    %c0_i32_0 = arith.constant 0 : i32
    %c0_i32_1 = arith.constant 0 : i32
    return %c0_i32, %c0_i32_0 : i32, i32
  }
  func.func @transform_2(%arg0: i32, %arg1: i32) -> (i32, i32) {
    %c0_i32 = arith.constant 0 : i32
    %c0_i32_0 = arith.constant 0 : i32
    %c0_i32_1 = arith.constant 0 : i32
    return %c0_i32, %c0_i32_0 : i32, i32
  }
  func.func @transform_3(%arg0: i32, %arg1: i32) -> (i32, i32, i32) {
    %c0_i32 = arith.constant 0 : i32
    %c0_i32_0 = arith.constant 0 : i32
    %c0_i32_1 = arith.constant 0 : i32
    return %c0_i32, %arg1, %c0_i32_0 : i32, i32, i32
  }
  func.func @transform_4(%arg0: i32, %arg1: i32) -> (i32, i32, i32) {
    %c0_i32 = arith.constant 0 : i32
    %c0_i32_0 = arith.constant 0 : i32
    return %arg0, %arg1, %c0_i32 : i32, i32, i32
  }
}

module attributes {stable_mosaic.version = 11 : i64} {
  func.func @_attn_block_kernel(%arg0: i32, %arg1: i32, %arg2: memref<1x16x128xf32, #tpu.memory_space<vmem>>, %arg3: memref<1x128xf32, #tpu.memory_space<vmem>>, %arg4: memref<1x128xf32, #tpu.memory_space<vmem>>, %arg5: memref<1x128x32xbf16, #tpu.memory_space<vmem>>, %arg6: memref<1x128x32xbf16, #tpu.memory_space<vmem>>, %arg7: memref<1x128x32xbf16, #tpu.memory_space<vmem>>, %arg8: memref<1x32x128xbf16, #tpu.memory_space<vmem>>, %arg9: memref<1x128xf32, #tpu.memory_space<vmem>>, %arg10: memref<1x16x128xf32, #tpu.memory_space<vmem>>, %arg11: memref<16x128xbf16, #tpu.memory_space<vmem>>, %arg12: memref<16x128xf32, #tpu.memory_space<vmem>>) attributes {dimension_semantics = [#tpu.dimension_semantics<parallel>, #tpu.dimension_semantics<arbitrary>], iteration_bounds = array<i64: 2, 4>, scalar_prefetch = 0 : i64, scratch_operands = 2 : i64, tpu.core_type = #tpu.core_type<tc>, window_params = [{transform_indices = @transform_0, window_bounds = array<i64: 1, 16, 128>}, {pipeline_mode = #tpu.pipeline_mode<synchronous>, transform_indices = @transform_1, window_bounds = array<i64: 1, 128>}, {pipeline_mode = #tpu.pipeline_mode<synchronous>, transform_indices = @transform_2, window_bounds = array<i64: 1, 128>}, {transform_indices = @transform_3, window_bounds = array<i64: 1, 128, 32>}, {transform_indices = @transform_4, window_bounds = array<i64: 1, 128, 32>}, {transform_indices = @transform_5, window_bounds = array<i64: 1, 128, 32>}, {transform_indices = @transform_6, window_bounds = array<i64: 1, 32, 128>}, {pipeline_mode = #tpu.pipeline_mode<synchronous>, transform_indices = @transform_7, window_bounds = array<i64: 1, 128>}, {transform_indices = @transform_8, window_bounds = array<i64: 1, 16, 128>}]} {
    %c0_i32 = arith.constant 0 : i32
    %0 = arith.cmpi eq, %arg1, %c0_i32 : i32
    %1 = arith.extui %0 : i1 to i32
    %c0_i32_0 = arith.constant 0 : i32
    %2 = arith.cmpi ne, %1, %c0_i32_0 : i32
    scf.if %2 {
      %c0_26 = arith.constant 0 : index
      %c0_27 = arith.constant 0 : index
      %c0_28 = arith.constant 0 : index
      %38 = vector.load %arg2[%c0_26, %c0_27, %c0_28] : memref<1x16x128xf32, #tpu.memory_space<vmem>>, vector<1x16x128xf32>
      %39 = vector.shape_cast %38 : vector<1x16x128xf32> to vector<16x128xf32>
      %cst_29 = arith.constant dense<0.000000e+00> : vector<16xf32>
      %40 = vector.multi_reduction <add>, %39, %cst_29 [1] : vector<16x128xf32> to vector<16xf32>
      %41 = vector.shape_cast %40 : vector<16xf32> to vector<16x1xf32>
      %cst_30 = arith.constant 1.280000e+02 : f32
      %42 = vector.broadcast %cst_30 : f32 to vector<16x1xf32>
      %43 = arith.divf %41, %42 : vector<16x1xf32>
      %44 = vector.broadcast %43 : vector<16x1xf32> to vector<16x128xf32>
      %45 = arith.subf %39, %44 : vector<16x128xf32>
      %46 = arith.mulf %45, %45 : vector<16x128xf32>
      %cst_31 = arith.constant dense<0.000000e+00> : vector<16xf32>
      %47 = vector.multi_reduction <add>, %46, %cst_31 [1] : vector<16x128xf32> to vector<16xf32>
      %48 = vector.shape_cast %47 : vector<16xf32> to vector<16x1xf32>
      %cst_32 = arith.constant 1.280000e+02 : f32
      %49 = vector.broadcast %cst_32 : f32 to vector<16x1xf32>
      %50 = arith.divf %48, %49 : vector<16x1xf32>
      %51 = vector.broadcast %43 : vector<16x1xf32> to vector<16x128xf32>
      %52 = arith.subf %39, %51 : vector<16x128xf32>
      %cst_33 = arith.constant 9.99999974E-6 : f32
      %53 = vector.broadcast %cst_33 : f32 to vector<16x1xf32>
      %54 = arith.addf %50, %53 : vector<16x1xf32>
      %55 = math.rsqrt %54 : vector<16x1xf32>
      %56 = vector.broadcast %55 : vector<16x1xf32> to vector<16x128xf32>
      %57 = arith.mulf %52, %56 : vector<16x128xf32>
      %c0_34 = arith.constant 0 : index
      %c0_35 = arith.constant 0 : index
      %58 = vector.load %arg3[%c0_34, %c0_35] : memref<1x128xf32, #tpu.memory_space<vmem>>, vector<1x128xf32>
      %59 = vector.broadcast %58 : vector<1x128xf32> to vector<16x128xf32>
      %60 = arith.mulf %57, %59 : vector<16x128xf32>
      %c0_36 = arith.constant 0 : index
      %c0_37 = arith.constant 0 : index
      %61 = vector.load %arg4[%c0_36, %c0_37] : memref<1x128xf32, #tpu.memory_space<vmem>>, vector<1x128xf32>
      %62 = vector.broadcast %61 : vector<1x128xf32> to vector<16x128xf32>
      %63 = arith.addf %60, %62 : vector<16x128xf32>
      %64 = arith.truncf %63 : vector<16x128xf32> to vector<16x128xbf16>
      %c0_38 = arith.constant 0 : index
      %c0_39 = arith.constant 0 : index
      %65 = vector.load %arg11[%c0_38, %c0_39] : memref<16x128xbf16, #tpu.memory_space<vmem>>, vector<16x128xbf16>
      tpu.vector_store %arg11[%c0_38, %c0_39], %64 {strides = array<i32>} : memref<16x128xbf16, #tpu.memory_space<vmem>>, vector<16x128xbf16>,
      %c0_40 = arith.constant 0 : index
      %c0_41 = arith.constant 0 : index
      %66 = vector.load %arg9[%c0_40, %c0_41] : memref<1x128xf32, #tpu.memory_space<vmem>>, vector<1x128xf32>
      %67 = vector.broadcast %66 : vector<1x128xf32> to vector<16x128xf32>
      %68 = arith.addf %39, %67 : vector<16x128xf32>
      %c0_42 = arith.constant 0 : index
      %c0_43 = arith.constant 0 : index
      %69 = vector.load %arg12[%c0_42, %c0_43] : memref<16x128xf32, #tpu.memory_space<vmem>>, vector<16x128xf32>
      tpu.vector_store %arg12[%c0_42, %c0_43], %68 {strides = array<i32>} : memref<16x128xf32, #tpu.memory_space<vmem>>, vector<16x128xf32>,
    } else {
    }
    %c0 = arith.constant 0 : index
    %c0_1 = arith.constant 0 : index
    %3 = vector.load %arg11[%c0, %c0_1] : memref<16x128xbf16, #tpu.memory_space<vmem>>, vector<16x128xbf16>
    %c0_2 = arith.constant 0 : index
    %c0_3 = arith.constant 0 : index
    %c0_4 = arith.constant 0 : index
    %4 = vector.load %arg5[%c0_2, %c0_3, %c0_4] : memref<1x128x32xbf16, #tpu.memory_space<vmem>>, vector<1x128x32xbf16>
    %5 = vector.shape_cast %4 : vector<1x128x32xbf16> to vector<128x32xbf16>
    %cst = arith.constant dense<0.000000e+00> : vector<16x32xf32>
    %6 = tpu.matmul %3, %5, %cst {dimension_numbers = #tpu.dot_dimension_numbers<[1], [0], [0], [1], [0, 0, 1, 1], [], []>} : vector<16x128xbf16>, vector<128x32xbf16>, vector<16x32xf32> -> vector<16x32xf32>
    %c0_5 = arith.constant 0 : index
    %c0_6 = arith.constant 0 : index
    %c0_7 = arith.constant 0 : index
    %7 = vector.load %arg6[%c0_5, %c0_6, %c0_7] : memref<1x128x32xbf16, #tpu.memory_space<vmem>>, vector<1x128x32xbf16>
    %8 = vector.shape_cast %7 : vector<1x128x32xbf16> to vector<128x32xbf16>
    %cst_8 = arith.constant dense<0.000000e+00> : vector<16x32xf32>
    %9 = tpu.matmul %3, %8, %cst_8 {dimension_numbers = #tpu.dot_dimension_numbers<[1], [0], [0], [1], [0, 0, 1, 1], [], []>} : vector<16x128xbf16>, vector<128x32xbf16>, vector<16x32xf32> -> vector<16x32xf32>
    %c0_9 = arith.constant 0 : index
    %c0_10 = arith.constant 0 : index
    %c0_11 = arith.constant 0 : index
    %10 = vector.load %arg7[%c0_9, %c0_10, %c0_11] : memref<1x128x32xbf16, #tpu.memory_space<vmem>>, vector<1x128x32xbf16>
    %11 = vector.shape_cast %10 : vector<1x128x32xbf16> to vector<128x32xbf16>
    %cst_12 = arith.constant dense<0.000000e+00> : vector<16x32xf32>
    %12 = tpu.matmul %3, %11, %cst_12 {dimension_numbers = #tpu.dot_dimension_numbers<[1], [0], [0], [1], [0, 0, 1, 1], [], []>} : vector<16x128xbf16>, vector<128x32xbf16>, vector<16x32xf32> -> vector<16x32xf32>
    %13 = arith.truncf %6 : vector<16x32xf32> to vector<16x32xbf16>
    %14 = arith.truncf %9 : vector<16x32xf32> to vector<16x32xbf16>
    %cst_13 = arith.constant dense<0.000000e+00> : vector<16x16xf32>
    %15 = tpu.matmul %13, %14, %cst_13 {dimension_numbers = #tpu.dot_dimension_numbers<[1], [1], [0], [0], [0, 0, 1, 0], [], []>} : vector<16x32xbf16>, vector<16x32xbf16>, vector<16x16xf32> -> vector<16x16xf32>
    %cst_14 = arith.constant dense<0xFF800000> : vector<16xf32>
    %16 = vector.multi_reduction <maximumf>, %15, %cst_14 [1] : vector<16x16xf32> to vector<16xf32>
    %17 = vector.shape_cast %16 : vector<16xf32> to vector<16x1xf32>
    %18 = vector.broadcast %17 : vector<16x1xf32> to vector<16x16xf32>
    %19 = arith.subf %15, %18 : vector<16x16xf32>
    %20 = math.exp %19 : vector<16x16xf32>
    %cst_15 = arith.constant dense<0.000000e+00> : vector<16xf32>
    %21 = vector.multi_reduction <add>, %20, %cst_15 [1] : vector<16x16xf32> to vector<16xf32>
    %22 = vector.shape_cast %21 : vector<16xf32> to vector<16x1xf32>
    %23 = vector.broadcast %22 : vector<16x1xf32> to vector<16x16xf32>
    %24 = arith.divf %20, %23 : vector<16x16xf32>
    %25 = arith.truncf %24 : vector<16x16xf32> to vector<16x16xbf16>
    %26 = arith.truncf %12 : vector<16x32xf32> to vector<16x32xbf16>
    %cst_16 = arith.constant dense<0.000000e+00> : vector<16x32xf32>
    %27 = tpu.matmul %25, %26, %cst_16 {dimension_numbers = #tpu.dot_dimension_numbers<[1], [0], [0], [1], [0, 0, 1, 1], [], []>} : vector<16x16xbf16>, vector<16x32xbf16>, vector<16x32xf32> -> vector<16x32xf32>
    %c0_17 = arith.constant 0 : index
    %c0_18 = arith.constant 0 : index
    %28 = vector.load %arg12[%c0_17, %c0_18] : memref<16x128xf32, #tpu.memory_space<vmem>>, vector<16x128xf32>
    %29 = arith.truncf %27 : vector<16x32xf32> to vector<16x32xbf16>
    %c0_19 = arith.constant 0 : index
    %c0_20 = arith.constant 0 : index
    %c0_21 = arith.constant 0 : index
    %30 = vector.load %arg8[%c0_19, %c0_20, %c0_21] : memref<1x32x128xbf16, #tpu.memory_space<vmem>>, vector<1x32x128xbf16>
    %31 = vector.shape_cast %30 : vector<1x32x128xbf16> to vector<32x128xbf16>
    %cst_22 = arith.constant dense<0.000000e+00> : vector<16x128xf32>
    %32 = tpu.matmul %29, %31, %cst_22 {dimension_numbers = #tpu.dot_dimension_numbers<[1], [0], [0], [1], [0, 0, 1, 1], [], []>} : vector<16x32xbf16>, vector<32x128xbf16>, vector<16x128xf32> -> vector<16x128xf32>
    %33 = arith.addf %28, %32 : vector<16x128xf32>
    %c0_23 = arith.constant 0 : index
    %c0_24 = arith.constant 0 : index
    %34 = vector.load %arg12[%c0_23, %c0_24] : memref<16x128xf32, #tpu.memory_space<vmem>>, vector<16x128xf32>
    tpu.vector_store %arg12[%c0_23, %c0_24], %33 {strides = array<i32>} : memref<16x128xf32, #tpu.memory_space<vmem>>, vector<16x128xf32>,
    %c3_i32 = arith.constant 3 : i32
    %35 = arith.cmpi eq, %arg1, %c3_i32 : i32
    %36 = arith.extui %35 : i1 to i32
    %c0_i32_25 = arith.constant 0 : i32
    %37 = arith.cmpi ne, %36, %c0_i32_25 : i32
    scf.if %37 {
      %c0_26 = arith.constant 0 : index
      %c0_27 = arith.constant 0 : index
      %38 = vector.load %arg12[%c0_26, %c0_27] : memref<16x128xf32, #tpu.memory_space<vmem>>, vector<16x128xf32>
      %c0_28 = arith.constant 0 : index
      %c0_29 = arith.constant 0 : index
      %c0_30 = arith.constant 0 : index
      %39 = vector.load %arg10[%c0_28, %c0_29, %c0_30] : memref<1x16x128xf32, #tpu.memory_space<vmem>>, vector<1x16x128xf32>
      %40 = vector.shape_cast %39 : vector<1x16x128xf32> to vector<16x128xf32>
      %41 = vector.shape_cast %38 : vector<16x128xf32> to vector<1x16x128xf32>
      tpu.vector_store %arg10[%c0_28, %c0_29, %c0_30], %41 {strides = array<i32>} : memref<1x16x128xf32, #tpu.memory_space<vmem>>, vector<1x16x128xf32>,
    } else {
    }
    return
  }
  func.func @transform_0(%arg0: i32, %arg1: i32) -> (i32, i32, i32) {
    %c0_i32 = arith.constant 0 : i32
    %c0_i32_0 = arith.constant 0 : i32
    %c0_i32_1 = arith.constant 0 : i32
    return %arg0, %c0_i32, %c0_i32_0 : i32, i32, i32
  }
  func.func @transform_1(%arg0: i32, %arg1: i32) -> (i32, i32) {
    %c0_i32 = arith.constant 0 : i32
    %c0_i32_0 = arith.constant 0 : i32
    %c0_i32_1 = arith.constant 0 : i32
    return %c0_i32, %c0_i32_0 : i32, i32
  }
  func.func @transform_2(%arg0: i32, %arg1: i32) -> (i32, i32) {
    %c0_i32 = arith.constant 0 : i32
    %c0_i32_0 = arith.constant 0 : i32
    %c0_i32_1 = arith.constant 0 : i32
    return %c0_i32, %c0_i32_0 : i32, i32
  }
  func.func @transform_3(%arg0: i32, %arg1: i32) -> (i32, i32, i32) {
    %c0_i32 = arith.constant 0 : i32
    %c0_i32_0 = arith.constant 0 : i32
    %c0_i32_1 = arith.constant 0 : i32
    return %arg1, %c0_i32, %c0_i32_0 : i32, i32, i32
  }
  func.func @transform_4(%arg0: i32, %arg1: i32) -> (i32, i32, i32) {
    %c0_i32 = arith.constant 0 : i32
    %c0_i32_0 = arith.constant 0 : i32
    %c0_i32_1 = arith.constant 0 : i32
    return %arg1, %c0_i32, %c0_i32_0 : i32, i32, i32
  }
  func.func @transform_5(%arg0: i32, %arg1: i32) -> (i32, i32, i32) {
    %c0_i32 = arith.constant 0 : i32
    %c0_i32_0 = arith.constant 0 : i32
    %c0_i32_1 = arith.constant 0 : i32
    return %arg1, %c0_i32, %c0_i32_0 : i32, i32, i32
  }
  func.func @transform_6(%arg0: i32, %arg1: i32) -> (i32, i32, i32) {
    %c0_i32 = arith.constant 0 : i32
    %c0_i32_0 = arith.constant 0 : i32
    %c0_i32_1 = arith.constant 0 : i32
    return %arg1, %c0_i32, %c0_i32_0 : i32, i32, i32
  }
  func.func @transform_7(%arg0: i32, %arg1: i32) -> (i32, i32) {
    %c0_i32 = arith.constant 0 : i32
    %c0_i32_0 = arith.constant 0 : i32
    %c0_i32_1 = arith.constant 0 : i32
    return %c0_i32, %c0_i32_0 : i32, i32
  }
  func.func @transform_8(%arg0: i32, %arg1: i32) -> (i32, i32, i32) {
    %c0_i32 = arith.constant 0 : i32
    %c0_i32_0 = arith.constant 0 : i32
    %c0_i32_1 = arith.constant 0 : i32
    return %arg0, %c0_i32, %c0_i32_0 : i32, i32, i32
  }
}

module attributes {stable_mosaic.version = 11 : i64} {
  func.func @_mlp_block_kernel(%arg0: i32, %arg1: memref<32x128xf32, #tpu.memory_space<vmem>>, %arg2: memref<1x128xf32, #tpu.memory_space<vmem>>, %arg3: memref<1x128xf32, #tpu.memory_space<vmem>>, %arg4: memref<128x512xbf16, #tpu.memory_space<vmem>>, %arg5: memref<1x512xf32, #tpu.memory_space<vmem>>, %arg6: memref<512x128xbf16, #tpu.memory_space<vmem>>, %arg7: memref<1x128xf32, #tpu.memory_space<vmem>>, %arg8: memref<32x128xf32, #tpu.memory_space<vmem>>) attributes {dimension_semantics = [#tpu.dimension_semantics<parallel>], iteration_bounds = array<i64: 1>, scalar_prefetch = 0 : i64, scratch_operands = 0 : i64, tpu.core_type = #tpu.core_type<tc>, window_params = [{transform_indices = @transform_0, window_bounds = array<i64: 32, 128>}, {pipeline_mode = #tpu.pipeline_mode<synchronous>, transform_indices = @transform_1, window_bounds = array<i64: 1, 128>}, {pipeline_mode = #tpu.pipeline_mode<synchronous>, transform_indices = @transform_2, window_bounds = array<i64: 1, 128>}, {pipeline_mode = #tpu.pipeline_mode<synchronous>, transform_indices = @transform_3, window_bounds = array<i64: 128, 512>}, {pipeline_mode = #tpu.pipeline_mode<synchronous>, transform_indices = @transform_4, window_bounds = array<i64: 1, 512>}, {pipeline_mode = #tpu.pipeline_mode<synchronous>, transform_indices = @transform_5, window_bounds = array<i64: 512, 128>}, {pipeline_mode = #tpu.pipeline_mode<synchronous>, transform_indices = @transform_6, window_bounds = array<i64: 1, 128>}, {transform_indices = @transform_7, window_bounds = array<i64: 32, 128>}]} {
    %c0 = arith.constant 0 : index
    %c0_0 = arith.constant 0 : index
    %0 = vector.load %arg1[%c0, %c0_0] : memref<32x128xf32, #tpu.memory_space<vmem>>, vector<32x128xf32>
    %cst = arith.constant dense<0.000000e+00> : vector<32xf32>
    %1 = vector.multi_reduction <add>, %0, %cst [1] : vector<32x128xf32> to vector<32xf32>
    %2 = vector.shape_cast %1 : vector<32xf32> to vector<32x1xf32>
    %cst_1 = arith.constant 1.280000e+02 : f32
    %3 = vector.broadcast %cst_1 : f32 to vector<32x1xf32>
    %4 = arith.divf %2, %3 : vector<32x1xf32>
    %5 = vector.broadcast %4 : vector<32x1xf32> to vector<32x128xf32>
    %6 = arith.subf %0, %5 : vector<32x128xf32>
    %7 = arith.mulf %6, %6 : vector<32x128xf32>
    %cst_2 = arith.constant dense<0.000000e+00> : vector<32xf32>
    %8 = vector.multi_reduction <add>, %7, %cst_2 [1] : vector<32x128xf32> to vector<32xf32>
    %9 = vector.shape_cast %8 : vector<32xf32> to vector<32x1xf32>
    %cst_3 = arith.constant 1.280000e+02 : f32
    %10 = vector.broadcast %cst_3 : f32 to vector<32x1xf32>
    %11 = arith.divf %9, %10 : vector<32x1xf32>
    %12 = vector.broadcast %4 : vector<32x1xf32> to vector<32x128xf32>
    %13 = arith.subf %0, %12 : vector<32x128xf32>
    %cst_4 = arith.constant 9.99999974E-6 : f32
    %14 = vector.broadcast %cst_4 : f32 to vector<32x1xf32>
    %15 = arith.addf %11, %14 : vector<32x1xf32>
    %16 = math.rsqrt %15 : vector<32x1xf32>
    %17 = vector.broadcast %16 : vector<32x1xf32> to vector<32x128xf32>
    %18 = arith.mulf %13, %17 : vector<32x128xf32>
    %c0_5 = arith.constant 0 : index
    %c0_6 = arith.constant 0 : index
    %19 = vector.load %arg2[%c0_5, %c0_6] : memref<1x128xf32, #tpu.memory_space<vmem>>, vector<1x128xf32>
    %20 = vector.broadcast %19 : vector<1x128xf32> to vector<32x128xf32>
    %21 = arith.mulf %18, %20 : vector<32x128xf32>
    %c0_7 = arith.constant 0 : index
    %c0_8 = arith.constant 0 : index
    %22 = vector.load %arg3[%c0_7, %c0_8] : memref<1x128xf32, #tpu.memory_space<vmem>>, vector<1x128xf32>
    %23 = vector.broadcast %22 : vector<1x128xf32> to vector<32x128xf32>
    %24 = arith.addf %21, %23 : vector<32x128xf32>
    %25 = arith.truncf %24 : vector<32x128xf32> to vector<32x128xbf16>
    %c0_9 = arith.constant 0 : index
    %c0_10 = arith.constant 0 : index
    %26 = vector.load %arg4[%c0_9, %c0_10] : memref<128x512xbf16, #tpu.memory_space<vmem>>, vector<128x512xbf16>
    %cst_11 = arith.constant dense<0.000000e+00> : vector<32x512xf32>
    %27 = tpu.matmul %25, %26, %cst_11 {dimension_numbers = #tpu.dot_dimension_numbers<[1], [0], [0], [1], [0, 0, 1, 1], [], []>} : vector<32x128xbf16>, vector<128x512xbf16>, vector<32x512xf32> -> vector<32x512xf32>
    %c0_12 = arith.constant 0 : index
    %c0_13 = arith.constant 0 : index
    %28 = vector.load %arg5[%c0_12, %c0_13] : memref<1x512xf32, #tpu.memory_space<vmem>>, vector<1x512xf32>
    %29 = vector.broadcast %28 : vector<1x512xf32> to vector<32x512xf32>
    %30 = arith.addf %27, %29 : vector<32x512xf32>
    %cst_14 = arith.constant 5.000000e-01 : f32
    %31 = vector.broadcast %cst_14 : f32 to vector<32x512xf32>
    %32 = arith.mulf %31, %30 : vector<32x512xf32>
    %cst_15 = arith.constant 0.707106769 : f32
    %33 = vector.broadcast %cst_15 : f32 to vector<32x512xf32>
    %34 = arith.mulf %30, %33 : vector<32x512xf32>
    %35 = math.erf %34 : vector<32x512xf32>
    %cst_16 = arith.constant 1.000000e+00 : f32
    %36 = vector.broadcast %cst_16 : f32 to vector<32x512xf32>
    %37 = arith.addf %36, %35 : vector<32x512xf32>
    %38 = arith.mulf %32, %37 : vector<32x512xf32>
    %39 = arith.truncf %38 : vector<32x512xf32> to vector<32x512xbf16>
    %c0_17 = arith.constant 0 : index
    %c0_18 = arith.constant 0 : index
    %40 = vector.load %arg6[%c0_17, %c0_18] : memref<512x128xbf16, #tpu.memory_space<vmem>>, vector<512x128xbf16>
    %cst_19 = arith.constant dense<0.000000e+00> : vector<32x128xf32>
    %41 = tpu.matmul %39, %40, %cst_19 {dimension_numbers = #tpu.dot_dimension_numbers<[1], [0], [0], [1], [0, 0, 1, 1], [], []>} : vector<32x512xbf16>, vector<512x128xbf16>, vector<32x128xf32> -> vector<32x128xf32>
    %c0_20 = arith.constant 0 : index
    %c0_21 = arith.constant 0 : index
    %42 = vector.load %arg7[%c0_20, %c0_21] : memref<1x128xf32, #tpu.memory_space<vmem>>, vector<1x128xf32>
    %43 = vector.broadcast %42 : vector<1x128xf32> to vector<32x128xf32>
    %44 = arith.addf %41, %43 : vector<32x128xf32>
    %45 = arith.addf %0, %44 : vector<32x128xf32>
    %c0_22 = arith.constant 0 : index
    %c0_23 = arith.constant 0 : index
    %46 = vector.load %arg8[%c0_22, %c0_23] : memref<32x128xf32, #tpu.memory_space<vmem>>, vector<32x128xf32>
    tpu.vector_store %arg8[%c0_22, %c0_23], %45 {strides = array<i32>} : memref<32x128xf32, #tpu.memory_space<vmem>>, vector<32x128xf32>,
    return
  }
  func.func @transform_0(%arg0: i32) -> (i32, i32) {
    %c0_i32 = arith.constant 0 : i32
    %c0_i32_0 = arith.constant 0 : i32
    return %arg0, %c0_i32 : i32, i32
  }
  func.func @transform_1(%arg0: i32) -> (i32, i32) {
    %c0_i32 = arith.constant 0 : i32
    %c0_i32_0 = arith.constant 0 : i32
    %c0_i32_1 = arith.constant 0 : i32
    return %c0_i32, %c0_i32_0 : i32, i32
  }
  func.func @transform_2(%arg0: i32) -> (i32, i32) {
    %c0_i32 = arith.constant 0 : i32
    %c0_i32_0 = arith.constant 0 : i32
    %c0_i32_1 = arith.constant 0 : i32
    return %c0_i32, %c0_i32_0 : i32, i32
  }
  func.func @transform_3(%arg0: i32) -> (i32, i32) {
    %c0_i32 = arith.constant 0 : i32
    %c0_i32_0 = arith.constant 0 : i32
    %c0_i32_1 = arith.constant 0 : i32
    return %c0_i32, %c0_i32_0 : i32, i32
  }
  func.func @transform_4(%arg0: i32) -> (i32, i32) {
    %c0_i32 = arith.constant 0 : i32
    %c0_i32_0 = arith.constant 0 : i32
    %c0_i32_1 = arith.constant 0 : i32
    return %c0_i32, %c0_i32_0 : i32, i32
  }
  func.func @transform_5(%arg0: i32) -> (i32, i32) {
    %c0_i32 = arith.constant 0 : i32
    %c0_i32_0 = arith.constant 0 : i32
    %c0_i32_1 = arith.constant 0 : i32
    return %c0_i32, %c0_i32_0 : i32, i32
  }
  func.func @transform_6(%arg0: i32) -> (i32, i32) {
    %c0_i32 = arith.constant 0 : i32
    %c0_i32_0 = arith.constant 0 : i32
    %c0_i32_1 = arith.constant 0 : i32
    return %c0_i32, %c0_i32_0 : i32, i32
  }
  func.func @transform_7(%arg0: i32) -> (i32, i32) {
    %c0_i32 = arith.constant 0 : i32
    %c0_i32_0 = arith.constant 0 : i32
    return %arg0, %c0_i32 : i32, i32
  }
}

module attributes {stable_mosaic.version = 11 : i64} {
  func.func @_mlp_block_kernel(%arg0: i32, %arg1: memref<32x128xf32, #tpu.memory_space<vmem>>, %arg2: memref<1x128xf32, #tpu.memory_space<vmem>>, %arg3: memref<1x128xf32, #tpu.memory_space<vmem>>, %arg4: memref<128x512xbf16, #tpu.memory_space<vmem>>, %arg5: memref<1x512xf32, #tpu.memory_space<vmem>>, %arg6: memref<512x128xbf16, #tpu.memory_space<vmem>>, %arg7: memref<1x128xf32, #tpu.memory_space<vmem>>, %arg8: memref<32x128xf32, #tpu.memory_space<vmem>>) attributes {dimension_semantics = [#tpu.dimension_semantics<parallel>], iteration_bounds = array<i64: 1>, scalar_prefetch = 0 : i64, scratch_operands = 0 : i64, tpu.core_type = #tpu.core_type<tc>, window_params = [{transform_indices = @transform_0, window_bounds = array<i64: 32, 128>}, {pipeline_mode = #tpu.pipeline_mode<synchronous>, transform_indices = @transform_1, window_bounds = array<i64: 1, 128>}, {pipeline_mode = #tpu.pipeline_mode<synchronous>, transform_indices = @transform_2, window_bounds = array<i64: 1, 128>}, {pipeline_mode = #tpu.pipeline_mode<synchronous>, transform_indices = @transform_3, window_bounds = array<i64: 128, 512>}, {pipeline_mode = #tpu.pipeline_mode<synchronous>, transform_indices = @transform_4, window_bounds = array<i64: 1, 512>}, {pipeline_mode = #tpu.pipeline_mode<synchronous>, transform_indices = @transform_5, window_bounds = array<i64: 512, 128>}, {pipeline_mode = #tpu.pipeline_mode<synchronous>, transform_indices = @transform_6, window_bounds = array<i64: 1, 128>}, {transform_indices = @transform_7, window_bounds = array<i64: 32, 128>}]} {
    %c0 = arith.constant 0 : index
    %c0_0 = arith.constant 0 : index
    %0 = vector.load %arg1[%c0, %c0_0] : memref<32x128xf32, #tpu.memory_space<vmem>>, vector<32x128xf32>
    %cst = arith.constant dense<0.000000e+00> : vector<32xf32>
    %1 = vector.multi_reduction <add>, %0, %cst [1] : vector<32x128xf32> to vector<32xf32>
    %2 = vector.shape_cast %1 : vector<32xf32> to vector<32x1xf32>
    %cst_1 = arith.constant 1.280000e+02 : f32
    %3 = vector.broadcast %cst_1 : f32 to vector<32x1xf32>
    %4 = arith.divf %2, %3 : vector<32x1xf32>
    %5 = vector.broadcast %4 : vector<32x1xf32> to vector<32x128xf32>
    %6 = arith.subf %0, %5 : vector<32x128xf32>
    %7 = arith.mulf %6, %6 : vector<32x128xf32>
    %cst_2 = arith.constant dense<0.000000e+00> : vector<32xf32>
    %8 = vector.multi_reduction <add>, %7, %cst_2 [1] : vector<32x128xf32> to vector<32xf32>
    %9 = vector.shape_cast %8 : vector<32xf32> to vector<32x1xf32>
    %cst_3 = arith.constant 1.280000e+02 : f32
    %10 = vector.broadcast %cst_3 : f32 to vector<32x1xf32>
    %11 = arith.divf %9, %10 : vector<32x1xf32>
    %12 = vector.broadcast %4 : vector<32x1xf32> to vector<32x128xf32>
    %13 = arith.subf %0, %12 : vector<32x128xf32>
    %cst_4 = arith.constant 9.99999974E-6 : f32
    %14 = vector.broadcast %cst_4 : f32 to vector<32x1xf32>
    %15 = arith.addf %11, %14 : vector<32x1xf32>
    %16 = math.rsqrt %15 : vector<32x1xf32>
    %17 = vector.broadcast %16 : vector<32x1xf32> to vector<32x128xf32>
    %18 = arith.mulf %13, %17 : vector<32x128xf32>
    %c0_5 = arith.constant 0 : index
    %c0_6 = arith.constant 0 : index
    %19 = vector.load %arg2[%c0_5, %c0_6] : memref<1x128xf32, #tpu.memory_space<vmem>>, vector<1x128xf32>
    %20 = vector.broadcast %19 : vector<1x128xf32> to vector<32x128xf32>
    %21 = arith.mulf %18, %20 : vector<32x128xf32>
    %c0_7 = arith.constant 0 : index
    %c0_8 = arith.constant 0 : index
    %22 = vector.load %arg3[%c0_7, %c0_8] : memref<1x128xf32, #tpu.memory_space<vmem>>, vector<1x128xf32>
    %23 = vector.broadcast %22 : vector<1x128xf32> to vector<32x128xf32>
    %24 = arith.addf %21, %23 : vector<32x128xf32>
    %25 = arith.truncf %24 : vector<32x128xf32> to vector<32x128xbf16>
    %c0_9 = arith.constant 0 : index
    %c0_10 = arith.constant 0 : index
    %26 = vector.load %arg4[%c0_9, %c0_10] : memref<128x512xbf16, #tpu.memory_space<vmem>>, vector<128x512xbf16>
    %cst_11 = arith.constant dense<0.000000e+00> : vector<32x512xf32>
    %27 = tpu.matmul %25, %26, %cst_11 {dimension_numbers = #tpu.dot_dimension_numbers<[1], [0], [0], [1], [0, 0, 1, 1], [], []>} : vector<32x128xbf16>, vector<128x512xbf16>, vector<32x512xf32> -> vector<32x512xf32>
    %c0_12 = arith.constant 0 : index
    %c0_13 = arith.constant 0 : index
    %28 = vector.load %arg5[%c0_12, %c0_13] : memref<1x512xf32, #tpu.memory_space<vmem>>, vector<1x512xf32>
    %29 = vector.broadcast %28 : vector<1x512xf32> to vector<32x512xf32>
    %30 = arith.addf %27, %29 : vector<32x512xf32>
    %cst_14 = arith.constant 5.000000e-01 : f32
    %31 = vector.broadcast %cst_14 : f32 to vector<32x512xf32>
    %32 = arith.mulf %31, %30 : vector<32x512xf32>
    %cst_15 = arith.constant 0.707106769 : f32
    %33 = vector.broadcast %cst_15 : f32 to vector<32x512xf32>
    %34 = arith.mulf %30, %33 : vector<32x512xf32>
    %35 = math.erf %34 : vector<32x512xf32>
    %cst_16 = arith.constant 1.000000e+00 : f32
    %36 = vector.broadcast %cst_16 : f32 to vector<32x512xf32>
    %37 = arith.addf %36, %35 : vector<32x512xf32>
    %38 = arith.mulf %32, %37 : vector<32x512xf32>
    %39 = arith.truncf %38 : vector<32x512xf32> to vector<32x512xbf16>
    %c0_17 = arith.constant 0 : index
    %c0_18 = arith.constant 0 : index
    %40 = vector.load %arg6[%c0_17, %c0_18] : memref<512x128xbf16, #tpu.memory_space<vmem>>, vector<512x128xbf16>
    %cst_19 = arith.constant dense<0.000000e+00> : vector<32x128xf32>
    %41 = tpu.matmul %39, %40, %cst_19 {dimension_numbers = #tpu.dot_dimension_numbers<[1], [0], [0], [1], [0, 0, 1, 1], [], []>} : vector<32x512xbf16>, vector<512x128xbf16>, vector<32x128xf32> -> vector<32x128xf32>
    %c0_20 = arith.constant 0 : index
    %c0_21 = arith.constant 0 : index
    %42 = vector.load %arg7[%c0_20, %c0_21] : memref<1x128xf32, #tpu.memory_space<vmem>>, vector<1x128xf32>
    %43 = vector.broadcast %42 : vector<1x128xf32> to vector<32x128xf32>
    %44 = arith.addf %41, %43 : vector<32x128xf32>
    %45 = arith.addf %0, %44 : vector<32x128xf32>
    %c0_22 = arith.constant 0 : index
    %c0_23 = arith.constant 0 : index
    %46 = vector.load %arg8[%c0_22, %c0_23] : memref<32x128xf32, #tpu.memory_space<vmem>>, vector<32x128xf32>
    tpu.vector_store %arg8[%c0_22, %c0_23], %45 {strides = array<i32>} : memref<32x128xf32, #tpu.memory_space<vmem>>, vector<32x128xf32>,
    return
  }
  func.func @transform_0(%arg0: i32) -> (i32, i32) {
    %c0_i32 = arith.constant 0 : i32
    %c0_i32_0 = arith.constant 0 : i32
    return %arg0, %c0_i32 : i32, i32
  }
  func.func @transform_1(%arg0: i32) -> (i32, i32) {
    %c0_i32 = arith.constant 0 : i32
    %c0_i32_0 = arith.constant 0 : i32
    %c0_i32_1 = arith.constant 0 : i32
    return %c0_i32, %c0_i32_0 : i32, i32
  }
  func.func @transform_2(%arg0: i32) -> (i32, i32) {
    %c0_i32 = arith.constant 0 : i32
    %c0_i32_0 = arith.constant 0 : i32
    %c0_i32_1 = arith.constant 0 : i32
    return %c0_i32, %c0_i32_0 : i32, i32
  }
  func.func @transform_3(%arg0: i32) -> (i32, i32) {
    %c0_i32 = arith.constant 0 : i32
    %c0_i32_0 = arith.constant 0 : i32
    %c0_i32_1 = arith.constant 0 : i32
    return %c0_i32, %c0_i32_0 : i32, i32
  }
  func.func @transform_4(%arg0: i32) -> (i32, i32) {
    %c0_i32 = arith.constant 0 : i32
    %c0_i32_0 = arith.constant 0 : i32
    %c0_i32_1 = arith.constant 0 : i32
    return %c0_i32, %c0_i32_0 : i32, i32
  }
  func.func @transform_5(%arg0: i32) -> (i32, i32) {
    %c0_i32 = arith.constant 0 : i32
    %c0_i32_0 = arith.constant 0 : i32
    %c0_i32_1 = arith.constant 0 : i32
    return %c0_i32, %c0_i32_0 : i32, i32
  }
  func.func @transform_6(%arg0: i32) -> (i32, i32) {
    %c0_i32 = arith.constant 0 : i32
    %c0_i32_0 = arith.constant 0 : i32
    %c0_i32_1 = arith.constant 0 : i32
    return %c0_i32, %c0_i32_0 : i32, i32
  }
  func.func @transform_7(%arg0: i32) -> (i32, i32) {
    %c0_i32 = arith.constant 0 : i32
    %c0_i32_0 = arith.constant 0 : i32
    return %arg0, %c0_i32 : i32, i32
  }
}

module attributes {stable_mosaic.version = 11 : i64} {
  func.func @_linear_kernel(%arg0: i32, %arg1: i32, %arg2: memref<32x128xf32, #tpu.memory_space<vmem>>, %arg3: memref<1x128xf32, #tpu.memory_space<vmem>>, %arg4: memref<1x128xf32, #tpu.memory_space<vmem>>, %arg5: memref<128x128xbf16, #tpu.memory_space<vmem>>, %arg6: memref<32x128xf32, #tpu.memory_space<vmem>>) attributes {dimension_semantics = [#tpu.dimension_semantics<parallel>, #tpu.dimension_semantics<parallel>], iteration_bounds = array<i64: 1, 1>, scalar_prefetch = 0 : i64, scratch_operands = 0 : i64, tpu.core_type = #tpu.core_type<tc>, window_params = [{transform_indices = @transform_0, window_bounds = array<i64: 32, 128>}, {pipeline_mode = #tpu.pipeline_mode<synchronous>, transform_indices = @transform_1, window_bounds = array<i64: 1, 128>}, {pipeline_mode = #tpu.pipeline_mode<synchronous>, transform_indices = @transform_2, window_bounds = array<i64: 1, 128>}, {transform_indices = @transform_3, window_bounds = array<i64: 128, 128>}, {transform_indices = @transform_4, window_bounds = array<i64: 32, 128>}]} {
    %c0 = arith.constant 0 : index
    %c0_0 = arith.constant 0 : index
    %0 = vector.load %arg2[%c0, %c0_0] : memref<32x128xf32, #tpu.memory_space<vmem>>, vector<32x128xf32>
    %cst = arith.constant dense<0.000000e+00> : vector<32xf32>
    %1 = vector.multi_reduction <add>, %0, %cst [1] : vector<32x128xf32> to vector<32xf32>
    %2 = vector.shape_cast %1 : vector<32xf32> to vector<32x1xf32>
    %cst_1 = arith.constant 1.280000e+02 : f32
    %3 = vector.broadcast %cst_1 : f32 to vector<32x1xf32>
    %4 = arith.divf %2, %3 : vector<32x1xf32>
    %5 = vector.broadcast %4 : vector<32x1xf32> to vector<32x128xf32>
    %6 = arith.subf %0, %5 : vector<32x128xf32>
    %7 = arith.mulf %6, %6 : vector<32x128xf32>
    %cst_2 = arith.constant dense<0.000000e+00> : vector<32xf32>
    %8 = vector.multi_reduction <add>, %7, %cst_2 [1] : vector<32x128xf32> to vector<32xf32>
    %9 = vector.shape_cast %8 : vector<32xf32> to vector<32x1xf32>
    %cst_3 = arith.constant 1.280000e+02 : f32
    %10 = vector.broadcast %cst_3 : f32 to vector<32x1xf32>
    %11 = arith.divf %9, %10 : vector<32x1xf32>
    %12 = vector.broadcast %4 : vector<32x1xf32> to vector<32x128xf32>
    %13 = arith.subf %0, %12 : vector<32x128xf32>
    %cst_4 = arith.constant 9.99999974E-6 : f32
    %14 = vector.broadcast %cst_4 : f32 to vector<32x1xf32>
    %15 = arith.addf %11, %14 : vector<32x1xf32>
    %16 = math.rsqrt %15 : vector<32x1xf32>
    %17 = vector.broadcast %16 : vector<32x1xf32> to vector<32x128xf32>
    %18 = arith.mulf %13, %17 : vector<32x128xf32>
    %c0_5 = arith.constant 0 : index
    %c0_6 = arith.constant 0 : index
    %19 = vector.load %arg3[%c0_5, %c0_6] : memref<1x128xf32, #tpu.memory_space<vmem>>, vector<1x128xf32>
    %20 = vector.broadcast %19 : vector<1x128xf32> to vector<32x128xf32>
    %21 = arith.mulf %18, %20 : vector<32x128xf32>
    %c0_7 = arith.constant 0 : index
    %c0_8 = arith.constant 0 : index
    %22 = vector.load %arg4[%c0_7, %c0_8] : memref<1x128xf32, #tpu.memory_space<vmem>>, vector<1x128xf32>
    %23 = vector.broadcast %22 : vector<1x128xf32> to vector<32x128xf32>
    %24 = arith.addf %21, %23 : vector<32x128xf32>
    %25 = arith.truncf %24 : vector<32x128xf32> to vector<32x128xbf16>
    %c0_9 = arith.constant 0 : index
    %c0_10 = arith.constant 0 : index
    %26 = vector.load %arg5[%c0_9, %c0_10] : memref<128x128xbf16, #tpu.memory_space<vmem>>, vector<128x128xbf16>
    %cst_11 = arith.constant dense<0.000000e+00> : vector<32x128xf32>
    %27 = tpu.matmul %25, %26, %cst_11 {dimension_numbers = #tpu.dot_dimension_numbers<[1], [0], [0], [1], [0, 0, 1, 1], [], []>} : vector<32x128xbf16>, vector<128x128xbf16>, vector<32x128xf32> -> vector<32x128xf32>
    %c0_12 = arith.constant 0 : index
    %c0_13 = arith.constant 0 : index
    %28 = vector.load %arg6[%c0_12, %c0_13] : memref<32x128xf32, #tpu.memory_space<vmem>>, vector<32x128xf32>
    tpu.vector_store %arg6[%c0_12, %c0_13], %27 {strides = array<i32>} : memref<32x128xf32, #tpu.memory_space<vmem>>, vector<32x128xf32>,
    return
  }
  func.func @transform_0(%arg0: i32, %arg1: i32) -> (i32, i32) {
    %c0_i32 = arith.constant 0 : i32
    %c0_i32_0 = arith.constant 0 : i32
    return %arg0, %c0_i32 : i32, i32
  }
  func.func @transform_1(%arg0: i32, %arg1: i32) -> (i32, i32) {
    %c0_i32 = arith.constant 0 : i32
    %c0_i32_0 = arith.constant 0 : i32
    %c0_i32_1 = arith.constant 0 : i32
    return %c0_i32, %c0_i32_0 : i32, i32
  }
  func.func @transform_2(%arg0: i32, %arg1: i32) -> (i32, i32) {
    %c0_i32 = arith.constant 0 : i32
    %c0_i32_0 = arith.constant 0 : i32
    %c0_i32_1 = arith.constant 0 : i32
    return %c0_i32, %c0_i32_0 : i32, i32
  }
  func.func @transform_3(%arg0: i32, %arg1: i32) -> (i32, i32) {
    %c0_i32 = arith.constant 0 : i32
    %c0_i32_0 = arith.constant 0 : i32
    return %c0_i32, %arg1 : i32, i32
  }
  func.func @transform_4(%arg0: i32, %arg1: i32) -> (i32, i32) {
    %c0_i32 = arith.constant 0 : i32
    return %arg0, %arg1 : i32, i32
  }
}

module attributes {stable_mosaic.version = 11 : i64} {
  func.func @_attn_block_kernel(%arg0: i32, %arg1: i32, %arg2: memref<1x16x128xf32, #tpu.memory_space<vmem>>, %arg3: memref<1x128xf32, #tpu.memory_space<vmem>>, %arg4: memref<1x128xf32, #tpu.memory_space<vmem>>, %arg5: memref<1x128x32xbf16, #tpu.memory_space<vmem>>, %arg6: memref<1x128x32xbf16, #tpu.memory_space<vmem>>, %arg7: memref<1x128x32xbf16, #tpu.memory_space<vmem>>, %arg8: memref<1x32x128xbf16, #tpu.memory_space<vmem>>, %arg9: memref<1x128xf32, #tpu.memory_space<vmem>>, %arg10: memref<1x16x128xf32, #tpu.memory_space<vmem>>, %arg11: memref<16x128xbf16, #tpu.memory_space<vmem>>, %arg12: memref<16x128xf32, #tpu.memory_space<vmem>>) attributes {dimension_semantics = [#tpu.dimension_semantics<parallel>, #tpu.dimension_semantics<arbitrary>], iteration_bounds = array<i64: 2, 4>, scalar_prefetch = 0 : i64, scratch_operands = 2 : i64, tpu.core_type = #tpu.core_type<tc>, window_params = [{transform_indices = @transform_0, window_bounds = array<i64: 1, 16, 128>}, {pipeline_mode = #tpu.pipeline_mode<synchronous>, transform_indices = @transform_1, window_bounds = array<i64: 1, 128>}, {pipeline_mode = #tpu.pipeline_mode<synchronous>, transform_indices = @transform_2, window_bounds = array<i64: 1, 128>}, {transform_indices = @transform_3, window_bounds = array<i64: 1, 128, 32>}, {transform_indices = @transform_4, window_bounds = array<i64: 1, 128, 32>}, {transform_indices = @transform_5, window_bounds = array<i64: 1, 128, 32>}, {transform_indices = @transform_6, window_bounds = array<i64: 1, 32, 128>}, {pipeline_mode = #tpu.pipeline_mode<synchronous>, transform_indices = @transform_7, window_bounds = array<i64: 1, 128>}, {transform_indices = @transform_8, window_bounds = array<i64: 1, 16, 128>}]} {
    %c0_i32 = arith.constant 0 : i32
    %0 = arith.cmpi eq, %arg1, %c0_i32 : i32
    %1 = arith.extui %0 : i1 to i32
    %c0_i32_0 = arith.constant 0 : i32
    %2 = arith.cmpi ne, %1, %c0_i32_0 : i32
    scf.if %2 {
      %c0_26 = arith.constant 0 : index
      %c0_27 = arith.constant 0 : index
      %c0_28 = arith.constant 0 : index
      %38 = vector.load %arg2[%c0_26, %c0_27, %c0_28] : memref<1x16x128xf32, #tpu.memory_space<vmem>>, vector<1x16x128xf32>
      %39 = vector.shape_cast %38 : vector<1x16x128xf32> to vector<16x128xf32>
      %cst_29 = arith.constant dense<0.000000e+00> : vector<16xf32>
      %40 = vector.multi_reduction <add>, %39, %cst_29 [1] : vector<16x128xf32> to vector<16xf32>
      %41 = vector.shape_cast %40 : vector<16xf32> to vector<16x1xf32>
      %cst_30 = arith.constant 1.280000e+02 : f32
      %42 = vector.broadcast %cst_30 : f32 to vector<16x1xf32>
      %43 = arith.divf %41, %42 : vector<16x1xf32>
      %44 = vector.broadcast %43 : vector<16x1xf32> to vector<16x128xf32>
      %45 = arith.subf %39, %44 : vector<16x128xf32>
      %46 = arith.mulf %45, %45 : vector<16x128xf32>
      %cst_31 = arith.constant dense<0.000000e+00> : vector<16xf32>
      %47 = vector.multi_reduction <add>, %46, %cst_31 [1] : vector<16x128xf32> to vector<16xf32>
      %48 = vector.shape_cast %47 : vector<16xf32> to vector<16x1xf32>
      %cst_32 = arith.constant 1.280000e+02 : f32
      %49 = vector.broadcast %cst_32 : f32 to vector<16x1xf32>
      %50 = arith.divf %48, %49 : vector<16x1xf32>
      %51 = vector.broadcast %43 : vector<16x1xf32> to vector<16x128xf32>
      %52 = arith.subf %39, %51 : vector<16x128xf32>
      %cst_33 = arith.constant 9.99999974E-6 : f32
      %53 = vector.broadcast %cst_33 : f32 to vector<16x1xf32>
      %54 = arith.addf %50, %53 : vector<16x1xf32>
      %55 = math.rsqrt %54 : vector<16x1xf32>
      %56 = vector.broadcast %55 : vector<16x1xf32> to vector<16x128xf32>
      %57 = arith.mulf %52, %56 : vector<16x128xf32>
      %c0_34 = arith.constant 0 : index
      %c0_35 = arith.constant 0 : index
      %58 = vector.load %arg3[%c0_34, %c0_35] : memref<1x128xf32, #tpu.memory_space<vmem>>, vector<1x128xf32>
      %59 = vector.broadcast %58 : vector<1x128xf32> to vector<16x128xf32>
      %60 = arith.mulf %57, %59 : vector<16x128xf32>
      %c0_36 = arith.constant 0 : index
      %c0_37 = arith.constant 0 : index
      %61 = vector.load %arg4[%c0_36, %c0_37] : memref<1x128xf32, #tpu.memory_space<vmem>>, vector<1x128xf32>
      %62 = vector.broadcast %61 : vector<1x128xf32> to vector<16x128xf32>
      %63 = arith.addf %60, %62 : vector<16x128xf32>
      %64 = arith.truncf %63 : vector<16x128xf32> to vector<16x128xbf16>
      %c0_38 = arith.constant 0 : index
      %c0_39 = arith.constant 0 : index
      %65 = vector.load %arg11[%c0_38, %c0_39] : memref<16x128xbf16, #tpu.memory_space<vmem>>, vector<16x128xbf16>
      tpu.vector_store %arg11[%c0_38, %c0_39], %64 {strides = array<i32>} : memref<16x128xbf16, #tpu.memory_space<vmem>>, vector<16x128xbf16>,
      %c0_40 = arith.constant 0 : index
      %c0_41 = arith.constant 0 : index
      %66 = vector.load %arg9[%c0_40, %c0_41] : memref<1x128xf32, #tpu.memory_space<vmem>>, vector<1x128xf32>
      %67 = vector.broadcast %66 : vector<1x128xf32> to vector<16x128xf32>
      %68 = arith.addf %39, %67 : vector<16x128xf32>
      %c0_42 = arith.constant 0 : index
      %c0_43 = arith.constant 0 : index
      %69 = vector.load %arg12[%c0_42, %c0_43] : memref<16x128xf32, #tpu.memory_space<vmem>>, vector<16x128xf32>
      tpu.vector_store %arg12[%c0_42, %c0_43], %68 {strides = array<i32>} : memref<16x128xf32, #tpu.memory_space<vmem>>, vector<16x128xf32>,
    } else {
    }
    %c0 = arith.constant 0 : index
    %c0_1 = arith.constant 0 : index
    %3 = vector.load %arg11[%c0, %c0_1] : memref<16x128xbf16, #tpu.memory_space<vmem>>, vector<16x128xbf16>
    %c0_2 = arith.constant 0 : index
    %c0_3 = arith.constant 0 : index
    %c0_4 = arith.constant 0 : index
    %4 = vector.load %arg5[%c0_2, %c0_3, %c0_4] : memref<1x128x32xbf16, #tpu.memory_space<vmem>>, vector<1x128x32xbf16>
    %5 = vector.shape_cast %4 : vector<1x128x32xbf16> to vector<128x32xbf16>
    %cst = arith.constant dense<0.000000e+00> : vector<16x32xf32>
    %6 = tpu.matmul %3, %5, %cst {dimension_numbers = #tpu.dot_dimension_numbers<[1], [0], [0], [1], [0, 0, 1, 1], [], []>} : vector<16x128xbf16>, vector<128x32xbf16>, vector<16x32xf32> -> vector<16x32xf32>
    %c0_5 = arith.constant 0 : index
    %c0_6 = arith.constant 0 : index
    %c0_7 = arith.constant 0 : index
    %7 = vector.load %arg6[%c0_5, %c0_6, %c0_7] : memref<1x128x32xbf16, #tpu.memory_space<vmem>>, vector<1x128x32xbf16>
    %8 = vector.shape_cast %7 : vector<1x128x32xbf16> to vector<128x32xbf16>
    %cst_8 = arith.constant dense<0.000000e+00> : vector<16x32xf32>
    %9 = tpu.matmul %3, %8, %cst_8 {dimension_numbers = #tpu.dot_dimension_numbers<[1], [0], [0], [1], [0, 0, 1, 1], [], []>} : vector<16x128xbf16>, vector<128x32xbf16>, vector<16x32xf32> -> vector<16x32xf32>
    %c0_9 = arith.constant 0 : index
    %c0_10 = arith.constant 0 : index
    %c0_11 = arith.constant 0 : index
    %10 = vector.load %arg7[%c0_9, %c0_10, %c0_11] : memref<1x128x32xbf16, #tpu.memory_space<vmem>>, vector<1x128x32xbf16>
    %11 = vector.shape_cast %10 : vector<1x128x32xbf16> to vector<128x32xbf16>
    %cst_12 = arith.constant dense<0.000000e+00> : vector<16x32xf32>
    %12 = tpu.matmul %3, %11, %cst_12 {dimension_numbers = #tpu.dot_dimension_numbers<[1], [0], [0], [1], [0, 0, 1, 1], [], []>} : vector<16x128xbf16>, vector<128x32xbf16>, vector<16x32xf32> -> vector<16x32xf32>
    %13 = arith.truncf %6 : vector<16x32xf32> to vector<16x32xbf16>
    %14 = arith.truncf %9 : vector<16x32xf32> to vector<16x32xbf16>
    %cst_13 = arith.constant dense<0.000000e+00> : vector<16x16xf32>
    %15 = tpu.matmul %13, %14, %cst_13 {dimension_numbers = #tpu.dot_dimension_numbers<[1], [1], [0], [0], [0, 0, 1, 0], [], []>} : vector<16x32xbf16>, vector<16x32xbf16>, vector<16x16xf32> -> vector<16x16xf32>
    %cst_14 = arith.constant dense<0xFF800000> : vector<16xf32>
    %16 = vector.multi_reduction <maximumf>, %15, %cst_14 [1] : vector<16x16xf32> to vector<16xf32>
    %17 = vector.shape_cast %16 : vector<16xf32> to vector<16x1xf32>
    %18 = vector.broadcast %17 : vector<16x1xf32> to vector<16x16xf32>
    %19 = arith.subf %15, %18 : vector<16x16xf32>
    %20 = math.exp %19 : vector<16x16xf32>
    %cst_15 = arith.constant dense<0.000000e+00> : vector<16xf32>
    %21 = vector.multi_reduction <add>, %20, %cst_15 [1] : vector<16x16xf32> to vector<16xf32>
    %22 = vector.shape_cast %21 : vector<16xf32> to vector<16x1xf32>
    %23 = vector.broadcast %22 : vector<16x1xf32> to vector<16x16xf32>
    %24 = arith.divf %20, %23 : vector<16x16xf32>
    %25 = arith.truncf %24 : vector<16x16xf32> to vector<16x16xbf16>
    %26 = arith.truncf %12 : vector<16x32xf32> to vector<16x32xbf16>
    %cst_16 = arith.constant dense<0.000000e+00> : vector<16x32xf32>
    %27 = tpu.matmul %25, %26, %cst_16 {dimension_numbers = #tpu.dot_dimension_numbers<[1], [0], [0], [1], [0, 0, 1, 1], [], []>} : vector<16x16xbf16>, vector<16x32xbf16>, vector<16x32xf32> -> vector<16x32xf32>
    %c0_17 = arith.constant 0 : index
    %c0_18 = arith.constant 0 : index
    %28 = vector.load %arg12[%c0_17, %c0_18] : memref<16x128xf32, #tpu.memory_space<vmem>>, vector<16x128xf32>
    %29 = arith.truncf %27 : vector<16x32xf32> to vector<16x32xbf16>
    %c0_19 = arith.constant 0 : index
    %c0_20 = arith.constant 0 : index
    %c0_21 = arith.constant 0 : index
    %30 = vector.load %arg8[%c0_19, %c0_20, %c0_21] : memref<1x32x128xbf16, #tpu.memory_space<vmem>>, vector<1x32x128xbf16>
    %31 = vector.shape_cast %30 : vector<1x32x128xbf16> to vector<32x128xbf16>
    %cst_22 = arith.constant dense<0.000000e+00> : vector<16x128xf32>
    %32 = tpu.matmul %29, %31, %cst_22 {dimension_numbers = #tpu.dot_dimension_numbers<[1], [0], [0], [1], [0, 0, 1, 1], [], []>} : vector<16x32xbf16>, vector<32x128xbf16>, vector<16x128xf32> -> vector<16x128xf32>
    %33 = arith.addf %28, %32 : vector<16x128xf32>
    %c0_23 = arith.constant 0 : index
    %c0_24 = arith.constant 0 : index
    %34 = vector.load %arg12[%c0_23, %c0_24] : memref<16x128xf32, #tpu.memory_space<vmem>>, vector<16x128xf32>
    tpu.vector_store %arg12[%c0_23, %c0_24], %33 {strides = array<i32>} : memref<16x128xf32, #tpu.memory_space<vmem>>, vector<16x128xf32>,
    %c3_i32 = arith.constant 3 : i32
    %35 = arith.cmpi eq, %arg1, %c3_i32 : i32
    %36 = arith.extui %35 : i1 to i32
    %c0_i32_25 = arith.constant 0 : i32
    %37 = arith.cmpi ne, %36, %c0_i32_25 : i32
    scf.if %37 {
      %c0_26 = arith.constant 0 : index
      %c0_27 = arith.constant 0 : index
      %38 = vector.load %arg12[%c0_26, %c0_27] : memref<16x128xf32, #tpu.memory_space<vmem>>, vector<16x128xf32>
      %c0_28 = arith.constant 0 : index
      %c0_29 = arith.constant 0 : index
      %c0_30 = arith.constant 0 : index
      %39 = vector.load %arg10[%c0_28, %c0_29, %c0_30] : memref<1x16x128xf32, #tpu.memory_space<vmem>>, vector<1x16x128xf32>
      %40 = vector.shape_cast %39 : vector<1x16x128xf32> to vector<16x128xf32>
      %41 = vector.shape_cast %38 : vector<16x128xf32> to vector<1x16x128xf32>
      tpu.vector_store %arg10[%c0_28, %c0_29, %c0_30], %41 {strides = array<i32>} : memref<1x16x128xf32, #tpu.memory_space<vmem>>, vector<1x16x128xf32>,
    } else {
    }
    return
  }
  func.func @transform_0(%arg0: i32, %arg1: i32) -> (i32, i32, i32) {
    %c0_i32 = arith.constant 0 : i32
    %c0_i32_0 = arith.constant 0 : i32
    %c0_i32_1 = arith.constant 0 : i32
    return %arg0, %c0_i32, %c0_i32_0 : i32, i32, i32
  }
  func.func @transform_1(%arg0: i32, %arg1: i32) -> (i32, i32) {
    %c0_i32 = arith.constant 0 : i32
    %c0_i32_0 = arith.constant 0 : i32
    %c0_i32_1 = arith.constant 0 : i32
    return %c0_i32, %c0_i32_0 : i32, i32
  }
  func.func @transform_2(%arg0: i32, %arg1: i32) -> (i32, i32) {
    %c0_i32 = arith.constant 0 : i32
    %c0_i32_0 = arith.constant 0 : i32
    %c0_i32_1 = arith.constant 0 : i32
    return %c0_i32, %c0_i32_0 : i32, i32
  }
  func.func @transform_3(%arg0: i32, %arg1: i32) -> (i32, i32, i32) {
    %c0_i32 = arith.constant 0 : i32
    %c0_i32_0 = arith.constant 0 : i32
    %c0_i32_1 = arith.constant 0 : i32
    return %arg1, %c0_i32, %c0_i32_0 : i32, i32, i32
  }
  func.func @transform_4(%arg0: i32, %arg1: i32) -> (i32, i32, i32) {
    %c0_i32 = arith.constant 0 : i32
    %c0_i32_0 = arith.constant 0 : i32
    %c0_i32_1 = arith.constant 0 : i32
    return %arg1, %c0_i32, %c0_i32_0 : i32, i32, i32
  }
  func.func @transform_5(%arg0: i32, %arg1: i32) -> (i32, i32, i32) {
    %c0_i32 = arith.constant 0 : i32
    %c0_i32_0 = arith.constant 0 : i32
    %c0_i32_1 = arith.constant 0 : i32
    return %arg1, %c0_i32, %c0_i32_0 : i32, i32, i32
  }
  func.func @transform_6(%arg0: i32, %arg1: i32) -> (i32, i32, i32) {
    %c0_i32 = arith.constant 0 : i32
    %c0_i32_0 = arith.constant 0 : i32
    %c0_i32_1 = arith.constant 0 : i32
    return %arg1, %c0_i32, %c0_i32_0 : i32, i32, i32
  }
  func.func @transform_7(%arg0: i32, %arg1: i32) -> (i32, i32) {
    %c0_i32 = arith.constant 0 : i32
    %c0_i32_0 = arith.constant 0 : i32
    %c0_i32_1 = arith.constant 0 : i32
    return %c0_i32, %c0_i32_0 : i32, i32
  }
  func.func @transform_8(%arg0: i32, %arg1: i32) -> (i32, i32, i32) {
    %c0_i32 = arith.constant 0 : i32
    %c0_i32_0 = arith.constant 0 : i32
    %c0_i32_1 = arith.constant 0 : i32
    return %arg0, %c0_i32, %c0_i32_0 : i32, i32, i32
  }
}

module attributes {stable_mosaic.version = 11 : i64} {
  func.func @_attn_block_kernel(%arg0: i32, %arg1: i32, %arg2: memref<1x16x128xf32, #tpu.memory_space<vmem>>, %arg3: memref<1x128xf32, #tpu.memory_space<vmem>>, %arg4: memref<1x128xf32, #tpu.memory_space<vmem>>, %arg5: memref<1x128x32xbf16, #tpu.memory_space<vmem>>, %arg6: memref<1x128x32xbf16, #tpu.memory_space<vmem>>, %arg7: memref<1x128x32xbf16, #tpu.memory_space<vmem>>, %arg8: memref<1x32x128xbf16, #tpu.memory_space<vmem>>, %arg9: memref<1x128xf32, #tpu.memory_space<vmem>>, %arg10: memref<1x16x128xf32, #tpu.memory_space<vmem>>, %arg11: memref<16x128xbf16, #tpu.memory_space<vmem>>, %arg12: memref<16x128xf32, #tpu.memory_space<vmem>>) attributes {dimension_semantics = [#tpu.dimension_semantics<parallel>, #tpu.dimension_semantics<arbitrary>], iteration_bounds = array<i64: 2, 4>, scalar_prefetch = 0 : i64, scratch_operands = 2 : i64, tpu.core_type = #tpu.core_type<tc>, window_params = [{transform_indices = @transform_0, window_bounds = array<i64: 1, 16, 128>}, {pipeline_mode = #tpu.pipeline_mode<synchronous>, transform_indices = @transform_1, window_bounds = array<i64: 1, 128>}, {pipeline_mode = #tpu.pipeline_mode<synchronous>, transform_indices = @transform_2, window_bounds = array<i64: 1, 128>}, {transform_indices = @transform_3, window_bounds = array<i64: 1, 128, 32>}, {transform_indices = @transform_4, window_bounds = array<i64: 1, 128, 32>}, {transform_indices = @transform_5, window_bounds = array<i64: 1, 128, 32>}, {transform_indices = @transform_6, window_bounds = array<i64: 1, 32, 128>}, {pipeline_mode = #tpu.pipeline_mode<synchronous>, transform_indices = @transform_7, window_bounds = array<i64: 1, 128>}, {transform_indices = @transform_8, window_bounds = array<i64: 1, 16, 128>}]} {
    %c0_i32 = arith.constant 0 : i32
    %0 = arith.cmpi eq, %arg1, %c0_i32 : i32
    %1 = arith.extui %0 : i1 to i32
    %c0_i32_0 = arith.constant 0 : i32
    %2 = arith.cmpi ne, %1, %c0_i32_0 : i32
    scf.if %2 {
      %c0_26 = arith.constant 0 : index
      %c0_27 = arith.constant 0 : index
      %c0_28 = arith.constant 0 : index
      %38 = vector.load %arg2[%c0_26, %c0_27, %c0_28] : memref<1x16x128xf32, #tpu.memory_space<vmem>>, vector<1x16x128xf32>
      %39 = vector.shape_cast %38 : vector<1x16x128xf32> to vector<16x128xf32>
      %cst_29 = arith.constant dense<0.000000e+00> : vector<16xf32>
      %40 = vector.multi_reduction <add>, %39, %cst_29 [1] : vector<16x128xf32> to vector<16xf32>
      %41 = vector.shape_cast %40 : vector<16xf32> to vector<16x1xf32>
      %cst_30 = arith.constant 1.280000e+02 : f32
      %42 = vector.broadcast %cst_30 : f32 to vector<16x1xf32>
      %43 = arith.divf %41, %42 : vector<16x1xf32>
      %44 = vector.broadcast %43 : vector<16x1xf32> to vector<16x128xf32>
      %45 = arith.subf %39, %44 : vector<16x128xf32>
      %46 = arith.mulf %45, %45 : vector<16x128xf32>
      %cst_31 = arith.constant dense<0.000000e+00> : vector<16xf32>
      %47 = vector.multi_reduction <add>, %46, %cst_31 [1] : vector<16x128xf32> to vector<16xf32>
      %48 = vector.shape_cast %47 : vector<16xf32> to vector<16x1xf32>
      %cst_32 = arith.constant 1.280000e+02 : f32
      %49 = vector.broadcast %cst_32 : f32 to vector<16x1xf32>
      %50 = arith.divf %48, %49 : vector<16x1xf32>
      %51 = vector.broadcast %43 : vector<16x1xf32> to vector<16x128xf32>
      %52 = arith.subf %39, %51 : vector<16x128xf32>
      %cst_33 = arith.constant 9.99999974E-6 : f32
      %53 = vector.broadcast %cst_33 : f32 to vector<16x1xf32>
      %54 = arith.addf %50, %53 : vector<16x1xf32>
      %55 = math.rsqrt %54 : vector<16x1xf32>
      %56 = vector.broadcast %55 : vector<16x1xf32> to vector<16x128xf32>
      %57 = arith.mulf %52, %56 : vector<16x128xf32>
      %c0_34 = arith.constant 0 : index
      %c0_35 = arith.constant 0 : index
      %58 = vector.load %arg3[%c0_34, %c0_35] : memref<1x128xf32, #tpu.memory_space<vmem>>, vector<1x128xf32>
      %59 = vector.broadcast %58 : vector<1x128xf32> to vector<16x128xf32>
      %60 = arith.mulf %57, %59 : vector<16x128xf32>
      %c0_36 = arith.constant 0 : index
      %c0_37 = arith.constant 0 : index
      %61 = vector.load %arg4[%c0_36, %c0_37] : memref<1x128xf32, #tpu.memory_space<vmem>>, vector<1x128xf32>
      %62 = vector.broadcast %61 : vector<1x128xf32> to vector<16x128xf32>
      %63 = arith.addf %60, %62 : vector<16x128xf32>
      %64 = arith.truncf %63 : vector<16x128xf32> to vector<16x128xbf16>
      %c0_38 = arith.constant 0 : index
      %c0_39 = arith.constant 0 : index
      %65 = vector.load %arg11[%c0_38, %c0_39] : memref<16x128xbf16, #tpu.memory_space<vmem>>, vector<16x128xbf16>
      tpu.vector_store %arg11[%c0_38, %c0_39], %64 {strides = array<i32>} : memref<16x128xbf16, #tpu.memory_space<vmem>>, vector<16x128xbf16>,
      %c0_40 = arith.constant 0 : index
      %c0_41 = arith.constant 0 : index
      %66 = vector.load %arg9[%c0_40, %c0_41] : memref<1x128xf32, #tpu.memory_space<vmem>>, vector<1x128xf32>
      %67 = vector.broadcast %66 : vector<1x128xf32> to vector<16x128xf32>
      %68 = arith.addf %39, %67 : vector<16x128xf32>
      %c0_42 = arith.constant 0 : index
      %c0_43 = arith.constant 0 : index
      %69 = vector.load %arg12[%c0_42, %c0_43] : memref<16x128xf32, #tpu.memory_space<vmem>>, vector<16x128xf32>
      tpu.vector_store %arg12[%c0_42, %c0_43], %68 {strides = array<i32>} : memref<16x128xf32, #tpu.memory_space<vmem>>, vector<16x128xf32>,
    } else {
    }
    %c0 = arith.constant 0 : index
    %c0_1 = arith.constant 0 : index
    %3 = vector.load %arg11[%c0, %c0_1] : memref<16x128xbf16, #tpu.memory_space<vmem>>, vector<16x128xbf16>
    %c0_2 = arith.constant 0 : index
    %c0_3 = arith.constant 0 : index
    %c0_4 = arith.constant 0 : index
    %4 = vector.load %arg5[%c0_2, %c0_3, %c0_4] : memref<1x128x32xbf16, #tpu.memory_space<vmem>>, vector<1x128x32xbf16>
    %5 = vector.shape_cast %4 : vector<1x128x32xbf16> to vector<128x32xbf16>
    %cst = arith.constant dense<0.000000e+00> : vector<16x32xf32>
    %6 = tpu.matmul %3, %5, %cst {dimension_numbers = #tpu.dot_dimension_numbers<[1], [0], [0], [1], [0, 0, 1, 1], [], []>} : vector<16x128xbf16>, vector<128x32xbf16>, vector<16x32xf32> -> vector<16x32xf32>
    %c0_5 = arith.constant 0 : index
    %c0_6 = arith.constant 0 : index
    %c0_7 = arith.constant 0 : index
    %7 = vector.load %arg6[%c0_5, %c0_6, %c0_7] : memref<1x128x32xbf16, #tpu.memory_space<vmem>>, vector<1x128x32xbf16>
    %8 = vector.shape_cast %7 : vector<1x128x32xbf16> to vector<128x32xbf16>
    %cst_8 = arith.constant dense<0.000000e+00> : vector<16x32xf32>
    %9 = tpu.matmul %3, %8, %cst_8 {dimension_numbers = #tpu.dot_dimension_numbers<[1], [0], [0], [1], [0, 0, 1, 1], [], []>} : vector<16x128xbf16>, vector<128x32xbf16>, vector<16x32xf32> -> vector<16x32xf32>
    %c0_9 = arith.constant 0 : index
    %c0_10 = arith.constant 0 : index
    %c0_11 = arith.constant 0 : index
    %10 = vector.load %arg7[%c0_9, %c0_10, %c0_11] : memref<1x128x32xbf16, #tpu.memory_space<vmem>>, vector<1x128x32xbf16>
    %11 = vector.shape_cast %10 : vector<1x128x32xbf16> to vector<128x32xbf16>
    %cst_12 = arith.constant dense<0.000000e+00> : vector<16x32xf32>
    %12 = tpu.matmul %3, %11, %cst_12 {dimension_numbers = #tpu.dot_dimension_numbers<[1], [0], [0], [1], [0, 0, 1, 1], [], []>} : vector<16x128xbf16>, vector<128x32xbf16>, vector<16x32xf32> -> vector<16x32xf32>
    %13 = arith.truncf %6 : vector<16x32xf32> to vector<16x32xbf16>
    %14 = arith.truncf %9 : vector<16x32xf32> to vector<16x32xbf16>
    %cst_13 = arith.constant dense<0.000000e+00> : vector<16x16xf32>
    %15 = tpu.matmul %13, %14, %cst_13 {dimension_numbers = #tpu.dot_dimension_numbers<[1], [1], [0], [0], [0, 0, 1, 0], [], []>} : vector<16x32xbf16>, vector<16x32xbf16>, vector<16x16xf32> -> vector<16x16xf32>
    %cst_14 = arith.constant dense<0xFF800000> : vector<16xf32>
    %16 = vector.multi_reduction <maximumf>, %15, %cst_14 [1] : vector<16x16xf32> to vector<16xf32>
    %17 = vector.shape_cast %16 : vector<16xf32> to vector<16x1xf32>
    %18 = vector.broadcast %17 : vector<16x1xf32> to vector<16x16xf32>
    %19 = arith.subf %15, %18 : vector<16x16xf32>
    %20 = math.exp %19 : vector<16x16xf32>
    %cst_15 = arith.constant dense<0.000000e+00> : vector<16xf32>
    %21 = vector.multi_reduction <add>, %20, %cst_15 [1] : vector<16x16xf32> to vector<16xf32>
    %22 = vector.shape_cast %21 : vector<16xf32> to vector<16x1xf32>
    %23 = vector.broadcast %22 : vector<16x1xf32> to vector<16x16xf32>
    %24 = arith.divf %20, %23 : vector<16x16xf32>
    %25 = arith.truncf %24 : vector<16x16xf32> to vector<16x16xbf16>
    %26 = arith.truncf %12 : vector<16x32xf32> to vector<16x32xbf16>
    %cst_16 = arith.constant dense<0.000000e+00> : vector<16x32xf32>
    %27 = tpu.matmul %25, %26, %cst_16 {dimension_numbers = #tpu.dot_dimension_numbers<[1], [0], [0], [1], [0, 0, 1, 1], [], []>} : vector<16x16xbf16>, vector<16x32xbf16>, vector<16x32xf32> -> vector<16x32xf32>
    %c0_17 = arith.constant 0 : index
    %c0_18 = arith.constant 0 : index
    %28 = vector.load %arg12[%c0_17, %c0_18] : memref<16x128xf32, #tpu.memory_space<vmem>>, vector<16x128xf32>
    %29 = arith.truncf %27 : vector<16x32xf32> to vector<16x32xbf16>
    %c0_19 = arith.constant 0 : index
    %c0_20 = arith.constant 0 : index
    %c0_21 = arith.constant 0 : index
    %30 = vector.load %arg8[%c0_19, %c0_20, %c0_21] : memref<1x32x128xbf16, #tpu.memory_space<vmem>>, vector<1x32x128xbf16>
    %31 = vector.shape_cast %30 : vector<1x32x128xbf16> to vector<32x128xbf16>
    %cst_22 = arith.constant dense<0.000000e+00> : vector<16x128xf32>
    %32 = tpu.matmul %29, %31, %cst_22 {dimension_numbers = #tpu.dot_dimension_numbers<[1], [0], [0], [1], [0, 0, 1, 1], [], []>} : vector<16x32xbf16>, vector<32x128xbf16>, vector<16x128xf32> -> vector<16x128xf32>
    %33 = arith.addf %28, %32 : vector<16x128xf32>
    %c0_23 = arith.constant 0 : index
    %c0_24 = arith.constant 0 : index
    %34 = vector.load %arg12[%c0_23, %c0_24] : memref<16x128xf32, #tpu.memory_space<vmem>>, vector<16x128xf32>
    tpu.vector_store %arg12[%c0_23, %c0_24], %33 {strides = array<i32>} : memref<16x128xf32, #tpu.memory_space<vmem>>, vector<16x128xf32>,
    %c3_i32 = arith.constant 3 : i32
    %35 = arith.cmpi eq, %arg1, %c3_i32 : i32
    %36 = arith.extui %35 : i1 to i32
    %c0_i32_25 = arith.constant 0 : i32
    %37 = arith.cmpi ne, %36, %c0_i32_25 : i32
    scf.if %37 {
      %c0_26 = arith.constant 0 : index
      %c0_27 = arith.constant 0 : index
      %38 = vector.load %arg12[%c0_26, %c0_27] : memref<16x128xf32, #tpu.memory_space<vmem>>, vector<16x128xf32>
      %c0_28 = arith.constant 0 : index
      %c0_29 = arith.constant 0 : index
      %c0_30 = arith.constant 0 : index
      %39 = vector.load %arg10[%c0_28, %c0_29, %c0_30] : memref<1x16x128xf32, #tpu.memory_space<vmem>>, vector<1x16x128xf32>
      %40 = vector.shape_cast %39 : vector<1x16x128xf32> to vector<16x128xf32>
      %41 = vector.shape_cast %38 : vector<16x128xf32> to vector<1x16x128xf32>
      tpu.vector_store %arg10[%c0_28, %c0_29, %c0_30], %41 {strides = array<i32>} : memref<1x16x128xf32, #tpu.memory_space<vmem>>, vector<1x16x128xf32>,
    } else {
    }
    return
  }
  func.func @transform_0(%arg0: i32, %arg1: i32) -> (i32, i32, i32) {
    %c0_i32 = arith.constant 0 : i32
    %c0_i32_0 = arith.constant 0 : i32
    %c0_i32_1 = arith.constant 0 : i32
    return %arg0, %c0_i32, %c0_i32_0 : i32, i32, i32
  }
  func.func @transform_1(%arg0: i32, %arg1: i32) -> (i32, i32) {
    %c0_i32 = arith.constant 0 : i32
    %c0_i32_0 = arith.constant 0 : i32
    %c0_i32_1 = arith.constant 0 : i32
    return %c0_i32, %c0_i32_0 : i32, i32
  }
  func.func @transform_2(%arg0: i32, %arg1: i32) -> (i32, i32) {
    %c0_i32 = arith.constant 0 : i32
    %c0_i32_0 = arith.constant 0 : i32
    %c0_i32_1 = arith.constant 0 : i32
    return %c0_i32, %c0_i32_0 : i32, i32
  }
  func.func @transform_3(%arg0: i32, %arg1: i32) -> (i32, i32, i32) {
    %c0_i32 = arith.constant 0 : i32
    %c0_i32_0 = arith.constant 0 : i32
    %c0_i32_1 = arith.constant 0 : i32
    return %arg1, %c0_i32, %c0_i32_0 : i32, i32, i32
  }
  func.func @transform_4(%arg0: i32, %arg1: i32) -> (i32, i32, i32) {
    %c0_i32 = arith.constant 0 : i32
    %c0_i32_0 = arith.constant 0 : i32
    %c0_i32_1 = arith.constant 0 : i32
    return %arg1, %c0_i32, %c0_i32_0 : i32, i32, i32
  }
  func.func @transform_5(%arg0: i32, %arg1: i32) -> (i32, i32, i32) {
    %c0_i32 = arith.constant 0 : i32
    %c0_i32_0 = arith.constant 0 : i32
    %c0_i32_1 = arith.constant 0 : i32
    return %arg1, %c0_i32, %c0_i32_0 : i32, i32, i32
  }
  func.func @transform_6(%arg0: i32, %arg1: i32) -> (i32, i32, i32) {
    %c0_i32 = arith.constant 0 : i32
    %c0_i32_0 = arith.constant 0 : i32
    %c0_i32_1 = arith.constant 0 : i32
    return %arg1, %c0_i32, %c0_i32_0 : i32, i32, i32
  }
  func.func @transform_7(%arg0: i32, %arg1: i32) -> (i32, i32) {
    %c0_i32 = arith.constant 0 : i32
    %c0_i32_0 = arith.constant 0 : i32
    %c0_i32_1 = arith.constant 0 : i32
    return %c0_i32, %c0_i32_0 : i32, i32
  }
  func.func @transform_8(%arg0: i32, %arg1: i32) -> (i32, i32, i32) {
    %c0_i32 = arith.constant 0 : i32
    %c0_i32_0 = arith.constant 0 : i32
    %c0_i32_1 = arith.constant 0 : i32
    return %arg0, %c0_i32, %c0_i32_0 : i32, i32, i32
  }
}

module attributes {stable_mosaic.version = 11 : i64} {
  func.func @_mlp_block_kernel(%arg0: i32, %arg1: memref<32x128xf32, #tpu.memory_space<vmem>>, %arg2: memref<1x128xf32, #tpu.memory_space<vmem>>, %arg3: memref<1x128xf32, #tpu.memory_space<vmem>>, %arg4: memref<128x512xbf16, #tpu.memory_space<vmem>>, %arg5: memref<1x512xf32, #tpu.memory_space<vmem>>, %arg6: memref<512x128xbf16, #tpu.memory_space<vmem>>, %arg7: memref<1x128xf32, #tpu.memory_space<vmem>>, %arg8: memref<32x128xf32, #tpu.memory_space<vmem>>) attributes {dimension_semantics = [#tpu.dimension_semantics<parallel>], iteration_bounds = array<i64: 1>, scalar_prefetch = 0 : i64, scratch_operands = 0 : i64, tpu.core_type = #tpu.core_type<tc>, window_params = [{transform_indices = @transform_0, window_bounds = array<i64: 32, 128>}, {pipeline_mode = #tpu.pipeline_mode<synchronous>, transform_indices = @transform_1, window_bounds = array<i64: 1, 128>}, {pipeline_mode = #tpu.pipeline_mode<synchronous>, transform_indices = @transform_2, window_bounds = array<i64: 1, 128>}, {pipeline_mode = #tpu.pipeline_mode<synchronous>, transform_indices = @transform_3, window_bounds = array<i64: 128, 512>}, {pipeline_mode = #tpu.pipeline_mode<synchronous>, transform_indices = @transform_4, window_bounds = array<i64: 1, 512>}, {pipeline_mode = #tpu.pipeline_mode<synchronous>, transform_indices = @transform_5, window_bounds = array<i64: 512, 128>}, {pipeline_mode = #tpu.pipeline_mode<synchronous>, transform_indices = @transform_6, window_bounds = array<i64: 1, 128>}, {transform_indices = @transform_7, window_bounds = array<i64: 32, 128>}]} {
    %c0 = arith.constant 0 : index
    %c0_0 = arith.constant 0 : index
    %0 = vector.load %arg1[%c0, %c0_0] : memref<32x128xf32, #tpu.memory_space<vmem>>, vector<32x128xf32>
    %cst = arith.constant dense<0.000000e+00> : vector<32xf32>
    %1 = vector.multi_reduction <add>, %0, %cst [1] : vector<32x128xf32> to vector<32xf32>
    %2 = vector.shape_cast %1 : vector<32xf32> to vector<32x1xf32>
    %cst_1 = arith.constant 1.280000e+02 : f32
    %3 = vector.broadcast %cst_1 : f32 to vector<32x1xf32>
    %4 = arith.divf %2, %3 : vector<32x1xf32>
    %5 = vector.broadcast %4 : vector<32x1xf32> to vector<32x128xf32>
    %6 = arith.subf %0, %5 : vector<32x128xf32>
    %7 = arith.mulf %6, %6 : vector<32x128xf32>
    %cst_2 = arith.constant dense<0.000000e+00> : vector<32xf32>
    %8 = vector.multi_reduction <add>, %7, %cst_2 [1] : vector<32x128xf32> to vector<32xf32>
    %9 = vector.shape_cast %8 : vector<32xf32> to vector<32x1xf32>
    %cst_3 = arith.constant 1.280000e+02 : f32
    %10 = vector.broadcast %cst_3 : f32 to vector<32x1xf32>
    %11 = arith.divf %9, %10 : vector<32x1xf32>
    %12 = vector.broadcast %4 : vector<32x1xf32> to vector<32x128xf32>
    %13 = arith.subf %0, %12 : vector<32x128xf32>
    %cst_4 = arith.constant 9.99999974E-6 : f32
    %14 = vector.broadcast %cst_4 : f32 to vector<32x1xf32>
    %15 = arith.addf %11, %14 : vector<32x1xf32>
    %16 = math.rsqrt %15 : vector<32x1xf32>
    %17 = vector.broadcast %16 : vector<32x1xf32> to vector<32x128xf32>
    %18 = arith.mulf %13, %17 : vector<32x128xf32>
    %c0_5 = arith.constant 0 : index
    %c0_6 = arith.constant 0 : index
    %19 = vector.load %arg2[%c0_5, %c0_6] : memref<1x128xf32, #tpu.memory_space<vmem>>, vector<1x128xf32>
    %20 = vector.broadcast %19 : vector<1x128xf32> to vector<32x128xf32>
    %21 = arith.mulf %18, %20 : vector<32x128xf32>
    %c0_7 = arith.constant 0 : index
    %c0_8 = arith.constant 0 : index
    %22 = vector.load %arg3[%c0_7, %c0_8] : memref<1x128xf32, #tpu.memory_space<vmem>>, vector<1x128xf32>
    %23 = vector.broadcast %22 : vector<1x128xf32> to vector<32x128xf32>
    %24 = arith.addf %21, %23 : vector<32x128xf32>
    %25 = arith.truncf %24 : vector<32x128xf32> to vector<32x128xbf16>
    %c0_9 = arith.constant 0 : index
    %c0_10 = arith.constant 0 : index
    %26 = vector.load %arg4[%c0_9, %c0_10] : memref<128x512xbf16, #tpu.memory_space<vmem>>, vector<128x512xbf16>
    %cst_11 = arith.constant dense<0.000000e+00> : vector<32x512xf32>
    %27 = tpu.matmul %25, %26, %cst_11 {dimension_numbers = #tpu.dot_dimension_numbers<[1], [0], [0], [1], [0, 0, 1, 1], [], []>} : vector<32x128xbf16>, vector<128x512xbf16>, vector<32x512xf32> -> vector<32x512xf32>
    %c0_12 = arith.constant 0 : index
    %c0_13 = arith.constant 0 : index
    %28 = vector.load %arg5[%c0_12, %c0_13] : memref<1x512xf32, #tpu.memory_space<vmem>>, vector<1x512xf32>
    %29 = vector.broadcast %28 : vector<1x512xf32> to vector<32x512xf32>
    %30 = arith.addf %27, %29 : vector<32x512xf32>
    %cst_14 = arith.constant 5.000000e-01 : f32
    %31 = vector.broadcast %cst_14 : f32 to vector<32x512xf32>
    %32 = arith.mulf %31, %30 : vector<32x512xf32>
    %cst_15 = arith.constant 0.707106769 : f32
    %33 = vector.broadcast %cst_15 : f32 to vector<32x512xf32>
    %34 = arith.mulf %30, %33 : vector<32x512xf32>
    %35 = math.erf %34 : vector<32x512xf32>
    %cst_16 = arith.constant 1.000000e+00 : f32
    %36 = vector.broadcast %cst_16 : f32 to vector<32x512xf32>
    %37 = arith.addf %36, %35 : vector<32x512xf32>
    %38 = arith.mulf %32, %37 : vector<32x512xf32>
    %39 = arith.truncf %38 : vector<32x512xf32> to vector<32x512xbf16>
    %c0_17 = arith.constant 0 : index
    %c0_18 = arith.constant 0 : index
    %40 = vector.load %arg6[%c0_17, %c0_18] : memref<512x128xbf16, #tpu.memory_space<vmem>>, vector<512x128xbf16>
    %cst_19 = arith.constant dense<0.000000e+00> : vector<32x128xf32>
    %41 = tpu.matmul %39, %40, %cst_19 {dimension_numbers = #tpu.dot_dimension_numbers<[1], [0], [0], [1], [0, 0, 1, 1], [], []>} : vector<32x512xbf16>, vector<512x128xbf16>, vector<32x128xf32> -> vector<32x128xf32>
    %c0_20 = arith.constant 0 : index
    %c0_21 = arith.constant 0 : index
    %42 = vector.load %arg7[%c0_20, %c0_21] : memref<1x128xf32, #tpu.memory_space<vmem>>, vector<1x128xf32>
    %43 = vector.broadcast %42 : vector<1x128xf32> to vector<32x128xf32>
    %44 = arith.addf %41, %43 : vector<32x128xf32>
    %45 = arith.addf %0, %44 : vector<32x128xf32>
    %c0_22 = arith.constant 0 : index
    %c0_23 = arith.constant 0 : index
    %46 = vector.load %arg8[%c0_22, %c0_23] : memref<32x128xf32, #tpu.memory_space<vmem>>, vector<32x128xf32>
    tpu.vector_store %arg8[%c0_22, %c0_23], %45 {strides = array<i32>} : memref<32x128xf32, #tpu.memory_space<vmem>>, vector<32x128xf32>,
    return
  }
  func.func @transform_0(%arg0: i32) -> (i32, i32) {
    %c0_i32 = arith.constant 0 : i32
    %c0_i32_0 = arith.constant 0 : i32
    return %arg0, %c0_i32 : i32, i32
  }
  func.func @transform_1(%arg0: i32) -> (i32, i32) {
    %c0_i32 = arith.constant 0 : i32
    %c0_i32_0 = arith.constant 0 : i32
    %c0_i32_1 = arith.constant 0 : i32
    return %c0_i32, %c0_i32_0 : i32, i32
  }
  func.func @transform_2(%arg0: i32) -> (i32, i32) {
    %c0_i32 = arith.constant 0 : i32
    %c0_i32_0 = arith.constant 0 : i32
    %c0_i32_1 = arith.constant 0 : i32
    return %c0_i32, %c0_i32_0 : i32, i32
  }
  func.func @transform_3(%arg0: i32) -> (i32, i32) {
    %c0_i32 = arith.constant 0 : i32
    %c0_i32_0 = arith.constant 0 : i32
    %c0_i32_1 = arith.constant 0 : i32
    return %c0_i32, %c0_i32_0 : i32, i32
  }
  func.func @transform_4(%arg0: i32) -> (i32, i32) {
    %c0_i32 = arith.constant 0 : i32
    %c0_i32_0 = arith.constant 0 : i32
    %c0_i32_1 = arith.constant 0 : i32
    return %c0_i32, %c0_i32_0 : i32, i32
  }
  func.func @transform_5(%arg0: i32) -> (i32, i32) {
    %c0_i32 = arith.constant 0 : i32
    %c0_i32_0 = arith.constant 0 : i32
    %c0_i32_1 = arith.constant 0 : i32
    return %c0_i32, %c0_i32_0 : i32, i32
  }
  func.func @transform_6(%arg0: i32) -> (i32, i32) {
    %c0_i32 = arith.constant 0 : i32
    %c0_i32_0 = arith.constant 0 : i32
    %c0_i32_1 = arith.constant 0 : i32
    return %c0_i32, %c0_i32_0 : i32, i32
  }
  func.func @transform_7(%arg0: i32) -> (i32, i32) {
    %c0_i32 = arith.constant 0 : i32
    %c0_i32_0 = arith.constant 0 : i32
    return %arg0, %c0_i32 : i32, i32
  }
}

module attributes {stable_mosaic.version = 11 : i64} {
  func.func @_linear_kernel(%arg0: i32, %arg1: i32, %arg2: memref<32x128xf32, #tpu.memory_space<vmem>>, %arg3: memref<1x128xf32, #tpu.memory_space<vmem>>, %arg4: memref<1x128xf32, #tpu.memory_space<vmem>>, %arg5: memref<128x256xbf16, #tpu.memory_space<vmem>>, %arg6: memref<1x256xf32, #tpu.memory_space<vmem>>, %arg7: memref<32x256xf32, #tpu.memory_space<vmem>>) attributes {dimension_semantics = [#tpu.dimension_semantics<parallel>, #tpu.dimension_semantics<parallel>], iteration_bounds = array<i64: 1, 1>, scalar_prefetch = 0 : i64, scratch_operands = 0 : i64, tpu.core_type = #tpu.core_type<tc>, window_params = [{transform_indices = @transform_0, window_bounds = array<i64: 32, 128>}, {pipeline_mode = #tpu.pipeline_mode<synchronous>, transform_indices = @transform_1, window_bounds = array<i64: 1, 128>}, {pipeline_mode = #tpu.pipeline_mode<synchronous>, transform_indices = @transform_2, window_bounds = array<i64: 1, 128>}, {transform_indices = @transform_3, window_bounds = array<i64: 128, 256>}, {transform_indices = @transform_4, window_bounds = array<i64: 1, 256>}, {transform_indices = @transform_5, window_bounds = array<i64: 32, 256>}]} {
    %c0 = arith.constant 0 : index
    %c0_0 = arith.constant 0 : index
    %0 = vector.load %arg2[%c0, %c0_0] : memref<32x128xf32, #tpu.memory_space<vmem>>, vector<32x128xf32>
    %cst = arith.constant dense<0.000000e+00> : vector<32xf32>
    %1 = vector.multi_reduction <add>, %0, %cst [1] : vector<32x128xf32> to vector<32xf32>
    %2 = vector.shape_cast %1 : vector<32xf32> to vector<32x1xf32>
    %cst_1 = arith.constant 1.280000e+02 : f32
    %3 = vector.broadcast %cst_1 : f32 to vector<32x1xf32>
    %4 = arith.divf %2, %3 : vector<32x1xf32>
    %5 = vector.broadcast %4 : vector<32x1xf32> to vector<32x128xf32>
    %6 = arith.subf %0, %5 : vector<32x128xf32>
    %7 = arith.mulf %6, %6 : vector<32x128xf32>
    %cst_2 = arith.constant dense<0.000000e+00> : vector<32xf32>
    %8 = vector.multi_reduction <add>, %7, %cst_2 [1] : vector<32x128xf32> to vector<32xf32>
    %9 = vector.shape_cast %8 : vector<32xf32> to vector<32x1xf32>
    %cst_3 = arith.constant 1.280000e+02 : f32
    %10 = vector.broadcast %cst_3 : f32 to vector<32x1xf32>
    %11 = arith.divf %9, %10 : vector<32x1xf32>
    %12 = vector.broadcast %4 : vector<32x1xf32> to vector<32x128xf32>
    %13 = arith.subf %0, %12 : vector<32x128xf32>
    %cst_4 = arith.constant 9.99999974E-6 : f32
    %14 = vector.broadcast %cst_4 : f32 to vector<32x1xf32>
    %15 = arith.addf %11, %14 : vector<32x1xf32>
    %16 = math.rsqrt %15 : vector<32x1xf32>
    %17 = vector.broadcast %16 : vector<32x1xf32> to vector<32x128xf32>
    %18 = arith.mulf %13, %17 : vector<32x128xf32>
    %c0_5 = arith.constant 0 : index
    %c0_6 = arith.constant 0 : index
    %19 = vector.load %arg3[%c0_5, %c0_6] : memref<1x128xf32, #tpu.memory_space<vmem>>, vector<1x128xf32>
    %20 = vector.broadcast %19 : vector<1x128xf32> to vector<32x128xf32>
    %21 = arith.mulf %18, %20 : vector<32x128xf32>
    %c0_7 = arith.constant 0 : index
    %c0_8 = arith.constant 0 : index
    %22 = vector.load %arg4[%c0_7, %c0_8] : memref<1x128xf32, #tpu.memory_space<vmem>>, vector<1x128xf32>
    %23 = vector.broadcast %22 : vector<1x128xf32> to vector<32x128xf32>
    %24 = arith.addf %21, %23 : vector<32x128xf32>
    %25 = arith.truncf %24 : vector<32x128xf32> to vector<32x128xbf16>
    %c0_9 = arith.constant 0 : index
    %c0_10 = arith.constant 0 : index
    %26 = vector.load %arg5[%c0_9, %c0_10] : memref<128x256xbf16, #tpu.memory_space<vmem>>, vector<128x256xbf16>
    %cst_11 = arith.constant dense<0.000000e+00> : vector<32x256xf32>
    %27 = tpu.matmul %25, %26, %cst_11 {dimension_numbers = #tpu.dot_dimension_numbers<[1], [0], [0], [1], [0, 0, 1, 1], [], []>} : vector<32x128xbf16>, vector<128x256xbf16>, vector<32x256xf32> -> vector<32x256xf32>
    %c0_12 = arith.constant 0 : index
    %c0_13 = arith.constant 0 : index
    %28 = vector.load %arg6[%c0_12, %c0_13] : memref<1x256xf32, #tpu.memory_space<vmem>>, vector<1x256xf32>
    %29 = vector.broadcast %28 : vector<1x256xf32> to vector<32x256xf32>
    %30 = arith.addf %27, %29 : vector<32x256xf32>
    %c0_14 = arith.constant 0 : index
    %c0_15 = arith.constant 0 : index
    %31 = vector.load %arg7[%c0_14, %c0_15] : memref<32x256xf32, #tpu.memory_space<vmem>>, vector<32x256xf32>
    tpu.vector_store %arg7[%c0_14, %c0_15], %30 {strides = array<i32>} : memref<32x256xf32, #tpu.memory_space<vmem>>, vector<32x256xf32>,
    return
  }
  func.func @transform_0(%arg0: i32, %arg1: i32) -> (i32, i32) {
    %c0_i32 = arith.constant 0 : i32
    %c0_i32_0 = arith.constant 0 : i32
    return %arg0, %c0_i32 : i32, i32
  }
  func.func @transform_1(%arg0: i32, %arg1: i32) -> (i32, i32) {
    %c0_i32 = arith.constant 0 : i32
    %c0_i32_0 = arith.constant 0 : i32
    %c0_i32_1 = arith.constant 0 : i32
    return %c0_i32, %c0_i32_0 : i32, i32
  }
  func.func @transform_2(%arg0: i32, %arg1: i32) -> (i32, i32) {
    %c0_i32 = arith.constant 0 : i32
    %c0_i32_0 = arith.constant 0 : i32
    %c0_i32_1 = arith.constant 0 : i32
    return %c0_i32, %c0_i32_0 : i32, i32
  }
  func.func @transform_3(%arg0: i32, %arg1: i32) -> (i32, i32) {
    %c0_i32 = arith.constant 0 : i32
    %c0_i32_0 = arith.constant 0 : i32
    return %c0_i32, %arg1 : i32, i32
  }
  func.func @transform_4(%arg0: i32, %arg1: i32) -> (i32, i32) {
    %c0_i32 = arith.constant 0 : i32
    %c0_i32_0 = arith.constant 0 : i32
    return %c0_i32, %arg1 : i32, i32
  }
  func.func @transform_5(%arg0: i32, %arg1: i32) -> (i32, i32) {
    %c0_i32 = arith.constant 0 : i32
    return %arg0, %arg1 : i32, i32
  }
}

</mosaic_0001>

<llo_original>
// kernel: pretrain_vit_forward.11
$region0: #{pretrain_vit_forward.11}
  #allocation0 [shape = 'u32[]', space=smem, size = 0x4, offset = 0x4, fixed_abs, tag = 'smem constant byte address 0x4 - core index']
  #allocation1 [shape = 'u32[144,128]{1,0:T(1,128)}', space=vmem, size = 0x12000, scoped, tag = 'internal scratch']
  %s0 = inlined_call_operand.vmem [shape: f32[2,16,256], index: 0, kind: input, shape index: {}]
  %s1 = inlined_call_operand.vmem [shape: bf16[256,128], index: 1, kind: input, shape index: {}]
  %s2 = inlined_call_operand.vmem [shape: f32[1,128], index: 2, kind: input, shape index: {}]
  %s3 = inlined_call_operand.vmem [shape: f32[1,16,128], index: 3, kind: input, shape index: {}]
  %s4 = inlined_call_operand.vmem [shape: f32[2,16,128], index: 4, kind: output, shape index: {}]
  %s5 = sld [smem:[#allocation0]]
  $region49: #{pretrain_vit_forward.11} parent=0
    _
  %s7 = ssub.s32 1, %s5
  %s8 = scalar_select 0, %s7, %s5
  loop: start=0, step=1, limit=4
  $region2: #{pretrain_vit_forward.11} parent=0 // loop_pre_header
    _
  $region3: #{pretrain_vit_forward.11} parent=0 // loop_header
    %s10 = sphi 0, %s14
    %p11 = scmp.ge.s32.totalorder %s10, 4
    %s17 = sphi 0, %s29
    %s18 = sphi 0, %s25
    %s19 = sphi 0, %s17
    %s20 = sphi 0, %s18
    %s21 = sphi 0, %s19
    %s22 = sphi 0, %s20
    %s34 = sphi 0, %s36
    %s37 = sphi 0, %s34
    %s38 = sphi 0, %s37
    %s54 = sphi 0, %s38
    %s58 = sphi 0, %s58
    %s60 = sphi 0, %s58
    %s61 = sphi 0, %s60
    %s75 = sphi 0, %s61
    %s79 = sphi 0, %s79
    %s81 = sphi 0, %s79
    %s82 = sphi 0, %s81
    %s96 = sphi 0, %s82
    %s102 = sphi 0, %s104
    %s105 = sphi 0, %s102
    %s106 = sphi 0, %s105
    %s122 = sphi 0, %s106
    %s130 = sphi 0, %s132
    %s133 = sphi 0, %s130
    %s134 = sphi 0, %s133
    %s150 = sphi 0, %s134
  $region4: #{pretrain_vit_forward.11} parent=0 // loop_header_branch
    %13 = sbr.rel (%p11) target = $region8
  $region5: #{pretrain_vit_forward.11} parent=0 // loop_body
    %s15 = ssub.s32 %s10, 1
    %s16 = ssub.s32 %s10, 2
    %s23 = sadd.s32 1, %s18
    %p24 = scmp.ge.s32.totalorder %s23, 1
    %s25 = scalar_select %p24, 0, %s23
    %s26 = sadd.s32 1, %s17
    %s27 = scalar_select %p24, %s26, %s17
    %p28 = scmp.ge.s32.totalorder %s27, 2
    %s29 = scalar_select %p28, 0, %s27
    %s30 = ssub.s32 %s17, %s29
    %s31 = ssub.s32 %s18, %s25
    %s32 = sor.u32 %s30, %s31
    %p33 = scmp.eq.s32.totalorder %s32, 0
    %s35 = sadd.s32 %s34, 1
    %s36 = scalar_select %p33, %s34, %s35
    %p39 = pneg %p33
    %p40 = scmp.eq.s32.totalorder %s10, 1
    %p41 = por %p39, %p40
    %p42 = scmp.ne.s32.totalorder %s34, %s37
    %p43 = scmp.eq.s32.totalorder %s10, 0
    %p44 = por %p42, %p43
    %p45 = scmp.ne.s32.totalorder %s34, %s37
    %p46 = scmp.eq.s32.totalorder %s15, 1
    %p47 = por %p45, %p46
    %p48 = scmp.ne.s32.totalorder %s37, %s38
    %p49 = scmp.eq.s32.totalorder %s15, 0
    %p50 = por %p48, %p49
    %p51 = scmp.ne.s32.totalorder %s37, %s38
    %p52 = scmp.eq.s32.totalorder %s16, 1
    %p53 = por %p51, %p52
    %p55 = scmp.ne.s32.totalorder %s38, %s54
    %p56 = scmp.eq.s32.totalorder %s16, 0
    %p57 = por %p55, %p56
    %s59 = sadd.s32 %s58, 1
    %p62 = scmp.eq.s32.totalorder %s10, 1
    %p63 = scmp.ne.s32.totalorder %s58, %s60
    %p64 = scmp.eq.s32.totalorder %s10, 0
    %p65 = por %p63, %p64
    %p66 = scmp.ne.s32.totalorder %s58, %s60
    %p67 = scmp.eq.s32.totalorder %s15, 1
    %p68 = por %p66, %p67
    %p69 = scmp.ne.s32.totalorder %s60, %s61
    %p70 = scmp.eq.s32.totalorder %s15, 0
    %p71 = por %p69, %p70
    %p72 = scmp.ne.s32.totalorder %s60, %s61
    %p73 = scmp.eq.s32.totalorder %s16, 1
    %p74 = por %p72, %p73
    %p76 = scmp.ne.s32.totalorder %s61, %s75
    %p77 = scmp.eq.s32.totalorder %s16, 0
    %p78 = por %p76, %p77
    %s80 = sadd.s32 %s79, 1
    %p83 = scmp.eq.s32.totalorder %s10, 1
    %p84 = scmp.ne.s32.totalorder %s79, %s81
    %p85 = scmp.eq.s32.totalorder %s10, 0
    %p86 = por %p84, %p85
    %p87 = scmp.ne.s32.totalorder %s79, %s81
    %p88 = scmp.eq.s32.totalorder %s15, 1
    %p89 = por %p87, %p88
    %p90 = scmp.ne.s32.totalorder %s81, %s82
    %p91 = scmp.eq.s32.totalorder %s15, 0
    %p92 = por %p90, %p91
    %p93 = scmp.ne.s32.totalorder %s81, %s82
    %p94 = scmp.eq.s32.totalorder %s16, 1
    %p95 = por %p93, %p94
    %p97 = scmp.ne.s32.totalorder %s82, %s96
    %p98 = scmp.eq.s32.totalorder %s16, 0
    %p99 = por %p97, %p98
    %s100 = ssub.s32 %s18, %s25
    %p101 = scmp.eq.s32.totalorder %s100, 0
    %s103 = sadd.s32 %s102, 1
    %s104 = scalar_select %p101, %s102, %s103
    %p107 = pneg %p101
    %p108 = scmp.eq.s32.totalorder %s10, 1
    %p109 = por %p107, %p108
    %p110 = scmp.ne.s32.totalorder %s102, %s105
    %p111 = scmp.eq.s32.totalorder %s10, 0
    %p112 = por %p110, %p111
    %p113 = scmp.ne.s32.totalorder %s102, %s105
    %p114 = scmp.eq.s32.totalorder %s15, 1
    %p115 = por %p113, %p114
    %p116 = scmp.ne.s32.totalorder %s105, %s106
    %p117 = scmp.eq.s32.totalorder %s15, 0
    %p118 = por %p116, %p117
    %p119 = scmp.ne.s32.totalorder %s105, %s106
    %p120 = scmp.eq.s32.totalorder %s16, 1
    %p121 = por %p119, %p120
    %p123 = scmp.ne.s32.totalorder %s106, %s122
    %p124 = scmp.eq.s32.totalorder %s16, 0
    %p125 = por %p123, %p124
    %s126 = ssub.s32 %s17, %s29
    %s127 = ssub.s32 %s18, %s25
    %s128 = sor.u32 %s126, %s127
    %p129 = scmp.eq.s32.totalorder %s128, 0
    %s131 = sadd.s32 %s130, 1
    %s132 = scalar_select %p129, %s130, %s131
    %p135 = pneg %p129
    %p136 = scmp.eq.s32.totalorder %s10, 1
    %p137 = por %p135, %p136
    %p138 = scmp.ne.s32.totalorder %s130, %s133
    %p139 = scmp.eq.s32.totalorder %s10, 0
    %p140 = por %p138, %p139
    %p141 = scmp.ne.s32.totalorder %s130, %s133
    %p142 = scmp.eq.s32.totalorder %s15, 1
    %p143 = por %p141, %p142
    %p144 = scmp.ne.s32.totalorder %s133, %s134
    %p145 = scmp.eq.s32.totalorder %s15, 0
    %p146 = por %p144, %p145
    %p147 = scmp.ne.s32.totalorder %s133, %s134
    %p148 = scmp.eq.s32.totalorder %s16, 1
    %p149 = por %p147, %p148
    %p151 = scmp.ne.s32.totalorder %s134, %s150
    %p152 = scmp.eq.s32.totalorder %s16, 0
    %p153 = por %p151, %p152
    %p154 = scmp.le.s32.totalorder 1, %s10
    %p155 = scmp.lt.s32.totalorder %s10, 3
    %p156 = pnand %p154, %p155
    %p157 = pneg %p156
    // Predicated region
    $region9: #{pretrain_vit_forward.11} parent=5 // pred_check
      _
    $region10: #{pretrain_vit_forward.11} parent=5 // pred_check_branch
      %159 = sbr.rel (%p156) target = $region12
    $region11: #{pretrain_vit_forward.11} parent=5 // pred_region
      %s160 = ssub.s32 %s10, 1
      // Predicated region
      $region13: #{pretrain_vit_forward.11} parent=11 // pred_check
        %p161 = pneg %p71
      $region14: #{pretrain_vit_forward.11} parent=11 // pred_check_branch
        %163 = sbr.rel (%p161) target = $region16
      $region15: #{pretrain_vit_forward.11} parent=11 // pred_region
        _
      $region16: #{pretrain_vit_forward.11} parent=11 // pred_fallthru
        _
      // Predicated region
      $region17: #{pretrain_vit_forward.11} parent=11 // pred_check
        %p164 = pneg %p92
      $region18: #{pretrain_vit_forward.11} parent=11 // pred_check_branch
        %166 = sbr.rel (%p164) target = $region20
      $region19: #{pretrain_vit_forward.11} parent=11 // pred_region
        _
      $region20: #{pretrain_vit_forward.11} parent=11 // pred_fallthru
        _
      // Predicated region
      $region21: #{pretrain_vit_forward.11} parent=11 // pred_check
        %p167 = pneg %p118
      $region22: #{pretrain_vit_forward.11} parent=11 // pred_check_branch
        %169 = sbr.rel (%p167) target = $region24
      $region23: #{pretrain_vit_forward.11} parent=11 // pred_region
        %s170 = smul.u32 2, %s20
        %p171 = scmp.lt.s32.totalorder %s170, 1
        %s172 = scalar_select %p171, %s170, 1
        %s173 = smul.addr %s172, 8
        %s174 = scalar_lea.vmem %s3, %s173
        %s175 = smul.u32 2, %s20
      $region24: #{pretrain_vit_forward.11} parent=11 // pred_fallthru
        _
    $region12: #{pretrain_vit_forward.11} parent=5 // pred_fallthru
      _
    %p176 = scmp.lt.s32.totalorder %s10, 2
    // Predicated region
    $region25: #{pretrain_vit_forward.11} parent=5 // pred_check
      %p177 = pneg %p176
    $region26: #{pretrain_vit_forward.11} parent=5 // pred_check_branch
      %179 = sbr.rel (%p177) target = $region28
    $region27: #{pretrain_vit_forward.11} parent=5 // pred_region
      // Predicated region
      $region29: #{pretrain_vit_forward.11} parent=27 // pred_check
        %p180 = pneg %p44
      $region30: #{pretrain_vit_forward.11} parent=27 // pred_check_branch
        %182 = sbr.rel (%p180) target = $region32
      $region31: #{pretrain_vit_forward.11} parent=27 // pred_region
        %s183 = smul.u32 2, %s18
        %p184 = scmp.lt.s32.totalorder %s17, 1
        %s185 = scalar_select %p184, %s17, 1
        %p186 = scmp.lt.s32.totalorder %s183, 1
        %s187 = scalar_select %p186, %s183, 1
        %s188 = smul.addr %s187, 2
        %s189 = smul.addr %s185, 4
        %s190 = sadd.s32 %s188, %s189
        %s191 = smul.addr %s190, 8
        %s192 = scalar_lea.vmem %s0, %s191
        %s193 = smul.u32 2, %s18
      $region32: #{pretrain_vit_forward.11} parent=27 // pred_fallthru
        _
    $region28: #{pretrain_vit_forward.11} parent=5 // pred_fallthru
      _
    %p194 = scmp.le.s32.totalorder 1, %s10
    %p195 = scmp.lt.s32.totalorder %s10, 3
    %p196 = pnand %p194, %p195
    %p197 = pneg %p196
    // Predicated region
    $region33: #{pretrain_vit_forward.11} parent=5 // pred_check
      _
    $region34: #{pretrain_vit_forward.11} parent=5 // pred_check_branch
      %199 = sbr.rel (%p196) target = $region36
    $region35: #{pretrain_vit_forward.11} parent=5 // pred_region
      %s200 = ssub.s32 %s10, 1
      %s201 = smul.u32 2, %s20
      %p202 = scmp.lt.s32.totalorder %s19, 1
      %s203 = scalar_select %p202, %s19, 1
      %p204 = scmp.lt.s32.totalorder %s201, 1
      %s205 = scalar_select %p204, %s201, 1
      %s206 = smul.addr %s205, 2
      %s207 = smul.addr %s203, 4
      %s208 = sadd.s32 %s206, %s207
      %s209 = smul.addr %s208, 8
      %s210 = scalar_lea.vmem %s0, %s209
      %p211 = pneg %p50
      %p212 = pneg %p47
      %p213 = pneg %p71
      %p214 = pneg %p68
      %p215 = pneg %p92
      %p216 = pneg %p89
      %s217 = smul.u32 2, %s20
      %p218 = scmp.lt.s32.totalorder %s217, 1
      %s219 = scalar_select %p218, %s217, 1
      %s220 = smul.addr %s219, 8
      %s221 = scalar_lea.vmem %s3, %s220
      %p222 = pneg %p118
      %p223 = pneg %p115
      %p224 = pneg %p146
      %p225 = pneg %p143
      %s226 = smul.u32 2, %s20
      %p227 = scmp.lt.s32.totalorder %s19, 1
      %s228 = scalar_select %p227, %s19, 1
      %p229 = scmp.lt.s32.totalorder %s226, 1
      %s230 = scalar_select %p229, %s226, 1
      %s231 = smul.addr %s228, 2
      %s232 = sadd.s32 %s230, %s231
      %s233 = smul.addr %s232, 8
      %s234 = scalar_lea.vmem %s4, %s233
      %s235 = smul.u32 2, %s20
      %p236 = scmp.lt.s32.totalorder %s19, 1
      %s237 = scalar_select %p236, %s19, 1
      %p238 = scmp.lt.s32.totalorder %s235, 1
      %s239 = scalar_select %p238, %s235, 1
      %s240 = smul.addr %s239, 2
      %s241 = smul.addr %s237, 4
      %s242 = sadd.s32 %s240, %s241
      %s243 = smul.addr %s242, 8
      %s244 = scalar_lea.vmem %s0, %s243
      %s245 = smul.u32 2, %s20
      %s246 = smul.u32 2, %s20
      %p247 = scmp.lt.s32.totalorder %s246, 1
      %s248 = scalar_select %p247, %s246, 1
      %s249 = smul.addr %s248, 8
      %s250 = scalar_lea.vmem %s3, %s249
      %s251 = smul.u32 2, %s20
      %s252 = smul.u32 2, %s20
      %p253 = scmp.lt.s32.totalorder %s19, 1
      %s254 = scalar_select %p253, %s19, 1
      %p255 = scmp.lt.s32.totalorder %s252, 1
      %s256 = scalar_select %p255, %s252, 1
      %s257 = smul.addr %s254, 2
      %s258 = sadd.s32 %s256, %s257
      %s259 = smul.addr %s258, 8
      %s260 = scalar_lea.vmem %s4, %s259
      %s261 = smul.u32 2, %s20
      %v263 = vld [vmem:[%s244] sm:$0xff]
      %v264 = vld [vmem:[%s244 + $0x8] sm:$0xff]
      %v265 = vld [vmem:[%s244 + $0x10] sm:$0xff]
      %v266 = vld [vmem:[%s244 + $0x18] sm:$0xff]
      %v267 = vpack.c.bf16 %v265, %v263
      %v268 = vpack.c.bf16 %v266, %v264
      %v269 = vld [vmem:[%s1] sm:$0xf]
      %v270 = vld [vmem:[%s1 + $0x4] sm:$0xf]
      %v271 = vld [vmem:[%s1 + $0x8] sm:$0xf]
      %v272 = vld [vmem:[%s1 + $0xc] sm:$0xf]
      %v273 = vld [vmem:[%s1 + $0x10] sm:$0xf]
      %v274 = vld [vmem:[%s1 + $0x14] sm:$0xf]
      %v275 = vld [vmem:[%s1 + $0x18] sm:$0xf]
      %v276 = vld [vmem:[%s1 + $0x1c] sm:$0xf]
      %v277 = vld [vmem:[%s1 + $0x20] sm:$0xf]
      %v278 = vld [vmem:[%s1 + $0x24] sm:$0xf]
      %v279 = vld [vmem:[%s1 + $0x28] sm:$0xf]
      %v280 = vld [vmem:[%s1 + $0x2c] sm:$0xf]
      %v281 = vld [vmem:[%s1 + $0x30] sm:$0xf]
      %v282 = vld [vmem:[%s1 + $0x34] sm:$0xf]
      %v283 = vld [vmem:[%s1 + $0x38] sm:$0xf]
      %v284 = vld [vmem:[%s1 + $0x3c] sm:$0xf]
      %v285 = vld [vmem:[%s1 + $0x40] sm:$0xf]
      %v286 = vld [vmem:[%s1 + $0x44] sm:$0xf]
      %v287 = vld [vmem:[%s1 + $0x48] sm:$0xf]
      %v288 = vld [vmem:[%s1 + $0x4c] sm:$0xf]
      %v289 = vld [vmem:[%s1 + $0x50] sm:$0xf]
      %v290 = vld [vmem:[%s1 + $0x54] sm:$0xf]
      %v291 = vld [vmem:[%s1 + $0x58] sm:$0xf]
      %v292 = vld [vmem:[%s1 + $0x5c] sm:$0xf]
      %v293 = vld [vmem:[%s1 + $0x60] sm:$0xf]
      %v294 = vld [vmem:[%s1 + $0x64] sm:$0xf]
      %v295 = vld [vmem:[%s1 + $0x68] sm:$0xf]
      %v296 = vld [vmem:[%s1 + $0x6c] sm:$0xf]
      %v297 = vld [vmem:[%s1 + $0x70] sm:$0xf]
      %v298 = vld [vmem:[%s1 + $0x74] sm:$0xf]
      %v299 = vld [vmem:[%s1 + $0x78] sm:$0xf]
      %v300 = vld [vmem:[%s1 + $0x7c] sm:$0xf]
      %v301 = vld [vmem:[%s2] sm:$0x1]
      %v303 = vlaneseq
      %v304 = vshrl.u32 %v303, 7
      %v305 = vsub.s32 0, %v304
      %v306 = vrot.slane %v301, %v305
      %v340 = vunpack.c.l.b16 %v269
      %v341 = vunpack.c.l.b16 %v270
      %v342 = vunpack.c.l.b16 %v271
      %v343 = vunpack.c.l.b16 %v272
      %v344 = vunpack.c.l.b16 %v273
      %v345 = vunpack.c.l.b16 %v274
      %v346 = vunpack.c.l.b16 %v275
      %v347 = vunpack.c.l.b16 %v276
      %v348 = vunpack.c.l.b16 %v277
      %v349 = vunpack.c.l.b16 %v278
      %v350 = vunpack.c.l.b16 %v279
      %v351 = vunpack.c.l.b16 %v280
      %v352 = vunpack.c.l.b16 %v281
      %v353 = vunpack.c.l.b16 %v282
      %v354 = vunpack.c.l.b16 %v283
      %v355 = vunpack.c.l.b16 %v284
      %v356 = vunpack.c.l.b16 %v285
      %v357 = vunpack.c.l.b16 %v286
      %v358 = vunpack.c.l.b16 %v287
      %v359 = vunpack.c.l.b16 %v288
      %v360 = vunpack.c.l.b16 %v289
      %v361 = vunpack.c.l.b16 %v290
      %v362 = vunpack.c.l.b16 %v291
      %v363 = vunpack.c.l.b16 %v292
      %v364 = vunpack.c.l.b16 %v293
      %v365 = vunpack.c.l.b16 %v294
      %v366 = vunpack.c.l.b16 %v295
      %v367 = vunpack.c.l.b16 %v296
      %v368 = vunpack.c.l.b16 %v297
      %v369 = vunpack.c.l.b16 %v298
      %v370 = vunpack.c.l.b16 %v299
      %v371 = vunpack.c.l.b16 %v300
      %v372 = vpack.c.b16 %v341, %v340
      %v373 = vpack.c.b16 %v343, %v342
      %v374 = vpack.c.b16 %v345, %v344
      %v375 = vpack.c.b16 %v347, %v346
      %v376 = vpack.c.b16 %v349, %v348
      %v377 = vpack.c.b16 %v351, %v350
      %v378 = vpack.c.b16 %v353, %v352
      %v379 = vpack.c.b16 %v355, %v354
      %v380 = vpack.c.b16 %v357, %v356
      %v381 = vpack.c.b16 %v359, %v358
      %v382 = vpack.c.b16 %v361, %v360
      %v383 = vpack.c.b16 %v363, %v362
      %v384 = vpack.c.b16 %v365, %v364
      %v385 = vpack.c.b16 %v367, %v366
      %v386 = vpack.c.b16 %v369, %v368
      %v387 = vpack.c.b16 %v371, %v370
      %404 = vmatprep.subr.bf16.mxu0 0
      %405 = vmatpush1.bf16.msra.mxu0 %v379
      %406 = vmatprep.subr.bf16.mxu0 0
      %407 = vmatpush1.bf16.msra.mxu0 %v378
      %408 = vmatprep.subr.bf16.mxu0 0
      %409 = vmatpush1.bf16.msra.mxu0 %v377
      %410 = vmatprep.subr.bf16.mxu0 0
      %411 = vmatpush1.bf16.msra.mxu0 %v376
      %412 = vmatprep.subr.bf16.mxu0 0
      %413 = vmatpush1.bf16.msra.mxu0 %v375
      %414 = vmatprep.subr.bf16.mxu0 0
      %415 = vmatpush1.bf16.msra.mxu0 %v374
      %416 = vmatprep.subr.bf16.mxu0 0
      %417 = vmatpush1.bf16.msra.mxu0 %v373
      %418 = vmatprep.subr.bf16.mxu0 0
      %419 = vmatpush1.bf16.msra.mxu0 %v372
      %420 = vmatprep.subr.bf16.mxu0 0
      %421 = vmatpush2.bf16.msra.mxu0 %v387
      %422 = vmatprep.subr.bf16.mxu0 0
      %423 = vmatpush2.bf16.msra.mxu0 %v386
      %424 = vmatprep.subr.bf16.mxu0 0
      %425 = vmatpush2.bf16.msra.mxu0 %v385
      %426 = vmatprep.subr.bf16.mxu0 0
      %427 = vmatpush2.bf16.msra.mxu0 %v384
      %428 = vmatprep.subr.bf16.mxu0 0
      %429 = vmatpush2.bf16.msra.mxu0 %v383
      %430 = vmatprep.subr.bf16.mxu0 0
      %431 = vmatpush2.bf16.msra.mxu0 %v382
      %432 = vmatprep.subr.bf16.mxu0 0
      %433 = vmatpush2.bf16.msra.mxu0 %v381
      %434 = vmatprep.subr.bf16.mxu0 0
      %435 = vmatpush2.bf16.msra.mxu0 %v380
      %436 = vmatprep.mubr.bf16.mxu0 %v268
      %437 = vmatmul.mubr.bf16.gmra.mxu0 %v267
      %v438 = vpop.f32.mrf.mxu0
      %v439 = vadd.f32 %v306, %v438
      %v440 = vpop.f32.mrf.mxu0
      %v441 = vpop.f32.mrf.mxu0
      %v442 = vadd.f32 %v306, %v441
      %v443 = vpop.f32.mrf.mxu0
      %444 = vdwg.mxu0
      %v445 = vld [vmem:[%s250] sm:$0xff]
      %v446 = vld [vmem:[%s250 + $0x8] sm:$0xff]
      %v447 = vadd.f32 %v439, %v445
      %v448 = vadd.f32 %v442, %v446
      %449 = vst [vmem:[%s260] sm:$0xff] %v447
      %450 = vst [vmem:[%s260 + $0x8] sm:$0xff] %v448
      %s451 = smul.u32 2, %s20
      %p452 = scmp.lt.s32.totalorder %s19, 1
      %s453 = scalar_select %p452, %s19, 1
      %p454 = scmp.lt.s32.totalorder %s451, 1
      %s455 = scalar_select %p454, %s451, 1
      %s456 = smul.addr %s453, 2
      %s457 = sadd.s32 %s455, %s456
      %s458 = smul.addr %s457, 8
      %s459 = scalar_lea.vmem %s4, %s458
      // Predicated region
      $region37: #{pretrain_vit_forward.11} parent=35 // pred_check
        %p460 = pneg %p143
      $region38: #{pretrain_vit_forward.11} parent=35 // pred_check_branch
        %462 = sbr.rel (%p460) target = $region40
      $region39: #{pretrain_vit_forward.11} parent=35 // pred_region
        %s463 = smul.u32 2, %s20
      $region40: #{pretrain_vit_forward.11} parent=35 // pred_fallthru
        _
    $region36: #{pretrain_vit_forward.11} parent=5 // pred_fallthru
      _
    %p464 = scmp.le.s32.totalorder 2, %s10
    // Predicated region
    $region41: #{pretrain_vit_forward.11} parent=5 // pred_check
      %p465 = pneg %p464
    $region42: #{pretrain_vit_forward.11} parent=5 // pred_check_branch
      %467 = sbr.rel (%p465) target = $region44
    $region43: #{pretrain_vit_forward.11} parent=5 // pred_region
      %s468 = ssub.s32 %s10, 2
      // Predicated region
      $region45: #{pretrain_vit_forward.11} parent=43 // pred_check
        %p469 = pneg %p149
      $region46: #{pretrain_vit_forward.11} parent=43 // pred_check_branch
        %471 = sbr.rel (%p469) target = $region48
      $region47: #{pretrain_vit_forward.11} parent=43 // pred_region
        %s472 = smul.u32 2, %s22
        %p473 = scmp.lt.s32.totalorder %s21, 1
        %s474 = scalar_select %p473, %s21, 1
        %p475 = scmp.lt.s32.totalorder %s472, 1
        %s476 = scalar_select %p475, %s472, 1
        %s477 = smul.addr %s474, 2
        %s478 = sadd.s32 %s476, %s477
        %s479 = smul.addr %s478, 8
        %s480 = scalar_lea.vmem %s4, %s479
      $region48: #{pretrain_vit_forward.11} parent=43 // pred_fallthru
        _
    $region44: #{pretrain_vit_forward.11} parent=5 // pred_fallthru
      _
  $region6: #{pretrain_vit_forward.11} parent=0 // loop_footer
    %s14 = sadd.s32 1, %s10
  $region7: #{pretrain_vit_forward.11} parent=0 // loop_footer_branch
    %9 = sbr.rel target = $region3
  $region8: #{pretrain_vit_forward.11} parent=0 // loop_exit
    _

// kernel: pretrain_vit_forward.12
$region0: #{pretrain_vit_forward.12}
  #allocation0 [shape = 'u32[]', space=smem, size = 0x4, offset = 0x4, fixed_abs, tag = 'smem constant byte address 0x4 - core index']
  #allocation1 [shape = 'u32[144,128]{1,0:T(1,128)}', space=vmem, size = 0x12000, scoped, tag = 'internal scratch']
  #allocation2 [shape = 'bf16[16,128]{1,0:T(8,128)(2,1)}', space=vmem, size = 0x1000, scoped, tag = 'scratch operand']
  #allocation3 [shape = 'f32[16,128]{1,0:T(8,128)}', space=vmem, size = 0x2000, scoped, tag = 'scratch operand']
  %s0 = inlined_call_operand.vmem [shape: f32[2,16,128], index: 0, kind: input, shape index: {}]
  %s1 = inlined_call_operand.hbm [shape: f32[1,128], index: 1, kind: input, shape index: {}]
  %s2 = inlined_call_operand.hbm [shape: f32[1,128], index: 2, kind: input, shape index: {}]
  %s3 = inlined_call_operand.vmem [shape: bf16[4,128,32], index: 3, kind: input, shape index: {}]
  %s4 = inlined_call_operand.vmem [shape: bf16[4,128,32], index: 4, kind: input, shape index: {}]
  %s5 = inlined_call_operand.vmem [shape: bf16[4,128,32], index: 5, kind: input, shape index: {}]
  %s6 = inlined_call_operand.vmem [shape: bf16[4,32,128], index: 6, kind: input, shape index: {}]
  %s7 = inlined_call_operand.hbm [shape: f32[1,128], index: 7, kind: input, shape index: {}]
  %s8 = inlined_call_operand.vmem [shape: f32[2,16,128], index: 8, kind: output, shape index: {}]
  %s9 = sld [smem:[#allocation0]]
  $region85: #{pretrain_vit_forward.12} parent=0
    _
  %s11 = ssub.s32 1, %s9
  %s12 = scalar_select 0, %s11, %s9
  $region1: #{pretrain_vit_forward.12} parent=0
    #allocation4 [shape = 'u8[512]{0}', space=vmem, size = 0x400, scoped, tag = 'input window, operand 1, single buffered']
    #allocation5 [shape = 's32[2]{0}', space=sflag, size = 0x8, scoped, tag = 'scoped memory for pretrain_vit_forward.12']
    #allocation6 [shape = 'u8[512]{0}', space=vmem, size = 0x400, scoped, tag = 'input window, operand 2, single buffered']
    #allocation7 [shape = 's32[1]{0}', space=sflag, size = 0x4, scoped, tag = 'scoped memory for pretrain_vit_forward.12']
    #allocation8 [shape = 'u8[512]{0}', space=vmem, size = 0x400, scoped, tag = 'input window, operand 7, single buffered']
    %13 = vsyncpa [#allocation5], 0
    %14 = vsyncpa [#allocation7], 0
    loop: start=0, step=1, limit=10
    $region2: #{pretrain_vit_forward.12} parent=1 // loop_pre_header
      _
    $region3: #{pretrain_vit_forward.12} parent=1 // loop_header
      %s16 = sphi 0, %s20
      %p17 = scmp.ge.s32.totalorder %s16, 10
      %s23 = sphi 0, %s35
      %s24 = sphi 0, %s31
      %s25 = sphi 0, %s23
      %s26 = sphi 0, %s24
      %s27 = sphi 0, %s25
      %s28 = sphi 0, %s26
      %s38 = sphi 0, %s40
      %s41 = sphi 0, %s38
      %s42 = sphi 0, %s41
      %s58 = sphi 0, %s42
      %s62 = sphi 0, %s62
      %s64 = sphi 0, %s62
      %s65 = sphi 0, %s64
      %s79 = sphi 0, %s65
      %s83 = sphi 0, %s83
      %s85 = sphi 0, %s83
      %s86 = sphi 0, %s85
      %s100 = sphi 0, %s86
      %s106 = sphi 0, %s108
      %s109 = sphi 0, %s106
      %s110 = sphi 0, %s109
      %s126 = sphi 0, %s110
      %s132 = sphi 0, %s134
      %s135 = sphi 0, %s132
      %s136 = sphi 0, %s135
      %s152 = sphi 0, %s136
      %s158 = sphi 0, %s160
      %s161 = sphi 0, %s158
      %s162 = sphi 0, %s161
      %s178 = sphi 0, %s162
      %s184 = sphi 0, %s186
      %s187 = sphi 0, %s184
      %s188 = sphi 0, %s187
      %s204 = sphi 0, %s188
      %s208 = sphi 0, %s208
      %s210 = sphi 0, %s208
      %s211 = sphi 0, %s210
      %s225 = sphi 0, %s211
      %s231 = sphi 0, %s233
      %s234 = sphi 0, %s231
      %s235 = sphi 0, %s234
      %s251 = sphi 0, %s235
    $region4: #{pretrain_vit_forward.12} parent=1 // loop_header_branch
      %19 = sbr.rel (%p17) target = $region8
    $region5: #{pretrain_vit_forward.12} parent=1 // loop_body
      %s21 = ssub.s32 %s16, 1
      %s22 = ssub.s32 %s16, 2
      %s29 = sadd.s32 1, %s24
      %p30 = scmp.ge.s32.totalorder %s29, 4
      %s31 = scalar_select %p30, 0, %s29
      %s32 = sadd.s32 1, %s23
      %s33 = scalar_select %p30, %s32, %s23
      %p34 = scmp.ge.s32.totalorder %s33, 2
      %s35 = scalar_select %p34, 0, %s33
      %s36 = ssub.s32 %s23, %s35
      %p37 = scmp.eq.s32.totalorder %s36, 0
      %s39 = sadd.s32 %s38, 1
      %s40 = scalar_select %p37, %s38, %s39
      %p43 = pneg %p37
      %p44 = scmp.eq.s32.totalorder %s16, 7
      %p45 = por %p43, %p44
      %p46 = scmp.ne.s32.totalorder %s38, %s41
      %p47 = scmp.eq.s32.totalorder %s16, 0
      %p48 = por %p46, %p47
      %p49 = scmp.ne.s32.totalorder %s38, %s41
      %p50 = scmp.eq.s32.totalorder %s21, 7
      %p51 = por %p49, %p50
      %p52 = scmp.ne.s32.totalorder %s41, %s42
      %p53 = scmp.eq.s32.totalorder %s21, 0
      %p54 = por %p52, %p53
      %p55 = scmp.ne.s32.totalorder %s41, %s42
      %p56 = scmp.eq.s32.totalorder %s22, 7
      %p57 = por %p55, %p56
      %p59 = scmp.ne.s32.totalorder %s42, %s58
      %p60 = scmp.eq.s32.totalorder %s22, 0
      %p61 = por %p59, %p60
      %s63 = sadd.s32 %s62, 1
      %p66 = scmp.eq.s32.totalorder %s16, 7
      %p67 = scmp.ne.s32.totalorder %s62, %s64
      %p68 = scmp.eq.s32.totalorder %s16, 0
      %p69 = por %p67, %p68
      %p70 = scmp.ne.s32.totalorder %s62, %s64
      %p71 = scmp.eq.s32.totalorder %s21, 7
      %p72 = por %p70, %p71
      %p73 = scmp.ne.s32.totalorder %s64, %s65
      %p74 = scmp.eq.s32.totalorder %s21, 0
      %p75 = por %p73, %p74
      %p76 = scmp.ne.s32.totalorder %s64, %s65
      %p77 = scmp.eq.s32.totalorder %s22, 7
      %p78 = por %p76, %p77
      %p80 = scmp.ne.s32.totalorder %s65, %s79
      %p81 = scmp.eq.s32.totalorder %s22, 0
      %p82 = por %p80, %p81
      %s84 = sadd.s32 %s83, 1
      %p87 = scmp.eq.s32.totalorder %s16, 7
      %p88 = scmp.ne.s32.totalorder %s83, %s85
      %p89 = scmp.eq.s32.totalorder %s16, 0
      %p90 = por %p88, %p89
      %p91 = scmp.ne.s32.totalorder %s83, %s85
      %p92 = scmp.eq.s32.totalorder %s21, 7
      %p93 = por %p91, %p92
      %p94 = scmp.ne.s32.totalorder %s85, %s86
      %p95 = scmp.eq.s32.totalorder %s21, 0
      %p96 = por %p94, %p95
      %p97 = scmp.ne.s32.totalorder %s85, %s86
      %p98 = scmp.eq.s32.totalorder %s22, 7
      %p99 = por %p97, %p98
      %p101 = scmp.ne.s32.totalorder %s86, %s100
      %p102 = scmp.eq.s32.totalorder %s22, 0
      %p103 = por %p101, %p102
      %s104 = ssub.s32 %s24, %s31
      %p105 = scmp.eq.s32.totalorder %s104, 0
      %s107 = sadd.s32 %s106, 1
      %s108 = scalar_select %p105, %s106, %s107
      %p111 = pneg %p105
      %p112 = scmp.eq.s32.totalorder %s16, 7
      %p113 = por %p111, %p112
      %p114 = scmp.ne.s32.totalorder %s106, %s109
      %p115 = scmp.eq.s32.totalorder %s16, 0
      %p116 = por %p114, %p115
      %p117 = scmp.ne.s32.totalorder %s106, %s109
      %p118 = scmp.eq.s32.totalorder %s21, 7
      %p119 = por %p117, %p118
      %p120 = scmp.ne.s32.totalorder %s109, %s110
      %p121 = scmp.eq.s32.totalorder %s21, 0
      %p122 = por %p120, %p121
      %p123 = scmp.ne.s32.totalorder %s109, %s110
      %p124 = scmp.eq.s32.totalorder %s22, 7
      %p125 = por %p123, %p124
      %p127 = scmp.ne.s32.totalorder %s110, %s126
      %p128 = scmp.eq.s32.totalorder %s22, 0
      %p129 = por %p127, %p128
      %s130 = ssub.s32 %s24, %s31
      %p131 = scmp.eq.s32.totalorder %s130, 0
      %s133 = sadd.s32 %s132, 1
      %s134 = scalar_select %p131, %s132, %s133
      %p137 = pneg %p131
      %p138 = scmp.eq.s32.totalorder %s16, 7
      %p139 = por %p137, %p138
      %p140 = scmp.ne.s32.totalorder %s132, %s135
      %p141 = scmp.eq.s32.totalorder %s16, 0
      %p142 = por %p140, %p141
      %p143 = scmp.ne.s32.totalorder %s132, %s135
      %p144 = scmp.eq.s32.totalorder %s21, 7
      %p145 = por %p143, %p144
      %p146 = scmp.ne.s32.totalorder %s135, %s136
      %p147 = scmp.eq.s32.totalorder %s21, 0
      %p148 = por %p146, %p147
      %p149 = scmp.ne.s32.totalorder %s135, %s136
      %p150 = scmp.eq.s32.totalorder %s22, 7
      %p151 = por %p149, %p150
      %p153 = scmp.ne.s32.totalorder %s136, %s152
      %p154 = scmp.eq.s32.totalorder %s22, 0
      %p155 = por %p153, %p154
      %s156 = ssub.s32 %s24, %s31
      %p157 = scmp.eq.s32.totalorder %s156, 0
      %s159 = sadd.s32 %s158, 1
      %s160 = scalar_select %p157, %s158, %s159
      %p163 = pneg %p157
      %p164 = scmp.eq.s32.totalorder %s16, 7
      %p165 = por %p163, %p164
      %p166 = scmp.ne.s32.totalorder %s158, %s161
      %p167 = scmp.eq.s32.totalorder %s16, 0
      %p168 = por %p166, %p167
      %p169 = scmp.ne.s32.totalorder %s158, %s161
      %p170 = scmp.eq.s32.totalorder %s21, 7
      %p171 = por %p169, %p170
      %p172 = scmp.ne.s32.totalorder %s161, %s162
      %p173 = scmp.eq.s32.totalorder %s21, 0
      %p174 = por %p172, %p173
      %p175 = scmp.ne.s32.totalorder %s161, %s162
      %p176 = scmp.eq.s32.totalorder %s22, 7
      %p177 = por %p175, %p176
      %p179 = scmp.ne.s32.totalorder %s162, %s178
      %p180 = scmp.eq.s32.totalorder %s22, 0
      %p181 = por %p179, %p180
      %s182 = ssub.s32 %s24, %s31
      %p183 = scmp.eq.s32.totalorder %s182, 0
      %s185 = sadd.s32 %s184, 1
      %s186 = scalar_select %p183, %s184, %s185
      %p189 = pneg %p183
      %p190 = scmp.eq.s32.totalorder %s16, 7
      %p191 = por %p189, %p190
      %p192 = scmp.ne.s32.totalorder %s184, %s187
      %p193 = scmp.eq.s32.totalorder %s16, 0
      %p194 = por %p192, %p193
      %p195 = scmp.ne.s32.totalorder %s184, %s187
      %p196 = scmp.eq.s32.totalorder %s21, 7
      %p197 = por %p195, %p196
      %p198 = scmp.ne.s32.totalorder %s187, %s188
      %p199 = scmp.eq.s32.totalorder %s21, 0
      %p200 = por %p198, %p199
      %p201 = scmp.ne.s32.totalorder %s187, %s188
      %p202 = scmp.eq.s32.totalorder %s22, 7
      %p203 = por %p201, %p202
      %p205 = scmp.ne.s32.totalorder %s188, %s204
      %p206 = scmp.eq.s32.totalorder %s22, 0
      %p207 = por %p205, %p206
      %s209 = sadd.s32 %s208, 1
      %p212 = scmp.eq.s32.totalorder %s16, 7
      %p213 = scmp.ne.s32.totalorder %s208, %s210
      %p214 = scmp.eq.s32.totalorder %s16, 0
      %p215 = por %p213, %p214
      %p216 = scmp.ne.s32.totalorder %s208, %s210
      %p217 = scmp.eq.s32.totalorder %s21, 7
      %p218 = por %p216, %p217
      %p219 = scmp.ne.s32.totalorder %s210, %s211
      %p220 = scmp.eq.s32.totalorder %s21, 0
      %p221 = por %p219, %p220
      %p222 = scmp.ne.s32.totalorder %s210, %s211
      %p223 = scmp.eq.s32.totalorder %s22, 7
      %p224 = por %p222, %p223
      %p226 = scmp.ne.s32.totalorder %s211, %s225
      %p227 = scmp.eq.s32.totalorder %s22, 0
      %p228 = por %p226, %p227
      %s229 = ssub.s32 %s23, %s35
      %p230 = scmp.eq.s32.totalorder %s229, 0
      %s232 = sadd.s32 %s231, 1
      %s233 = scalar_select %p230, %s231, %s232
      %p236 = pneg %p230
      %p237 = scmp.eq.s32.totalorder %s16, 7
      %p238 = por %p236, %p237
      %p239 = scmp.ne.s32.totalorder %s231, %s234
      %p240 = scmp.eq.s32.totalorder %s16, 0
      %p241 = por %p239, %p240
      %p242 = scmp.ne.s32.totalorder %s231, %s234
      %p243 = scmp.eq.s32.totalorder %s21, 7
      %p244 = por %p242, %p243
      %p245 = scmp.ne.s32.totalorder %s234, %s235
      %p246 = scmp.eq.s32.totalorder %s21, 0
      %p247 = por %p245, %p246
      %p248 = scmp.ne.s32.totalorder %s234, %s235
      %p249 = scmp.eq.s32.totalorder %s22, 7
      %p250 = por %p248, %p249
      %p252 = scmp.ne.s32.totalorder %s235, %s251
      %p253 = scmp.eq.s32.totalorder %s22, 0
      %p254 = por %p252, %p253
      %p255 = scmp.le.s32.totalorder 1, %s16
      %p256 = scmp.lt.s32.totalorder %s16, 9
      %p257 = pnand %p255, %p256
      %p258 = pneg %p257
      // Predicated region
      $region9: #{pretrain_vit_forward.12} parent=5 // pred_check
        _
      $region10: #{pretrain_vit_forward.12} parent=5 // pred_check_branch
        %260 = sbr.rel (%p257) target = $region12
      $region11: #{pretrain_vit_forward.12} parent=5 // pred_region
        %s261 = ssub.s32 %s16, 1
        // Predicated region
        $region13: #{pretrain_vit_forward.12} parent=11 // pred_check
          %p262 = pneg %p75
        $region14: #{pretrain_vit_forward.12} parent=11 // pred_check_branch
          %264 = sbr.rel (%p262) target = $region16
        $region15: #{pretrain_vit_forward.12} parent=11 // pred_region
          %s266 = ssub.s32 16, 16
          %267 = vsyncadd [#allocation5], %s266
          %s269 = sshll.u32 [#allocation4], 4
          %s270 = int_to_ptr.vmem [resolvable:$true] %s269
          %272 = dma.hbm_to_vmem [thread:$0]  %s1, 16, %s270, [#allocation5]
        $region16: #{pretrain_vit_forward.12} parent=11 // pred_fallthru
          _
        // Predicated region
        $region17: #{pretrain_vit_forward.12} parent=11 // pred_check
          %p273 = pneg %p96
        $region18: #{pretrain_vit_forward.12} parent=11 // pred_check_branch
          %275 = sbr.rel (%p273) target = $region20
        $region19: #{pretrain_vit_forward.12} parent=11 // pred_region
          %s277 = ssub.s32 16, 16
          %278 = vsyncadd [#allocation7], %s277
          %s280 = sshll.u32 [#allocation6], 4
          %s281 = int_to_ptr.vmem [resolvable:$true] %s280
          %283 = dma.hbm_to_vmem [thread:$0]  %s2, 16, %s281, [#allocation7]
        $region20: #{pretrain_vit_forward.12} parent=11 // pred_fallthru
          _
        // Predicated region
        $region21: #{pretrain_vit_forward.12} parent=11 // pred_check
          %p284 = pneg %p221
        $region22: #{pretrain_vit_forward.12} parent=11 // pred_check_branch
          %286 = sbr.rel (%p284) target = $region24
        $region23: #{pretrain_vit_forward.12} parent=11 // pred_region
          %s288 = ssub.s32 16, 16
          %289 = vsyncadd [#allocation7], %s288
          %s291 = sshll.u32 [#allocation8], 4
          %s292 = int_to_ptr.vmem [resolvable:$true] %s291
          %294 = dma.hbm_to_vmem [thread:$0]  %s7, 16, %s292, [#allocation7]
        $region24: #{pretrain_vit_forward.12} parent=11 // pred_fallthru
          _
      $region12: #{pretrain_vit_forward.12} parent=5 // pred_fallthru
        _
      %p295 = scmp.lt.s32.totalorder %s16, 8
      // Predicated region
      $region25: #{pretrain_vit_forward.12} parent=5 // pred_check
        %p296 = pneg %p295
      $region26: #{pretrain_vit_forward.12} parent=5 // pred_check_branch
        %298 = sbr.rel (%p296) target = $region28
      $region27: #{pretrain_vit_forward.12} parent=5 // pred_region
        // Predicated region
        $region29: #{pretrain_vit_forward.12} parent=27 // pred_check
          %p299 = pneg %p48
        $region30: #{pretrain_vit_forward.12} parent=27 // pred_check_branch
          %301 = sbr.rel (%p299) target = $region32
        $region31: #{pretrain_vit_forward.12} parent=27 // pred_region
          %p302 = scmp.lt.s32.totalorder %s23, 1
          %s303 = scalar_select %p302, %s23, 1
          %s304 = smul.addr %s303, 2
          %s305 = smul.addr %s304, 8
          %s306 = scalar_lea.vmem %s0, %s305
        $region32: #{pretrain_vit_forward.12} parent=27 // pred_fallthru
          _
        // Predicated region
        $region33: #{pretrain_vit_forward.12} parent=27 // pred_check
          %p307 = pneg %p116
        $region34: #{pretrain_vit_forward.12} parent=27 // pred_check_branch
          %309 = sbr.rel (%p307) target = $region36
        $region35: #{pretrain_vit_forward.12} parent=27 // pred_region
          %p310 = scmp.lt.s32.totalorder %s24, 3
          %s311 = scalar_select %p310, %s24, 3
          %s312 = smul.addr %s311, 16
          %s313 = smul.addr %s312, 4
          %s314 = scalar_lea.vmem %s3, %s313
        $region36: #{pretrain_vit_forward.12} parent=27 // pred_fallthru
          _
        // Predicated region
        $region37: #{pretrain_vit_forward.12} parent=27 // pred_check
          %p315 = pneg %p142
        $region38: #{pretrain_vit_forward.12} parent=27 // pred_check_branch
          %317 = sbr.rel (%p315) target = $region40
        $region39: #{pretrain_vit_forward.12} parent=27 // pred_region
          %p318 = scmp.lt.s32.totalorder %s24, 3
          %s319 = scalar_select %p318, %s24, 3
          %s320 = smul.addr %s319, 16
          %s321 = smul.addr %s320, 4
          %s322 = scalar_lea.vmem %s4, %s321
        $region40: #{pretrain_vit_forward.12} parent=27 // pred_fallthru
          _
        // Predicated region
        $region41: #{pretrain_vit_forward.12} parent=27 // pred_check
          %p323 = pneg %p168
        $region42: #{pretrain_vit_forward.12} parent=27 // pred_check_branch
          %325 = sbr.rel (%p323) target = $region44
        $region43: #{pretrain_vit_forward.12} parent=27 // pred_region
          %p326 = scmp.lt.s32.totalorder %s24, 3
          %s327 = scalar_select %p326, %s24, 3
          %s328 = smul.addr %s327, 16
          %s329 = smul.addr %s328, 4
          %s330 = scalar_lea.vmem %s5, %s329
        $region44: #{pretrain_vit_forward.12} parent=27 // pred_fallthru
          _
        // Predicated region
        $region45: #{pretrain_vit_forward.12} parent=27 // pred_check
          %p331 = pneg %p194
        $region46: #{pretrain_vit_forward.12} parent=27 // pred_check_branch
          %333 = sbr.rel (%p331) target = $region48
        $region47: #{pretrain_vit_forward.12} parent=27 // pred_region
          %p334 = scmp.lt.s32.totalorder %s24, 3
          %s335 = scalar_select %p334, %s24, 3
          %s336 = smul.addr %s335, 4
          %s337 = smul.addr %s336, 4
          %s338 = scalar_lea.vmem %s6, %s337
        $region48: #{pretrain_vit_forward.12} parent=27 // pred_fallthru
          _
      $region28: #{pretrain_vit_forward.12} parent=5 // pred_fallthru
        _
      %p339 = scmp.le.s32.totalorder 1, %s16
      %p340 = scmp.lt.s32.totalorder %s16, 9
      %p341 = pnand %p339, %p340
      %p342 = pneg %p341
      // Predicated region
      $region49: #{pretrain_vit_forward.12} parent=5 // pred_check
        _
      $region50: #{pretrain_vit_forward.12} parent=5 // pred_check_branch
        %344 = sbr.rel (%p341) target = $region52
      $region51: #{pretrain_vit_forward.12} parent=5 // pred_region
        %s345 = ssub.s32 %s16, 1
        // Predicated region
        $region53: #{pretrain_vit_forward.12} parent=51 // pred_check
          %p346 = pneg %p75
        $region54: #{pretrain_vit_forward.12} parent=51 // pred_check_branch
          %348 = sbr.rel (%p346) target = $region56
        $region55: #{pretrain_vit_forward.12} parent=51 // pred_region
          %349 = dma.done [#allocation5], 16
        $region56: #{pretrain_vit_forward.12} parent=51 // pred_fallthru
          _
        // Predicated region
        $region57: #{pretrain_vit_forward.12} parent=51 // pred_check
          %p350 = pneg %p96
        $region58: #{pretrain_vit_forward.12} parent=51 // pred_check_branch
          %352 = sbr.rel (%p350) target = $region60
        $region59: #{pretrain_vit_forward.12} parent=51 // pred_region
          %353 = dma.done [#allocation7], 16
        $region60: #{pretrain_vit_forward.12} parent=51 // pred_fallthru
          _
        // Predicated region
        $region61: #{pretrain_vit_forward.12} parent=51 // pred_check
          %p354 = pneg %p221
        $region62: #{pretrain_vit_forward.12} parent=51 // pred_check_branch
          %356 = sbr.rel (%p354) target = $region64
        $region63: #{pretrain_vit_forward.12} parent=51 // pred_region
          %357 = dma.done [#allocation7], 16
        $region64: #{pretrain_vit_forward.12} parent=51 // pred_fallthru
          _
        %p358 = scmp.lt.s32.totalorder %s25, 1
        %s359 = scalar_select %p358, %s25, 1
        %s360 = smul.addr %s359, 2
        %s361 = smul.addr %s360, 8
        %s362 = scalar_lea.vmem %s0, %s361
        %p363 = pneg %p54
        %p364 = pneg %p51
        %p365 = pneg %p75
        %p366 = pneg %p72
        %p367 = pneg %p96
        %p368 = pneg %p93
        %p369 = scmp.lt.s32.totalorder %s26, 3
        %s370 = scalar_select %p369, %s26, 3
        %s371 = smul.addr %s370, 16
        %s372 = smul.addr %s371, 4
        %s373 = scalar_lea.vmem %s3, %s372
        %p374 = pneg %p122
        %p375 = pneg %p119
        %p376 = scmp.lt.s32.totalorder %s26, 3
        %s377 = scalar_select %p376, %s26, 3
        %s378 = smul.addr %s377, 16
        %s379 = smul.addr %s378, 4
        %s380 = scalar_lea.vmem %s4, %s379
        %p381 = pneg %p148
        %p382 = pneg %p145
        %p383 = scmp.lt.s32.totalorder %s26, 3
        %s384 = scalar_select %p383, %s26, 3
        %s385 = smul.addr %s384, 16
        %s386 = smul.addr %s385, 4
        %s387 = scalar_lea.vmem %s5, %s386
        %p388 = pneg %p174
        %p389 = pneg %p171
        %p390 = scmp.lt.s32.totalorder %s26, 3
        %s391 = scalar_select %p390, %s26, 3
        %s392 = smul.addr %s391, 4
        %s393 = smul.addr %s392, 4
        %s394 = scalar_lea.vmem %s6, %s393
        %p395 = pneg %p200
        %p396 = pneg %p197
        %p397 = pneg %p221
        %p398 = pneg %p218
        %p399 = pneg %p247
        %p400 = pneg %p244
        %p401 = scmp.lt.s32.totalorder %s25, 1
        %s402 = scalar_select %p401, %s25, 1
        %s403 = smul.addr %s402, 2
        %s404 = smul.addr %s403, 8
        %s405 = scalar_lea.vmem %s8, %s404
        %p406 = scmp.lt.s32.totalorder %s25, 1
        %s407 = scalar_select %p406, %s25, 1
        %s408 = smul.addr %s407, 2
        %s409 = smul.addr %s408, 8
        %s410 = scalar_lea.vmem %s0, %s409
        %p411 = scmp.lt.s32.totalorder %s26, 3
        %s412 = scalar_select %p411, %s26, 3
        %s413 = smul.addr %s412, 16
        %s414 = smul.addr %s413, 4
        %s415 = scalar_lea.vmem %s3, %s414
        %p416 = scmp.lt.s32.totalorder %s26, 3
        %s417 = scalar_select %p416, %s26, 3
        %s418 = smul.addr %s417, 16
        %s419 = smul.addr %s418, 4
        %s420 = scalar_lea.vmem %s4, %s419
        %p421 = scmp.lt.s32.totalorder %s26, 3
        %s422 = scalar_select %p421, %s26, 3
        %s423 = smul.addr %s422, 16
        %s424 = smul.addr %s423, 4
        %s425 = scalar_lea.vmem %s5, %s424
        %p426 = scmp.lt.s32.totalorder %s26, 3
        %s427 = scalar_select %p426, %s26, 3
        %s428 = smul.addr %s427, 4
        %s429 = smul.addr %s428, 4
        %s430 = scalar_lea.vmem %s6, %s429
        %p431 = scmp.lt.s32.totalorder %s25, 1
        %s432 = scalar_select %p431, %s25, 1
        %s433 = smul.addr %s432, 2
        %s434 = smul.addr %s433, 8
        %s435 = scalar_lea.vmem %s8, %s434
        %p437 = scmp.eq.s32.totalorder %s26, 0
        // Predicated region
        $region65: #{pretrain_vit_forward.12} parent=51 // pred_check
          %p438 = pneg %p437
        $region66: #{pretrain_vit_forward.12} parent=51 // pred_check_branch
          %440 = sbr.rel (%p438) target = $region68
        $region67: #{pretrain_vit_forward.12} parent=51 // pred_region
          %v441 = vld [vmem:[%s410] sm:$0xff]
          %v442 = vld [vmem:[%s410 + $0x8] sm:$0xff]
          %443 = vadd.xlane.f32.xlu0 %v441
          %v444 = vpop.xlane.xlu0 %443
          %445 = vadd.xlane.f32.xlu0 %v442
          %v446 = vpop.xlane.xlu0 %445
          %v447 = vrcp.pop 128.0
          %v448 = vmul.f32 %v444, %v447
          %v449 = vmul.f32 %v446, %v447
          %v450 = vsub.f32 %v441, %v448
          %v451 = vsub.f32 %v442, %v449
          %v452 = vmul.f32 %v450, %v450
          %v453 = vmul.f32 %v451, %v451
          %454 = vadd.xlane.f32.xlu0 %v452
          %v455 = vpop.xlane.xlu0 %454
          %456 = vadd.xlane.f32.xlu0 %v453
          %v457 = vpop.xlane.xlu0 %456
          %v458 = vmul.f32 %v455, %v447
          %v459 = vmul.f32 %v457, %v447
          %v460 = vadd.f32 %v458, 1e-05
          %v461 = vadd.f32 %v459, 1e-05
          %v462 = vrsqrt.pop %v460
          %v463 = vrsqrt.pop %v461
          %v464 = vmul.f32 %v450, %v462
          %v465 = vmul.f32 %v451, %v463
          %v466 = vld [vmem:[#allocation4] sm:$0x1]
          %v468 = vlaneseq
          %v469 = vshrl.u32 %v468, 7
          %v470 = vsub.s32 0, %v469
          %v471 = vrot.slane %v466, %v470
          %v473 = vmul.f32 %v464, %v471
          %v474 = vmul.f32 %v465, %v471
          %v475 = vld [vmem:[#allocation6] sm:$0x1]
          %v477 = vlaneseq
          %v478 = vshrl.u32 %v477, 7
          %v479 = vsub.s32 0, %v478
          %v480 = vrot.slane %v475, %v479
          %v482 = vadd.f32 %v473, %v480
          %v483 = vadd.f32 %v474, %v480
          %v484 = vpack.c.bf16 %v483, %v482
          %v486 = vunpack.c.l.b16 %v484
          %v487 = vunpack.c.h.b16 %v484
          %v488 = vpack.c.b16 %v486, %v486
          %v489 = vpack.c.b16 %v487, %v487
          %492 = vst [vmem:[#allocation2] sm:$0xf] %v488
          %493 = vst [vmem:[#allocation2 + $0x4] sm:$0xf] %v489
          %v494 = vld [vmem:[#allocation8] sm:$0x1]
          %v496 = vlaneseq
          %v497 = vshrl.u32 %v496, 7
          %v498 = vsub.s32 0, %v497
          %v499 = vrot.slane %v494, %v498
          %v501 = vadd.f32 %v441, %v499
          %v502 = vadd.f32 %v442, %v499
          %503 = vst [vmem:[#allocation3] sm:$0xff] %v501
          %504 = vst [vmem:[#allocation3 + $0x8] sm:$0xff] %v502
        $region68: #{pretrain_vit_forward.12} parent=51 // pred_fallthru
          _
        %v505 = vld [vmem:[#allocation2] sm:$0xf]
        %v506 = vld [vmem:[#allocation2 + $0x4] sm:$0xf]
        %v507 = vld [vmem:[%s415] sm:$0xf]
        %v508 = vld [vmem:[%s415 + $0x4] sm:$0xf]
        %v509 = vld [vmem:[%s415 + $0x8] sm:$0xf]
        %v510 = vld [vmem:[%s415 + $0xc] sm:$0xf]
        %v511 = vld [vmem:[%s415 + $0x10] sm:$0xf]
        %v512 = vld [vmem:[%s415 + $0x14] sm:$0xf]
        %v513 = vld [vmem:[%s415 + $0x18] sm:$0xf]
        %v514 = vld [vmem:[%s415 + $0x1c] sm:$0xf]
        %v515 = vld [vmem:[%s415 + $0x20] sm:$0xf]
        %v516 = vld [vmem:[%s415 + $0x24] sm:$0xf]
        %v517 = vld [vmem:[%s415 + $0x28] sm:$0xf]
        %v518 = vld [vmem:[%s415 + $0x2c] sm:$0xf]
        %v519 = vld [vmem:[%s415 + $0x30] sm:$0xf]
        %v520 = vld [vmem:[%s415 + $0x34] sm:$0xf]
        %v521 = vld [vmem:[%s415 + $0x38] sm:$0xf]
        %v522 = vld [vmem:[%s415 + $0x3c] sm:$0xf]
        %v525 = vunpack.c.l.b16 %v505
        %v526 = vunpack.c.l.b16 %v506
        %v527 = vpack.c.b16 %v526, %v525
        %v545 = vunpack.c.l.b16 %v507
        %v546 = vunpack.c.l.b16 %v508
        %v547 = vunpack.c.l.b16 %v509
        %v548 = vunpack.c.l.b16 %v510
        %v549 = vunpack.c.l.b16 %v511
        %v550 = vunpack.c.l.b16 %v512
        %v551 = vunpack.c.l.b16 %v513
        %v552 = vunpack.c.l.b16 %v514
        %v553 = vunpack.c.l.b16 %v515
        %v554 = vunpack.c.l.b16 %v516
        %v555 = vunpack.c.l.b16 %v517
        %v556 = vunpack.c.l.b16 %v518
        %v557 = vunpack.c.l.b16 %v519
        %v558 = vunpack.c.l.b16 %v520
        %v559 = vunpack.c.l.b16 %v521
        %v560 = vunpack.c.l.b16 %v522
        %v561 = vpack.c.b16 %v546, %v545
        %v562 = vpack.c.b16 %v548, %v547
        %v563 = vpack.c.b16 %v550, %v549
        %v564 = vpack.c.b16 %v552, %v551
        %v565 = vpack.c.b16 %v554, %v553
        %v566 = vpack.c.b16 %v556, %v555
        %v567 = vpack.c.b16 %v558, %v557
        %v568 = vpack.c.b16 %v560, %v559
        %577 = vmatprep.subr.bf16.mxu0 0
        %578 = vmatpush1.bf16.msra.mxu0 %v568
        %579 = vmatprep.subr.bf16.mxu0 0
        %580 = vmatpush1.bf16.msra.mxu0 %v567
        %581 = vmatprep.subr.bf16.mxu0 0
        %582 = vmatpush1.bf16.msra.mxu0 %v566
        %583 = vmatprep.subr.bf16.mxu0 0
        %584 = vmatpush1.bf16.msra.mxu0 %v565
        %585 = vmatprep.subr.bf16.mxu0 0
        %586 = vmatpush1.bf16.msra.mxu0 %v564
        %587 = vmatprep.subr.bf16.mxu0 0
        %588 = vmatpush1.bf16.msra.mxu0 %v563
        %589 = vmatprep.subr.bf16.mxu0 0
        %590 = vmatpush1.bf16.msra.mxu0 %v562
        %591 = vmatprep.subr.bf16.mxu0 0
        %592 = vmatpush1.bf16.msra.mxu0 %v561
        %593 = vmatprep.subr.bf16.mxu0 0
        %594 = vmatpush2.bf16.msra.mxu0 0
        %595 = vmatprep.subr.bf16.mxu0 0
        %596 = vmatpush2.bf16.msra.mxu0 0
        %597 = vmatprep.subr.bf16.mxu0 0
        %598 = vmatpush2.bf16.msra.mxu0 0
        %599 = vmatprep.subr.bf16.mxu0 0
        %600 = vmatpush2.bf16.msra.mxu0 0
        %601 = vmatprep.subr.bf16.mxu0 0
        %602 = vmatpush2.bf16.msra.mxu0 0
        %603 = vmatprep.subr.bf16.mxu0 0
        %604 = vmatpush2.bf16.msra.mxu0 0
        %605 = vmatprep.subr.bf16.mxu0 0
        %606 = vmatpush2.bf16.msra.mxu0 0
        %607 = vmatprep.subr.bf16.mxu0 0
        %608 = vmatpush2.bf16.msra.mxu0 0
        %609 = vmatprep.mubr.bf16.mxu0 0
        %610 = vmatmul.mubr.bf16.gmra.mxu0 %v527
        %v611 = vpop.f32.mrf.mxu0
        %v612 = vadd.f32 0.0, %v611
        %v613 = vpop.f32.mrf.mxu0
        %v614 = vpop.f32.mrf.mxu0
        %v615 = vadd.f32 0.0, %v614
        %v616 = vpop.f32.mrf.mxu0
        %617 = vdwg.mxu0
        %v618 = vld [vmem:[%s420] sm:$0xf]
        %v619 = vld [vmem:[%s420 + $0x4] sm:$0xf]
        %v620 = vld [vmem:[%s420 + $0x8] sm:$0xf]
        %v621 = vld [vmem:[%s420 + $0xc] sm:$0xf]
        %v622 = vld [vmem:[%s420 + $0x10] sm:$0xf]
        %v623 = vld [vmem:[%s420 + $0x14] sm:$0xf]
        %v624 = vld [vmem:[%s420 + $0x18] sm:$0xf]
        %v625 = vld [vmem:[%s420 + $0x1c] sm:$0xf]
        %v626 = vld [vmem:[%s420 + $0x20] sm:$0xf]
        %v627 = vld [vmem:[%s420 + $0x24] sm:$0xf]
        %v628 = vld [vmem:[%s420 + $0x28] sm:$0xf]
        %v629 = vld [vmem:[%s420 + $0x2c] sm:$0xf]
        %v630 = vld [vmem:[%s420 + $0x30] sm:$0xf]
        %v631 = vld [vmem:[%s420 + $0x34] sm:$0xf]
        %v632 = vld [vmem:[%s420 + $0x38] sm:$0xf]
        %v633 = vld [vmem:[%s420 + $0x3c] sm:$0xf]
        %v650 = vunpack.c.l.b16 %v618
        %v651 = vunpack.c.l.b16 %v619
        %v652 = vunpack.c.l.b16 %v620
        %v653 = vunpack.c.l.b16 %v621
        %v654 = vunpack.c.l.b16 %v622
        %v655 = vunpack.c.l.b16 %v623
        %v656 = vunpack.c.l.b16 %v624
        %v657 = vunpack.c.l.b16 %v625
        %v658 = vunpack.c.l.b16 %v626
        %v659 = vunpack.c.l.b16 %v627
        %v660 = vunpack.c.l.b16 %v628
        %v661 = vunpack.c.l.b16 %v629
        %v662 = vunpack.c.l.b16 %v630
        %v663 = vunpack.c.l.b16 %v631
        %v664 = vunpack.c.l.b16 %v632
        %v665 = vunpack.c.l.b16 %v633
        %v666 = vpack.c.b16 %v651, %v650
        %v667 = vpack.c.b16 %v653, %v652
        %v668 = vpack.c.b16 %v655, %v654
        %v669 = vpack.c.b16 %v657, %v656
        %v670 = vpack.c.b16 %v659, %v658
        %v671 = vpack.c.b16 %v661, %v660
        %v672 = vpack.c.b16 %v663, %v662
        %v673 = vpack.c.b16 %v665, %v664
        %682 = vmatprep.subr.bf16.mxu0 0
        %683 = vmatpush1.bf16.msra.mxu0 %v673
        %684 = vmatprep.subr.bf16.mxu0 0
        %685 = vmatpush1.bf16.msra.mxu0 %v672
        %686 = vmatprep.subr.bf16.mxu0 0
        %687 = vmatpush1.bf16.msra.mxu0 %v671
        %688 = vmatprep.subr.bf16.mxu0 0
        %689 = vmatpush1.bf16.msra.mxu0 %v670
        %690 = vmatprep.subr.bf16.mxu0 0
        %691 = vmatpush1.bf16.msra.mxu0 %v669
        %692 = vmatprep.subr.bf16.mxu0 0
        %693 = vmatpush1.bf16.msra.mxu0 %v668
        %694 = vmatprep.subr.bf16.mxu0 0
        %695 = vmatpush1.bf16.msra.mxu0 %v667
        %696 = vmatprep.subr.bf16.mxu0 0
        %697 = vmatpush1.bf16.msra.mxu0 %v666
        %698 = vmatprep.subr.bf16.mxu0 0
        %699 = vmatpush2.bf16.msra.mxu0 0
        %700 = vmatprep.subr.bf16.mxu0 0
        %701 = vmatpush2.bf16.msra.mxu0 0
        %702 = vmatprep.subr.bf16.mxu0 0
        %703 = vmatpush2.bf16.msra.mxu0 0
        %704 = vmatprep.subr.bf16.mxu0 0
        %705 = vmatpush2.bf16.msra.mxu0 0
        %706 = vmatprep.subr.bf16.mxu0 0
        %707 = vmatpush2.bf16.msra.mxu0 0
        %708 = vmatprep.subr.bf16.mxu0 0
        %709 = vmatpush2.bf16.msra.mxu0 0
        %710 = vmatprep.subr.bf16.mxu0 0
        %711 = vmatpush2.bf16.msra.mxu0 0
        %712 = vmatprep.subr.bf16.mxu0 0
        %713 = vmatpush2.bf16.msra.mxu0 0
        %714 = vmatprep.mubr.bf16.mxu0 0
        %715 = vmatmul.mubr.bf16.gmra.mxu0 %v527
        %v716 = vpop.f32.mrf.mxu0
        %v717 = vadd.f32 0.0, %v716
        %v718 = vpop.f32.mrf.mxu0
        %v719 = vpop.f32.mrf.mxu0
        %v720 = vadd.f32 0.0, %v719
        %v721 = vpop.f32.mrf.mxu0
        %722 = vdwg.mxu0
        %v723 = vld [vmem:[%s425] sm:$0xf]
        %v724 = vld [vmem:[%s425 + $0x4] sm:$0xf]
        %v725 = vld [vmem:[%s425 + $0x8] sm:$0xf]
        %v726 = vld [vmem:[%s425 + $0xc] sm:$0xf]
        %v727 = vld [vmem:[%s425 + $0x10] sm:$0xf]
        %v728 = vld [vmem:[%s425 + $0x14] sm:$0xf]
        %v729 = vld [vmem:[%s425 + $0x18] sm:$0xf]
        %v730 = vld [vmem:[%s425 + $0x1c] sm:$0xf]
        %v731 = vld [vmem:[%s425 + $0x20] sm:$0xf]
        %v732 = vld [vmem:[%s425 + $0x24] sm:$0xf]
        %v733 = vld [vmem:[%s425 + $0x28] sm:$0xf]
        %v734 = vld [vmem:[%s425 + $0x2c] sm:$0xf]
        %v735 = vld [vmem:[%s425 + $0x30] sm:$0xf]
        %v736 = vld [vmem:[%s425 + $0x34] sm:$0xf]
        %v737 = vld [vmem:[%s425 + $0x38] sm:$0xf]
        %v738 = vld [vmem:[%s425 + $0x3c] sm:$0xf]
        %v755 = vunpack.c.l.b16 %v723
        %v756 = vunpack.c.l.b16 %v724
        %v757 = vunpack.c.l.b16 %v725
        %v758 = vunpack.c.l.b16 %v726
        %v759 = vunpack.c.l.b16 %v727
        %v760 = vunpack.c.l.b16 %v728
        %v761 = vunpack.c.l.b16 %v729
        %v762 = vunpack.c.l.b16 %v730
        %v763 = vunpack.c.l.b16 %v731
        %v764 = vunpack.c.l.b16 %v732
        %v765 = vunpack.c.l.b16 %v733
        %v766 = vunpack.c.l.b16 %v734
        %v767 = vunpack.c.l.b16 %v735
        %v768 = vunpack.c.l.b16 %v736
        %v769 = vunpack.c.l.b16 %v737
        %v770 = vunpack.c.l.b16 %v738
        %v771 = vpack.c.b16 %v756, %v755
        %v772 = vpack.c.b16 %v758, %v757
        %v773 = vpack.c.b16 %v760, %v759
        %v774 = vpack.c.b16 %v762, %v761
        %v775 = vpack.c.b16 %v764, %v763
        %v776 = vpack.c.b16 %v766, %v765
        %v777 = vpack.c.b16 %v768, %v767
        %v778 = vpack.c.b16 %v770, %v769
        %787 = vmatprep.subr.bf16.mxu0 0
        %788 = vmatpush1.bf16.msra.mxu0 %v778
        %789 = vmatprep.subr.bf16.mxu0 0
        %790 = vmatpush1.bf16.msra.mxu0 %v777
        %791 = vmatprep.subr.bf16.mxu0 0
        %792 = vmatpush1.bf16.msra.mxu0 %v776
        %793 = vmatprep.subr.bf16.mxu0 0
        %794 = vmatpush1.bf16.msra.mxu0 %v775
        %795 = vmatprep.subr.bf16.mxu0 0
        %796 = vmatpush1.bf16.msra.mxu0 %v774
        %797 = vmatprep.subr.bf16.mxu0 0
        %798 = vmatpush1.bf16.msra.mxu0 %v773
        %799 = vmatprep.subr.bf16.mxu0 0
        %800 = vmatpush1.bf16.msra.mxu0 %v772
        %801 = vmatprep.subr.bf16.mxu0 0
        %802 = vmatpush1.bf16.msra.mxu0 %v771
        %803 = vmatprep.subr.bf16.mxu0 0
        %804 = vmatpush2.bf16.msra.mxu0 0
        %805 = vmatprep.subr.bf16.mxu0 0
        %806 = vmatpush2.bf16.msra.mxu0 0
        %807 = vmatprep.subr.bf16.mxu0 0
        %808 = vmatpush2.bf16.msra.mxu0 0
        %809 = vmatprep.subr.bf16.mxu0 0
        %810 = vmatpush2.bf16.msra.mxu0 0
        %811 = vmatprep.subr.bf16.mxu0 0
        %812 = vmatpush2.bf16.msra.mxu0 0
        %813 = vmatprep.subr.bf16.mxu0 0
        %814 = vmatpush2.bf16.msra.mxu0 0
        %815 = vmatprep.subr.bf16.mxu0 0
        %816 = vmatpush2.bf16.msra.mxu0 0
        %817 = vmatprep.subr.bf16.mxu0 0
        %818 = vmatpush2.bf16.msra.mxu0 0
        %819 = vmatprep.mubr.bf16.mxu0 0
        %820 = vmatmul.mubr.bf16.gmra.mxu0 %v527
        %v821 = vpop.f32.mrf.mxu0
        %v822 = vadd.f32 0.0, %v821
        %v823 = vpop.f32.mrf.mxu0
        %v824 = vpop.f32.mrf.mxu0
        %v825 = vadd.f32 0.0, %v824
        %v826 = vpop.f32.mrf.mxu0
        %827 = vdwg.mxu0
        %v828 = vpack.c.bf16 %v615, %v612
        %v829 = vpack.c.bf16 %v720, %v717
        %vm830 = vcmask 261120
        %v832 = vsel %vm830, %v828, 0
        %v835 = vsel %vm830, %v829, 0
        %837 = vmatprep.subr.bf16.mxu0 0
        %838 = vmatpush1.bf16.xpose.msra.mxu0 0
        %839 = vmatprep.subr.bf16.mxu0 0
        %840 = vmatpush1.bf16.xpose.msra.mxu0 0
        %841 = vmatprep.subr.bf16.mxu0 0
        %842 = vmatpush1.bf16.xpose.msra.mxu0 0
        %843 = vmatprep.subr.bf16.mxu0 0
        %844 = vmatpush1.bf16.xpose.msra.mxu0 0
        %845 = vmatprep.subr.bf16.mxu0 0
        %846 = vmatpush1.bf16.xpose.msra.mxu0 0
        %847 = vmatprep.subr.bf16.mxu0 0
        %848 = vmatpush1.bf16.xpose.msra.mxu0 0
        %849 = vmatprep.subr.bf16.mxu0 0
        %850 = vmatpush1.bf16.xpose.msra.mxu0 0
        %851 = vmatprep.subr.bf16.mxu0 0
        %852 = vmatpush1.bf16.xpose.msra.mxu0 %v835
        %853 = vmatprep.subr.bf16.mxu0 0
        %854 = vmatpush2.bf16.xpose.msra.mxu0 0
        %855 = vmatprep.subr.bf16.mxu0 0
        %856 = vmatpush2.bf16.xpose.msra.mxu0 0
        %857 = vmatprep.subr.bf16.mxu0 0
        %858 = vmatpush2.bf16.xpose.msra.mxu0 0
        %859 = vmatprep.subr.bf16.mxu0 0
        %860 = vmatpush2.bf16.xpose.msra.mxu0 0
        %861 = vmatprep.subr.bf16.mxu0 0
        %862 = vmatpush2.bf16.xpose.msra.mxu0 0
        %863 = vmatprep.subr.bf16.mxu0 0
        %864 = vmatpush2.bf16.xpose.msra.mxu0 0
        %865 = vmatprep.subr.bf16.mxu0 0
        %866 = vmatpush2.bf16.xpose.msra.mxu0 0
        %867 = vmatprep.subr.bf16.mxu0 0
        %868 = vmatpush2.bf16.xpose.msra.mxu0 0
        %869 = vmatprep.mubr.bf16.mxu0 0
        %870 = vmatmul.mubr.bf16.gmra.mxu0 %v832
        %v871 = vpop.f32.mrf.mxu0
        %v872 = vadd.f32 0.0, %v871
        %v873 = vpop.f32.mrf.mxu0
        %v874 = vpop.f32.mrf.mxu0
        %v875 = vadd.f32 0.0, %v874
        %v876 = vpop.f32.mrf.mxu0
        %877 = vdwg.mxu0
        %vm878 = vcmask 130048
        %v879 = vsel %vm878, %v872, -inf
        %880 = vmax.xlane.f32.xlu0 %v879
        %v881 = vpop.xlane.xlu0 %880
        %v882 = vsel %vm878, %v875, -inf
        %883 = vmax.xlane.f32.xlu0 %v882
        %v884 = vpop.xlane.xlu0 %883
        %v885 = vsub.f32 %v872, %v881
        %v886 = vsub.f32 %v875, %v884
        %v887 = vmul.f32 %v885, 1.442695
        %v888 = vpow.pop %v887
        %v889 = vmul.f32 %v886, 1.442695
        %v890 = vpow.pop %v889
        %v891 = vsel %vm878, %v888, 0.0
        %892 = vadd.xlane.f32.xlu0 %v891
        %v893 = vpop.xlane.xlu0 %892
        %v894 = vsel %vm878, %v890, 0.0
        %895 = vadd.xlane.f32.xlu0 %v894
        %v896 = vpop.xlane.xlu0 %895
        %v897 = vrcp.pop %v893
        %v898 = vmul.f32 %v888, %v897
        %v899 = vrcp.pop %v896
        %v900 = vmul.f32 %v890, %v899
        %v901 = vpack.c.bf16 %v900, %v898
        %v902 = vpack.c.bf16 %v825, %v822
        %v904 = vsel %vm878, %v901, 0
        %906 = vmatprep.subr.bf16.mxu0 0
        %907 = vmatpush1.bf16.msra.mxu0 0
        %908 = vmatprep.subr.bf16.mxu0 0
        %909 = vmatpush1.bf16.msra.mxu0 0
        %910 = vmatprep.subr.bf16.mxu0 0
        %911 = vmatpush1.bf16.msra.mxu0 0
        %912 = vmatprep.subr.bf16.mxu0 0
        %913 = vmatpush1.bf16.msra.mxu0 0
        %914 = vmatprep.subr.bf16.mxu0 0
        %915 = vmatpush1.bf16.msra.mxu0 0
        %916 = vmatprep.subr.bf16.mxu0 0
        %917 = vmatpush1.bf16.msra.mxu0 0
        %918 = vmatprep.subr.bf16.mxu0 0
        %919 = vmatpush1.bf16.msra.mxu0 0
        %920 = vmatprep.subr.bf16.mxu0 0
        %921 = vmatpush1.bf16.msra.mxu0 %v902
        %922 = vmatprep.subr.bf16.mxu0 0
        %923 = vmatpush2.bf16.msra.mxu0 0
        %924 = vmatprep.subr.bf16.mxu0 0
        %925 = vmatpush2.bf16.msra.mxu0 0
        %926 = vmatprep.subr.bf16.mxu0 0
        %927 = vmatpush2.bf16.msra.mxu0 0
        %928 = vmatprep.subr.bf16.mxu0 0
        %929 = vmatpush2.bf16.msra.mxu0 0
        %930 = vmatprep.subr.bf16.mxu0 0
        %931 = vmatpush2.bf16.msra.mxu0 0
        %932 = vmatprep.subr.bf16.mxu0 0
        %933 = vmatpush2.bf16.msra.mxu0 0
        %934 = vmatprep.subr.bf16.mxu0 0
        %935 = vmatpush2.bf16.msra.mxu0 0
        %936 = vmatprep.subr.bf16.mxu0 0
        %937 = vmatpush2.bf16.msra.mxu0 0
        %938 = vmatprep.mubr.bf16.mxu0 0
        %939 = vmatmul.mubr.bf16.gmra.mxu0 %v904
        %v940 = vpop.f32.mrf.mxu0
        %v941 = vadd.f32 0.0, %v940
        %v942 = vpop.f32.mrf.mxu0
        %v943 = vpop.f32.mrf.mxu0
        %v944 = vadd.f32 0.0, %v943
        %v945 = vpop.f32.mrf.mxu0
        %946 = vdwg.mxu0
        %v947 = vld [vmem:[#allocation3] sm:$0xff]
        %v948 = vld [vmem:[#allocation3 + $0x8] sm:$0xff]
        %v949 = vpack.c.bf16 %v944, %v941
        %v950 = vld [vmem:[%s430] sm:$0xf]
        %v951 = vld [vmem:[%s430 + $0x4] sm:$0xf]
        %v952 = vld [vmem:[%s430 + $0x8] sm:$0xf]
        %v953 = vld [vmem:[%s430 + $0xc] sm:$0xf]
        %v958 = vunpack.c.l.b16 %v950
        %v959 = vunpack.c.l.b16 %v951
        %v960 = vunpack.c.l.b16 %v952
        %v961 = vunpack.c.l.b16 %v953
        %v962 = vpack.c.b16 %v959, %v958
        %v963 = vpack.c.b16 %v961, %v960
        %v967 = vsel %vm830, %v949, 0
        %969 = vmatprep.subr.bf16.mxu0 0
        %970 = vmatpush1.bf16.msra.mxu0 0
        %971 = vmatprep.subr.bf16.mxu0 0
        %972 = vmatpush1.bf16.msra.mxu0 0
        %973 = vmatprep.subr.bf16.mxu0 0
        %974 = vmatpush1.bf16.msra.mxu0 0
        %975 = vmatprep.subr.bf16.mxu0 0
        %976 = vmatpush1.bf16.msra.mxu0 0
        %977 = vmatprep.subr.bf16.mxu0 0
        %978 = vmatpush1.bf16.msra.mxu0 0
        %979 = vmatprep.subr.bf16.mxu0 0
        %980 = vmatpush1.bf16.msra.mxu0 0
        %981 = vmatprep.subr.bf16.mxu0 0
        %982 = vmatpush1.bf16.msra.mxu0 %v963
        %983 = vmatprep.subr.bf16.mxu0 0
        %984 = vmatpush1.bf16.msra.mxu0 %v962
        %985 = vmatprep.subr.bf16.mxu0 0
        %986 = vmatpush2.bf16.msra.mxu0 0
        %987 = vmatprep.subr.bf16.mxu0 0
        %988 = vmatpush2.bf16.msra.mxu0 0
        %989 = vmatprep.subr.bf16.mxu0 0
        %990 = vmatpush2.bf16.msra.mxu0 0
        %991 = vmatprep.subr.bf16.mxu0 0
        %992 = vmatpush2.bf16.msra.mxu0 0
        %993 = vmatprep.subr.bf16.mxu0 0
        %994 = vmatpush2.bf16.msra.mxu0 0
        %995 = vmatprep.subr.bf16.mxu0 0
        %996 = vmatpush2.bf16.msra.mxu0 0
        %997 = vmatprep.subr.bf16.mxu0 0
        %998 = vmatpush2.bf16.msra.mxu0 0
        %999 = vmatprep.subr.bf16.mxu0 0
        %1000 = vmatpush2.bf16.msra.mxu0 0
        %1001 = vmatprep.mubr.bf16.mxu0 0
        %1002 = vmatmul.mubr.bf16.gmra.mxu0 %v967
        %v1003 = vpop.f32.mrf.mxu0
        %v1004 = vadd.f32 0.0, %v1003
        %v1005 = vpop.f32.mrf.mxu0
        %v1006 = vpop.f32.mrf.mxu0
        %v1007 = vadd.f32 0.0, %v1006
        %v1008 = vpop.f32.mrf.mxu0
        %1009 = vdwg.mxu0
        %v1010 = vadd.f32 %v947, %v1004
        %v1011 = vadd.f32 %v948, %v1007
        %1012 = vst [vmem:[#allocation3] sm:$0xff] %v1010
        %1013 = vst [vmem:[#allocation3 + $0x8] sm:$0xff] %v1011
        %p1014 = scmp.eq.s32.totalorder %s26, 3
        // Predicated region
        $region69: #{pretrain_vit_forward.12} parent=51 // pred_check
          %p1015 = pneg %p1014
        $region70: #{pretrain_vit_forward.12} parent=51 // pred_check_branch
          %1017 = sbr.rel (%p1015) target = $region72
        $region71: #{pretrain_vit_forward.12} parent=51 // pred_region
          %v1018 = vld [vmem:[#allocation3] sm:$0xff]
          %v1019 = vld [vmem:[#allocation3 + $0x8] sm:$0xff]
          %1020 = vst [vmem:[%s435] sm:$0xff] %v1018
          %1021 = vst [vmem:[%s435 + $0x8] sm:$0xff] %v1019
        $region72: #{pretrain_vit_forward.12} parent=51 // pred_fallthru
          _
        %p1022 = scmp.lt.s32.totalorder %s25, 1
        %s1023 = scalar_select %p1022, %s25, 1
        %s1024 = smul.addr %s1023, 2
        %s1025 = smul.addr %s1024, 8
        %s1026 = scalar_lea.vmem %s8, %s1025
        // Predicated region
        $region73: #{pretrain_vit_forward.12} parent=51 // pred_check
          %p1027 = pneg %p244
        $region74: #{pretrain_vit_forward.12} parent=51 // pred_check_branch
          %1029 = sbr.rel (%p1027) target = $region76
        $region75: #{pretrain_vit_forward.12} parent=51 // pred_region
          _
        $region76: #{pretrain_vit_forward.12} parent=51 // pred_fallthru
          _
      $region52: #{pretrain_vit_forward.12} parent=5 // pred_fallthru
        _
      %p1030 = scmp.le.s32.totalorder 2, %s16
      // Predicated region
      $region77: #{pretrain_vit_forward.12} parent=5 // pred_check
        %p1031 = pneg %p1030
      $region78: #{pretrain_vit_forward.12} parent=5 // pred_check_branch
        %1033 = sbr.rel (%p1031) target = $region80
      $region79: #{pretrain_vit_forward.12} parent=5 // pred_region
        %s1034 = ssub.s32 %s16, 2
        // Predicated region
        $region81: #{pretrain_vit_forward.12} parent=79 // pred_check
          %p1035 = pneg %p250
        $region82: #{pretrain_vit_forward.12} parent=79 // pred_check_branch
          %1037 = sbr.rel (%p1035) target = $region84
        $region83: #{pretrain_vit_forward.12} parent=79 // pred_region
          %p1038 = scmp.lt.s32.totalorder %s27, 1
          %s1039 = scalar_select %p1038, %s27, 1
          %s1040 = smul.addr %s1039, 2
          %s1041 = smul.addr %s1040, 8
          %s1042 = scalar_lea.vmem %s8, %s1041
        $region84: #{pretrain_vit_forward.12} parent=79 // pred_fallthru
          _
      $region80: #{pretrain_vit_forward.12} parent=5 // pred_fallthru
        _
    $region6: #{pretrain_vit_forward.12} parent=1 // loop_footer
      %s20 = sadd.s32 1, %s16
    $region7: #{pretrain_vit_forward.12} parent=1 // loop_footer_branch
      %15 = sbr.rel target = $region3
    $region8: #{pretrain_vit_forward.12} parent=1 // loop_exit
      _
    %1043 = vsyncpa [#allocation5], 1
    %s1044 = scalar_lea.sflag [#allocation5], 1
    %1045 = vsyncpa %s1044, 1
    %1046 = vsyncpa [#allocation7], 1

// kernel: pretrain_vit_forward.13
$region0: #{pretrain_vit_forward.13}
  #allocation0 [shape = 'u32[]', space=smem, size = 0x4, offset = 0x4, fixed_abs, tag = 'smem constant byte address 0x4 - core index']
  #allocation1 [shape = 'u32[144,128]{1,0:T(1,128)}', space=vmem, size = 0x12000, scoped, tag = 'internal scratch']
  %s0 = inlined_call_operand.vmem [shape: f32[32,128], index: 0, kind: input, shape index: {}]
  %s1 = inlined_call_operand.vmem [shape: f32[1,128], index: 1, kind: input, shape index: {}]
  %s2 = inlined_call_operand.vmem [shape: f32[1,128], index: 2, kind: input, shape index: {}]
  %s3 = inlined_call_operand.vmem [shape: bf16[128,512], index: 3, kind: input, shape index: {}]
  %s4 = inlined_call_operand.vmem [shape: f32[1,512], index: 4, kind: input, shape index: {}]
  %s5 = inlined_call_operand.vmem [shape: bf16[512,128], index: 5, kind: input, shape index: {}]
  %s6 = inlined_call_operand.hbm [shape: f32[1,128], index: 6, kind: input, shape index: {}]
  %s7 = inlined_call_operand.vmem [shape: f32[32,128], index: 7, kind: output, shape index: {}]
  %s8 = sld [smem:[#allocation0]]
  $region42: #{pretrain_vit_forward.13} parent=0
    _
  %s10 = ssub.s32 1, %s8
  %s11 = scalar_select 0, %s10, %s8
  $region1: #{pretrain_vit_forward.13} parent=0
    #allocation2 [shape = 'u8[512]{0}', space=vmem, size = 0x400, scoped, tag = 'input window, operand 6, single buffered']
    #allocation3 [shape = 's32[1]{0}', space=sflag, size = 0x4, scoped, tag = 'scoped memory for pretrain_vit_forward.13']
    %12 = vsyncpa [#allocation3], 0
    // Predicated region
    $region2: #{pretrain_vit_forward.13} parent=1 // pred_check
      _
    $region3: #{pretrain_vit_forward.13} parent=1 // pred_check_branch
      %14 = sbr.rel (0) target = $region5
    $region4: #{pretrain_vit_forward.13} parent=1 // pred_region
      _
    $region5: #{pretrain_vit_forward.13} parent=1 // pred_fallthru
      _
    // Predicated region
    $region6: #{pretrain_vit_forward.13} parent=1 // pred_check
      _
    $region7: #{pretrain_vit_forward.13} parent=1 // pred_check_branch
      %16 = sbr.rel (0) target = $region9
    $region8: #{pretrain_vit_forward.13} parent=1 // pred_region
      _
    $region9: #{pretrain_vit_forward.13} parent=1 // pred_fallthru
      _
    // Predicated region
    $region10: #{pretrain_vit_forward.13} parent=1 // pred_check
      _
    $region11: #{pretrain_vit_forward.13} parent=1 // pred_check_branch
      %18 = sbr.rel (0) target = $region13
    $region12: #{pretrain_vit_forward.13} parent=1 // pred_region
      _
    $region13: #{pretrain_vit_forward.13} parent=1 // pred_fallthru
      _
    // Predicated region
    $region14: #{pretrain_vit_forward.13} parent=1 // pred_check
      _
    $region15: #{pretrain_vit_forward.13} parent=1 // pred_check_branch
      %20 = sbr.rel (0) target = $region17
    $region16: #{pretrain_vit_forward.13} parent=1 // pred_region
      _
    $region17: #{pretrain_vit_forward.13} parent=1 // pred_fallthru
      _
    // Predicated region
    $region18: #{pretrain_vit_forward.13} parent=1 // pred_check
      _
    $region19: #{pretrain_vit_forward.13} parent=1 // pred_check_branch
      %22 = sbr.rel (0) target = $region21
    $region20: #{pretrain_vit_forward.13} parent=1 // pred_region
      _
    $region21: #{pretrain_vit_forward.13} parent=1 // pred_fallthru
      _
    // Predicated region
    $region22: #{pretrain_vit_forward.13} parent=1 // pred_check
      _
    $region23: #{pretrain_vit_forward.13} parent=1 // pred_check_branch
      %24 = sbr.rel (0) target = $region25
    $region24: #{pretrain_vit_forward.13} parent=1 // pred_region
      _
    $region25: #{pretrain_vit_forward.13} parent=1 // pred_fallthru
      _
    // Predicated region
    $region26: #{pretrain_vit_forward.13} parent=1 // pred_check
      _
    $region27: #{pretrain_vit_forward.13} parent=1 // pred_check_branch
      %26 = sbr.rel (0) target = $region29
    $region28: #{pretrain_vit_forward.13} parent=1 // pred_region
      %s28 = ssub.s32 16, 16
      %29 = vsyncadd [#allocation3], %s28
      %s31 = sshll.u32 [#allocation2], 4
      %s32 = int_to_ptr.vmem [resolvable:$true] %s31
      %34 = dma.hbm_to_vmem [thread:$0]  %s6, 16, %s32, [#allocation3]
    $region29: #{pretrain_vit_forward.13} parent=1 // pred_fallthru
      _
    // Predicated region
    $region30: #{pretrain_vit_forward.13} parent=1 // pred_check
      _
    $region31: #{pretrain_vit_forward.13} parent=1 // pred_check_branch
      %36 = sbr.rel (0) target = $region33
    $region32: #{pretrain_vit_forward.13} parent=1 // pred_region
      %37 = dma.done [#allocation3], 16
    $region33: #{pretrain_vit_forward.13} parent=1 // pred_fallthru
      _
    %v39 = vld [vmem:[%s0] sm:$0xff]
    %v40 = vld [vmem:[%s0 + $0x8] sm:$0xff]
    %v41 = vld [vmem:[%s0 + $0x10] sm:$0xff]
    %v42 = vld [vmem:[%s0 + $0x18] sm:$0xff]
    %43 = vadd.xlane.f32.xlu0 %v39
    %v44 = vpop.xlane.xlu0 %43
    %45 = vadd.xlane.f32.xlu0 %v40
    %v46 = vpop.xlane.xlu0 %45
    %47 = vadd.xlane.f32.xlu0 %v41
    %v48 = vpop.xlane.xlu0 %47
    %49 = vadd.xlane.f32.xlu0 %v42
    %v50 = vpop.xlane.xlu0 %49
    %v51 = vrcp.pop 128.0
    %v52 = vmul.f32 %v44, %v51
    %v53 = vmul.f32 %v46, %v51
    %v54 = vmul.f32 %v48, %v51
    %v55 = vmul.f32 %v50, %v51
    %v56 = vsub.f32 %v39, %v52
    %v57 = vsub.f32 %v40, %v53
    %v58 = vsub.f32 %v41, %v54
    %v59 = vsub.f32 %v42, %v55
    %v60 = vmul.f32 %v56, %v56
    %v61 = vmul.f32 %v57, %v57
    %v62 = vmul.f32 %v58, %v58
    %v63 = vmul.f32 %v59, %v59
    %64 = vadd.xlane.f32.xlu0 %v60
    %v65 = vpop.xlane.xlu0 %64
    %66 = vadd.xlane.f32.xlu0 %v61
    %v67 = vpop.xlane.xlu0 %66
    %68 = vadd.xlane.f32.xlu0 %v62
    %v69 = vpop.xlane.xlu0 %68
    %70 = vadd.xlane.f32.xlu0 %v63
    %v71 = vpop.xlane.xlu0 %70
    %v72 = vmul.f32 %v65, %v51
    %v73 = vmul.f32 %v67, %v51
    %v74 = vmul.f32 %v69, %v51
    %v75 = vmul.f32 %v71, %v51
    %v76 = vadd.f32 %v72, 1e-05
    %v77 = vadd.f32 %v73, 1e-05
    %v78 = vadd.f32 %v74, 1e-05
    %v79 = vadd.f32 %v75, 1e-05
    %v80 = vrsqrt.pop %v76
    %v81 = vrsqrt.pop %v77
    %v82 = vrsqrt.pop %v78
    %v83 = vrsqrt.pop %v79
    %v84 = vmul.f32 %v56, %v80
    %v85 = vmul.f32 %v57, %v81
    %v86 = vmul.f32 %v58, %v82
    %v87 = vmul.f32 %v59, %v83
    %v88 = vld [vmem:[%s1] sm:$0x1]
    %v90 = vlaneseq
    %v91 = vshrl.u32 %v90, 7
    %v92 = vsub.s32 0, %v91
    %v93 = vrot.slane %v88, %v92
    %v95 = vmul.f32 %v84, %v93
    %v96 = vmul.f32 %v85, %v93
    %v97 = vmul.f32 %v86, %v93
    %v98 = vmul.f32 %v87, %v93
    %v99 = vld [vmem:[%s2] sm:$0x1]
    %v101 = vlaneseq
    %v102 = vshrl.u32 %v101, 7
    %v103 = vsub.s32 0, %v102
    %v104 = vrot.slane %v99, %v103
    %v106 = vadd.f32 %v95, %v104
    %v107 = vadd.f32 %v96, %v104
    %v108 = vadd.f32 %v97, %v104
    %v109 = vadd.f32 %v98, %v104
    %v110 = vpack.c.bf16 %v107, %v106
    %v111 = vpack.c.bf16 %v109, %v108
    %v112 = vld [vmem:[%s3] sm:$0xff]
    %v113 = vld [vmem:[%s3 + $0x8] sm:$0xff]
    %v114 = vld [vmem:[%s3 + $0x10] sm:$0xff]
    %v115 = vld [vmem:[%s3 + $0x18] sm:$0xff]
    %v116 = vld [vmem:[%s3 + $0x20] sm:$0xff]
    %v117 = vld [vmem:[%s3 + $0x28] sm:$0xff]
    %v118 = vld [vmem:[%s3 + $0x30] sm:$0xff]
    %v119 = vld [vmem:[%s3 + $0x38] sm:$0xff]
    %v120 = vld [vmem:[%s3 + $0x40] sm:$0xff]
    %v121 = vld [vmem:[%s3 + $0x48] sm:$0xff]
    %v122 = vld [vmem:[%s3 + $0x50] sm:$0xff]
    %v123 = vld [vmem:[%s3 + $0x58] sm:$0xff]
    %v124 = vld [vmem:[%s3 + $0x60] sm:$0xff]
    %v125 = vld [vmem:[%s3 + $0x68] sm:$0xff]
    %v126 = vld [vmem:[%s3 + $0x70] sm:$0xff]
    %v127 = vld [vmem:[%s3 + $0x78] sm:$0xff]
    %v128 = vld [vmem:[%s3 + $0x80] sm:$0xff]
    %v129 = vld [vmem:[%s3 + $0x88] sm:$0xff]
    %v130 = vld [vmem:[%s3 + $0x90] sm:$0xff]
    %v131 = vld [vmem:[%s3 + $0x98] sm:$0xff]
    %v132 = vld [vmem:[%s3 + $0xa0] sm:$0xff]
    %v133 = vld [vmem:[%s3 + $0xa8] sm:$0xff]
    %v134 = vld [vmem:[%s3 + $0xb0] sm:$0xff]
    %v135 = vld [vmem:[%s3 + $0xb8] sm:$0xff]
    %v136 = vld [vmem:[%s3 + $0xc0] sm:$0xff]
    %v137 = vld [vmem:[%s3 + $0xc8] sm:$0xff]
    %v138 = vld [vmem:[%s3 + $0xd0] sm:$0xff]
    %v139 = vld [vmem:[%s3 + $0xd8] sm:$0xff]
    %v140 = vld [vmem:[%s3 + $0xe0] sm:$0xff]
    %v141 = vld [vmem:[%s3 + $0xe8] sm:$0xff]
    %v142 = vld [vmem:[%s3 + $0xf0] sm:$0xff]
    %v143 = vld [vmem:[%s3 + $0xf8] sm:$0xff]
    %v144 = vld [vmem:[%s4] sm:$0xf]
    %v146 = vlaneseq
    %v147 = vshrl.u32 %v146, 7
    %v148 = vsub.s32 0, %v147
    %v149 = vrot.slane %v144, %v148
    %v150 = vlaneseq
    %v151 = vshrl.u32 %v150, 7
    %v152 = vsub.s32 1, %v151
    %v153 = vrot.slane %v144, %v152
    %v154 = vlaneseq
    %v155 = vshrl.u32 %v154, 7
    %v156 = vsub.s32 2, %v155
    %v157 = vrot.slane %v144, %v156
    %v158 = vlaneseq
    %v159 = vshrl.u32 %v158, 7
    %v160 = vsub.s32 3, %v159
    %v161 = vrot.slane %v144, %v160
    %v198 = vunpack.c.l.b16 %v112
    %v199 = vunpack.c.h.b16 %v112
    %v200 = vunpack.c.l.b16 %v113
    %v201 = vunpack.c.h.b16 %v113
    %v202 = vunpack.c.l.b16 %v114
    %v203 = vunpack.c.h.b16 %v114
    %v204 = vunpack.c.l.b16 %v115
    %v205 = vunpack.c.h.b16 %v115
    %v206 = vunpack.c.l.b16 %v116
    %v207 = vunpack.c.h.b16 %v116
    %v208 = vunpack.c.l.b16 %v117
    %v209 = vunpack.c.h.b16 %v117
    %v210 = vunpack.c.l.b16 %v118
    %v211 = vunpack.c.h.b16 %v118
    %v212 = vunpack.c.l.b16 %v119
    %v213 = vunpack.c.h.b16 %v119
    %v214 = vunpack.c.l.b16 %v120
    %v215 = vunpack.c.h.b16 %v120
    %v216 = vunpack.c.l.b16 %v121
    %v217 = vunpack.c.h.b16 %v121
    %v218 = vunpack.c.l.b16 %v122
    %v219 = vunpack.c.h.b16 %v122
    %v220 = vunpack.c.l.b16 %v123
    %v221 = vunpack.c.h.b16 %v123
    %v222 = vunpack.c.l.b16 %v124
    %v223 = vunpack.c.h.b16 %v124
    %v224 = vunpack.c.l.b16 %v125
    %v225 = vunpack.c.h.b16 %v125
    %v226 = vunpack.c.l.b16 %v126
    %v227 = vunpack.c.h.b16 %v126
    %v228 = vunpack.c.l.b16 %v127
    %v229 = vunpack.c.h.b16 %v127
    %v230 = vunpack.c.l.b16 %v128
    %v231 = vunpack.c.h.b16 %v128
    %v232 = vunpack.c.l.b16 %v129
    %v233 = vunpack.c.h.b16 %v129
    %v234 = vunpack.c.l.b16 %v130
    %v235 = vunpack.c.h.b16 %v130
    %v236 = vunpack.c.l.b16 %v131
    %v237 = vunpack.c.h.b16 %v131
    %v238 = vunpack.c.l.b16 %v132
    %v239 = vunpack.c.h.b16 %v132
    %v240 = vunpack.c.l.b16 %v133
    %v241 = vunpack.c.h.b16 %v133
    %v242 = vunpack.c.l.b16 %v134
    %v243 = vunpack.c.h.b16 %v134
    %v244 = vunpack.c.l.b16 %v135
    %v245 = vunpack.c.h.b16 %v135
    %v246 = vunpack.c.l.b16 %v136
    %v247 = vunpack.c.h.b16 %v136
    %v248 = vunpack.c.l.b16 %v137
    %v249 = vunpack.c.h.b16 %v137
    %v250 = vunpack.c.l.b16 %v138
    %v251 = vunpack.c.h.b16 %v138
    %v252 = vunpack.c.l.b16 %v139
    %v253 = vunpack.c.h.b16 %v139
    %v254 = vunpack.c.l.b16 %v140
    %v255 = vunpack.c.h.b16 %v140
    %v256 = vunpack.c.l.b16 %v141
    %v257 = vunpack.c.h.b16 %v141
    %v258 = vunpack.c.l.b16 %v142
    %v259 = vunpack.c.h.b16 %v142
    %v260 = vunpack.c.l.b16 %v143
    %v261 = vunpack.c.h.b16 %v143
    %v262 = vpack.c.b16 %v202, %v198
    %v263 = vpack.c.b16 %v203, %v199
    %v264 = vpack.c.b16 %v204, %v200
    %v265 = vpack.c.b16 %v205, %v201
    %v266 = vpack.c.b16 %v210, %v206
    %v267 = vpack.c.b16 %v211, %v207
    %v268 = vpack.c.b16 %v212, %v208
    %v269 = vpack.c.b16 %v213, %v209
    %v270 = vpack.c.b16 %v218, %v214
    %v271 = vpack.c.b16 %v219, %v215
    %v272 = vpack.c.b16 %v220, %v216
    %v273 = vpack.c.b16 %v221, %v217
    %v274 = vpack.c.b16 %v226, %v222
    %v275 = vpack.c.b16 %v227, %v223
    %v276 = vpack.c.b16 %v228, %v224
    %v277 = vpack.c.b16 %v229, %v225
    %v278 = vpack.c.b16 %v234, %v230
    %v279 = vpack.c.b16 %v235, %v231
    %v280 = vpack.c.b16 %v236, %v232
    %v281 = vpack.c.b16 %v237, %v233
    %v282 = vpack.c.b16 %v242, %v238
    %v283 = vpack.c.b16 %v243, %v239
    %v284 = vpack.c.b16 %v244, %v240
    %v285 = vpack.c.b16 %v245, %v241
    %v286 = vpack.c.b16 %v250, %v246
    %v287 = vpack.c.b16 %v251, %v247
    %v288 = vpack.c.b16 %v252, %v248
    %v289 = vpack.c.b16 %v253, %v249
    %v290 = vpack.c.b16 %v258, %v254
    %v291 = vpack.c.b16 %v259, %v255
    %v292 = vpack.c.b16 %v260, %v256
    %v293 = vpack.c.b16 %v261, %v257
    %326 = vmatprep.subr.bf16.mxu0 %v291
    %327 = vmatpush1.bf16.msra.mxu0 %v290
    %328 = vmatprep.subr.bf16.mxu0 %v287
    %329 = vmatpush1.bf16.msra.mxu0 %v286
    %330 = vmatprep.subr.bf16.mxu0 %v283
    %331 = vmatpush1.bf16.msra.mxu0 %v282
    %332 = vmatprep.subr.bf16.mxu0 %v279
    %333 = vmatpush1.bf16.msra.mxu0 %v278
    %334 = vmatprep.subr.bf16.mxu0 %v275
    %335 = vmatpush1.bf16.msra.mxu0 %v274
    %336 = vmatprep.subr.bf16.mxu0 %v271
    %337 = vmatpush1.bf16.msra.mxu0 %v270
    %338 = vmatprep.subr.bf16.mxu0 %v267
    %339 = vmatpush1.bf16.msra.mxu0 %v266
    %340 = vmatprep.subr.bf16.mxu0 %v263
    %341 = vmatpush1.bf16.msra.mxu0 %v262
    %342 = vmatprep.subr.bf16.mxu0 0
    %343 = vmatpush2.bf16.msra.mxu0 0
    %344 = vmatprep.subr.bf16.mxu0 0
    %345 = vmatpush2.bf16.msra.mxu0 0
    %346 = vmatprep.subr.bf16.mxu0 0
    %347 = vmatpush2.bf16.msra.mxu0 0
    %348 = vmatprep.subr.bf16.mxu0 0
    %349 = vmatpush2.bf16.msra.mxu0 0
    %350 = vmatprep.subr.bf16.mxu0 0
    %351 = vmatpush2.bf16.msra.mxu0 0
    %352 = vmatprep.subr.bf16.mxu0 0
    %353 = vmatpush2.bf16.msra.mxu0 0
    %354 = vmatprep.subr.bf16.mxu0 0
    %355 = vmatpush2.bf16.msra.mxu0 0
    %356 = vmatprep.subr.bf16.mxu0 0
    %357 = vmatpush2.bf16.msra.mxu0 0
    %358 = vmatprep.mubr.bf16.mxu0 0
    %359 = vmatmul.mubr.bf16.gmra.mxu0 %v110
    %v360 = vpop.f32.mrf.mxu0
    %v361 = vadd.f32 %v149, %v360
    %v362 = vpop.f32.mrf.mxu0
    %v363 = vadd.f32 %v153, %v362
    %v364 = vpop.f32.mrf.mxu0
    %v365 = vadd.f32 %v149, %v364
    %v366 = vpop.f32.mrf.mxu0
    %v367 = vadd.f32 %v153, %v366
    %368 = vmatprep.mubr.bf16.mxu0 0
    %369 = vmatmul.mubr.bf16.gmra.mxu0 %v111
    %v370 = vpop.f32.mrf.mxu0
    %v371 = vadd.f32 %v149, %v370
    %v372 = vpop.f32.mrf.mxu0
    %v373 = vadd.f32 %v153, %v372
    %v374 = vpop.f32.mrf.mxu0
    %v375 = vadd.f32 %v149, %v374
    %v376 = vpop.f32.mrf.mxu0
    %v377 = vadd.f32 %v153, %v376
    %378 = vdwg.mxu0
    %379 = vmatprep.subr.bf16.mxu0 %v293
    %380 = vmatpush1.bf16.msra.mxu0 %v292
    %381 = vmatprep.subr.bf16.mxu0 %v289
    %382 = vmatpush1.bf16.msra.mxu0 %v288
    %383 = vmatprep.subr.bf16.mxu0 %v285
    %384 = vmatpush1.bf16.msra.mxu0 %v284
    %385 = vmatprep.subr.bf16.mxu0 %v281
    %386 = vmatpush1.bf16.msra.mxu0 %v280
    %387 = vmatprep.subr.bf16.mxu0 %v277
    %388 = vmatpush1.bf16.msra.mxu0 %v276
    %389 = vmatprep.subr.bf16.mxu0 %v273
    %390 = vmatpush1.bf16.msra.mxu0 %v272
    %391 = vmatprep.subr.bf16.mxu0 %v269
    %392 = vmatpush1.bf16.msra.mxu0 %v268
    %393 = vmatprep.subr.bf16.mxu0 %v265
    %394 = vmatpush1.bf16.msra.mxu0 %v264
    %395 = vmatprep.subr.bf16.mxu0 0
    %396 = vmatpush2.bf16.msra.mxu0 0
    %397 = vmatprep.subr.bf16.mxu0 0
    %398 = vmatpush2.bf16.msra.mxu0 0
    %399 = vmatprep.subr.bf16.mxu0 0
    %400 = vmatpush2.bf16.msra.mxu0 0
    %401 = vmatprep.subr.bf16.mxu0 0
    %402 = vmatpush2.bf16.msra.mxu0 0
    %403 = vmatprep.subr.bf16.mxu0 0
    %404 = vmatpush2.bf16.msra.mxu0 0
    %405 = vmatprep.subr.bf16.mxu0 0
    %406 = vmatpush2.bf16.msra.mxu0 0
    %407 = vmatprep.subr.bf16.mxu0 0
    %408 = vmatpush2.bf16.msra.mxu0 0
    %409 = vmatprep.subr.bf16.mxu0 0
    %410 = vmatpush2.bf16.msra.mxu0 0
    %411 = vmatprep.mubr.bf16.mxu0 0
    %412 = vmatmul.mubr.bf16.gmra.mxu0 %v110
    %v413 = vpop.f32.mrf.mxu0
    %v414 = vadd.f32 %v157, %v413
    %v415 = vpop.f32.mrf.mxu0
    %v416 = vadd.f32 %v161, %v415
    %v417 = vpop.f32.mrf.mxu0
    %v418 = vadd.f32 %v157, %v417
    %v419 = vpop.f32.mrf.mxu0
    %v420 = vadd.f32 %v161, %v419
    %421 = vmatprep.mubr.bf16.mxu0 0
    %422 = vmatmul.mubr.bf16.gmra.mxu0 %v111
    %v423 = vpop.f32.mrf.mxu0
    %v424 = vadd.f32 %v157, %v423
    %v425 = vpop.f32.mrf.mxu0
    %v426 = vadd.f32 %v161, %v425
    %v427 = vpop.f32.mrf.mxu0
    %v428 = vadd.f32 %v157, %v427
    %v429 = vpop.f32.mrf.mxu0
    %v430 = vadd.f32 %v161, %v429
    %431 = vdwg.mxu0
    %v432 = vmul.f32 %v361, 0.5
    %v433 = vmul.f32 %v363, 0.5
    %v434 = vmul.f32 %v414, 0.5
    %v435 = vmul.f32 %v416, 0.5
    %v436 = vmul.f32 %v365, 0.5
    %v437 = vmul.f32 %v367, 0.5
    %v438 = vmul.f32 %v418, 0.5
    %v439 = vmul.f32 %v420, 0.5
    %v440 = vmul.f32 %v371, 0.5
    %v441 = vmul.f32 %v373, 0.5
    %v442 = vmul.f32 %v424, 0.5
    %v443 = vmul.f32 %v426, 0.5
    %v444 = vmul.f32 %v375, 0.5
    %v445 = vmul.f32 %v377, 0.5
    %v446 = vmul.f32 %v428, 0.5
    %v447 = vmul.f32 %v430, 0.5
    %v448 = vmul.f32 %v361, 0.70710677
    %v449 = vmul.f32 %v363, 0.70710677
    %v450 = vmul.f32 %v414, 0.70710677
    %v451 = vmul.f32 %v416, 0.70710677
    %v452 = vmul.f32 %v365, 0.70710677
    %v453 = vmul.f32 %v367, 0.70710677
    %v454 = vmul.f32 %v418, 0.70710677
    %v455 = vmul.f32 %v420, 0.70710677
    %v456 = vmul.f32 %v371, 0.70710677
    %v457 = vmul.f32 %v373, 0.70710677
    %v458 = vmul.f32 %v424, 0.70710677
    %v459 = vmul.f32 %v426, 0.70710677
    %v460 = vmul.f32 %v375, 0.70710677
    %v461 = vmul.f32 %v377, 0.70710677
    %v462 = vmul.f32 %v428, 0.70710677
    %v463 = vmul.f32 %v430, 0.70710677
    %v464 = verf.f32.pop %v448
    %v465 = verf.f32.pop %v449
    %v466 = verf.f32.pop %v450
    %v467 = verf.f32.pop %v451
    %v468 = verf.f32.pop %v452
    %v469 = verf.f32.pop %v453
    %v470 = verf.f32.pop %v454
    %v471 = verf.f32.pop %v455
    %v472 = verf.f32.pop %v456
    %v473 = verf.f32.pop %v457
    %v474 = verf.f32.pop %v458
    %v475 = verf.f32.pop %v459
    %v476 = verf.f32.pop %v460
    %v477 = verf.f32.pop %v461
    %v478 = verf.f32.pop %v462
    %v479 = verf.f32.pop %v463
    %v480 = vadd.f32 %v464, 1.0
    %v481 = vadd.f32 %v465, 1.0
    %v482 = vadd.f32 %v466, 1.0
    %v483 = vadd.f32 %v467, 1.0
    %v484 = vadd.f32 %v468, 1.0
    %v485 = vadd.f32 %v469, 1.0
    %v486 = vadd.f32 %v470, 1.0
    %v487 = vadd.f32 %v471, 1.0
    %v488 = vadd.f32 %v472, 1.0
    %v489 = vadd.f32 %v473, 1.0
    %v490 = vadd.f32 %v474, 1.0
    %v491 = vadd.f32 %v475, 1.0
    %v492 = vadd.f32 %v476, 1.0
    %v493 = vadd.f32 %v477, 1.0
    %v494 = vadd.f32 %v478, 1.0
    %v495 = vadd.f32 %v479, 1.0
    %v496 = vmul.f32 %v432, %v480
    %v497 = vmul.f32 %v433, %v481
    %v498 = vmul.f32 %v434, %v482
    %v499 = vmul.f32 %v435, %v483
    %v500 = vmul.f32 %v436, %v484
    %v501 = vmul.f32 %v437, %v485
    %v502 = vmul.f32 %v438, %v486
    %v503 = vmul.f32 %v439, %v487
    %v504 = vmul.f32 %v440, %v488
    %v505 = vmul.f32 %v441, %v489
    %v506 = vmul.f32 %v442, %v490
    %v507 = vmul.f32 %v443, %v491
    %v508 = vmul.f32 %v444, %v492
    %v509 = vmul.f32 %v445, %v493
    %v510 = vmul.f32 %v446, %v494
    %v511 = vmul.f32 %v447, %v495
    %v512 = vpack.c.bf16 %v500, %v496
    %v513 = vpack.c.bf16 %v501, %v497
    %v514 = vpack.c.bf16 %v502, %v498
    %v515 = vpack.c.bf16 %v503, %v499
    %v516 = vpack.c.bf16 %v508, %v504
    %v517 = vpack.c.bf16 %v509, %v505
    %v518 = vpack.c.bf16 %v510, %v506
    %v519 = vpack.c.bf16 %v511, %v507
    %v520 = vld [vmem:[%s5] sm:$0xf]
    %v521 = vld [vmem:[%s5 + $0x4] sm:$0xf]
    %v522 = vld [vmem:[%s5 + $0x8] sm:$0xf]
    %v523 = vld [vmem:[%s5 + $0xc] sm:$0xf]
    %v524 = vld [vmem:[%s5 + $0x10] sm:$0xf]
    %v525 = vld [vmem:[%s5 + $0x14] sm:$0xf]
    %v526 = vld [vmem:[%s5 + $0x18] sm:$0xf]
    %v527 = vld [vmem:[%s5 + $0x1c] sm:$0xf]
    %v528 = vld [vmem:[%s5 + $0x20] sm:$0xf]
    %v529 = vld [vmem:[%s5 + $0x24] sm:$0xf]
    %v530 = vld [vmem:[%s5 + $0x28] sm:$0xf]
    %v531 = vld [vmem:[%s5 + $0x2c] sm:$0xf]
    %v532 = vld [vmem:[%s5 + $0x30] sm:$0xf]
    %v533 = vld [vmem:[%s5 + $0x34] sm:$0xf]
    %v534 = vld [vmem:[%s5 + $0x38] sm:$0xf]
    %v535 = vld [vmem:[%s5 + $0x3c] sm:$0xf]
    %v536 = vld [vmem:[%s5 + $0x40] sm:$0xf]
    %v537 = vld [vmem:[%s5 + $0x44] sm:$0xf]
    %v538 = vld [vmem:[%s5 + $0x48] sm:$0xf]
    %v539 = vld [vmem:[%s5 + $0x4c] sm:$0xf]
    %v540 = vld [vmem:[%s5 + $0x50] sm:$0xf]
    %v541 = vld [vmem:[%s5 + $0x54] sm:$0xf]
    %v542 = vld [vmem:[%s5 + $0x58] sm:$0xf]
    %v543 = vld [vmem:[%s5 + $0x5c] sm:$0xf]
    %v544 = vld [vmem:[%s5 + $0x60] sm:$0xf]
    %v545 = vld [vmem:[%s5 + $0x64] sm:$0xf]
    %v546 = vld [vmem:[%s5 + $0x68] sm:$0xf]
    %v547 = vld [vmem:[%s5 + $0x6c] sm:$0xf]
    %v548 = vld [vmem:[%s5 + $0x70] sm:$0xf]
    %v549 = vld [vmem:[%s5 + $0x74] sm:$0xf]
    %v550 = vld [vmem:[%s5 + $0x78] sm:$0xf]
    %v551 = vld [vmem:[%s5 + $0x7c] sm:$0xf]
    %v552 = vld [vmem:[%s5 + $0x80] sm:$0xf]
    %v553 = vld [vmem:[%s5 + $0x84] sm:$0xf]
    %v554 = vld [vmem:[%s5 + $0x88] sm:$0xf]
    %v555 = vld [vmem:[%s5 + $0x8c] sm:$0xf]
    %v556 = vld [vmem:[%s5 + $0x90] sm:$0xf]
    %v557 = vld [vmem:[%s5 + $0x94] sm:$0xf]
    %v558 = vld [vmem:[%s5 + $0x98] sm:$0xf]
    %v559 = vld [vmem:[%s5 + $0x9c] sm:$0xf]
    %v560 = vld [vmem:[%s5 + $0xa0] sm:$0xf]
    %v561 = vld [vmem:[%s5 + $0xa4] sm:$0xf]
    %v562 = vld [vmem:[%s5 + $0xa8] sm:$0xf]
    %v563 = vld [vmem:[%s5 + $0xac] sm:$0xf]
    %v564 = vld [vmem:[%s5 + $0xb0] sm:$0xf]
    %v565 = vld [vmem:[%s5 + $0xb4] sm:$0xf]
    %v566 = vld [vmem:[%s5 + $0xb8] sm:$0xf]
    %v567 = vld [vmem:[%s5 + $0xbc] sm:$0xf]
    %v568 = vld [vmem:[%s5 + $0xc0] sm:$0xf]
    %v569 = vld [vmem:[%s5 + $0xc4] sm:$0xf]
    %v570 = vld [vmem:[%s5 + $0xc8] sm:$0xf]
    %v571 = vld [vmem:[%s5 + $0xcc] sm:$0xf]
    %v572 = vld [vmem:[%s5 + $0xd0] sm:$0xf]
    %v573 = vld [vmem:[%s5 + $0xd4] sm:$0xf]
    %v574 = vld [vmem:[%s5 + $0xd8] sm:$0xf]
    %v575 = vld [vmem:[%s5 + $0xdc] sm:$0xf]
    %v576 = vld [vmem:[%s5 + $0xe0] sm:$0xf]
    %v577 = vld [vmem:[%s5 + $0xe4] sm:$0xf]
    %v578 = vld [vmem:[%s5 + $0xe8] sm:$0xf]
    %v579 = vld [vmem:[%s5 + $0xec] sm:$0xf]
    %v580 = vld [vmem:[%s5 + $0xf0] sm:$0xf]
    %v581 = vld [vmem:[%s5 + $0xf4] sm:$0xf]
    %v582 = vld [vmem:[%s5 + $0xf8] sm:$0xf]
    %v583 = vld [vmem:[%s5 + $0xfc] sm:$0xf]
    %v584 = vld [vmem:[#allocation2] sm:$0x1]
    %v586 = vlaneseq
    %v587 = vshrl.u32 %v586, 7
    %v588 = vsub.s32 0, %v587
    %v589 = vrot.slane %v584, %v588
    %v655 = vunpack.c.l.b16 %v520
    %v656 = vunpack.c.l.b16 %v521
    %v657 = vunpack.c.l.b16 %v522
    %v658 = vunpack.c.l.b16 %v523
    %v659 = vunpack.c.l.b16 %v524
    %v660 = vunpack.c.l.b16 %v525
    %v661 = vunpack.c.l.b16 %v526
    %v662 = vunpack.c.l.b16 %v527
    %v663 = vunpack.c.l.b16 %v528
    %v664 = vunpack.c.l.b16 %v529
    %v665 = vunpack.c.l.b16 %v530
    %v666 = vunpack.c.l.b16 %v531
    %v667 = vunpack.c.l.b16 %v532
    %v668 = vunpack.c.l.b16 %v533
    %v669 = vunpack.c.l.b16 %v534
    %v670 = vunpack.c.l.b16 %v535
    %v671 = vunpack.c.l.b16 %v536
    %v672 = vunpack.c.l.b16 %v537
    %v673 = vunpack.c.l.b16 %v538
    %v674 = vunpack.c.l.b16 %v539
    %v675 = vunpack.c.l.b16 %v540
    %v676 = vunpack.c.l.b16 %v541
    %v677 = vunpack.c.l.b16 %v542
    %v678 = vunpack.c.l.b16 %v543
    %v679 = vunpack.c.l.b16 %v544
    %v680 = vunpack.c.l.b16 %v545
    %v681 = vunpack.c.l.b16 %v546
    %v682 = vunpack.c.l.b16 %v547
    %v683 = vunpack.c.l.b16 %v548
    %v684 = vunpack.c.l.b16 %v549
    %v685 = vunpack.c.l.b16 %v550
    %v686 = vunpack.c.l.b16 %v551
    %v687 = vunpack.c.l.b16 %v552
    %v688 = vunpack.c.l.b16 %v553
    %v689 = vunpack.c.l.b16 %v554
    %v690 = vunpack.c.l.b16 %v555
    %v691 = vunpack.c.l.b16 %v556
    %v692 = vunpack.c.l.b16 %v557
    %v693 = vunpack.c.l.b16 %v558
    %v694 = vunpack.c.l.b16 %v559
    %v695 = vunpack.c.l.b16 %v560
    %v696 = vunpack.c.l.b16 %v561
    %v697 = vunpack.c.l.b16 %v562
    %v698 = vunpack.c.l.b16 %v563
    %v699 = vunpack.c.l.b16 %v564
    %v700 = vunpack.c.l.b16 %v565
    %v701 = vunpack.c.l.b16 %v566
    %v702 = vunpack.c.l.b16 %v567
    %v703 = vunpack.c.l.b16 %v568
    %v704 = vunpack.c.l.b16 %v569
    %v705 = vunpack.c.l.b16 %v570
    %v706 = vunpack.c.l.b16 %v571
    %v707 = vunpack.c.l.b16 %v572
    %v708 = vunpack.c.l.b16 %v573
    %v709 = vunpack.c.l.b16 %v574
    %v710 = vunpack.c.l.b16 %v575
    %v711 = vunpack.c.l.b16 %v576
    %v712 = vunpack.c.l.b16 %v577
    %v713 = vunpack.c.l.b16 %v578
    %v714 = vunpack.c.l.b16 %v579
    %v715 = vunpack.c.l.b16 %v580
    %v716 = vunpack.c.l.b16 %v581
    %v717 = vunpack.c.l.b16 %v582
    %v718 = vunpack.c.l.b16 %v583
    %v719 = vpack.c.b16 %v656, %v655
    %v720 = vpack.c.b16 %v658, %v657
    %v721 = vpack.c.b16 %v660, %v659
    %v722 = vpack.c.b16 %v662, %v661
    %v723 = vpack.c.b16 %v664, %v663
    %v724 = vpack.c.b16 %v666, %v665
    %v725 = vpack.c.b16 %v668, %v667
    %v726 = vpack.c.b16 %v670, %v669
    %v727 = vpack.c.b16 %v672, %v671
    %v728 = vpack.c.b16 %v674, %v673
    %v729 = vpack.c.b16 %v676, %v675
    %v730 = vpack.c.b16 %v678, %v677
    %v731 = vpack.c.b16 %v680, %v679
    %v732 = vpack.c.b16 %v682, %v681
    %v733 = vpack.c.b16 %v684, %v683
    %v734 = vpack.c.b16 %v686, %v685
    %v735 = vpack.c.b16 %v688, %v687
    %v736 = vpack.c.b16 %v690, %v689
    %v737 = vpack.c.b16 %v692, %v691
    %v738 = vpack.c.b16 %v694, %v693
    %v739 = vpack.c.b16 %v696, %v695
    %v740 = vpack.c.b16 %v698, %v697
    %v741 = vpack.c.b16 %v700, %v699
    %v742 = vpack.c.b16 %v702, %v701
    %v743 = vpack.c.b16 %v704, %v703
    %v744 = vpack.c.b16 %v706, %v705
    %v745 = vpack.c.b16 %v708, %v707
    %v746 = vpack.c.b16 %v710, %v709
    %v747 = vpack.c.b16 %v712, %v711
    %v748 = vpack.c.b16 %v714, %v713
    %v749 = vpack.c.b16 %v716, %v715
    %v750 = vpack.c.b16 %v718, %v717
    %783 = vmatprep.subr.bf16.mxu0 0
    %784 = vmatpush1.bf16.msra.mxu0 %v726
    %785 = vmatprep.subr.bf16.mxu0 0
    %786 = vmatpush1.bf16.msra.mxu0 %v725
    %787 = vmatprep.subr.bf16.mxu0 0
    %788 = vmatpush1.bf16.msra.mxu0 %v724
    %789 = vmatprep.subr.bf16.mxu0 0
    %790 = vmatpush1.bf16.msra.mxu0 %v723
    %791 = vmatprep.subr.bf16.mxu0 0
    %792 = vmatpush1.bf16.msra.mxu0 %v722
    %793 = vmatprep.subr.bf16.mxu0 0
    %794 = vmatpush1.bf16.msra.mxu0 %v721
    %795 = vmatprep.subr.bf16.mxu0 0
    %796 = vmatpush1.bf16.msra.mxu0 %v720
    %797 = vmatprep.subr.bf16.mxu0 0
    %798 = vmatpush1.bf16.msra.mxu0 %v719
    %799 = vmatprep.subr.bf16.mxu0 0
    %800 = vmatpush2.bf16.msra.mxu0 %v734
    %801 = vmatprep.subr.bf16.mxu0 0
    %802 = vmatpush2.bf16.msra.mxu0 %v733
    %803 = vmatprep.subr.bf16.mxu0 0
    %804 = vmatpush2.bf16.msra.mxu0 %v732
    %805 = vmatprep.subr.bf16.mxu0 0
    %806 = vmatpush2.bf16.msra.mxu0 %v731
    %807 = vmatprep.subr.bf16.mxu0 0
    %808 = vmatpush2.bf16.msra.mxu0 %v730
    %809 = vmatprep.subr.bf16.mxu0 0
    %810 = vmatpush2.bf16.msra.mxu0 %v729
    %811 = vmatprep.subr.bf16.mxu0 0
    %812 = vmatpush2.bf16.msra.mxu0 %v728
    %813 = vmatprep.subr.bf16.mxu0 0
    %814 = vmatpush2.bf16.msra.mxu0 %v727
    %815 = vmatprep.mubr.bf16.mxu0 %v513
    %816 = vmatmul.mubr.bf16.gmra.mxu0 %v512
    %v817 = vpop.f32.mrf.mxu0
    %v818 = vadd.f32 %v589, %v817
    %v819 = vpop.f32.mrf.mxu0
    %v820 = vpop.f32.mrf.mxu0
    %v821 = vadd.f32 %v589, %v820
    %v822 = vpop.f32.mrf.mxu0
    %823 = vmatprep.mubr.bf16.mxu0 %v517
    %824 = vmatmul.mubr.bf16.gmra.mxu0 %v516
    %v825 = vpop.f32.mrf.mxu0
    %v826 = vadd.f32 %v589, %v825
    %v827 = vpop.f32.mrf.mxu0
    %v828 = vpop.f32.mrf.mxu0
    %v829 = vadd.f32 %v589, %v828
    %v830 = vpop.f32.mrf.mxu0
    %831 = vdwg.mxu0
    %832 = vmatprep.subr.bf16.mxu0 0
    %833 = vmatpush1.bf16.msra.mxu0 %v742
    %834 = vmatprep.subr.bf16.mxu0 0
    %835 = vmatpush1.bf16.msra.mxu0 %v741
    %836 = vmatprep.subr.bf16.mxu0 0
    %837 = vmatpush1.bf16.msra.mxu0 %v740
    %838 = vmatprep.subr.bf16.mxu0 0
    %839 = vmatpush1.bf16.msra.mxu0 %v739
    %840 = vmatprep.subr.bf16.mxu0 0
    %841 = vmatpush1.bf16.msra.mxu0 %v738
    %842 = vmatprep.subr.bf16.mxu0 0
    %843 = vmatpush1.bf16.msra.mxu0 %v737
    %844 = vmatprep.subr.bf16.mxu0 0
    %845 = vmatpush1.bf16.msra.mxu0 %v736
    %846 = vmatprep.subr.bf16.mxu0 0
    %847 = vmatpush1.bf16.msra.mxu0 %v735
    %848 = vmatprep.subr.bf16.mxu0 0
    %849 = vmatpush2.bf16.msra.mxu0 %v750
    %850 = vmatprep.subr.bf16.mxu0 0
    %851 = vmatpush2.bf16.msra.mxu0 %v749
    %852 = vmatprep.subr.bf16.mxu0 0
    %853 = vmatpush2.bf16.msra.mxu0 %v748
    %854 = vmatprep.subr.bf16.mxu0 0
    %855 = vmatpush2.bf16.msra.mxu0 %v747
    %856 = vmatprep.subr.bf16.mxu0 0
    %857 = vmatpush2.bf16.msra.mxu0 %v746
    %858 = vmatprep.subr.bf16.mxu0 0
    %859 = vmatpush2.bf16.msra.mxu0 %v745
    %860 = vmatprep.subr.bf16.mxu0 0
    %861 = vmatpush2.bf16.msra.mxu0 %v744
    %862 = vmatprep.subr.bf16.mxu0 0
    %863 = vmatpush2.bf16.msra.mxu0 %v743
    %864 = vmatprep.mubr.bf16.mxu0 %v515
    %865 = vmatmul.mubr.bf16.gmra.mxu0 %v514
    %v866 = vpop.f32.mrf.mxu0
    %v867 = vadd.f32 %v818, %v866
    %v868 = vpop.f32.mrf.mxu0
    %v869 = vpop.f32.mrf.mxu0
    %v870 = vadd.f32 %v821, %v869
    %v871 = vpop.f32.mrf.mxu0
    %872 = vmatprep.mubr.bf16.mxu0 %v519
    %873 = vmatmul.mubr.bf16.gmra.mxu0 %v518
    %v874 = vpop.f32.mrf.mxu0
    %v875 = vadd.f32 %v826, %v874
    %v876 = vpop.f32.mrf.mxu0
    %v877 = vpop.f32.mrf.mxu0
    %v878 = vadd.f32 %v829, %v877
    %v879 = vpop.f32.mrf.mxu0
    %880 = vdwg.mxu0
    %v881 = vadd.f32 %v39, %v867
    %v882 = vadd.f32 %v40, %v870
    %v883 = vadd.f32 %v41, %v875
    %v884 = vadd.f32 %v42, %v878
    %885 = vst [vmem:[%s7] sm:$0xff] %v881
    %886 = vst [vmem:[%s7 + $0x8] sm:$0xff] %v882
    %887 = vst [vmem:[%s7 + $0x10] sm:$0xff] %v883
    %888 = vst [vmem:[%s7 + $0x18] sm:$0xff] %v884
    // Predicated region
    $region34: #{pretrain_vit_forward.13} parent=1 // pred_check
      _
    $region35: #{pretrain_vit_forward.13} parent=1 // pred_check_branch
      %890 = sbr.rel (0) target = $region37
    $region36: #{pretrain_vit_forward.13} parent=1 // pred_region
      _
    $region37: #{pretrain_vit_forward.13} parent=1 // pred_fallthru
      _
    // Predicated region
    $region38: #{pretrain_vit_forward.13} parent=1 // pred_check
      _
    $region39: #{pretrain_vit_forward.13} parent=1 // pred_check_branch
      %892 = sbr.rel (0) target = $region41
    $region40: #{pretrain_vit_forward.13} parent=1 // pred_region
      _
    $region41: #{pretrain_vit_forward.13} parent=1 // pred_fallthru
      _
    %893 = vsyncpa [#allocation3], 1

// kernel: pretrain_vit_forward.15
$region0: #{pretrain_vit_forward.15}
  #allocation0 [shape = 'u32[]', space=smem, size = 0x4, offset = 0x4, fixed_abs, tag = 'smem constant byte address 0x4 - core index']
  #allocation1 [shape = 'u32[144,128]{1,0:T(1,128)}', space=vmem, size = 0x12000, scoped, tag = 'internal scratch']
  %s0 = inlined_call_operand.vmem [shape: f32[32,128], index: 0, kind: input, shape index: {}]
  %s1 = inlined_call_operand.hbm [shape: f32[1,128], index: 1, kind: input, shape index: {}]
  %s2 = inlined_call_operand.hbm [shape: f32[1,128], index: 2, kind: input, shape index: {}]
  %s3 = inlined_call_operand.vmem [shape: bf16[128,512], index: 3, kind: input, shape index: {}]
  %s4 = inlined_call_operand.vmem [shape: f32[1,512], index: 4, kind: input, shape index: {}]
  %s5 = inlined_call_operand.vmem [shape: bf16[512,128], index: 5, kind: input, shape index: {}]
  %s6 = inlined_call_operand.hbm [shape: f32[1,128], index: 6, kind: input, shape index: {}]
  %s7 = inlined_call_operand.vmem [shape: f32[32,128], index: 7, kind: output, shape index: {}]
  %s8 = sld [smem:[#allocation0]]
  $region50: #{pretrain_vit_forward.15} parent=0
    _
  %s10 = ssub.s32 1, %s8
  %s11 = scalar_select 0, %s10, %s8
  $region1: #{pretrain_vit_forward.15} parent=0
    #allocation2 [shape = 'u8[512]{0}', space=vmem, size = 0x400, scoped, tag = 'input window, operand 1, single buffered']
    #allocation3 [shape = 's32[1]{0}', space=sflag, size = 0x4, scoped, tag = 'scoped memory for pretrain_vit_forward.15']
    #allocation4 [shape = 'u8[512]{0}', space=vmem, size = 0x400, scoped, tag = 'input window, operand 2, single buffered']
    #allocation5 [shape = 's32[1]{0}', space=sflag, size = 0x4, scoped, tag = 'scoped memory for pretrain_vit_forward.15']
    #allocation6 [shape = 'u8[512]{0}', space=vmem, size = 0x400, scoped, tag = 'input window, operand 6, single buffered']
    %12 = vsyncpa [#allocation3], 0
    %13 = vsyncpa [#allocation5], 0
    // Predicated region
    $region2: #{pretrain_vit_forward.15} parent=1 // pred_check
      _
    $region3: #{pretrain_vit_forward.15} parent=1 // pred_check_branch
      %15 = sbr.rel (0) target = $region5
    $region4: #{pretrain_vit_forward.15} parent=1 // pred_region
      _
    $region5: #{pretrain_vit_forward.15} parent=1 // pred_fallthru
      _
    // Predicated region
    $region6: #{pretrain_vit_forward.15} parent=1 // pred_check
      _
    $region7: #{pretrain_vit_forward.15} parent=1 // pred_check_branch
      %17 = sbr.rel (0) target = $region9
    $region8: #{pretrain_vit_forward.15} parent=1 // pred_region
      %s19 = ssub.s32 16, 16
      %20 = vsyncadd [#allocation3], %s19
      %s22 = sshll.u32 [#allocation2], 4
      %s23 = int_to_ptr.vmem [resolvable:$true] %s22
      %25 = dma.hbm_to_vmem [thread:$0]  %s1, 16, %s23, [#allocation3]
    $region9: #{pretrain_vit_forward.15} parent=1 // pred_fallthru
      _
    // Predicated region
    $region10: #{pretrain_vit_forward.15} parent=1 // pred_check
      _
    $region11: #{pretrain_vit_forward.15} parent=1 // pred_check_branch
      %27 = sbr.rel (0) target = $region13
    $region12: #{pretrain_vit_forward.15} parent=1 // pred_region
      %s29 = ssub.s32 16, 16
      %30 = vsyncadd [#allocation5], %s29
      %s32 = sshll.u32 [#allocation4], 4
      %s33 = int_to_ptr.vmem [resolvable:$true] %s32
      %35 = dma.hbm_to_vmem [thread:$0]  %s2, 16, %s33, [#allocation5]
    $region13: #{pretrain_vit_forward.15} parent=1 // pred_fallthru
      _
    // Predicated region
    $region14: #{pretrain_vit_forward.15} parent=1 // pred_check
      _
    $region15: #{pretrain_vit_forward.15} parent=1 // pred_check_branch
      %37 = sbr.rel (0) target = $region17
    $region16: #{pretrain_vit_forward.15} parent=1 // pred_region
      _
    $region17: #{pretrain_vit_forward.15} parent=1 // pred_fallthru
      _
    // Predicated region
    $region18: #{pretrain_vit_forward.15} parent=1 // pred_check
      _
    $region19: #{pretrain_vit_forward.15} parent=1 // pred_check_branch
      %39 = sbr.rel (0) target = $region21
    $region20: #{pretrain_vit_forward.15} parent=1 // pred_region
      _
    $region21: #{pretrain_vit_forward.15} parent=1 // pred_fallthru
      _
    // Predicated region
    $region22: #{pretrain_vit_forward.15} parent=1 // pred_check
      _
    $region23: #{pretrain_vit_forward.15} parent=1 // pred_check_branch
      %41 = sbr.rel (0) target = $region25
    $region24: #{pretrain_vit_forward.15} parent=1 // pred_region
      _
    $region25: #{pretrain_vit_forward.15} parent=1 // pred_fallthru
      _
    // Predicated region
    $region26: #{pretrain_vit_forward.15} parent=1 // pred_check
      _
    $region27: #{pretrain_vit_forward.15} parent=1 // pred_check_branch
      %43 = sbr.rel (0) target = $region29
    $region28: #{pretrain_vit_forward.15} parent=1 // pred_region
      %s45 = ssub.s32 16, 16
      %46 = vsyncadd [#allocation5], %s45
      %s48 = sshll.u32 [#allocation6], 4
      %s49 = int_to_ptr.vmem [resolvable:$true] %s48
      %51 = dma.hbm_to_vmem [thread:$0]  %s6, 16, %s49, [#allocation5]
    $region29: #{pretrain_vit_forward.15} parent=1 // pred_fallthru
      _
    // Predicated region
    $region30: #{pretrain_vit_forward.15} parent=1 // pred_check
      _
    $region31: #{pretrain_vit_forward.15} parent=1 // pred_check_branch
      %53 = sbr.rel (0) target = $region33
    $region32: #{pretrain_vit_forward.15} parent=1 // pred_region
      %54 = dma.done [#allocation3], 16
    $region33: #{pretrain_vit_forward.15} parent=1 // pred_fallthru
      _
    // Predicated region
    $region34: #{pretrain_vit_forward.15} parent=1 // pred_check
      _
    $region35: #{pretrain_vit_forward.15} parent=1 // pred_check_branch
      %56 = sbr.rel (0) target = $region37
    $region36: #{pretrain_vit_forward.15} parent=1 // pred_region
      %57 = dma.done [#allocation5], 16
    $region37: #{pretrain_vit_forward.15} parent=1 // pred_fallthru
      _
    // Predicated region
    $region38: #{pretrain_vit_forward.15} parent=1 // pred_check
      _
    $region39: #{pretrain_vit_forward.15} parent=1 // pred_check_branch
      %59 = sbr.rel (0) target = $region41
    $region40: #{pretrain_vit_forward.15} parent=1 // pred_region
      %60 = dma.done [#allocation5], 16
    $region41: #{pretrain_vit_forward.15} parent=1 // pred_fallthru
      _
    %v62 = vld [vmem:[%s0] sm:$0xff]
    %v63 = vld [vmem:[%s0 + $0x8] sm:$0xff]
    %v64 = vld [vmem:[%s0 + $0x10] sm:$0xff]
    %v65 = vld [vmem:[%s0 + $0x18] sm:$0xff]
    %66 = vadd.xlane.f32.xlu0 %v62
    %v67 = vpop.xlane.xlu0 %66
    %68 = vadd.xlane.f32.xlu0 %v63
    %v69 = vpop.xlane.xlu0 %68
    %70 = vadd.xlane.f32.xlu0 %v64
    %v71 = vpop.xlane.xlu0 %70
    %72 = vadd.xlane.f32.xlu0 %v65
    %v73 = vpop.xlane.xlu0 %72
    %v74 = vrcp.pop 128.0
    %v75 = vmul.f32 %v67, %v74
    %v76 = vmul.f32 %v69, %v74
    %v77 = vmul.f32 %v71, %v74
    %v78 = vmul.f32 %v73, %v74
    %v79 = vsub.f32 %v62, %v75
    %v80 = vsub.f32 %v63, %v76
    %v81 = vsub.f32 %v64, %v77
    %v82 = vsub.f32 %v65, %v78
    %v83 = vmul.f32 %v79, %v79
    %v84 = vmul.f32 %v80, %v80
    %v85 = vmul.f32 %v81, %v81
    %v86 = vmul.f32 %v82, %v82
    %87 = vadd.xlane.f32.xlu0 %v83
    %v88 = vpop.xlane.xlu0 %87
    %89 = vadd.xlane.f32.xlu0 %v84
    %v90 = vpop.xlane.xlu0 %89
    %91 = vadd.xlane.f32.xlu0 %v85
    %v92 = vpop.xlane.xlu0 %91
    %93 = vadd.xlane.f32.xlu0 %v86
    %v94 = vpop.xlane.xlu0 %93
    %v95 = vmul.f32 %v88, %v74
    %v96 = vmul.f32 %v90, %v74
    %v97 = vmul.f32 %v92, %v74
    %v98 = vmul.f32 %v94, %v74
    %v99 = vadd.f32 %v95, 1e-05
    %v100 = vadd.f32 %v96, 1e-05
    %v101 = vadd.f32 %v97, 1e-05
    %v102 = vadd.f32 %v98, 1e-05
    %v103 = vrsqrt.pop %v99
    %v104 = vrsqrt.pop %v100
    %v105 = vrsqrt.pop %v101
    %v106 = vrsqrt.pop %v102
    %v107 = vmul.f32 %v79, %v103
    %v108 = vmul.f32 %v80, %v104
    %v109 = vmul.f32 %v81, %v105
    %v110 = vmul.f32 %v82, %v106
    %v111 = vld [vmem:[#allocation2] sm:$0x1]
    %v113 = vlaneseq
    %v114 = vshrl.u32 %v113, 7
    %v115 = vsub.s32 0, %v114
    %v116 = vrot.slane %v111, %v115
    %v118 = vmul.f32 %v107, %v116
    %v119 = vmul.f32 %v108, %v116
    %v120 = vmul.f32 %v109, %v116
    %v121 = vmul.f32 %v110, %v116
    %v122 = vld [vmem:[#allocation4] sm:$0x1]
    %v124 = vlaneseq
    %v125 = vshrl.u32 %v124, 7
    %v126 = vsub.s32 0, %v125
    %v127 = vrot.slane %v122, %v126
    %v129 = vadd.f32 %v118, %v127
    %v130 = vadd.f32 %v119, %v127
    %v131 = vadd.f32 %v120, %v127
    %v132 = vadd.f32 %v121, %v127
    %v133 = vpack.c.bf16 %v130, %v129
    %v134 = vpack.c.bf16 %v132, %v131
    %v135 = vld [vmem:[%s3] sm:$0xff]
    %v136 = vld [vmem:[%s3 + $0x8] sm:$0xff]
    %v137 = vld [vmem:[%s3 + $0x10] sm:$0xff]
    %v138 = vld [vmem:[%s3 + $0x18] sm:$0xff]
    %v139 = vld [vmem:[%s3 + $0x20] sm:$0xff]
    %v140 = vld [vmem:[%s3 + $0x28] sm:$0xff]
    %v141 = vld [vmem:[%s3 + $0x30] sm:$0xff]
    %v142 = vld [vmem:[%s3 + $0x38] sm:$0xff]
    %v143 = vld [vmem:[%s3 + $0x40] sm:$0xff]
    %v144 = vld [vmem:[%s3 + $0x48] sm:$0xff]
    %v145 = vld [vmem:[%s3 + $0x50] sm:$0xff]
    %v146 = vld [vmem:[%s3 + $0x58] sm:$0xff]
    %v147 = vld [vmem:[%s3 + $0x60] sm:$0xff]
    %v148 = vld [vmem:[%s3 + $0x68] sm:$0xff]
    %v149 = vld [vmem:[%s3 + $0x70] sm:$0xff]
    %v150 = vld [vmem:[%s3 + $0x78] sm:$0xff]
    %v151 = vld [vmem:[%s3 + $0x80] sm:$0xff]
    %v152 = vld [vmem:[%s3 + $0x88] sm:$0xff]
    %v153 = vld [vmem:[%s3 + $0x90] sm:$0xff]
    %v154 = vld [vmem:[%s3 + $0x98] sm:$0xff]
    %v155 = vld [vmem:[%s3 + $0xa0] sm:$0xff]
    %v156 = vld [vmem:[%s3 + $0xa8] sm:$0xff]
    %v157 = vld [vmem:[%s3 + $0xb0] sm:$0xff]
    %v158 = vld [vmem:[%s3 + $0xb8] sm:$0xff]
    %v159 = vld [vmem:[%s3 + $0xc0] sm:$0xff]
    %v160 = vld [vmem:[%s3 + $0xc8] sm:$0xff]
    %v161 = vld [vmem:[%s3 + $0xd0] sm:$0xff]
    %v162 = vld [vmem:[%s3 + $0xd8] sm:$0xff]
    %v163 = vld [vmem:[%s3 + $0xe0] sm:$0xff]
    %v164 = vld [vmem:[%s3 + $0xe8] sm:$0xff]
    %v165 = vld [vmem:[%s3 + $0xf0] sm:$0xff]
    %v166 = vld [vmem:[%s3 + $0xf8] sm:$0xff]
    %v167 = vld [vmem:[%s4] sm:$0xf]
    %v169 = vlaneseq
    %v170 = vshrl.u32 %v169, 7
    %v171 = vsub.s32 0, %v170
    %v172 = vrot.slane %v167, %v171
    %v173 = vlaneseq
    %v174 = vshrl.u32 %v173, 7
    %v175 = vsub.s32 1, %v174
    %v176 = vrot.slane %v167, %v175
    %v177 = vlaneseq
    %v178 = vshrl.u32 %v177, 7
    %v179 = vsub.s32 2, %v178
    %v180 = vrot.slane %v167, %v179
    %v181 = vlaneseq
    %v182 = vshrl.u32 %v181, 7
    %v183 = vsub.s32 3, %v182
    %v184 = vrot.slane %v167, %v183
    %v221 = vunpack.c.l.b16 %v135
    %v222 = vunpack.c.h.b16 %v135
    %v223 = vunpack.c.l.b16 %v136
    %v224 = vunpack.c.h.b16 %v136
    %v225 = vunpack.c.l.b16 %v137
    %v226 = vunpack.c.h.b16 %v137
    %v227 = vunpack.c.l.b16 %v138
    %v228 = vunpack.c.h.b16 %v138
    %v229 = vunpack.c.l.b16 %v139
    %v230 = vunpack.c.h.b16 %v139
    %v231 = vunpack.c.l.b16 %v140
    %v232 = vunpack.c.h.b16 %v140
    %v233 = vunpack.c.l.b16 %v141
    %v234 = vunpack.c.h.b16 %v141
    %v235 = vunpack.c.l.b16 %v142
    %v236 = vunpack.c.h.b16 %v142
    %v237 = vunpack.c.l.b16 %v143
    %v238 = vunpack.c.h.b16 %v143
    %v239 = vunpack.c.l.b16 %v144
    %v240 = vunpack.c.h.b16 %v144
    %v241 = vunpack.c.l.b16 %v145
    %v242 = vunpack.c.h.b16 %v145
    %v243 = vunpack.c.l.b16 %v146
    %v244 = vunpack.c.h.b16 %v146
    %v245 = vunpack.c.l.b16 %v147
    %v246 = vunpack.c.h.b16 %v147
    %v247 = vunpack.c.l.b16 %v148
    %v248 = vunpack.c.h.b16 %v148
    %v249 = vunpack.c.l.b16 %v149
    %v250 = vunpack.c.h.b16 %v149
    %v251 = vunpack.c.l.b16 %v150
    %v252 = vunpack.c.h.b16 %v150
    %v253 = vunpack.c.l.b16 %v151
    %v254 = vunpack.c.h.b16 %v151
    %v255 = vunpack.c.l.b16 %v152
    %v256 = vunpack.c.h.b16 %v152
    %v257 = vunpack.c.l.b16 %v153
    %v258 = vunpack.c.h.b16 %v153
    %v259 = vunpack.c.l.b16 %v154
    %v260 = vunpack.c.h.b16 %v154
    %v261 = vunpack.c.l.b16 %v155
    %v262 = vunpack.c.h.b16 %v155
    %v263 = vunpack.c.l.b16 %v156
    %v264 = vunpack.c.h.b16 %v156
    %v265 = vunpack.c.l.b16 %v157
    %v266 = vunpack.c.h.b16 %v157
    %v267 = vunpack.c.l.b16 %v158
    %v268 = vunpack.c.h.b16 %v158
    %v269 = vunpack.c.l.b16 %v159
    %v270 = vunpack.c.h.b16 %v159
    %v271 = vunpack.c.l.b16 %v160
    %v272 = vunpack.c.h.b16 %v160
    %v273 = vunpack.c.l.b16 %v161
    %v274 = vunpack.c.h.b16 %v161
    %v275 = vunpack.c.l.b16 %v162
    %v276 = vunpack.c.h.b16 %v162
    %v277 = vunpack.c.l.b16 %v163
    %v278 = vunpack.c.h.b16 %v163
    %v279 = vunpack.c.l.b16 %v164
    %v280 = vunpack.c.h.b16 %v164
    %v281 = vunpack.c.l.b16 %v165
    %v282 = vunpack.c.h.b16 %v165
    %v283 = vunpack.c.l.b16 %v166
    %v284 = vunpack.c.h.b16 %v166
    %v285 = vpack.c.b16 %v225, %v221
    %v286 = vpack.c.b16 %v226, %v222
    %v287 = vpack.c.b16 %v227, %v223
    %v288 = vpack.c.b16 %v228, %v224
    %v289 = vpack.c.b16 %v233, %v229
    %v290 = vpack.c.b16 %v234, %v230
    %v291 = vpack.c.b16 %v235, %v231
    %v292 = vpack.c.b16 %v236, %v232
    %v293 = vpack.c.b16 %v241, %v237
    %v294 = vpack.c.b16 %v242, %v238
    %v295 = vpack.c.b16 %v243, %v239
    %v296 = vpack.c.b16 %v244, %v240
    %v297 = vpack.c.b16 %v249, %v245
    %v298 = vpack.c.b16 %v250, %v246
    %v299 = vpack.c.b16 %v251, %v247
    %v300 = vpack.c.b16 %v252, %v248
    %v301 = vpack.c.b16 %v257, %v253
    %v302 = vpack.c.b16 %v258, %v254
    %v303 = vpack.c.b16 %v259, %v255
    %v304 = vpack.c.b16 %v260, %v256
    %v305 = vpack.c.b16 %v265, %v261
    %v306 = vpack.c.b16 %v266, %v262
    %v307 = vpack.c.b16 %v267, %v263
    %v308 = vpack.c.b16 %v268, %v264
    %v309 = vpack.c.b16 %v273, %v269
    %v310 = vpack.c.b16 %v274, %v270
    %v311 = vpack.c.b16 %v275, %v271
    %v312 = vpack.c.b16 %v276, %v272
    %v313 = vpack.c.b16 %v281, %v277
    %v314 = vpack.c.b16 %v282, %v278
    %v315 = vpack.c.b16 %v283, %v279
    %v316 = vpack.c.b16 %v284, %v280
    %349 = vmatprep.subr.bf16.mxu0 %v314
    %350 = vmatpush1.bf16.msra.mxu0 %v313
    %351 = vmatprep.subr.bf16.mxu0 %v310
    %352 = vmatpush1.bf16.msra.mxu0 %v309
    %353 = vmatprep.subr.bf16.mxu0 %v306
    %354 = vmatpush1.bf16.msra.mxu0 %v305
    %355 = vmatprep.subr.bf16.mxu0 %v302
    %356 = vmatpush1.bf16.msra.mxu0 %v301
    %357 = vmatprep.subr.bf16.mxu0 %v298
    %358 = vmatpush1.bf16.msra.mxu0 %v297
    %359 = vmatprep.subr.bf16.mxu0 %v294
    %360 = vmatpush1.bf16.msra.mxu0 %v293
    %361 = vmatprep.subr.bf16.mxu0 %v290
    %362 = vmatpush1.bf16.msra.mxu0 %v289
    %363 = vmatprep.subr.bf16.mxu0 %v286
    %364 = vmatpush1.bf16.msra.mxu0 %v285
    %365 = vmatprep.subr.bf16.mxu0 0
    %366 = vmatpush2.bf16.msra.mxu0 0
    %367 = vmatprep.subr.bf16.mxu0 0
    %368 = vmatpush2.bf16.msra.mxu0 0
    %369 = vmatprep.subr.bf16.mxu0 0
    %370 = vmatpush2.bf16.msra.mxu0 0
    %371 = vmatprep.subr.bf16.mxu0 0
    %372 = vmatpush2.bf16.msra.mxu0 0
    %373 = vmatprep.subr.bf16.mxu0 0
    %374 = vmatpush2.bf16.msra.mxu0 0
    %375 = vmatprep.subr.bf16.mxu0 0
    %376 = vmatpush2.bf16.msra.mxu0 0
    %377 = vmatprep.subr.bf16.mxu0 0
    %378 = vmatpush2.bf16.msra.mxu0 0
    %379 = vmatprep.subr.bf16.mxu0 0
    %380 = vmatpush2.bf16.msra.mxu0 0
    %381 = vmatprep.mubr.bf16.mxu0 0
    %382 = vmatmul.mubr.bf16.gmra.mxu0 %v133
    %v383 = vpop.f32.mrf.mxu0
    %v384 = vadd.f32 %v172, %v383
    %v385 = vpop.f32.mrf.mxu0
    %v386 = vadd.f32 %v176, %v385
    %v387 = vpop.f32.mrf.mxu0
    %v388 = vadd.f32 %v172, %v387
    %v389 = vpop.f32.mrf.mxu0
    %v390 = vadd.f32 %v176, %v389
    %391 = vmatprep.mubr.bf16.mxu0 0
    %392 = vmatmul.mubr.bf16.gmra.mxu0 %v134
    %v393 = vpop.f32.mrf.mxu0
    %v394 = vadd.f32 %v172, %v393
    %v395 = vpop.f32.mrf.mxu0
    %v396 = vadd.f32 %v176, %v395
    %v397 = vpop.f32.mrf.mxu0
    %v398 = vadd.f32 %v172, %v397
    %v399 = vpop.f32.mrf.mxu0
    %v400 = vadd.f32 %v176, %v399
    %401 = vdwg.mxu0
    %402 = vmatprep.subr.bf16.mxu0 %v316
    %403 = vmatpush1.bf16.msra.mxu0 %v315
    %404 = vmatprep.subr.bf16.mxu0 %v312
    %405 = vmatpush1.bf16.msra.mxu0 %v311
    %406 = vmatprep.subr.bf16.mxu0 %v308
    %407 = vmatpush1.bf16.msra.mxu0 %v307
    %408 = vmatprep.subr.bf16.mxu0 %v304
    %409 = vmatpush1.bf16.msra.mxu0 %v303
    %410 = vmatprep.subr.bf16.mxu0 %v300
    %411 = vmatpush1.bf16.msra.mxu0 %v299
    %412 = vmatprep.subr.bf16.mxu0 %v296
    %413 = vmatpush1.bf16.msra.mxu0 %v295
    %414 = vmatprep.subr.bf16.mxu0 %v292
    %415 = vmatpush1.bf16.msra.mxu0 %v291
    %416 = vmatprep.subr.bf16.mxu0 %v288
    %417 = vmatpush1.bf16.msra.mxu0 %v287
    %418 = vmatprep.subr.bf16.mxu0 0
    %419 = vmatpush2.bf16.msra.mxu0 0
    %420 = vmatprep.subr.bf16.mxu0 0
    %421 = vmatpush2.bf16.msra.mxu0 0
    %422 = vmatprep.subr.bf16.mxu0 0
    %423 = vmatpush2.bf16.msra.mxu0 0
    %424 = vmatprep.subr.bf16.mxu0 0
    %425 = vmatpush2.bf16.msra.mxu0 0
    %426 = vmatprep.subr.bf16.mxu0 0
    %427 = vmatpush2.bf16.msra.mxu0 0
    %428 = vmatprep.subr.bf16.mxu0 0
    %429 = vmatpush2.bf16.msra.mxu0 0
    %430 = vmatprep.subr.bf16.mxu0 0
    %431 = vmatpush2.bf16.msra.mxu0 0
    %432 = vmatprep.subr.bf16.mxu0 0
    %433 = vmatpush2.bf16.msra.mxu0 0
    %434 = vmatprep.mubr.bf16.mxu0 0
    %435 = vmatmul.mubr.bf16.gmra.mxu0 %v133
    %v436 = vpop.f32.mrf.mxu0
    %v437 = vadd.f32 %v180, %v436
    %v438 = vpop.f32.mrf.mxu0
    %v439 = vadd.f32 %v184, %v438
    %v440 = vpop.f32.mrf.mxu0
    %v441 = vadd.f32 %v180, %v440
    %v442 = vpop.f32.mrf.mxu0
    %v443 = vadd.f32 %v184, %v442
    %444 = vmatprep.mubr.bf16.mxu0 0
    %445 = vmatmul.mubr.bf16.gmra.mxu0 %v134
    %v446 = vpop.f32.mrf.mxu0
    %v447 = vadd.f32 %v180, %v446
    %v448 = vpop.f32.mrf.mxu0
    %v449 = vadd.f32 %v184, %v448
    %v450 = vpop.f32.mrf.mxu0
    %v451 = vadd.f32 %v180, %v450
    %v452 = vpop.f32.mrf.mxu0
    %v453 = vadd.f32 %v184, %v452
    %454 = vdwg.mxu0
    %v455 = vmul.f32 %v384, 0.5
    %v456 = vmul.f32 %v386, 0.5
    %v457 = vmul.f32 %v437, 0.5
    %v458 = vmul.f32 %v439, 0.5
    %v459 = vmul.f32 %v388, 0.5
    %v460 = vmul.f32 %v390, 0.5
    %v461 = vmul.f32 %v441, 0.5
    %v462 = vmul.f32 %v443, 0.5
    %v463 = vmul.f32 %v394, 0.5
    %v464 = vmul.f32 %v396, 0.5
    %v465 = vmul.f32 %v447, 0.5
    %v466 = vmul.f32 %v449, 0.5
    %v467 = vmul.f32 %v398, 0.5
    %v468 = vmul.f32 %v400, 0.5
    %v469 = vmul.f32 %v451, 0.5
    %v470 = vmul.f32 %v453, 0.5
    %v471 = vmul.f32 %v384, 0.70710677
    %v472 = vmul.f32 %v386, 0.70710677
    %v473 = vmul.f32 %v437, 0.70710677
    %v474 = vmul.f32 %v439, 0.70710677
    %v475 = vmul.f32 %v388, 0.70710677
    %v476 = vmul.f32 %v390, 0.70710677
    %v477 = vmul.f32 %v441, 0.70710677
    %v478 = vmul.f32 %v443, 0.70710677
    %v479 = vmul.f32 %v394, 0.70710677
    %v480 = vmul.f32 %v396, 0.70710677
    %v481 = vmul.f32 %v447, 0.70710677
    %v482 = vmul.f32 %v449, 0.70710677
    %v483 = vmul.f32 %v398, 0.70710677
    %v484 = vmul.f32 %v400, 0.70710677
    %v485 = vmul.f32 %v451, 0.70710677
    %v486 = vmul.f32 %v453, 0.70710677
    %v487 = verf.f32.pop %v471
    %v488 = verf.f32.pop %v472
    %v489 = verf.f32.pop %v473
    %v490 = verf.f32.pop %v474
    %v491 = verf.f32.pop %v475
    %v492 = verf.f32.pop %v476
    %v493 = verf.f32.pop %v477
    %v494 = verf.f32.pop %v478
    %v495 = verf.f32.pop %v479
    %v496 = verf.f32.pop %v480
    %v497 = verf.f32.pop %v481
    %v498 = verf.f32.pop %v482
    %v499 = verf.f32.pop %v483
    %v500 = verf.f32.pop %v484
    %v501 = verf.f32.pop %v485
    %v502 = verf.f32.pop %v486
    %v503 = vadd.f32 %v487, 1.0
    %v504 = vadd.f32 %v488, 1.0
    %v505 = vadd.f32 %v489, 1.0
    %v506 = vadd.f32 %v490, 1.0
    %v507 = vadd.f32 %v491, 1.0
    %v508 = vadd.f32 %v492, 1.0
    %v509 = vadd.f32 %v493, 1.0
    %v510 = vadd.f32 %v494, 1.0
    %v511 = vadd.f32 %v495, 1.0
    %v512 = vadd.f32 %v496, 1.0
    %v513 = vadd.f32 %v497, 1.0
    %v514 = vadd.f32 %v498, 1.0
    %v515 = vadd.f32 %v499, 1.0
    %v516 = vadd.f32 %v500, 1.0
    %v517 = vadd.f32 %v501, 1.0
    %v518 = vadd.f32 %v502, 1.0
    %v519 = vmul.f32 %v455, %v503
    %v520 = vmul.f32 %v456, %v504
    %v521 = vmul.f32 %v457, %v505
    %v522 = vmul.f32 %v458, %v506
    %v523 = vmul.f32 %v459, %v507
    %v524 = vmul.f32 %v460, %v508
    %v525 = vmul.f32 %v461, %v509
    %v526 = vmul.f32 %v462, %v510
    %v527 = vmul.f32 %v463, %v511
    %v528 = vmul.f32 %v464, %v512
    %v529 = vmul.f32 %v465, %v513
    %v530 = vmul.f32 %v466, %v514
    %v531 = vmul.f32 %v467, %v515
    %v532 = vmul.f32 %v468, %v516
    %v533 = vmul.f32 %v469, %v517
    %v534 = vmul.f32 %v470, %v518
    %v535 = vpack.c.bf16 %v523, %v519
    %v536 = vpack.c.bf16 %v524, %v520
    %v537 = vpack.c.bf16 %v525, %v521
    %v538 = vpack.c.bf16 %v526, %v522
    %v539 = vpack.c.bf16 %v531, %v527
    %v540 = vpack.c.bf16 %v532, %v528
    %v541 = vpack.c.bf16 %v533, %v529
    %v542 = vpack.c.bf16 %v534, %v530
    %v543 = vld [vmem:[%s5] sm:$0xf]
    %v544 = vld [vmem:[%s5 + $0x4] sm:$0xf]
    %v545 = vld [vmem:[%s5 + $0x8] sm:$0xf]
    %v546 = vld [vmem:[%s5 + $0xc] sm:$0xf]
    %v547 = vld [vmem:[%s5 + $0x10] sm:$0xf]
    %v548 = vld [vmem:[%s5 + $0x14] sm:$0xf]
    %v549 = vld [vmem:[%s5 + $0x18] sm:$0xf]
    %v550 = vld [vmem:[%s5 + $0x1c] sm:$0xf]
    %v551 = vld [vmem:[%s5 + $0x20] sm:$0xf]
    %v552 = vld [vmem:[%s5 + $0x24] sm:$0xf]
    %v553 = vld [vmem:[%s5 + $0x28] sm:$0xf]
    %v554 = vld [vmem:[%s5 + $0x2c] sm:$0xf]
    %v555 = vld [vmem:[%s5 + $0x30] sm:$0xf]
    %v556 = vld [vmem:[%s5 + $0x34] sm:$0xf]
    %v557 = vld [vmem:[%s5 + $0x38] sm:$0xf]
    %v558 = vld [vmem:[%s5 + $0x3c] sm:$0xf]
    %v559 = vld [vmem:[%s5 + $0x40] sm:$0xf]
    %v560 = vld [vmem:[%s5 + $0x44] sm:$0xf]
    %v561 = vld [vmem:[%s5 + $0x48] sm:$0xf]
    %v562 = vld [vmem:[%s5 + $0x4c] sm:$0xf]
    %v563 = vld [vmem:[%s5 + $0x50] sm:$0xf]
    %v564 = vld [vmem:[%s5 + $0x54] sm:$0xf]
    %v565 = vld [vmem:[%s5 + $0x58] sm:$0xf]
    %v566 = vld [vmem:[%s5 + $0x5c] sm:$0xf]
    %v567 = vld [vmem:[%s5 + $0x60] sm:$0xf]
    %v568 = vld [vmem:[%s5 + $0x64] sm:$0xf]
    %v569 = vld [vmem:[%s5 + $0x68] sm:$0xf]
    %v570 = vld [vmem:[%s5 + $0x6c] sm:$0xf]
    %v571 = vld [vmem:[%s5 + $0x70] sm:$0xf]
    %v572 = vld [vmem:[%s5 + $0x74] sm:$0xf]
    %v573 = vld [vmem:[%s5 + $0x78] sm:$0xf]
    %v574 = vld [vmem:[%s5 + $0x7c] sm:$0xf]
    %v575 = vld [vmem:[%s5 + $0x80] sm:$0xf]
    %v576 = vld [vmem:[%s5 + $0x84] sm:$0xf]
    %v577 = vld [vmem:[%s5 + $0x88] sm:$0xf]
    %v578 = vld [vmem:[%s5 + $0x8c] sm:$0xf]
    %v579 = vld [vmem:[%s5 + $0x90] sm:$0xf]
    %v580 = vld [vmem:[%s5 + $0x94] sm:$0xf]
    %v581 = vld [vmem:[%s5 + $0x98] sm:$0xf]
    %v582 = vld [vmem:[%s5 + $0x9c] sm:$0xf]
    %v583 = vld [vmem:[%s5 + $0xa0] sm:$0xf]
    %v584 = vld [vmem:[%s5 + $0xa4] sm:$0xf]
    %v585 = vld [vmem:[%s5 + $0xa8] sm:$0xf]
    %v586 = vld [vmem:[%s5 + $0xac] sm:$0xf]
    %v587 = vld [vmem:[%s5 + $0xb0] sm:$0xf]
    %v588 = vld [vmem:[%s5 + $0xb4] sm:$0xf]
    %v589 = vld [vmem:[%s5 + $0xb8] sm:$0xf]
    %v590 = vld [vmem:[%s5 + $0xbc] sm:$0xf]
    %v591 = vld [vmem:[%s5 + $0xc0] sm:$0xf]
    %v592 = vld [vmem:[%s5 + $0xc4] sm:$0xf]
    %v593 = vld [vmem:[%s5 + $0xc8] sm:$0xf]
    %v594 = vld [vmem:[%s5 + $0xcc] sm:$0xf]
    %v595 = vld [vmem:[%s5 + $0xd0] sm:$0xf]
    %v596 = vld [vmem:[%s5 + $0xd4] sm:$0xf]
    %v597 = vld [vmem:[%s5 + $0xd8] sm:$0xf]
    %v598 = vld [vmem:[%s5 + $0xdc] sm:$0xf]
    %v599 = vld [vmem:[%s5 + $0xe0] sm:$0xf]
    %v600 = vld [vmem:[%s5 + $0xe4] sm:$0xf]
    %v601 = vld [vmem:[%s5 + $0xe8] sm:$0xf]
    %v602 = vld [vmem:[%s5 + $0xec] sm:$0xf]
    %v603 = vld [vmem:[%s5 + $0xf0] sm:$0xf]
    %v604 = vld [vmem:[%s5 + $0xf4] sm:$0xf]
    %v605 = vld [vmem:[%s5 + $0xf8] sm:$0xf]
    %v606 = vld [vmem:[%s5 + $0xfc] sm:$0xf]
    %v607 = vld [vmem:[#allocation6] sm:$0x1]
    %v609 = vlaneseq
    %v610 = vshrl.u32 %v609, 7
    %v611 = vsub.s32 0, %v610
    %v612 = vrot.slane %v607, %v611
    %v678 = vunpack.c.l.b16 %v543
    %v679 = vunpack.c.l.b16 %v544
    %v680 = vunpack.c.l.b16 %v545
    %v681 = vunpack.c.l.b16 %v546
    %v682 = vunpack.c.l.b16 %v547
    %v683 = vunpack.c.l.b16 %v548
    %v684 = vunpack.c.l.b16 %v549
    %v685 = vunpack.c.l.b16 %v550
    %v686 = vunpack.c.l.b16 %v551
    %v687 = vunpack.c.l.b16 %v552
    %v688 = vunpack.c.l.b16 %v553
    %v689 = vunpack.c.l.b16 %v554
    %v690 = vunpack.c.l.b16 %v555
    %v691 = vunpack.c.l.b16 %v556
    %v692 = vunpack.c.l.b16 %v557
    %v693 = vunpack.c.l.b16 %v558
    %v694 = vunpack.c.l.b16 %v559
    %v695 = vunpack.c.l.b16 %v560
    %v696 = vunpack.c.l.b16 %v561
    %v697 = vunpack.c.l.b16 %v562
    %v698 = vunpack.c.l.b16 %v563
    %v699 = vunpack.c.l.b16 %v564
    %v700 = vunpack.c.l.b16 %v565
    %v701 = vunpack.c.l.b16 %v566
    %v702 = vunpack.c.l.b16 %v567
    %v703 = vunpack.c.l.b16 %v568
    %v704 = vunpack.c.l.b16 %v569
    %v705 = vunpack.c.l.b16 %v570
    %v706 = vunpack.c.l.b16 %v571
    %v707 = vunpack.c.l.b16 %v572
    %v708 = vunpack.c.l.b16 %v573
    %v709 = vunpack.c.l.b16 %v574
    %v710 = vunpack.c.l.b16 %v575
    %v711 = vunpack.c.l.b16 %v576
    %v712 = vunpack.c.l.b16 %v577
    %v713 = vunpack.c.l.b16 %v578
    %v714 = vunpack.c.l.b16 %v579
    %v715 = vunpack.c.l.b16 %v580
    %v716 = vunpack.c.l.b16 %v581
    %v717 = vunpack.c.l.b16 %v582
    %v718 = vunpack.c.l.b16 %v583
    %v719 = vunpack.c.l.b16 %v584
    %v720 = vunpack.c.l.b16 %v585
    %v721 = vunpack.c.l.b16 %v586
    %v722 = vunpack.c.l.b16 %v587
    %v723 = vunpack.c.l.b16 %v588
    %v724 = vunpack.c.l.b16 %v589
    %v725 = vunpack.c.l.b16 %v590
    %v726 = vunpack.c.l.b16 %v591
    %v727 = vunpack.c.l.b16 %v592
    %v728 = vunpack.c.l.b16 %v593
    %v729 = vunpack.c.l.b16 %v594
    %v730 = vunpack.c.l.b16 %v595
    %v731 = vunpack.c.l.b16 %v596
    %v732 = vunpack.c.l.b16 %v597
    %v733 = vunpack.c.l.b16 %v598
    %v734 = vunpack.c.l.b16 %v599
    %v735 = vunpack.c.l.b16 %v600
    %v736 = vunpack.c.l.b16 %v601
    %v737 = vunpack.c.l.b16 %v602
    %v738 = vunpack.c.l.b16 %v603
    %v739 = vunpack.c.l.b16 %v604
    %v740 = vunpack.c.l.b16 %v605
    %v741 = vunpack.c.l.b16 %v606
    %v742 = vpack.c.b16 %v679, %v678
    %v743 = vpack.c.b16 %v681, %v680
    %v744 = vpack.c.b16 %v683, %v682
    %v745 = vpack.c.b16 %v685, %v684
    %v746 = vpack.c.b16 %v687, %v686
    %v747 = vpack.c.b16 %v689, %v688
    %v748 = vpack.c.b16 %v691, %v690
    %v749 = vpack.c.b16 %v693, %v692
    %v750 = vpack.c.b16 %v695, %v694
    %v751 = vpack.c.b16 %v697, %v696
    %v752 = vpack.c.b16 %v699, %v698
    %v753 = vpack.c.b16 %v701, %v700
    %v754 = vpack.c.b16 %v703, %v702
    %v755 = vpack.c.b16 %v705, %v704
    %v756 = vpack.c.b16 %v707, %v706
    %v757 = vpack.c.b16 %v709, %v708
    %v758 = vpack.c.b16 %v711, %v710
    %v759 = vpack.c.b16 %v713, %v712
    %v760 = vpack.c.b16 %v715, %v714
    %v761 = vpack.c.b16 %v717, %v716
    %v762 = vpack.c.b16 %v719, %v718
    %v763 = vpack.c.b16 %v721, %v720
    %v764 = vpack.c.b16 %v723, %v722
    %v765 = vpack.c.b16 %v725, %v724
    %v766 = vpack.c.b16 %v727, %v726
    %v767 = vpack.c.b16 %v729, %v728
    %v768 = vpack.c.b16 %v731, %v730
    %v769 = vpack.c.b16 %v733, %v732
    %v770 = vpack.c.b16 %v735, %v734
    %v771 = vpack.c.b16 %v737, %v736
    %v772 = vpack.c.b16 %v739, %v738
    %v773 = vpack.c.b16 %v741, %v740
    %806 = vmatprep.subr.bf16.mxu0 0
    %807 = vmatpush1.bf16.msra.mxu0 %v749
    %808 = vmatprep.subr.bf16.mxu0 0
    %809 = vmatpush1.bf16.msra.mxu0 %v748
    %810 = vmatprep.subr.bf16.mxu0 0
    %811 = vmatpush1.bf16.msra.mxu0 %v747
    %812 = vmatprep.subr.bf16.mxu0 0
    %813 = vmatpush1.bf16.msra.mxu0 %v746
    %814 = vmatprep.subr.bf16.mxu0 0
    %815 = vmatpush1.bf16.msra.mxu0 %v745
    %816 = vmatprep.subr.bf16.mxu0 0
    %817 = vmatpush1.bf16.msra.mxu0 %v744
    %818 = vmatprep.subr.bf16.mxu0 0
    %819 = vmatpush1.bf16.msra.mxu0 %v743
    %820 = vmatprep.subr.bf16.mxu0 0
    %821 = vmatpush1.bf16.msra.mxu0 %v742
    %822 = vmatprep.subr.bf16.mxu0 0
    %823 = vmatpush2.bf16.msra.mxu0 %v757
    %824 = vmatprep.subr.bf16.mxu0 0
    %825 = vmatpush2.bf16.msra.mxu0 %v756
    %826 = vmatprep.subr.bf16.mxu0 0
    %827 = vmatpush2.bf16.msra.mxu0 %v755
    %828 = vmatprep.subr.bf16.mxu0 0
    %829 = vmatpush2.bf16.msra.mxu0 %v754
    %830 = vmatprep.subr.bf16.mxu0 0
    %831 = vmatpush2.bf16.msra.mxu0 %v753
    %832 = vmatprep.subr.bf16.mxu0 0
    %833 = vmatpush2.bf16.msra.mxu0 %v752
    %834 = vmatprep.subr.bf16.mxu0 0
    %835 = vmatpush2.bf16.msra.mxu0 %v751
    %836 = vmatprep.subr.bf16.mxu0 0
    %837 = vmatpush2.bf16.msra.mxu0 %v750
    %838 = vmatprep.mubr.bf16.mxu0 %v536
    %839 = vmatmul.mubr.bf16.gmra.mxu0 %v535
    %v840 = vpop.f32.mrf.mxu0
    %v841 = vadd.f32 %v612, %v840
    %v842 = vpop.f32.mrf.mxu0
    %v843 = vpop.f32.mrf.mxu0
    %v844 = vadd.f32 %v612, %v843
    %v845 = vpop.f32.mrf.mxu0
    %846 = vmatprep.mubr.bf16.mxu0 %v540
    %847 = vmatmul.mubr.bf16.gmra.mxu0 %v539
    %v848 = vpop.f32.mrf.mxu0
    %v849 = vadd.f32 %v612, %v848
    %v850 = vpop.f32.mrf.mxu0
    %v851 = vpop.f32.mrf.mxu0
    %v852 = vadd.f32 %v612, %v851
    %v853 = vpop.f32.mrf.mxu0
    %854 = vdwg.mxu0
    %855 = vmatprep.subr.bf16.mxu0 0
    %856 = vmatpush1.bf16.msra.mxu0 %v765
    %857 = vmatprep.subr.bf16.mxu0 0
    %858 = vmatpush1.bf16.msra.mxu0 %v764
    %859 = vmatprep.subr.bf16.mxu0 0
    %860 = vmatpush1.bf16.msra.mxu0 %v763
    %861 = vmatprep.subr.bf16.mxu0 0
    %862 = vmatpush1.bf16.msra.mxu0 %v762
    %863 = vmatprep.subr.bf16.mxu0 0
    %864 = vmatpush1.bf16.msra.mxu0 %v761
    %865 = vmatprep.subr.bf16.mxu0 0
    %866 = vmatpush1.bf16.msra.mxu0 %v760
    %867 = vmatprep.subr.bf16.mxu0 0
    %868 = vmatpush1.bf16.msra.mxu0 %v759
    %869 = vmatprep.subr.bf16.mxu0 0
    %870 = vmatpush1.bf16.msra.mxu0 %v758
    %871 = vmatprep.subr.bf16.mxu0 0
    %872 = vmatpush2.bf16.msra.mxu0 %v773
    %873 = vmatprep.subr.bf16.mxu0 0
    %874 = vmatpush2.bf16.msra.mxu0 %v772
    %875 = vmatprep.subr.bf16.mxu0 0
    %876 = vmatpush2.bf16.msra.mxu0 %v771
    %877 = vmatprep.subr.bf16.mxu0 0
    %878 = vmatpush2.bf16.msra.mxu0 %v770
    %879 = vmatprep.subr.bf16.mxu0 0
    %880 = vmatpush2.bf16.msra.mxu0 %v769
    %881 = vmatprep.subr.bf16.mxu0 0
    %882 = vmatpush2.bf16.msra.mxu0 %v768
    %883 = vmatprep.subr.bf16.mxu0 0
    %884 = vmatpush2.bf16.msra.mxu0 %v767
    %885 = vmatprep.subr.bf16.mxu0 0
    %886 = vmatpush2.bf16.msra.mxu0 %v766
    %887 = vmatprep.mubr.bf16.mxu0 %v538
    %888 = vmatmul.mubr.bf16.gmra.mxu0 %v537
    %v889 = vpop.f32.mrf.mxu0
    %v890 = vadd.f32 %v841, %v889
    %v891 = vpop.f32.mrf.mxu0
    %v892 = vpop.f32.mrf.mxu0
    %v893 = vadd.f32 %v844, %v892
    %v894 = vpop.f32.mrf.mxu0
    %895 = vmatprep.mubr.bf16.mxu0 %v542
    %896 = vmatmul.mubr.bf16.gmra.mxu0 %v541
    %v897 = vpop.f32.mrf.mxu0
    %v898 = vadd.f32 %v849, %v897
    %v899 = vpop.f32.mrf.mxu0
    %v900 = vpop.f32.mrf.mxu0
    %v901 = vadd.f32 %v852, %v900
    %v902 = vpop.f32.mrf.mxu0
    %903 = vdwg.mxu0
    %v904 = vadd.f32 %v62, %v890
    %v905 = vadd.f32 %v63, %v893
    %v906 = vadd.f32 %v64, %v898
    %v907 = vadd.f32 %v65, %v901
    %908 = vst [vmem:[%s7] sm:$0xff] %v904
    %909 = vst [vmem:[%s7 + $0x8] sm:$0xff] %v905
    %910 = vst [vmem:[%s7 + $0x10] sm:$0xff] %v906
    %911 = vst [vmem:[%s7 + $0x18] sm:$0xff] %v907
    // Predicated region
    $region42: #{pretrain_vit_forward.15} parent=1 // pred_check
      _
    $region43: #{pretrain_vit_forward.15} parent=1 // pred_check_branch
      %913 = sbr.rel (0) target = $region45
    $region44: #{pretrain_vit_forward.15} parent=1 // pred_region
      _
    $region45: #{pretrain_vit_forward.15} parent=1 // pred_fallthru
      _
    // Predicated region
    $region46: #{pretrain_vit_forward.15} parent=1 // pred_check
      _
    $region47: #{pretrain_vit_forward.15} parent=1 // pred_check_branch
      %915 = sbr.rel (0) target = $region49
    $region48: #{pretrain_vit_forward.15} parent=1 // pred_region
      _
    $region49: #{pretrain_vit_forward.15} parent=1 // pred_fallthru
      _
    %916 = vsyncpa [#allocation3], 1
    %917 = vsyncpa [#allocation5], 1

// kernel: pretrain_vit_forward.16
$region0: #{pretrain_vit_forward.16}
  #allocation0 [shape = 'u32[]', space=smem, size = 0x4, offset = 0x4, fixed_abs, tag = 'smem constant byte address 0x4 - core index']
  #allocation1 [shape = 'u32[144,128]{1,0:T(1,128)}', space=vmem, size = 0x12000, scoped, tag = 'internal scratch']
  %s0 = inlined_call_operand.vmem [shape: f32[32,128], index: 0, kind: input, shape index: {}]
  %s1 = inlined_call_operand.vmem [shape: f32[1,128], index: 1, kind: input, shape index: {}]
  %s2 = inlined_call_operand.vmem [shape: f32[1,128], index: 2, kind: input, shape index: {}]
  %s3 = inlined_call_operand.vmem [shape: bf16[128,128], index: 3, kind: input, shape index: {}]
  %s4 = inlined_call_operand.vmem [shape: f32[32,128], index: 4, kind: output, shape index: {}]
  %s5 = sld [smem:[#allocation0]]
  $region26: #{pretrain_vit_forward.16} parent=0
    _
  %s7 = ssub.s32 1, %s5
  %s8 = scalar_select 0, %s7, %s5
  // Predicated region
  $region2: #{pretrain_vit_forward.16} parent=0 // pred_check
    _
  $region3: #{pretrain_vit_forward.16} parent=0 // pred_check_branch
    %10 = sbr.rel (0) target = $region5
  $region4: #{pretrain_vit_forward.16} parent=0 // pred_region
    _
  $region5: #{pretrain_vit_forward.16} parent=0 // pred_fallthru
    _
  // Predicated region
  $region6: #{pretrain_vit_forward.16} parent=0 // pred_check
    _
  $region7: #{pretrain_vit_forward.16} parent=0 // pred_check_branch
    %12 = sbr.rel (0) target = $region9
  $region8: #{pretrain_vit_forward.16} parent=0 // pred_region
    _
  $region9: #{pretrain_vit_forward.16} parent=0 // pred_fallthru
    _
  // Predicated region
  $region10: #{pretrain_vit_forward.16} parent=0 // pred_check
    _
  $region11: #{pretrain_vit_forward.16} parent=0 // pred_check_branch
    %14 = sbr.rel (0) target = $region13
  $region12: #{pretrain_vit_forward.16} parent=0 // pred_region
    _
  $region13: #{pretrain_vit_forward.16} parent=0 // pred_fallthru
    _
  // Predicated region
  $region14: #{pretrain_vit_forward.16} parent=0 // pred_check
    _
  $region15: #{pretrain_vit_forward.16} parent=0 // pred_check_branch
    %16 = sbr.rel (0) target = $region17
  $region16: #{pretrain_vit_forward.16} parent=0 // pred_region
    _
  $region17: #{pretrain_vit_forward.16} parent=0 // pred_fallthru
    _
  %v18 = vld [vmem:[%s0] sm:$0xff]
  %v19 = vld [vmem:[%s0 + $0x8] sm:$0xff]
  %v20 = vld [vmem:[%s0 + $0x10] sm:$0xff]
  %v21 = vld [vmem:[%s0 + $0x18] sm:$0xff]
  %22 = vadd.xlane.f32.xlu0 %v18
  %v23 = vpop.xlane.xlu0 %22
  %24 = vadd.xlane.f32.xlu0 %v19
  %v25 = vpop.xlane.xlu0 %24
  %26 = vadd.xlane.f32.xlu0 %v20
  %v27 = vpop.xlane.xlu0 %26
  %28 = vadd.xlane.f32.xlu0 %v21
  %v29 = vpop.xlane.xlu0 %28
  %v30 = vrcp.pop 128.0
  %v31 = vmul.f32 %v23, %v30
  %v32 = vmul.f32 %v25, %v30
  %v33 = vmul.f32 %v27, %v30
  %v34 = vmul.f32 %v29, %v30
  %v35 = vsub.f32 %v18, %v31
  %v36 = vsub.f32 %v19, %v32
  %v37 = vsub.f32 %v20, %v33
  %v38 = vsub.f32 %v21, %v34
  %v39 = vmul.f32 %v35, %v35
  %v40 = vmul.f32 %v36, %v36
  %v41 = vmul.f32 %v37, %v37
  %v42 = vmul.f32 %v38, %v38
  %43 = vadd.xlane.f32.xlu0 %v39
  %v44 = vpop.xlane.xlu0 %43
  %45 = vadd.xlane.f32.xlu0 %v40
  %v46 = vpop.xlane.xlu0 %45
  %47 = vadd.xlane.f32.xlu0 %v41
  %v48 = vpop.xlane.xlu0 %47
  %49 = vadd.xlane.f32.xlu0 %v42
  %v50 = vpop.xlane.xlu0 %49
  %v51 = vmul.f32 %v44, %v30
  %v52 = vmul.f32 %v46, %v30
  %v53 = vmul.f32 %v48, %v30
  %v54 = vmul.f32 %v50, %v30
  %v55 = vadd.f32 %v51, 1e-05
  %v56 = vadd.f32 %v52, 1e-05
  %v57 = vadd.f32 %v53, 1e-05
  %v58 = vadd.f32 %v54, 1e-05
  %v59 = vrsqrt.pop %v55
  %v60 = vrsqrt.pop %v56
  %v61 = vrsqrt.pop %v57
  %v62 = vrsqrt.pop %v58
  %v63 = vmul.f32 %v35, %v59
  %v64 = vmul.f32 %v36, %v60
  %v65 = vmul.f32 %v37, %v61
  %v66 = vmul.f32 %v38, %v62
  %v67 = vld [vmem:[%s1] sm:$0x1]
  %v69 = vlaneseq
  %v70 = vshrl.u32 %v69, 7
  %v71 = vsub.s32 0, %v70
  %v72 = vrot.slane %v67, %v71
  %v74 = vmul.f32 %v63, %v72
  %v75 = vmul.f32 %v64, %v72
  %v76 = vmul.f32 %v65, %v72
  %v77 = vmul.f32 %v66, %v72
  %v78 = vld [vmem:[%s2] sm:$0x1]
  %v80 = vlaneseq
  %v81 = vshrl.u32 %v80, 7
  %v82 = vsub.s32 0, %v81
  %v83 = vrot.slane %v78, %v82
  %v85 = vadd.f32 %v74, %v83
  %v86 = vadd.f32 %v75, %v83
  %v87 = vadd.f32 %v76, %v83
  %v88 = vadd.f32 %v77, %v83
  %v89 = vpack.c.bf16 %v86, %v85
  %v90 = vpack.c.bf16 %v88, %v87
  %v91 = vld [vmem:[%s3] sm:$0xf]
  %v92 = vld [vmem:[%s3 + $0x4] sm:$0xf]
  %v93 = vld [vmem:[%s3 + $0x8] sm:$0xf]
  %v94 = vld [vmem:[%s3 + $0xc] sm:$0xf]
  %v95 = vld [vmem:[%s3 + $0x10] sm:$0xf]
  %v96 = vld [vmem:[%s3 + $0x14] sm:$0xf]
  %v97 = vld [vmem:[%s3 + $0x18] sm:$0xf]
  %v98 = vld [vmem:[%s3 + $0x1c] sm:$0xf]
  %v99 = vld [vmem:[%s3 + $0x20] sm:$0xf]
  %v100 = vld [vmem:[%s3 + $0x24] sm:$0xf]
  %v101 = vld [vmem:[%s3 + $0x28] sm:$0xf]
  %v102 = vld [vmem:[%s3 + $0x2c] sm:$0xf]
  %v103 = vld [vmem:[%s3 + $0x30] sm:$0xf]
  %v104 = vld [vmem:[%s3 + $0x34] sm:$0xf]
  %v105 = vld [vmem:[%s3 + $0x38] sm:$0xf]
  %v106 = vld [vmem:[%s3 + $0x3c] sm:$0xf]
  %v123 = vunpack.c.l.b16 %v91
  %v124 = vunpack.c.l.b16 %v92
  %v125 = vunpack.c.l.b16 %v93
  %v126 = vunpack.c.l.b16 %v94
  %v127 = vunpack.c.l.b16 %v95
  %v128 = vunpack.c.l.b16 %v96
  %v129 = vunpack.c.l.b16 %v97
  %v130 = vunpack.c.l.b16 %v98
  %v131 = vunpack.c.l.b16 %v99
  %v132 = vunpack.c.l.b16 %v100
  %v133 = vunpack.c.l.b16 %v101
  %v134 = vunpack.c.l.b16 %v102
  %v135 = vunpack.c.l.b16 %v103
  %v136 = vunpack.c.l.b16 %v104
  %v137 = vunpack.c.l.b16 %v105
  %v138 = vunpack.c.l.b16 %v106
  %v139 = vpack.c.b16 %v124, %v123
  %v140 = vpack.c.b16 %v126, %v125
  %v141 = vpack.c.b16 %v128, %v127
  %v142 = vpack.c.b16 %v130, %v129
  %v143 = vpack.c.b16 %v132, %v131
  %v144 = vpack.c.b16 %v134, %v133
  %v145 = vpack.c.b16 %v136, %v135
  %v146 = vpack.c.b16 %v138, %v137
  %155 = vmatprep.subr.bf16.mxu0 0
  %156 = vmatpush1.bf16.msra.mxu0 %v146
  %157 = vmatprep.subr.bf16.mxu0 0
  %158 = vmatpush1.bf16.msra.mxu0 %v145
  %159 = vmatprep.subr.bf16.mxu0 0
  %160 = vmatpush1.bf16.msra.mxu0 %v144
  %161 = vmatprep.subr.bf16.mxu0 0
  %162 = vmatpush1.bf16.msra.mxu0 %v143
  %163 = vmatprep.subr.bf16.mxu0 0
  %164 = vmatpush1.bf16.msra.mxu0 %v142
  %165 = vmatprep.subr.bf16.mxu0 0
  %166 = vmatpush1.bf16.msra.mxu0 %v141
  %167 = vmatprep.subr.bf16.mxu0 0
  %168 = vmatpush1.bf16.msra.mxu0 %v140
  %169 = vmatprep.subr.bf16.mxu0 0
  %170 = vmatpush1.bf16.msra.mxu0 %v139
  %171 = vmatprep.subr.bf16.mxu0 0
  %172 = vmatpush2.bf16.msra.mxu0 0
  %173 = vmatprep.subr.bf16.mxu0 0
  %174 = vmatpush2.bf16.msra.mxu0 0
  %175 = vmatprep.subr.bf16.mxu0 0
  %176 = vmatpush2.bf16.msra.mxu0 0
  %177 = vmatprep.subr.bf16.mxu0 0
  %178 = vmatpush2.bf16.msra.mxu0 0
  %179 = vmatprep.subr.bf16.mxu0 0
  %180 = vmatpush2.bf16.msra.mxu0 0
  %181 = vmatprep.subr.bf16.mxu0 0
  %182 = vmatpush2.bf16.msra.mxu0 0
  %183 = vmatprep.subr.bf16.mxu0 0
  %184 = vmatpush2.bf16.msra.mxu0 0
  %185 = vmatprep.subr.bf16.mxu0 0
  %186 = vmatpush2.bf16.msra.mxu0 0
  %187 = vmatprep.mubr.bf16.mxu0 0
  %188 = vmatmul.mubr.bf16.gmra.mxu0 %v89
  %v189 = vpop.f32.mrf.mxu0
  %v190 = vadd.f32 0.0, %v189
  %v191 = vpop.f32.mrf.mxu0
  %v192 = vpop.f32.mrf.mxu0
  %v193 = vadd.f32 0.0, %v192
  %v194 = vpop.f32.mrf.mxu0
  %195 = vmatprep.mubr.bf16.mxu0 0
  %196 = vmatmul.mubr.bf16.gmra.mxu0 %v90
  %v197 = vpop.f32.mrf.mxu0
  %v198 = vadd.f32 0.0, %v197
  %v199 = vpop.f32.mrf.mxu0
  %v200 = vpop.f32.mrf.mxu0
  %v201 = vadd.f32 0.0, %v200
  %v202 = vpop.f32.mrf.mxu0
  %203 = vdwg.mxu0
  %204 = vst [vmem:[%s4] sm:$0xff] %v190
  %205 = vst [vmem:[%s4 + $0x8] sm:$0xff] %v193
  %206 = vst [vmem:[%s4 + $0x10] sm:$0xff] %v198
  %207 = vst [vmem:[%s4 + $0x18] sm:$0xff] %v201
  // Predicated region
  $region18: #{pretrain_vit_forward.16} parent=0 // pred_check
    _
  $region19: #{pretrain_vit_forward.16} parent=0 // pred_check_branch
    %209 = sbr.rel (0) target = $region21
  $region20: #{pretrain_vit_forward.16} parent=0 // pred_region
    _
  $region21: #{pretrain_vit_forward.16} parent=0 // pred_fallthru
    _
  // Predicated region
  $region22: #{pretrain_vit_forward.16} parent=0 // pred_check
    _
  $region23: #{pretrain_vit_forward.16} parent=0 // pred_check_branch
    %211 = sbr.rel (0) target = $region25
  $region24: #{pretrain_vit_forward.16} parent=0 // pred_region
    _
  $region25: #{pretrain_vit_forward.16} parent=0 // pred_fallthru
    _

// kernel: pretrain_vit_forward.17
$region0: #{pretrain_vit_forward.17}
  #allocation0 [shape = 'u32[]', space=smem, size = 0x4, offset = 0x4, fixed_abs, tag = 'smem constant byte address 0x4 - core index']
  #allocation1 [shape = 'u32[144,128]{1,0:T(1,128)}', space=vmem, size = 0x12000, scoped, tag = 'internal scratch']
  #allocation2 [shape = 'bf16[16,128]{1,0:T(8,128)(2,1)}', space=vmem, size = 0x1000, scoped, tag = 'scratch operand']
  #allocation3 [shape = 'f32[16,128]{1,0:T(8,128)}', space=vmem, size = 0x2000, scoped, tag = 'scratch operand']
  %s0 = inlined_call_operand.vmem [shape: f32[2,16,128], index: 0, kind: input, shape index: {}]
  %s1 = inlined_call_operand.vmem [shape: f32[1,128], index: 1, kind: input, shape index: {}]
  %s2 = inlined_call_operand.hbm [shape: f32[1,128], index: 2, kind: input, shape index: {}]
  %s3 = inlined_call_operand.vmem [shape: bf16[4,128,32], index: 3, kind: input, shape index: {}]
  %s4 = inlined_call_operand.vmem [shape: bf16[4,128,32], index: 4, kind: input, shape index: {}]
  %s5 = inlined_call_operand.vmem [shape: bf16[4,128,32], index: 5, kind: input, shape index: {}]
  %s6 = inlined_call_operand.vmem [shape: bf16[4,32,128], index: 6, kind: input, shape index: {}]
  %s7 = inlined_call_operand.hbm [shape: f32[1,128], index: 7, kind: input, shape index: {}]
  %s8 = inlined_call_operand.vmem [shape: f32[2,16,128], index: 8, kind: output, shape index: {}]
  %s9 = sld [smem:[#allocation0]]
  $region81: #{pretrain_vit_forward.17} parent=0
    _
  %s11 = ssub.s32 1, %s9
  %s12 = scalar_select 0, %s11, %s9
  $region1: #{pretrain_vit_forward.17} parent=0
    #allocation4 [shape = 'u8[512]{0}', space=vmem, size = 0x400, scoped, tag = 'input window, operand 2, single buffered']
    #allocation5 [shape = 's32[2]{0}', space=sflag, size = 0x8, scoped, tag = 'scoped memory for pretrain_vit_forward.17']
    #allocation6 [shape = 'u8[512]{0}', space=vmem, size = 0x400, scoped, tag = 'input window, operand 7, single buffered']
    #allocation7 [shape = 's32[1]{0}', space=sflag, size = 0x4, scoped, tag = 'scoped memory for pretrain_vit_forward.17']
    %13 = vsyncpa [#allocation5], 0
    %14 = vsyncpa [#allocation7], 0
    loop: start=0, step=1, limit=10
    $region2: #{pretrain_vit_forward.17} parent=1 // loop_pre_header
      _
    $region3: #{pretrain_vit_forward.17} parent=1 // loop_header
      %s16 = sphi 0, %s20
      %p17 = scmp.ge.s32.totalorder %s16, 10
      %s23 = sphi 0, %s35
      %s24 = sphi 0, %s31
      %s25 = sphi 0, %s23
      %s26 = sphi 0, %s24
      %s27 = sphi 0, %s25
      %s28 = sphi 0, %s26
      %s38 = sphi 0, %s40
      %s41 = sphi 0, %s38
      %s42 = sphi 0, %s41
      %s58 = sphi 0, %s42
      %s62 = sphi 0, %s62
      %s64 = sphi 0, %s62
      %s65 = sphi 0, %s64
      %s79 = sphi 0, %s65
      %s83 = sphi 0, %s83
      %s85 = sphi 0, %s83
      %s86 = sphi 0, %s85
      %s100 = sphi 0, %s86
      %s106 = sphi 0, %s108
      %s109 = sphi 0, %s106
      %s110 = sphi 0, %s109
      %s126 = sphi 0, %s110
      %s132 = sphi 0, %s134
      %s135 = sphi 0, %s132
      %s136 = sphi 0, %s135
      %s152 = sphi 0, %s136
      %s158 = sphi 0, %s160
      %s161 = sphi 0, %s158
      %s162 = sphi 0, %s161
      %s178 = sphi 0, %s162
      %s184 = sphi 0, %s186
      %s187 = sphi 0, %s184
      %s188 = sphi 0, %s187
      %s204 = sphi 0, %s188
      %s208 = sphi 0, %s208
      %s210 = sphi 0, %s208
      %s211 = sphi 0, %s210
      %s225 = sphi 0, %s211
      %s231 = sphi 0, %s233
      %s234 = sphi 0, %s231
      %s235 = sphi 0, %s234
      %s251 = sphi 0, %s235
    $region4: #{pretrain_vit_forward.17} parent=1 // loop_header_branch
      %19 = sbr.rel (%p17) target = $region8
    $region5: #{pretrain_vit_forward.17} parent=1 // loop_body
      %s21 = ssub.s32 %s16, 1
      %s22 = ssub.s32 %s16, 2
      %s29 = sadd.s32 1, %s24
      %p30 = scmp.ge.s32.totalorder %s29, 4
      %s31 = scalar_select %p30, 0, %s29
      %s32 = sadd.s32 1, %s23
      %s33 = scalar_select %p30, %s32, %s23
      %p34 = scmp.ge.s32.totalorder %s33, 2
      %s35 = scalar_select %p34, 0, %s33
      %s36 = ssub.s32 %s23, %s35
      %p37 = scmp.eq.s32.totalorder %s36, 0
      %s39 = sadd.s32 %s38, 1
      %s40 = scalar_select %p37, %s38, %s39
      %p43 = pneg %p37
      %p44 = scmp.eq.s32.totalorder %s16, 7
      %p45 = por %p43, %p44
      %p46 = scmp.ne.s32.totalorder %s38, %s41
      %p47 = scmp.eq.s32.totalorder %s16, 0
      %p48 = por %p46, %p47
      %p49 = scmp.ne.s32.totalorder %s38, %s41
      %p50 = scmp.eq.s32.totalorder %s21, 7
      %p51 = por %p49, %p50
      %p52 = scmp.ne.s32.totalorder %s41, %s42
      %p53 = scmp.eq.s32.totalorder %s21, 0
      %p54 = por %p52, %p53
      %p55 = scmp.ne.s32.totalorder %s41, %s42
      %p56 = scmp.eq.s32.totalorder %s22, 7
      %p57 = por %p55, %p56
      %p59 = scmp.ne.s32.totalorder %s42, %s58
      %p60 = scmp.eq.s32.totalorder %s22, 0
      %p61 = por %p59, %p60
      %s63 = sadd.s32 %s62, 1
      %p66 = scmp.eq.s32.totalorder %s16, 7
      %p67 = scmp.ne.s32.totalorder %s62, %s64
      %p68 = scmp.eq.s32.totalorder %s16, 0
      %p69 = por %p67, %p68
      %p70 = scmp.ne.s32.totalorder %s62, %s64
      %p71 = scmp.eq.s32.totalorder %s21, 7
      %p72 = por %p70, %p71
      %p73 = scmp.ne.s32.totalorder %s64, %s65
      %p74 = scmp.eq.s32.totalorder %s21, 0
      %p75 = por %p73, %p74
      %p76 = scmp.ne.s32.totalorder %s64, %s65
      %p77 = scmp.eq.s32.totalorder %s22, 7
      %p78 = por %p76, %p77
      %p80 = scmp.ne.s32.totalorder %s65, %s79
      %p81 = scmp.eq.s32.totalorder %s22, 0
      %p82 = por %p80, %p81
      %s84 = sadd.s32 %s83, 1
      %p87 = scmp.eq.s32.totalorder %s16, 7
      %p88 = scmp.ne.s32.totalorder %s83, %s85
      %p89 = scmp.eq.s32.totalorder %s16, 0
      %p90 = por %p88, %p89
      %p91 = scmp.ne.s32.totalorder %s83, %s85
      %p92 = scmp.eq.s32.totalorder %s21, 7
      %p93 = por %p91, %p92
      %p94 = scmp.ne.s32.totalorder %s85, %s86
      %p95 = scmp.eq.s32.totalorder %s21, 0
      %p96 = por %p94, %p95
      %p97 = scmp.ne.s32.totalorder %s85, %s86
      %p98 = scmp.eq.s32.totalorder %s22, 7
      %p99 = por %p97, %p98
      %p101 = scmp.ne.s32.totalorder %s86, %s100
      %p102 = scmp.eq.s32.totalorder %s22, 0
      %p103 = por %p101, %p102
      %s104 = ssub.s32 %s24, %s31
      %p105 = scmp.eq.s32.totalorder %s104, 0
      %s107 = sadd.s32 %s106, 1
      %s108 = scalar_select %p105, %s106, %s107
      %p111 = pneg %p105
      %p112 = scmp.eq.s32.totalorder %s16, 7
      %p113 = por %p111, %p112
      %p114 = scmp.ne.s32.totalorder %s106, %s109
      %p115 = scmp.eq.s32.totalorder %s16, 0
      %p116 = por %p114, %p115
      %p117 = scmp.ne.s32.totalorder %s106, %s109
      %p118 = scmp.eq.s32.totalorder %s21, 7
      %p119 = por %p117, %p118
      %p120 = scmp.ne.s32.totalorder %s109, %s110
      %p121 = scmp.eq.s32.totalorder %s21, 0
      %p122 = por %p120, %p121
      %p123 = scmp.ne.s32.totalorder %s109, %s110
      %p124 = scmp.eq.s32.totalorder %s22, 7
      %p125 = por %p123, %p124
      %p127 = scmp.ne.s32.totalorder %s110, %s126
      %p128 = scmp.eq.s32.totalorder %s22, 0
      %p129 = por %p127, %p128
      %s130 = ssub.s32 %s24, %s31
      %p131 = scmp.eq.s32.totalorder %s130, 0
      %s133 = sadd.s32 %s132, 1
      %s134 = scalar_select %p131, %s132, %s133
      %p137 = pneg %p131
      %p138 = scmp.eq.s32.totalorder %s16, 7
      %p139 = por %p137, %p138
      %p140 = scmp.ne.s32.totalorder %s132, %s135
      %p141 = scmp.eq.s32.totalorder %s16, 0
      %p142 = por %p140, %p141
      %p143 = scmp.ne.s32.totalorder %s132, %s135
      %p144 = scmp.eq.s32.totalorder %s21, 7
      %p145 = por %p143, %p144
      %p146 = scmp.ne.s32.totalorder %s135, %s136
      %p147 = scmp.eq.s32.totalorder %s21, 0
      %p148 = por %p146, %p147
      %p149 = scmp.ne.s32.totalorder %s135, %s136
      %p150 = scmp.eq.s32.totalorder %s22, 7
      %p151 = por %p149, %p150
      %p153 = scmp.ne.s32.totalorder %s136, %s152
      %p154 = scmp.eq.s32.totalorder %s22, 0
      %p155 = por %p153, %p154
      %s156 = ssub.s32 %s24, %s31
      %p157 = scmp.eq.s32.totalorder %s156, 0
      %s159 = sadd.s32 %s158, 1
      %s160 = scalar_select %p157, %s158, %s159
      %p163 = pneg %p157
      %p164 = scmp.eq.s32.totalorder %s16, 7
      %p165 = por %p163, %p164
      %p166 = scmp.ne.s32.totalorder %s158, %s161
      %p167 = scmp.eq.s32.totalorder %s16, 0
      %p168 = por %p166, %p167
      %p169 = scmp.ne.s32.totalorder %s158, %s161
      %p170 = scmp.eq.s32.totalorder %s21, 7
      %p171 = por %p169, %p170
      %p172 = scmp.ne.s32.totalorder %s161, %s162
      %p173 = scmp.eq.s32.totalorder %s21, 0
      %p174 = por %p172, %p173
      %p175 = scmp.ne.s32.totalorder %s161, %s162
      %p176 = scmp.eq.s32.totalorder %s22, 7
      %p177 = por %p175, %p176
      %p179 = scmp.ne.s32.totalorder %s162, %s178
      %p180 = scmp.eq.s32.totalorder %s22, 0
      %p181 = por %p179, %p180
      %s182 = ssub.s32 %s24, %s31
      %p183 = scmp.eq.s32.totalorder %s182, 0
      %s185 = sadd.s32 %s184, 1
      %s186 = scalar_select %p183, %s184, %s185
      %p189 = pneg %p183
      %p190 = scmp.eq.s32.totalorder %s16, 7
      %p191 = por %p189, %p190
      %p192 = scmp.ne.s32.totalorder %s184, %s187
      %p193 = scmp.eq.s32.totalorder %s16, 0
      %p194 = por %p192, %p193
      %p195 = scmp.ne.s32.totalorder %s184, %s187
      %p196 = scmp.eq.s32.totalorder %s21, 7
      %p197 = por %p195, %p196
      %p198 = scmp.ne.s32.totalorder %s187, %s188
      %p199 = scmp.eq.s32.totalorder %s21, 0
      %p200 = por %p198, %p199
      %p201 = scmp.ne.s32.totalorder %s187, %s188
      %p202 = scmp.eq.s32.totalorder %s22, 7
      %p203 = por %p201, %p202
      %p205 = scmp.ne.s32.totalorder %s188, %s204
      %p206 = scmp.eq.s32.totalorder %s22, 0
      %p207 = por %p205, %p206
      %s209 = sadd.s32 %s208, 1
      %p212 = scmp.eq.s32.totalorder %s16, 7
      %p213 = scmp.ne.s32.totalorder %s208, %s210
      %p214 = scmp.eq.s32.totalorder %s16, 0
      %p215 = por %p213, %p214
      %p216 = scmp.ne.s32.totalorder %s208, %s210
      %p217 = scmp.eq.s32.totalorder %s21, 7
      %p218 = por %p216, %p217
      %p219 = scmp.ne.s32.totalorder %s210, %s211
      %p220 = scmp.eq.s32.totalorder %s21, 0
      %p221 = por %p219, %p220
      %p222 = scmp.ne.s32.totalorder %s210, %s211
      %p223 = scmp.eq.s32.totalorder %s22, 7
      %p224 = por %p222, %p223
      %p226 = scmp.ne.s32.totalorder %s211, %s225
      %p227 = scmp.eq.s32.totalorder %s22, 0
      %p228 = por %p226, %p227
      %s229 = ssub.s32 %s23, %s35
      %p230 = scmp.eq.s32.totalorder %s229, 0
      %s232 = sadd.s32 %s231, 1
      %s233 = scalar_select %p230, %s231, %s232
      %p236 = pneg %p230
      %p237 = scmp.eq.s32.totalorder %s16, 7
      %p238 = por %p236, %p237
      %p239 = scmp.ne.s32.totalorder %s231, %s234
      %p240 = scmp.eq.s32.totalorder %s16, 0
      %p241 = por %p239, %p240
      %p242 = scmp.ne.s32.totalorder %s231, %s234
      %p243 = scmp.eq.s32.totalorder %s21, 7
      %p244 = por %p242, %p243
      %p245 = scmp.ne.s32.totalorder %s234, %s235
      %p246 = scmp.eq.s32.totalorder %s21, 0
      %p247 = por %p245, %p246
      %p248 = scmp.ne.s32.totalorder %s234, %s235
      %p249 = scmp.eq.s32.totalorder %s22, 7
      %p250 = por %p248, %p249
      %p252 = scmp.ne.s32.totalorder %s235, %s251
      %p253 = scmp.eq.s32.totalorder %s22, 0
      %p254 = por %p252, %p253
      %p255 = scmp.le.s32.totalorder 1, %s16
      %p256 = scmp.lt.s32.totalorder %s16, 9
      %p257 = pnand %p255, %p256
      %p258 = pneg %p257
      // Predicated region
      $region9: #{pretrain_vit_forward.17} parent=5 // pred_check
        _
      $region10: #{pretrain_vit_forward.17} parent=5 // pred_check_branch
        %260 = sbr.rel (%p257) target = $region12
      $region11: #{pretrain_vit_forward.17} parent=5 // pred_region
        %s261 = ssub.s32 %s16, 1
        // Predicated region
        $region13: #{pretrain_vit_forward.17} parent=11 // pred_check
          %p262 = pneg %p75
        $region14: #{pretrain_vit_forward.17} parent=11 // pred_check_branch
          %264 = sbr.rel (%p262) target = $region16
        $region15: #{pretrain_vit_forward.17} parent=11 // pred_region
          _
        $region16: #{pretrain_vit_forward.17} parent=11 // pred_fallthru
          _
        // Predicated region
        $region17: #{pretrain_vit_forward.17} parent=11 // pred_check
          %p265 = pneg %p96
        $region18: #{pretrain_vit_forward.17} parent=11 // pred_check_branch
          %267 = sbr.rel (%p265) target = $region20
        $region19: #{pretrain_vit_forward.17} parent=11 // pred_region
          %s269 = ssub.s32 16, 16
          %270 = vsyncadd [#allocation5], %s269
          %s272 = sshll.u32 [#allocation4], 4
          %s273 = int_to_ptr.vmem [resolvable:$true] %s272
          %275 = dma.hbm_to_vmem [thread:$0]  %s2, 16, %s273, [#allocation5]
        $region20: #{pretrain_vit_forward.17} parent=11 // pred_fallthru
          _
        // Predicated region
        $region21: #{pretrain_vit_forward.17} parent=11 // pred_check
          %p276 = pneg %p221
        $region22: #{pretrain_vit_forward.17} parent=11 // pred_check_branch
          %278 = sbr.rel (%p276) target = $region24
        $region23: #{pretrain_vit_forward.17} parent=11 // pred_region
          %s280 = ssub.s32 16, 16
          %281 = vsyncadd [#allocation7], %s280
          %s283 = sshll.u32 [#allocation6], 4
          %s284 = int_to_ptr.vmem [resolvable:$true] %s283
          %286 = dma.hbm_to_vmem [thread:$0]  %s7, 16, %s284, [#allocation7]
        $region24: #{pretrain_vit_forward.17} parent=11 // pred_fallthru
          _
      $region12: #{pretrain_vit_forward.17} parent=5 // pred_fallthru
        _
      %p287 = scmp.lt.s32.totalorder %s16, 8
      // Predicated region
      $region25: #{pretrain_vit_forward.17} parent=5 // pred_check
        %p288 = pneg %p287
      $region26: #{pretrain_vit_forward.17} parent=5 // pred_check_branch
        %290 = sbr.rel (%p288) target = $region28
      $region27: #{pretrain_vit_forward.17} parent=5 // pred_region
        // Predicated region
        $region29: #{pretrain_vit_forward.17} parent=27 // pred_check
          %p291 = pneg %p48
        $region30: #{pretrain_vit_forward.17} parent=27 // pred_check_branch
          %293 = sbr.rel (%p291) target = $region32
        $region31: #{pretrain_vit_forward.17} parent=27 // pred_region
          %p294 = scmp.lt.s32.totalorder %s23, 1
          %s295 = scalar_select %p294, %s23, 1
          %s296 = smul.addr %s295, 2
          %s297 = smul.addr %s296, 8
          %s298 = scalar_lea.vmem %s0, %s297
        $region32: #{pretrain_vit_forward.17} parent=27 // pred_fallthru
          _
        // Predicated region
        $region33: #{pretrain_vit_forward.17} parent=27 // pred_check
          %p299 = pneg %p116
        $region34: #{pretrain_vit_forward.17} parent=27 // pred_check_branch
          %301 = sbr.rel (%p299) target = $region36
        $region35: #{pretrain_vit_forward.17} parent=27 // pred_region
          %p302 = scmp.lt.s32.totalorder %s24, 3
          %s303 = scalar_select %p302, %s24, 3
          %s304 = smul.addr %s303, 16
          %s305 = smul.addr %s304, 4
          %s306 = scalar_lea.vmem %s3, %s305
        $region36: #{pretrain_vit_forward.17} parent=27 // pred_fallthru
          _
        // Predicated region
        $region37: #{pretrain_vit_forward.17} parent=27 // pred_check
          %p307 = pneg %p142
        $region38: #{pretrain_vit_forward.17} parent=27 // pred_check_branch
          %309 = sbr.rel (%p307) target = $region40
        $region39: #{pretrain_vit_forward.17} parent=27 // pred_region
          %p310 = scmp.lt.s32.totalorder %s24, 3
          %s311 = scalar_select %p310, %s24, 3
          %s312 = smul.addr %s311, 16
          %s313 = smul.addr %s312, 4
          %s314 = scalar_lea.vmem %s4, %s313
        $region40: #{pretrain_vit_forward.17} parent=27 // pred_fallthru
          _
        // Predicated region
        $region41: #{pretrain_vit_forward.17} parent=27 // pred_check
          %p315 = pneg %p168
        $region42: #{pretrain_vit_forward.17} parent=27 // pred_check_branch
          %317 = sbr.rel (%p315) target = $region44
        $region43: #{pretrain_vit_forward.17} parent=27 // pred_region
          %p318 = scmp.lt.s32.totalorder %s24, 3
          %s319 = scalar_select %p318, %s24, 3
          %s320 = smul.addr %s319, 16
          %s321 = smul.addr %s320, 4
          %s322 = scalar_lea.vmem %s5, %s321
        $region44: #{pretrain_vit_forward.17} parent=27 // pred_fallthru
          _
        // Predicated region
        $region45: #{pretrain_vit_forward.17} parent=27 // pred_check
          %p323 = pneg %p194
        $region46: #{pretrain_vit_forward.17} parent=27 // pred_check_branch
          %325 = sbr.rel (%p323) target = $region48
        $region47: #{pretrain_vit_forward.17} parent=27 // pred_region
          %p326 = scmp.lt.s32.totalorder %s24, 3
          %s327 = scalar_select %p326, %s24, 3
          %s328 = smul.addr %s327, 4
          %s329 = smul.addr %s328, 4
          %s330 = scalar_lea.vmem %s6, %s329
        $region48: #{pretrain_vit_forward.17} parent=27 // pred_fallthru
          _
      $region28: #{pretrain_vit_forward.17} parent=5 // pred_fallthru
        _
      %p331 = scmp.le.s32.totalorder 1, %s16
      %p332 = scmp.lt.s32.totalorder %s16, 9
      %p333 = pnand %p331, %p332
      %p334 = pneg %p333
      // Predicated region
      $region49: #{pretrain_vit_forward.17} parent=5 // pred_check
        _
      $region50: #{pretrain_vit_forward.17} parent=5 // pred_check_branch
        %336 = sbr.rel (%p333) target = $region52
      $region51: #{pretrain_vit_forward.17} parent=5 // pred_region
        %s337 = ssub.s32 %s16, 1
        // Predicated region
        $region53: #{pretrain_vit_forward.17} parent=51 // pred_check
          %p338 = pneg %p96
        $region54: #{pretrain_vit_forward.17} parent=51 // pred_check_branch
          %340 = sbr.rel (%p338) target = $region56
        $region55: #{pretrain_vit_forward.17} parent=51 // pred_region
          %341 = dma.done [#allocation5], 16
        $region56: #{pretrain_vit_forward.17} parent=51 // pred_fallthru
          _
        // Predicated region
        $region57: #{pretrain_vit_forward.17} parent=51 // pred_check
          %p342 = pneg %p221
        $region58: #{pretrain_vit_forward.17} parent=51 // pred_check_branch
          %344 = sbr.rel (%p342) target = $region60
        $region59: #{pretrain_vit_forward.17} parent=51 // pred_region
          %345 = dma.done [#allocation7], 16
        $region60: #{pretrain_vit_forward.17} parent=51 // pred_fallthru
          _
        %p346 = scmp.lt.s32.totalorder %s25, 1
        %s347 = scalar_select %p346, %s25, 1
        %s348 = smul.addr %s347, 2
        %s349 = smul.addr %s348, 8
        %s350 = scalar_lea.vmem %s0, %s349
        %p351 = pneg %p54
        %p352 = pneg %p51
        %p353 = pneg %p75
        %p354 = pneg %p72
        %p355 = pneg %p96
        %p356 = pneg %p93
        %p357 = scmp.lt.s32.totalorder %s26, 3
        %s358 = scalar_select %p357, %s26, 3
        %s359 = smul.addr %s358, 16
        %s360 = smul.addr %s359, 4
        %s361 = scalar_lea.vmem %s3, %s360
        %p362 = pneg %p122
        %p363 = pneg %p119
        %p364 = scmp.lt.s32.totalorder %s26, 3
        %s365 = scalar_select %p364, %s26, 3
        %s366 = smul.addr %s365, 16
        %s367 = smul.addr %s366, 4
        %s368 = scalar_lea.vmem %s4, %s367
        %p369 = pneg %p148
        %p370 = pneg %p145
        %p371 = scmp.lt.s32.totalorder %s26, 3
        %s372 = scalar_select %p371, %s26, 3
        %s373 = smul.addr %s372, 16
        %s374 = smul.addr %s373, 4
        %s375 = scalar_lea.vmem %s5, %s374
        %p376 = pneg %p174
        %p377 = pneg %p171
        %p378 = scmp.lt.s32.totalorder %s26, 3
        %s379 = scalar_select %p378, %s26, 3
        %s380 = smul.addr %s379, 4
        %s381 = smul.addr %s380, 4
        %s382 = scalar_lea.vmem %s6, %s381
        %p383 = pneg %p200
        %p384 = pneg %p197
        %p385 = pneg %p221
        %p386 = pneg %p218
        %p387 = pneg %p247
        %p388 = pneg %p244
        %p389 = scmp.lt.s32.totalorder %s25, 1
        %s390 = scalar_select %p389, %s25, 1
        %s391 = smul.addr %s390, 2
        %s392 = smul.addr %s391, 8
        %s393 = scalar_lea.vmem %s8, %s392
        %p394 = scmp.lt.s32.totalorder %s25, 1
        %s395 = scalar_select %p394, %s25, 1
        %s396 = smul.addr %s395, 2
        %s397 = smul.addr %s396, 8
        %s398 = scalar_lea.vmem %s0, %s397
        %p399 = scmp.lt.s32.totalorder %s26, 3
        %s400 = scalar_select %p399, %s26, 3
        %s401 = smul.addr %s400, 16
        %s402 = smul.addr %s401, 4
        %s403 = scalar_lea.vmem %s3, %s402
        %p404 = scmp.lt.s32.totalorder %s26, 3
        %s405 = scalar_select %p404, %s26, 3
        %s406 = smul.addr %s405, 16
        %s407 = smul.addr %s406, 4
        %s408 = scalar_lea.vmem %s4, %s407
        %p409 = scmp.lt.s32.totalorder %s26, 3
        %s410 = scalar_select %p409, %s26, 3
        %s411 = smul.addr %s410, 16
        %s412 = smul.addr %s411, 4
        %s413 = scalar_lea.vmem %s5, %s412
        %p414 = scmp.lt.s32.totalorder %s26, 3
        %s415 = scalar_select %p414, %s26, 3
        %s416 = smul.addr %s415, 4
        %s417 = smul.addr %s416, 4
        %s418 = scalar_lea.vmem %s6, %s417
        %p419 = scmp.lt.s32.totalorder %s25, 1
        %s420 = scalar_select %p419, %s25, 1
        %s421 = smul.addr %s420, 2
        %s422 = smul.addr %s421, 8
        %s423 = scalar_lea.vmem %s8, %s422
        %p425 = scmp.eq.s32.totalorder %s26, 0
        // Predicated region
        $region61: #{pretrain_vit_forward.17} parent=51 // pred_check
          %p426 = pneg %p425
        $region62: #{pretrain_vit_forward.17} parent=51 // pred_check_branch
          %428 = sbr.rel (%p426) target = $region64
        $region63: #{pretrain_vit_forward.17} parent=51 // pred_region
          %v429 = vld [vmem:[%s398] sm:$0xff]
          %v430 = vld [vmem:[%s398 + $0x8] sm:$0xff]
          %431 = vadd.xlane.f32.xlu0 %v429
          %v432 = vpop.xlane.xlu0 %431
          %433 = vadd.xlane.f32.xlu0 %v430
          %v434 = vpop.xlane.xlu0 %433
          %v435 = vrcp.pop 128.0
          %v436 = vmul.f32 %v432, %v435
          %v437 = vmul.f32 %v434, %v435
          %v438 = vsub.f32 %v429, %v436
          %v439 = vsub.f32 %v430, %v437
          %v440 = vmul.f32 %v438, %v438
          %v441 = vmul.f32 %v439, %v439
          %442 = vadd.xlane.f32.xlu0 %v440
          %v443 = vpop.xlane.xlu0 %442
          %444 = vadd.xlane.f32.xlu0 %v441
          %v445 = vpop.xlane.xlu0 %444
          %v446 = vmul.f32 %v443, %v435
          %v447 = vmul.f32 %v445, %v435
          %v448 = vadd.f32 %v446, 1e-05
          %v449 = vadd.f32 %v447, 1e-05
          %v450 = vrsqrt.pop %v448
          %v451 = vrsqrt.pop %v449
          %v452 = vmul.f32 %v438, %v450
          %v453 = vmul.f32 %v439, %v451
          %v454 = vld [vmem:[%s1] sm:$0x1]
          %v456 = vlaneseq
          %v457 = vshrl.u32 %v456, 7
          %v458 = vsub.s32 0, %v457
          %v459 = vrot.slane %v454, %v458
          %v461 = vmul.f32 %v452, %v459
          %v462 = vmul.f32 %v453, %v459
          %v463 = vld [vmem:[#allocation4] sm:$0x1]
          %v465 = vlaneseq
          %v466 = vshrl.u32 %v465, 7
          %v467 = vsub.s32 0, %v466
          %v468 = vrot.slane %v463, %v467
          %v470 = vadd.f32 %v461, %v468
          %v471 = vadd.f32 %v462, %v468
          %v472 = vpack.c.bf16 %v471, %v470
          %v474 = vunpack.c.l.b16 %v472
          %v475 = vunpack.c.h.b16 %v472
          %v476 = vpack.c.b16 %v474, %v474
          %v477 = vpack.c.b16 %v475, %v475
          %480 = vst [vmem:[#allocation2] sm:$0xf] %v476
          %481 = vst [vmem:[#allocation2 + $0x4] sm:$0xf] %v477
          %v482 = vld [vmem:[#allocation6] sm:$0x1]
          %v484 = vlaneseq
          %v485 = vshrl.u32 %v484, 7
          %v486 = vsub.s32 0, %v485
          %v487 = vrot.slane %v482, %v486
          %v489 = vadd.f32 %v429, %v487
          %v490 = vadd.f32 %v430, %v487
          %491 = vst [vmem:[#allocation3] sm:$0xff] %v489
          %492 = vst [vmem:[#allocation3 + $0x8] sm:$0xff] %v490
        $region64: #{pretrain_vit_forward.17} parent=51 // pred_fallthru
          _
        %v493 = vld [vmem:[#allocation2] sm:$0xf]
        %v494 = vld [vmem:[#allocation2 + $0x4] sm:$0xf]
        %v495 = vld [vmem:[%s403] sm:$0xf]
        %v496 = vld [vmem:[%s403 + $0x4] sm:$0xf]
        %v497 = vld [vmem:[%s403 + $0x8] sm:$0xf]
        %v498 = vld [vmem:[%s403 + $0xc] sm:$0xf]
        %v499 = vld [vmem:[%s403 + $0x10] sm:$0xf]
        %v500 = vld [vmem:[%s403 + $0x14] sm:$0xf]
        %v501 = vld [vmem:[%s403 + $0x18] sm:$0xf]
        %v502 = vld [vmem:[%s403 + $0x1c] sm:$0xf]
        %v503 = vld [vmem:[%s403 + $0x20] sm:$0xf]
        %v504 = vld [vmem:[%s403 + $0x24] sm:$0xf]
        %v505 = vld [vmem:[%s403 + $0x28] sm:$0xf]
        %v506 = vld [vmem:[%s403 + $0x2c] sm:$0xf]
        %v507 = vld [vmem:[%s403 + $0x30] sm:$0xf]
        %v508 = vld [vmem:[%s403 + $0x34] sm:$0xf]
        %v509 = vld [vmem:[%s403 + $0x38] sm:$0xf]
        %v510 = vld [vmem:[%s403 + $0x3c] sm:$0xf]
        %v513 = vunpack.c.l.b16 %v493
        %v514 = vunpack.c.l.b16 %v494
        %v515 = vpack.c.b16 %v514, %v513
        %v533 = vunpack.c.l.b16 %v495
        %v534 = vunpack.c.l.b16 %v496
        %v535 = vunpack.c.l.b16 %v497
        %v536 = vunpack.c.l.b16 %v498
        %v537 = vunpack.c.l.b16 %v499
        %v538 = vunpack.c.l.b16 %v500
        %v539 = vunpack.c.l.b16 %v501
        %v540 = vunpack.c.l.b16 %v502
        %v541 = vunpack.c.l.b16 %v503
        %v542 = vunpack.c.l.b16 %v504
        %v543 = vunpack.c.l.b16 %v505
        %v544 = vunpack.c.l.b16 %v506
        %v545 = vunpack.c.l.b16 %v507
        %v546 = vunpack.c.l.b16 %v508
        %v547 = vunpack.c.l.b16 %v509
        %v548 = vunpack.c.l.b16 %v510
        %v549 = vpack.c.b16 %v534, %v533
        %v550 = vpack.c.b16 %v536, %v535
        %v551 = vpack.c.b16 %v538, %v537
        %v552 = vpack.c.b16 %v540, %v539
        %v553 = vpack.c.b16 %v542, %v541
        %v554 = vpack.c.b16 %v544, %v543
        %v555 = vpack.c.b16 %v546, %v545
        %v556 = vpack.c.b16 %v548, %v547
        %565 = vmatprep.subr.bf16.mxu0 0
        %566 = vmatpush1.bf16.msra.mxu0 %v556
        %567 = vmatprep.subr.bf16.mxu0 0
        %568 = vmatpush1.bf16.msra.mxu0 %v555
        %569 = vmatprep.subr.bf16.mxu0 0
        %570 = vmatpush1.bf16.msra.mxu0 %v554
        %571 = vmatprep.subr.bf16.mxu0 0
        %572 = vmatpush1.bf16.msra.mxu0 %v553
        %573 = vmatprep.subr.bf16.mxu0 0
        %574 = vmatpush1.bf16.msra.mxu0 %v552
        %575 = vmatprep.subr.bf16.mxu0 0
        %576 = vmatpush1.bf16.msra.mxu0 %v551
        %577 = vmatprep.subr.bf16.mxu0 0
        %578 = vmatpush1.bf16.msra.mxu0 %v550
        %579 = vmatprep.subr.bf16.mxu0 0
        %580 = vmatpush1.bf16.msra.mxu0 %v549
        %581 = vmatprep.subr.bf16.mxu0 0
        %582 = vmatpush2.bf16.msra.mxu0 0
        %583 = vmatprep.subr.bf16.mxu0 0
        %584 = vmatpush2.bf16.msra.mxu0 0
        %585 = vmatprep.subr.bf16.mxu0 0
        %586 = vmatpush2.bf16.msra.mxu0 0
        %587 = vmatprep.subr.bf16.mxu0 0
        %588 = vmatpush2.bf16.msra.mxu0 0
        %589 = vmatprep.subr.bf16.mxu0 0
        %590 = vmatpush2.bf16.msra.mxu0 0
        %591 = vmatprep.subr.bf16.mxu0 0
        %592 = vmatpush2.bf16.msra.mxu0 0
        %593 = vmatprep.subr.bf16.mxu0 0
        %594 = vmatpush2.bf16.msra.mxu0 0
        %595 = vmatprep.subr.bf16.mxu0 0
        %596 = vmatpush2.bf16.msra.mxu0 0
        %597 = vmatprep.mubr.bf16.mxu0 0
        %598 = vmatmul.mubr.bf16.gmra.mxu0 %v515
        %v599 = vpop.f32.mrf.mxu0
        %v600 = vadd.f32 0.0, %v599
        %v601 = vpop.f32.mrf.mxu0
        %v602 = vpop.f32.mrf.mxu0
        %v603 = vadd.f32 0.0, %v602
        %v604 = vpop.f32.mrf.mxu0
        %605 = vdwg.mxu0
        %v606 = vld [vmem:[%s408] sm:$0xf]
        %v607 = vld [vmem:[%s408 + $0x4] sm:$0xf]
        %v608 = vld [vmem:[%s408 + $0x8] sm:$0xf]
        %v609 = vld [vmem:[%s408 + $0xc] sm:$0xf]
        %v610 = vld [vmem:[%s408 + $0x10] sm:$0xf]
        %v611 = vld [vmem:[%s408 + $0x14] sm:$0xf]
        %v612 = vld [vmem:[%s408 + $0x18] sm:$0xf]
        %v613 = vld [vmem:[%s408 + $0x1c] sm:$0xf]
        %v614 = vld [vmem:[%s408 + $0x20] sm:$0xf]
        %v615 = vld [vmem:[%s408 + $0x24] sm:$0xf]
        %v616 = vld [vmem:[%s408 + $0x28] sm:$0xf]
        %v617 = vld [vmem:[%s408 + $0x2c] sm:$0xf]
        %v618 = vld [vmem:[%s408 + $0x30] sm:$0xf]
        %v619 = vld [vmem:[%s408 + $0x34] sm:$0xf]
        %v620 = vld [vmem:[%s408 + $0x38] sm:$0xf]
        %v621 = vld [vmem:[%s408 + $0x3c] sm:$0xf]
        %v638 = vunpack.c.l.b16 %v606
        %v639 = vunpack.c.l.b16 %v607
        %v640 = vunpack.c.l.b16 %v608
        %v641 = vunpack.c.l.b16 %v609
        %v642 = vunpack.c.l.b16 %v610
        %v643 = vunpack.c.l.b16 %v611
        %v644 = vunpack.c.l.b16 %v612
        %v645 = vunpack.c.l.b16 %v613
        %v646 = vunpack.c.l.b16 %v614
        %v647 = vunpack.c.l.b16 %v615
        %v648 = vunpack.c.l.b16 %v616
        %v649 = vunpack.c.l.b16 %v617
        %v650 = vunpack.c.l.b16 %v618
        %v651 = vunpack.c.l.b16 %v619
        %v652 = vunpack.c.l.b16 %v620
        %v653 = vunpack.c.l.b16 %v621
        %v654 = vpack.c.b16 %v639, %v638
        %v655 = vpack.c.b16 %v641, %v640
        %v656 = vpack.c.b16 %v643, %v642
        %v657 = vpack.c.b16 %v645, %v644
        %v658 = vpack.c.b16 %v647, %v646
        %v659 = vpack.c.b16 %v649, %v648
        %v660 = vpack.c.b16 %v651, %v650
        %v661 = vpack.c.b16 %v653, %v652
        %670 = vmatprep.subr.bf16.mxu0 0
        %671 = vmatpush1.bf16.msra.mxu0 %v661
        %672 = vmatprep.subr.bf16.mxu0 0
        %673 = vmatpush1.bf16.msra.mxu0 %v660
        %674 = vmatprep.subr.bf16.mxu0 0
        %675 = vmatpush1.bf16.msra.mxu0 %v659
        %676 = vmatprep.subr.bf16.mxu0 0
        %677 = vmatpush1.bf16.msra.mxu0 %v658
        %678 = vmatprep.subr.bf16.mxu0 0
        %679 = vmatpush1.bf16.msra.mxu0 %v657
        %680 = vmatprep.subr.bf16.mxu0 0
        %681 = vmatpush1.bf16.msra.mxu0 %v656
        %682 = vmatprep.subr.bf16.mxu0 0
        %683 = vmatpush1.bf16.msra.mxu0 %v655
        %684 = vmatprep.subr.bf16.mxu0 0
        %685 = vmatpush1.bf16.msra.mxu0 %v654
        %686 = vmatprep.subr.bf16.mxu0 0
        %687 = vmatpush2.bf16.msra.mxu0 0
        %688 = vmatprep.subr.bf16.mxu0 0
        %689 = vmatpush2.bf16.msra.mxu0 0
        %690 = vmatprep.subr.bf16.mxu0 0
        %691 = vmatpush2.bf16.msra.mxu0 0
        %692 = vmatprep.subr.bf16.mxu0 0
        %693 = vmatpush2.bf16.msra.mxu0 0
        %694 = vmatprep.subr.bf16.mxu0 0
        %695 = vmatpush2.bf16.msra.mxu0 0
        %696 = vmatprep.subr.bf16.mxu0 0
        %697 = vmatpush2.bf16.msra.mxu0 0
        %698 = vmatprep.subr.bf16.mxu0 0
        %699 = vmatpush2.bf16.msra.mxu0 0
        %700 = vmatprep.subr.bf16.mxu0 0
        %701 = vmatpush2.bf16.msra.mxu0 0
        %702 = vmatprep.mubr.bf16.mxu0 0
        %703 = vmatmul.mubr.bf16.gmra.mxu0 %v515
        %v704 = vpop.f32.mrf.mxu0
        %v705 = vadd.f32 0.0, %v704
        %v706 = vpop.f32.mrf.mxu0
        %v707 = vpop.f32.mrf.mxu0
        %v708 = vadd.f32 0.0, %v707
        %v709 = vpop.f32.mrf.mxu0
        %710 = vdwg.mxu0
        %v711 = vld [vmem:[%s413] sm:$0xf]
        %v712 = vld [vmem:[%s413 + $0x4] sm:$0xf]
        %v713 = vld [vmem:[%s413 + $0x8] sm:$0xf]
        %v714 = vld [vmem:[%s413 + $0xc] sm:$0xf]
        %v715 = vld [vmem:[%s413 + $0x10] sm:$0xf]
        %v716 = vld [vmem:[%s413 + $0x14] sm:$0xf]
        %v717 = vld [vmem:[%s413 + $0x18] sm:$0xf]
        %v718 = vld [vmem:[%s413 + $0x1c] sm:$0xf]
        %v719 = vld [vmem:[%s413 + $0x20] sm:$0xf]
        %v720 = vld [vmem:[%s413 + $0x24] sm:$0xf]
        %v721 = vld [vmem:[%s413 + $0x28] sm:$0xf]
        %v722 = vld [vmem:[%s413 + $0x2c] sm:$0xf]
        %v723 = vld [vmem:[%s413 + $0x30] sm:$0xf]
        %v724 = vld [vmem:[%s413 + $0x34] sm:$0xf]
        %v725 = vld [vmem:[%s413 + $0x38] sm:$0xf]
        %v726 = vld [vmem:[%s413 + $0x3c] sm:$0xf]
        %v743 = vunpack.c.l.b16 %v711
        %v744 = vunpack.c.l.b16 %v712
        %v745 = vunpack.c.l.b16 %v713
        %v746 = vunpack.c.l.b16 %v714
        %v747 = vunpack.c.l.b16 %v715
        %v748 = vunpack.c.l.b16 %v716
        %v749 = vunpack.c.l.b16 %v717
        %v750 = vunpack.c.l.b16 %v718
        %v751 = vunpack.c.l.b16 %v719
        %v752 = vunpack.c.l.b16 %v720
        %v753 = vunpack.c.l.b16 %v721
        %v754 = vunpack.c.l.b16 %v722
        %v755 = vunpack.c.l.b16 %v723
        %v756 = vunpack.c.l.b16 %v724
        %v757 = vunpack.c.l.b16 %v725
        %v758 = vunpack.c.l.b16 %v726
        %v759 = vpack.c.b16 %v744, %v743
        %v760 = vpack.c.b16 %v746, %v745
        %v761 = vpack.c.b16 %v748, %v747
        %v762 = vpack.c.b16 %v750, %v749
        %v763 = vpack.c.b16 %v752, %v751
        %v764 = vpack.c.b16 %v754, %v753
        %v765 = vpack.c.b16 %v756, %v755
        %v766 = vpack.c.b16 %v758, %v757
        %775 = vmatprep.subr.bf16.mxu0 0
        %776 = vmatpush1.bf16.msra.mxu0 %v766
        %777 = vmatprep.subr.bf16.mxu0 0
        %778 = vmatpush1.bf16.msra.mxu0 %v765
        %779 = vmatprep.subr.bf16.mxu0 0
        %780 = vmatpush1.bf16.msra.mxu0 %v764
        %781 = vmatprep.subr.bf16.mxu0 0
        %782 = vmatpush1.bf16.msra.mxu0 %v763
        %783 = vmatprep.subr.bf16.mxu0 0
        %784 = vmatpush1.bf16.msra.mxu0 %v762
        %785 = vmatprep.subr.bf16.mxu0 0
        %786 = vmatpush1.bf16.msra.mxu0 %v761
        %787 = vmatprep.subr.bf16.mxu0 0
        %788 = vmatpush1.bf16.msra.mxu0 %v760
        %789 = vmatprep.subr.bf16.mxu0 0
        %790 = vmatpush1.bf16.msra.mxu0 %v759
        %791 = vmatprep.subr.bf16.mxu0 0
        %792 = vmatpush2.bf16.msra.mxu0 0
        %793 = vmatprep.subr.bf16.mxu0 0
        %794 = vmatpush2.bf16.msra.mxu0 0
        %795 = vmatprep.subr.bf16.mxu0 0
        %796 = vmatpush2.bf16.msra.mxu0 0
        %797 = vmatprep.subr.bf16.mxu0 0
        %798 = vmatpush2.bf16.msra.mxu0 0
        %799 = vmatprep.subr.bf16.mxu0 0
        %800 = vmatpush2.bf16.msra.mxu0 0
        %801 = vmatprep.subr.bf16.mxu0 0
        %802 = vmatpush2.bf16.msra.mxu0 0
        %803 = vmatprep.subr.bf16.mxu0 0
        %804 = vmatpush2.bf16.msra.mxu0 0
        %805 = vmatprep.subr.bf16.mxu0 0
        %806 = vmatpush2.bf16.msra.mxu0 0
        %807 = vmatprep.mubr.bf16.mxu0 0
        %808 = vmatmul.mubr.bf16.gmra.mxu0 %v515
        %v809 = vpop.f32.mrf.mxu0
        %v810 = vadd.f32 0.0, %v809
        %v811 = vpop.f32.mrf.mxu0
        %v812 = vpop.f32.mrf.mxu0
        %v813 = vadd.f32 0.0, %v812
        %v814 = vpop.f32.mrf.mxu0
        %815 = vdwg.mxu0
        %v816 = vpack.c.bf16 %v603, %v600
        %v817 = vpack.c.bf16 %v708, %v705
        %vm818 = vcmask 261120
        %v820 = vsel %vm818, %v816, 0
        %v823 = vsel %vm818, %v817, 0
        %825 = vmatprep.subr.bf16.mxu0 0
        %826 = vmatpush1.bf16.xpose.msra.mxu0 0
        %827 = vmatprep.subr.bf16.mxu0 0
        %828 = vmatpush1.bf16.xpose.msra.mxu0 0
        %829 = vmatprep.subr.bf16.mxu0 0
        %830 = vmatpush1.bf16.xpose.msra.mxu0 0
        %831 = vmatprep.subr.bf16.mxu0 0
        %832 = vmatpush1.bf16.xpose.msra.mxu0 0
        %833 = vmatprep.subr.bf16.mxu0 0
        %834 = vmatpush1.bf16.xpose.msra.mxu0 0
        %835 = vmatprep.subr.bf16.mxu0 0
        %836 = vmatpush1.bf16.xpose.msra.mxu0 0
        %837 = vmatprep.subr.bf16.mxu0 0
        %838 = vmatpush1.bf16.xpose.msra.mxu0 0
        %839 = vmatprep.subr.bf16.mxu0 0
        %840 = vmatpush1.bf16.xpose.msra.mxu0 %v823
        %841 = vmatprep.subr.bf16.mxu0 0
        %842 = vmatpush2.bf16.xpose.msra.mxu0 0
        %843 = vmatprep.subr.bf16.mxu0 0
        %844 = vmatpush2.bf16.xpose.msra.mxu0 0
        %845 = vmatprep.subr.bf16.mxu0 0
        %846 = vmatpush2.bf16.xpose.msra.mxu0 0
        %847 = vmatprep.subr.bf16.mxu0 0
        %848 = vmatpush2.bf16.xpose.msra.mxu0 0
        %849 = vmatprep.subr.bf16.mxu0 0
        %850 = vmatpush2.bf16.xpose.msra.mxu0 0
        %851 = vmatprep.subr.bf16.mxu0 0
        %852 = vmatpush2.bf16.xpose.msra.mxu0 0
        %853 = vmatprep.subr.bf16.mxu0 0
        %854 = vmatpush2.bf16.xpose.msra.mxu0 0
        %855 = vmatprep.subr.bf16.mxu0 0
        %856 = vmatpush2.bf16.xpose.msra.mxu0 0
        %857 = vmatprep.mubr.bf16.mxu0 0
        %858 = vmatmul.mubr.bf16.gmra.mxu0 %v820
        %v859 = vpop.f32.mrf.mxu0
        %v860 = vadd.f32 0.0, %v859
        %v861 = vpop.f32.mrf.mxu0
        %v862 = vpop.f32.mrf.mxu0
        %v863 = vadd.f32 0.0, %v862
        %v864 = vpop.f32.mrf.mxu0
        %865 = vdwg.mxu0
        %vm866 = vcmask 130048
        %v867 = vsel %vm866, %v860, -inf
        %868 = vmax.xlane.f32.xlu0 %v867
        %v869 = vpop.xlane.xlu0 %868
        %v870 = vsel %vm866, %v863, -inf
        %871 = vmax.xlane.f32.xlu0 %v870
        %v872 = vpop.xlane.xlu0 %871
        %v873 = vsub.f32 %v860, %v869
        %v874 = vsub.f32 %v863, %v872
        %v875 = vmul.f32 %v873, 1.442695
        %v876 = vpow.pop %v875
        %v877 = vmul.f32 %v874, 1.442695
        %v878 = vpow.pop %v877
        %v879 = vsel %vm866, %v876, 0.0
        %880 = vadd.xlane.f32.xlu0 %v879
        %v881 = vpop.xlane.xlu0 %880
        %v882 = vsel %vm866, %v878, 0.0
        %883 = vadd.xlane.f32.xlu0 %v882
        %v884 = vpop.xlane.xlu0 %883
        %v885 = vrcp.pop %v881
        %v886 = vmul.f32 %v876, %v885
        %v887 = vrcp.pop %v884
        %v888 = vmul.f32 %v878, %v887
        %v889 = vpack.c.bf16 %v888, %v886
        %v890 = vpack.c.bf16 %v813, %v810
        %v892 = vsel %vm866, %v889, 0
        %894 = vmatprep.subr.bf16.mxu0 0
        %895 = vmatpush1.bf16.msra.mxu0 0
        %896 = vmatprep.subr.bf16.mxu0 0
        %897 = vmatpush1.bf16.msra.mxu0 0
        %898 = vmatprep.subr.bf16.mxu0 0
        %899 = vmatpush1.bf16.msra.mxu0 0
        %900 = vmatprep.subr.bf16.mxu0 0
        %901 = vmatpush1.bf16.msra.mxu0 0
        %902 = vmatprep.subr.bf16.mxu0 0
        %903 = vmatpush1.bf16.msra.mxu0 0
        %904 = vmatprep.subr.bf16.mxu0 0
        %905 = vmatpush1.bf16.msra.mxu0 0
        %906 = vmatprep.subr.bf16.mxu0 0
        %907 = vmatpush1.bf16.msra.mxu0 0
        %908 = vmatprep.subr.bf16.mxu0 0
        %909 = vmatpush1.bf16.msra.mxu0 %v890
        %910 = vmatprep.subr.bf16.mxu0 0
        %911 = vmatpush2.bf16.msra.mxu0 0
        %912 = vmatprep.subr.bf16.mxu0 0
        %913 = vmatpush2.bf16.msra.mxu0 0
        %914 = vmatprep.subr.bf16.mxu0 0
        %915 = vmatpush2.bf16.msra.mxu0 0
        %916 = vmatprep.subr.bf16.mxu0 0
        %917 = vmatpush2.bf16.msra.mxu0 0
        %918 = vmatprep.subr.bf16.mxu0 0
        %919 = vmatpush2.bf16.msra.mxu0 0
        %920 = vmatprep.subr.bf16.mxu0 0
        %921 = vmatpush2.bf16.msra.mxu0 0
        %922 = vmatprep.subr.bf16.mxu0 0
        %923 = vmatpush2.bf16.msra.mxu0 0
        %924 = vmatprep.subr.bf16.mxu0 0
        %925 = vmatpush2.bf16.msra.mxu0 0
        %926 = vmatprep.mubr.bf16.mxu0 0
        %927 = vmatmul.mubr.bf16.gmra.mxu0 %v892
        %v928 = vpop.f32.mrf.mxu0
        %v929 = vadd.f32 0.0, %v928
        %v930 = vpop.f32.mrf.mxu0
        %v931 = vpop.f32.mrf.mxu0
        %v932 = vadd.f32 0.0, %v931
        %v933 = vpop.f32.mrf.mxu0
        %934 = vdwg.mxu0
        %v935 = vld [vmem:[#allocation3] sm:$0xff]
        %v936 = vld [vmem:[#allocation3 + $0x8] sm:$0xff]
        %v937 = vpack.c.bf16 %v932, %v929
        %v938 = vld [vmem:[%s418] sm:$0xf]
        %v939 = vld [vmem:[%s418 + $0x4] sm:$0xf]
        %v940 = vld [vmem:[%s418 + $0x8] sm:$0xf]
        %v941 = vld [vmem:[%s418 + $0xc] sm:$0xf]
        %v946 = vunpack.c.l.b16 %v938
        %v947 = vunpack.c.l.b16 %v939
        %v948 = vunpack.c.l.b16 %v940
        %v949 = vunpack.c.l.b16 %v941
        %v950 = vpack.c.b16 %v947, %v946
        %v951 = vpack.c.b16 %v949, %v948
        %v955 = vsel %vm818, %v937, 0
        %957 = vmatprep.subr.bf16.mxu0 0
        %958 = vmatpush1.bf16.msra.mxu0 0
        %959 = vmatprep.subr.bf16.mxu0 0
        %960 = vmatpush1.bf16.msra.mxu0 0
        %961 = vmatprep.subr.bf16.mxu0 0
        %962 = vmatpush1.bf16.msra.mxu0 0
        %963 = vmatprep.subr.bf16.mxu0 0
        %964 = vmatpush1.bf16.msra.mxu0 0
        %965 = vmatprep.subr.bf16.mxu0 0
        %966 = vmatpush1.bf16.msra.mxu0 0
        %967 = vmatprep.subr.bf16.mxu0 0
        %968 = vmatpush1.bf16.msra.mxu0 0
        %969 = vmatprep.subr.bf16.mxu0 0
        %970 = vmatpush1.bf16.msra.mxu0 %v951
        %971 = vmatprep.subr.bf16.mxu0 0
        %972 = vmatpush1.bf16.msra.mxu0 %v950
        %973 = vmatprep.subr.bf16.mxu0 0
        %974 = vmatpush2.bf16.msra.mxu0 0
        %975 = vmatprep.subr.bf16.mxu0 0
        %976 = vmatpush2.bf16.msra.mxu0 0
        %977 = vmatprep.subr.bf16.mxu0 0
        %978 = vmatpush2.bf16.msra.mxu0 0
        %979 = vmatprep.subr.bf16.mxu0 0
        %980 = vmatpush2.bf16.msra.mxu0 0
        %981 = vmatprep.subr.bf16.mxu0 0
        %982 = vmatpush2.bf16.msra.mxu0 0
        %983 = vmatprep.subr.bf16.mxu0 0
        %984 = vmatpush2.bf16.msra.mxu0 0
        %985 = vmatprep.subr.bf16.mxu0 0
        %986 = vmatpush2.bf16.msra.mxu0 0
        %987 = vmatprep.subr.bf16.mxu0 0
        %988 = vmatpush2.bf16.msra.mxu0 0
        %989 = vmatprep.mubr.bf16.mxu0 0
        %990 = vmatmul.mubr.bf16.gmra.mxu0 %v955
        %v991 = vpop.f32.mrf.mxu0
        %v992 = vadd.f32 0.0, %v991
        %v993 = vpop.f32.mrf.mxu0
        %v994 = vpop.f32.mrf.mxu0
        %v995 = vadd.f32 0.0, %v994
        %v996 = vpop.f32.mrf.mxu0
        %997 = vdwg.mxu0
        %v998 = vadd.f32 %v935, %v992
        %v999 = vadd.f32 %v936, %v995
        %1000 = vst [vmem:[#allocation3] sm:$0xff] %v998
        %1001 = vst [vmem:[#allocation3 + $0x8] sm:$0xff] %v999
        %p1002 = scmp.eq.s32.totalorder %s26, 3
        // Predicated region
        $region65: #{pretrain_vit_forward.17} parent=51 // pred_check
          %p1003 = pneg %p1002
        $region66: #{pretrain_vit_forward.17} parent=51 // pred_check_branch
          %1005 = sbr.rel (%p1003) target = $region68
        $region67: #{pretrain_vit_forward.17} parent=51 // pred_region
          %v1006 = vld [vmem:[#allocation3] sm:$0xff]
          %v1007 = vld [vmem:[#allocation3 + $0x8] sm:$0xff]
          %1008 = vst [vmem:[%s423] sm:$0xff] %v1006
          %1009 = vst [vmem:[%s423 + $0x8] sm:$0xff] %v1007
        $region68: #{pretrain_vit_forward.17} parent=51 // pred_fallthru
          _
        %p1010 = scmp.lt.s32.totalorder %s25, 1
        %s1011 = scalar_select %p1010, %s25, 1
        %s1012 = smul.addr %s1011, 2
        %s1013 = smul.addr %s1012, 8
        %s1014 = scalar_lea.vmem %s8, %s1013
        // Predicated region
        $region69: #{pretrain_vit_forward.17} parent=51 // pred_check
          %p1015 = pneg %p244
        $region70: #{pretrain_vit_forward.17} parent=51 // pred_check_branch
          %1017 = sbr.rel (%p1015) target = $region72
        $region71: #{pretrain_vit_forward.17} parent=51 // pred_region
          _
        $region72: #{pretrain_vit_forward.17} parent=51 // pred_fallthru
          _
      $region52: #{pretrain_vit_forward.17} parent=5 // pred_fallthru
        _
      %p1018 = scmp.le.s32.totalorder 2, %s16
      // Predicated region
      $region73: #{pretrain_vit_forward.17} parent=5 // pred_check
        %p1019 = pneg %p1018
      $region74: #{pretrain_vit_forward.17} parent=5 // pred_check_branch
        %1021 = sbr.rel (%p1019) target = $region76
      $region75: #{pretrain_vit_forward.17} parent=5 // pred_region
        %s1022 = ssub.s32 %s16, 2
        // Predicated region
        $region77: #{pretrain_vit_forward.17} parent=75 // pred_check
          %p1023 = pneg %p250
        $region78: #{pretrain_vit_forward.17} parent=75 // pred_check_branch
          %1025 = sbr.rel (%p1023) target = $region80
        $region79: #{pretrain_vit_forward.17} parent=75 // pred_region
          %p1026 = scmp.lt.s32.totalorder %s27, 1
          %s1027 = scalar_select %p1026, %s27, 1
          %s1028 = smul.addr %s1027, 2
          %s1029 = smul.addr %s1028, 8
          %s1030 = scalar_lea.vmem %s8, %s1029
        $region80: #{pretrain_vit_forward.17} parent=75 // pred_fallthru
          _
      $region76: #{pretrain_vit_forward.17} parent=5 // pred_fallthru
        _
    $region6: #{pretrain_vit_forward.17} parent=1 // loop_footer
      %s20 = sadd.s32 1, %s16
    $region7: #{pretrain_vit_forward.17} parent=1 // loop_footer_branch
      %15 = sbr.rel target = $region3
    $region8: #{pretrain_vit_forward.17} parent=1 // loop_exit
      _
    %1031 = vsyncpa [#allocation5], 1
    %s1032 = scalar_lea.sflag [#allocation5], 1
    %1033 = vsyncpa %s1032, 1
    %1034 = vsyncpa [#allocation7], 1

// kernel: pretrain_vit_forward.19
$region0: #{pretrain_vit_forward.19}
  #allocation0 [shape = 'u32[]', space=smem, size = 0x4, offset = 0x4, fixed_abs, tag = 'smem constant byte address 0x4 - core index']
  #allocation1 [shape = 'u32[144,128]{1,0:T(1,128)}', space=vmem, size = 0x12000, scoped, tag = 'internal scratch']
  #allocation2 [shape = 'bf16[16,128]{1,0:T(8,128)(2,1)}', space=vmem, size = 0x1000, scoped, tag = 'scratch operand']
  #allocation3 [shape = 'f32[16,128]{1,0:T(8,128)}', space=vmem, size = 0x2000, scoped, tag = 'scratch operand']
  %s0 = inlined_call_operand.vmem [shape: f32[2,16,128], index: 0, kind: input, shape index: {}]
  %s1 = inlined_call_operand.vmem [shape: f32[1,128], index: 1, kind: input, shape index: {}]
  %s2 = inlined_call_operand.vmem [shape: f32[1,128], index: 2, kind: input, shape index: {}]
  %s3 = inlined_call_operand.vmem [shape: bf16[4,128,32], index: 3, kind: input, shape index: {}]
  %s4 = inlined_call_operand.vmem [shape: bf16[4,128,32], index: 4, kind: input, shape index: {}]
  %s5 = inlined_call_operand.vmem [shape: bf16[4,128,32], index: 5, kind: input, shape index: {}]
  %s6 = inlined_call_operand.vmem [shape: bf16[4,32,128], index: 6, kind: input, shape index: {}]
  %s7 = inlined_call_operand.vmem [shape: f32[1,128], index: 7, kind: input, shape index: {}]
  %s8 = inlined_call_operand.vmem [shape: f32[2,16,128], index: 8, kind: output, shape index: {}]
  %s9 = sld [smem:[#allocation0]]
  $region73: #{pretrain_vit_forward.19} parent=0
    _
  %s11 = ssub.s32 1, %s9
  %s12 = scalar_select 0, %s11, %s9
  loop: start=0, step=1, limit=10
  $region2: #{pretrain_vit_forward.19} parent=0 // loop_pre_header
    _
  $region3: #{pretrain_vit_forward.19} parent=0 // loop_header
    %s14 = sphi 0, %s18
    %p15 = scmp.ge.s32.totalorder %s14, 10
    %s21 = sphi 0, %s33
    %s22 = sphi 0, %s29
    %s23 = sphi 0, %s21
    %s24 = sphi 0, %s22
    %s25 = sphi 0, %s23
    %s26 = sphi 0, %s24
    %s36 = sphi 0, %s38
    %s39 = sphi 0, %s36
    %s40 = sphi 0, %s39
    %s56 = sphi 0, %s40
    %s60 = sphi 0, %s60
    %s62 = sphi 0, %s60
    %s63 = sphi 0, %s62
    %s77 = sphi 0, %s63
    %s81 = sphi 0, %s81
    %s83 = sphi 0, %s81
    %s84 = sphi 0, %s83
    %s98 = sphi 0, %s84
    %s104 = sphi 0, %s106
    %s107 = sphi 0, %s104
    %s108 = sphi 0, %s107
    %s124 = sphi 0, %s108
    %s130 = sphi 0, %s132
    %s133 = sphi 0, %s130
    %s134 = sphi 0, %s133
    %s150 = sphi 0, %s134
    %s156 = sphi 0, %s158
    %s159 = sphi 0, %s156
    %s160 = sphi 0, %s159
    %s176 = sphi 0, %s160
    %s182 = sphi 0, %s184
    %s185 = sphi 0, %s182
    %s186 = sphi 0, %s185
    %s202 = sphi 0, %s186
    %s206 = sphi 0, %s206
    %s208 = sphi 0, %s206
    %s209 = sphi 0, %s208
    %s223 = sphi 0, %s209
    %s229 = sphi 0, %s231
    %s232 = sphi 0, %s229
    %s233 = sphi 0, %s232
    %s249 = sphi 0, %s233
  $region4: #{pretrain_vit_forward.19} parent=0 // loop_header_branch
    %17 = sbr.rel (%p15) target = $region8
  $region5: #{pretrain_vit_forward.19} parent=0 // loop_body
    %s19 = ssub.s32 %s14, 1
    %s20 = ssub.s32 %s14, 2
    %s27 = sadd.s32 1, %s22
    %p28 = scmp.ge.s32.totalorder %s27, 4
    %s29 = scalar_select %p28, 0, %s27
    %s30 = sadd.s32 1, %s21
    %s31 = scalar_select %p28, %s30, %s21
    %p32 = scmp.ge.s32.totalorder %s31, 2
    %s33 = scalar_select %p32, 0, %s31
    %s34 = ssub.s32 %s21, %s33
    %p35 = scmp.eq.s32.totalorder %s34, 0
    %s37 = sadd.s32 %s36, 1
    %s38 = scalar_select %p35, %s36, %s37
    %p41 = pneg %p35
    %p42 = scmp.eq.s32.totalorder %s14, 7
    %p43 = por %p41, %p42
    %p44 = scmp.ne.s32.totalorder %s36, %s39
    %p45 = scmp.eq.s32.totalorder %s14, 0
    %p46 = por %p44, %p45
    %p47 = scmp.ne.s32.totalorder %s36, %s39
    %p48 = scmp.eq.s32.totalorder %s19, 7
    %p49 = por %p47, %p48
    %p50 = scmp.ne.s32.totalorder %s39, %s40
    %p51 = scmp.eq.s32.totalorder %s19, 0
    %p52 = por %p50, %p51
    %p53 = scmp.ne.s32.totalorder %s39, %s40
    %p54 = scmp.eq.s32.totalorder %s20, 7
    %p55 = por %p53, %p54
    %p57 = scmp.ne.s32.totalorder %s40, %s56
    %p58 = scmp.eq.s32.totalorder %s20, 0
    %p59 = por %p57, %p58
    %s61 = sadd.s32 %s60, 1
    %p64 = scmp.eq.s32.totalorder %s14, 7
    %p65 = scmp.ne.s32.totalorder %s60, %s62
    %p66 = scmp.eq.s32.totalorder %s14, 0
    %p67 = por %p65, %p66
    %p68 = scmp.ne.s32.totalorder %s60, %s62
    %p69 = scmp.eq.s32.totalorder %s19, 7
    %p70 = por %p68, %p69
    %p71 = scmp.ne.s32.totalorder %s62, %s63
    %p72 = scmp.eq.s32.totalorder %s19, 0
    %p73 = por %p71, %p72
    %p74 = scmp.ne.s32.totalorder %s62, %s63
    %p75 = scmp.eq.s32.totalorder %s20, 7
    %p76 = por %p74, %p75
    %p78 = scmp.ne.s32.totalorder %s63, %s77
    %p79 = scmp.eq.s32.totalorder %s20, 0
    %p80 = por %p78, %p79
    %s82 = sadd.s32 %s81, 1
    %p85 = scmp.eq.s32.totalorder %s14, 7
    %p86 = scmp.ne.s32.totalorder %s81, %s83
    %p87 = scmp.eq.s32.totalorder %s14, 0
    %p88 = por %p86, %p87
    %p89 = scmp.ne.s32.totalorder %s81, %s83
    %p90 = scmp.eq.s32.totalorder %s19, 7
    %p91 = por %p89, %p90
    %p92 = scmp.ne.s32.totalorder %s83, %s84
    %p93 = scmp.eq.s32.totalorder %s19, 0
    %p94 = por %p92, %p93
    %p95 = scmp.ne.s32.totalorder %s83, %s84
    %p96 = scmp.eq.s32.totalorder %s20, 7
    %p97 = por %p95, %p96
    %p99 = scmp.ne.s32.totalorder %s84, %s98
    %p100 = scmp.eq.s32.totalorder %s20, 0
    %p101 = por %p99, %p100
    %s102 = ssub.s32 %s22, %s29
    %p103 = scmp.eq.s32.totalorder %s102, 0
    %s105 = sadd.s32 %s104, 1
    %s106 = scalar_select %p103, %s104, %s105
    %p109 = pneg %p103
    %p110 = scmp.eq.s32.totalorder %s14, 7
    %p111 = por %p109, %p110
    %p112 = scmp.ne.s32.totalorder %s104, %s107
    %p113 = scmp.eq.s32.totalorder %s14, 0
    %p114 = por %p112, %p113
    %p115 = scmp.ne.s32.totalorder %s104, %s107
    %p116 = scmp.eq.s32.totalorder %s19, 7
    %p117 = por %p115, %p116
    %p118 = scmp.ne.s32.totalorder %s107, %s108
    %p119 = scmp.eq.s32.totalorder %s19, 0
    %p120 = por %p118, %p119
    %p121 = scmp.ne.s32.totalorder %s107, %s108
    %p122 = scmp.eq.s32.totalorder %s20, 7
    %p123 = por %p121, %p122
    %p125 = scmp.ne.s32.totalorder %s108, %s124
    %p126 = scmp.eq.s32.totalorder %s20, 0
    %p127 = por %p125, %p126
    %s128 = ssub.s32 %s22, %s29
    %p129 = scmp.eq.s32.totalorder %s128, 0
    %s131 = sadd.s32 %s130, 1
    %s132 = scalar_select %p129, %s130, %s131
    %p135 = pneg %p129
    %p136 = scmp.eq.s32.totalorder %s14, 7
    %p137 = por %p135, %p136
    %p138 = scmp.ne.s32.totalorder %s130, %s133
    %p139 = scmp.eq.s32.totalorder %s14, 0
    %p140 = por %p138, %p139
    %p141 = scmp.ne.s32.totalorder %s130, %s133
    %p142 = scmp.eq.s32.totalorder %s19, 7
    %p143 = por %p141, %p142
    %p144 = scmp.ne.s32.totalorder %s133, %s134
    %p145 = scmp.eq.s32.totalorder %s19, 0
    %p146 = por %p144, %p145
    %p147 = scmp.ne.s32.totalorder %s133, %s134
    %p148 = scmp.eq.s32.totalorder %s20, 7
    %p149 = por %p147, %p148
    %p151 = scmp.ne.s32.totalorder %s134, %s150
    %p152 = scmp.eq.s32.totalorder %s20, 0
    %p153 = por %p151, %p152
    %s154 = ssub.s32 %s22, %s29
    %p155 = scmp.eq.s32.totalorder %s154, 0
    %s157 = sadd.s32 %s156, 1
    %s158 = scalar_select %p155, %s156, %s157
    %p161 = pneg %p155
    %p162 = scmp.eq.s32.totalorder %s14, 7
    %p163 = por %p161, %p162
    %p164 = scmp.ne.s32.totalorder %s156, %s159
    %p165 = scmp.eq.s32.totalorder %s14, 0
    %p166 = por %p164, %p165
    %p167 = scmp.ne.s32.totalorder %s156, %s159
    %p168 = scmp.eq.s32.totalorder %s19, 7
    %p169 = por %p167, %p168
    %p170 = scmp.ne.s32.totalorder %s159, %s160
    %p171 = scmp.eq.s32.totalorder %s19, 0
    %p172 = por %p170, %p171
    %p173 = scmp.ne.s32.totalorder %s159, %s160
    %p174 = scmp.eq.s32.totalorder %s20, 7
    %p175 = por %p173, %p174
    %p177 = scmp.ne.s32.totalorder %s160, %s176
    %p178 = scmp.eq.s32.totalorder %s20, 0
    %p179 = por %p177, %p178
    %s180 = ssub.s32 %s22, %s29
    %p181 = scmp.eq.s32.totalorder %s180, 0
    %s183 = sadd.s32 %s182, 1
    %s184 = scalar_select %p181, %s182, %s183
    %p187 = pneg %p181
    %p188 = scmp.eq.s32.totalorder %s14, 7
    %p189 = por %p187, %p188
    %p190 = scmp.ne.s32.totalorder %s182, %s185
    %p191 = scmp.eq.s32.totalorder %s14, 0
    %p192 = por %p190, %p191
    %p193 = scmp.ne.s32.totalorder %s182, %s185
    %p194 = scmp.eq.s32.totalorder %s19, 7
    %p195 = por %p193, %p194
    %p196 = scmp.ne.s32.totalorder %s185, %s186
    %p197 = scmp.eq.s32.totalorder %s19, 0
    %p198 = por %p196, %p197
    %p199 = scmp.ne.s32.totalorder %s185, %s186
    %p200 = scmp.eq.s32.totalorder %s20, 7
    %p201 = por %p199, %p200
    %p203 = scmp.ne.s32.totalorder %s186, %s202
    %p204 = scmp.eq.s32.totalorder %s20, 0
    %p205 = por %p203, %p204
    %s207 = sadd.s32 %s206, 1
    %p210 = scmp.eq.s32.totalorder %s14, 7
    %p211 = scmp.ne.s32.totalorder %s206, %s208
    %p212 = scmp.eq.s32.totalorder %s14, 0
    %p213 = por %p211, %p212
    %p214 = scmp.ne.s32.totalorder %s206, %s208
    %p215 = scmp.eq.s32.totalorder %s19, 7
    %p216 = por %p214, %p215
    %p217 = scmp.ne.s32.totalorder %s208, %s209
    %p218 = scmp.eq.s32.totalorder %s19, 0
    %p219 = por %p217, %p218
    %p220 = scmp.ne.s32.totalorder %s208, %s209
    %p221 = scmp.eq.s32.totalorder %s20, 7
    %p222 = por %p220, %p221
    %p224 = scmp.ne.s32.totalorder %s209, %s223
    %p225 = scmp.eq.s32.totalorder %s20, 0
    %p226 = por %p224, %p225
    %s227 = ssub.s32 %s21, %s33
    %p228 = scmp.eq.s32.totalorder %s227, 0
    %s230 = sadd.s32 %s229, 1
    %s231 = scalar_select %p228, %s229, %s230
    %p234 = pneg %p228
    %p235 = scmp.eq.s32.totalorder %s14, 7
    %p236 = por %p234, %p235
    %p237 = scmp.ne.s32.totalorder %s229, %s232
    %p238 = scmp.eq.s32.totalorder %s14, 0
    %p239 = por %p237, %p238
    %p240 = scmp.ne.s32.totalorder %s229, %s232
    %p241 = scmp.eq.s32.totalorder %s19, 7
    %p242 = por %p240, %p241
    %p243 = scmp.ne.s32.totalorder %s232, %s233
    %p244 = scmp.eq.s32.totalorder %s19, 0
    %p245 = por %p243, %p244
    %p246 = scmp.ne.s32.totalorder %s232, %s233
    %p247 = scmp.eq.s32.totalorder %s20, 7
    %p248 = por %p246, %p247
    %p250 = scmp.ne.s32.totalorder %s233, %s249
    %p251 = scmp.eq.s32.totalorder %s20, 0
    %p252 = por %p250, %p251
    %p253 = scmp.le.s32.totalorder 1, %s14
    %p254 = scmp.lt.s32.totalorder %s14, 9
    %p255 = pnand %p253, %p254
    %p256 = pneg %p255
    // Predicated region
    $region9: #{pretrain_vit_forward.19} parent=5 // pred_check
      _
    $region10: #{pretrain_vit_forward.19} parent=5 // pred_check_branch
      %258 = sbr.rel (%p255) target = $region12
    $region11: #{pretrain_vit_forward.19} parent=5 // pred_region
      %s259 = ssub.s32 %s14, 1
      // Predicated region
      $region13: #{pretrain_vit_forward.19} parent=11 // pred_check
        %p260 = pneg %p73
      $region14: #{pretrain_vit_forward.19} parent=11 // pred_check_branch
        %262 = sbr.rel (%p260) target = $region16
      $region15: #{pretrain_vit_forward.19} parent=11 // pred_region
        _
      $region16: #{pretrain_vit_forward.19} parent=11 // pred_fallthru
        _
      // Predicated region
      $region17: #{pretrain_vit_forward.19} parent=11 // pred_check
        %p263 = pneg %p94
      $region18: #{pretrain_vit_forward.19} parent=11 // pred_check_branch
        %265 = sbr.rel (%p263) target = $region20
      $region19: #{pretrain_vit_forward.19} parent=11 // pred_region
        _
      $region20: #{pretrain_vit_forward.19} parent=11 // pred_fallthru
        _
      // Predicated region
      $region21: #{pretrain_vit_forward.19} parent=11 // pred_check
        %p266 = pneg %p219
      $region22: #{pretrain_vit_forward.19} parent=11 // pred_check_branch
        %268 = sbr.rel (%p266) target = $region24
      $region23: #{pretrain_vit_forward.19} parent=11 // pred_region
        _
      $region24: #{pretrain_vit_forward.19} parent=11 // pred_fallthru
        _
    $region12: #{pretrain_vit_forward.19} parent=5 // pred_fallthru
      _
    %p269 = scmp.lt.s32.totalorder %s14, 8
    // Predicated region
    $region25: #{pretrain_vit_forward.19} parent=5 // pred_check
      %p270 = pneg %p269
    $region26: #{pretrain_vit_forward.19} parent=5 // pred_check_branch
      %272 = sbr.rel (%p270) target = $region28
    $region27: #{pretrain_vit_forward.19} parent=5 // pred_region
      // Predicated region
      $region29: #{pretrain_vit_forward.19} parent=27 // pred_check
        %p273 = pneg %p46
      $region30: #{pretrain_vit_forward.19} parent=27 // pred_check_branch
        %275 = sbr.rel (%p273) target = $region32
      $region31: #{pretrain_vit_forward.19} parent=27 // pred_region
        %p276 = scmp.lt.s32.totalorder %s21, 1
        %s277 = scalar_select %p276, %s21, 1
        %s278 = smul.addr %s277, 2
        %s279 = smul.addr %s278, 8
        %s280 = scalar_lea.vmem %s0, %s279
      $region32: #{pretrain_vit_forward.19} parent=27 // pred_fallthru
        _
      // Predicated region
      $region33: #{pretrain_vit_forward.19} parent=27 // pred_check
        %p281 = pneg %p114
      $region34: #{pretrain_vit_forward.19} parent=27 // pred_check_branch
        %283 = sbr.rel (%p281) target = $region36
      $region35: #{pretrain_vit_forward.19} parent=27 // pred_region
        %p284 = scmp.lt.s32.totalorder %s22, 3
        %s285 = scalar_select %p284, %s22, 3
        %s286 = smul.addr %s285, 16
        %s287 = smul.addr %s286, 4
        %s288 = scalar_lea.vmem %s3, %s287
      $region36: #{pretrain_vit_forward.19} parent=27 // pred_fallthru
        _
      // Predicated region
      $region37: #{pretrain_vit_forward.19} parent=27 // pred_check
        %p289 = pneg %p140
      $region38: #{pretrain_vit_forward.19} parent=27 // pred_check_branch
        %291 = sbr.rel (%p289) target = $region40
      $region39: #{pretrain_vit_forward.19} parent=27 // pred_region
        %p292 = scmp.lt.s32.totalorder %s22, 3
        %s293 = scalar_select %p292, %s22, 3
        %s294 = smul.addr %s293, 16
        %s295 = smul.addr %s294, 4
        %s296 = scalar_lea.vmem %s4, %s295
      $region40: #{pretrain_vit_forward.19} parent=27 // pred_fallthru
        _
      // Predicated region
      $region41: #{pretrain_vit_forward.19} parent=27 // pred_check
        %p297 = pneg %p166
      $region42: #{pretrain_vit_forward.19} parent=27 // pred_check_branch
        %299 = sbr.rel (%p297) target = $region44
      $region43: #{pretrain_vit_forward.19} parent=27 // pred_region
        %p300 = scmp.lt.s32.totalorder %s22, 3
        %s301 = scalar_select %p300, %s22, 3
        %s302 = smul.addr %s301, 16
        %s303 = smul.addr %s302, 4
        %s304 = scalar_lea.vmem %s5, %s303
      $region44: #{pretrain_vit_forward.19} parent=27 // pred_fallthru
        _
      // Predicated region
      $region45: #{pretrain_vit_forward.19} parent=27 // pred_check
        %p305 = pneg %p192
      $region46: #{pretrain_vit_forward.19} parent=27 // pred_check_branch
        %307 = sbr.rel (%p305) target = $region48
      $region47: #{pretrain_vit_forward.19} parent=27 // pred_region
        %p308 = scmp.lt.s32.totalorder %s22, 3
        %s309 = scalar_select %p308, %s22, 3
        %s310 = smul.addr %s309, 4
        %s311 = smul.addr %s310, 4
        %s312 = scalar_lea.vmem %s6, %s311
      $region48: #{pretrain_vit_forward.19} parent=27 // pred_fallthru
        _
    $region28: #{pretrain_vit_forward.19} parent=5 // pred_fallthru
      _
    %p313 = scmp.le.s32.totalorder 1, %s14
    %p314 = scmp.lt.s32.totalorder %s14, 9
    %p315 = pnand %p313, %p314
    %p316 = pneg %p315
    // Predicated region
    $region49: #{pretrain_vit_forward.19} parent=5 // pred_check
      _
    $region50: #{pretrain_vit_forward.19} parent=5 // pred_check_branch
      %318 = sbr.rel (%p315) target = $region52
    $region51: #{pretrain_vit_forward.19} parent=5 // pred_region
      %s319 = ssub.s32 %s14, 1
      %p320 = scmp.lt.s32.totalorder %s23, 1
      %s321 = scalar_select %p320, %s23, 1
      %s322 = smul.addr %s321, 2
      %s323 = smul.addr %s322, 8
      %s324 = scalar_lea.vmem %s0, %s323
      %p325 = pneg %p52
      %p326 = pneg %p49
      %p327 = pneg %p73
      %p328 = pneg %p70
      %p329 = pneg %p94
      %p330 = pneg %p91
      %p331 = scmp.lt.s32.totalorder %s24, 3
      %s332 = scalar_select %p331, %s24, 3
      %s333 = smul.addr %s332, 16
      %s334 = smul.addr %s333, 4
      %s335 = scalar_lea.vmem %s3, %s334
      %p336 = pneg %p120
      %p337 = pneg %p117
      %p338 = scmp.lt.s32.totalorder %s24, 3
      %s339 = scalar_select %p338, %s24, 3
      %s340 = smul.addr %s339, 16
      %s341 = smul.addr %s340, 4
      %s342 = scalar_lea.vmem %s4, %s341
      %p343 = pneg %p146
      %p344 = pneg %p143
      %p345 = scmp.lt.s32.totalorder %s24, 3
      %s346 = scalar_select %p345, %s24, 3
      %s347 = smul.addr %s346, 16
      %s348 = smul.addr %s347, 4
      %s349 = scalar_lea.vmem %s5, %s348
      %p350 = pneg %p172
      %p351 = pneg %p169
      %p352 = scmp.lt.s32.totalorder %s24, 3
      %s353 = scalar_select %p352, %s24, 3
      %s354 = smul.addr %s353, 4
      %s355 = smul.addr %s354, 4
      %s356 = scalar_lea.vmem %s6, %s355
      %p357 = pneg %p198
      %p358 = pneg %p195
      %p359 = pneg %p219
      %p360 = pneg %p216
      %p361 = pneg %p245
      %p362 = pneg %p242
      %p363 = scmp.lt.s32.totalorder %s23, 1
      %s364 = scalar_select %p363, %s23, 1
      %s365 = smul.addr %s364, 2
      %s366 = smul.addr %s365, 8
      %s367 = scalar_lea.vmem %s8, %s366
      %p368 = scmp.lt.s32.totalorder %s23, 1
      %s369 = scalar_select %p368, %s23, 1
      %s370 = smul.addr %s369, 2
      %s371 = smul.addr %s370, 8
      %s372 = scalar_lea.vmem %s0, %s371
      %p373 = scmp.lt.s32.totalorder %s24, 3
      %s374 = scalar_select %p373, %s24, 3
      %s375 = smul.addr %s374, 16
      %s376 = smul.addr %s375, 4
      %s377 = scalar_lea.vmem %s3, %s376
      %p378 = scmp.lt.s32.totalorder %s24, 3
      %s379 = scalar_select %p378, %s24, 3
      %s380 = smul.addr %s379, 16
      %s381 = smul.addr %s380, 4
      %s382 = scalar_lea.vmem %s4, %s381
      %p383 = scmp.lt.s32.totalorder %s24, 3
      %s384 = scalar_select %p383, %s24, 3
      %s385 = smul.addr %s384, 16
      %s386 = smul.addr %s385, 4
      %s387 = scalar_lea.vmem %s5, %s386
      %p388 = scmp.lt.s32.totalorder %s24, 3
      %s389 = scalar_select %p388, %s24, 3
      %s390 = smul.addr %s389, 4
      %s391 = smul.addr %s390, 4
      %s392 = scalar_lea.vmem %s6, %s391
      %p393 = scmp.lt.s32.totalorder %s23, 1
      %s394 = scalar_select %p393, %s23, 1
      %s395 = smul.addr %s394, 2
      %s396 = smul.addr %s395, 8
      %s397 = scalar_lea.vmem %s8, %s396
      %p399 = scmp.eq.s32.totalorder %s24, 0
      // Predicated region
      $region53: #{pretrain_vit_forward.19} parent=51 // pred_check
        %p400 = pneg %p399
      $region54: #{pretrain_vit_forward.19} parent=51 // pred_check_branch
        %402 = sbr.rel (%p400) target = $region56
      $region55: #{pretrain_vit_forward.19} parent=51 // pred_region
        %v403 = vld [vmem:[%s372] sm:$0xff]
        %v404 = vld [vmem:[%s372 + $0x8] sm:$0xff]
        %405 = vadd.xlane.f32.xlu0 %v403
        %v406 = vpop.xlane.xlu0 %405
        %407 = vadd.xlane.f32.xlu0 %v404
        %v408 = vpop.xlane.xlu0 %407
        %v409 = vrcp.pop 128.0
        %v410 = vmul.f32 %v406, %v409
        %v411 = vmul.f32 %v408, %v409
        %v412 = vsub.f32 %v403, %v410
        %v413 = vsub.f32 %v404, %v411
        %v414 = vmul.f32 %v412, %v412
        %v415 = vmul.f32 %v413, %v413
        %416 = vadd.xlane.f32.xlu0 %v414
        %v417 = vpop.xlane.xlu0 %416
        %418 = vadd.xlane.f32.xlu0 %v415
        %v419 = vpop.xlane.xlu0 %418
        %v420 = vmul.f32 %v417, %v409
        %v421 = vmul.f32 %v419, %v409
        %v422 = vadd.f32 %v420, 1e-05
        %v423 = vadd.f32 %v421, 1e-05
        %v424 = vrsqrt.pop %v422
        %v425 = vrsqrt.pop %v423
        %v426 = vmul.f32 %v412, %v424
        %v427 = vmul.f32 %v413, %v425
        %v428 = vld [vmem:[%s1] sm:$0x1]
        %v430 = vlaneseq
        %v431 = vshrl.u32 %v430, 7
        %v432 = vsub.s32 0, %v431
        %v433 = vrot.slane %v428, %v432
        %v435 = vmul.f32 %v426, %v433
        %v436 = vmul.f32 %v427, %v433
        %v437 = vld [vmem:[%s2] sm:$0x1]
        %v439 = vlaneseq
        %v440 = vshrl.u32 %v439, 7
        %v441 = vsub.s32 0, %v440
        %v442 = vrot.slane %v437, %v441
        %v444 = vadd.f32 %v435, %v442
        %v445 = vadd.f32 %v436, %v442
        %v446 = vpack.c.bf16 %v445, %v444
        %v448 = vunpack.c.l.b16 %v446
        %v449 = vunpack.c.h.b16 %v446
        %v450 = vpack.c.b16 %v448, %v448
        %v451 = vpack.c.b16 %v449, %v449
        %454 = vst [vmem:[#allocation2] sm:$0xf] %v450
        %455 = vst [vmem:[#allocation2 + $0x4] sm:$0xf] %v451
        %v456 = vld [vmem:[%s7] sm:$0x1]
        %v458 = vlaneseq
        %v459 = vshrl.u32 %v458, 7
        %v460 = vsub.s32 0, %v459
        %v461 = vrot.slane %v456, %v460
        %v463 = vadd.f32 %v403, %v461
        %v464 = vadd.f32 %v404, %v461
        %465 = vst [vmem:[#allocation3] sm:$0xff] %v463
        %466 = vst [vmem:[#allocation3 + $0x8] sm:$0xff] %v464
      $region56: #{pretrain_vit_forward.19} parent=51 // pred_fallthru
        _
      %v467 = vld [vmem:[#allocation2] sm:$0xf]
      %v468 = vld [vmem:[#allocation2 + $0x4] sm:$0xf]
      %v469 = vld [vmem:[%s377] sm:$0xf]
      %v470 = vld [vmem:[%s377 + $0x4] sm:$0xf]
      %v471 = vld [vmem:[%s377 + $0x8] sm:$0xf]
      %v472 = vld [vmem:[%s377 + $0xc] sm:$0xf]
      %v473 = vld [vmem:[%s377 + $0x10] sm:$0xf]
      %v474 = vld [vmem:[%s377 + $0x14] sm:$0xf]
      %v475 = vld [vmem:[%s377 + $0x18] sm:$0xf]
      %v476 = vld [vmem:[%s377 + $0x1c] sm:$0xf]
      %v477 = vld [vmem:[%s377 + $0x20] sm:$0xf]
      %v478 = vld [vmem:[%s377 + $0x24] sm:$0xf]
      %v479 = vld [vmem:[%s377 + $0x28] sm:$0xf]
      %v480 = vld [vmem:[%s377 + $0x2c] sm:$0xf]
      %v481 = vld [vmem:[%s377 + $0x30] sm:$0xf]
      %v482 = vld [vmem:[%s377 + $0x34] sm:$0xf]
      %v483 = vld [vmem:[%s377 + $0x38] sm:$0xf]
      %v484 = vld [vmem:[%s377 + $0x3c] sm:$0xf]
      %v487 = vunpack.c.l.b16 %v467
      %v488 = vunpack.c.l.b16 %v468
      %v489 = vpack.c.b16 %v488, %v487
      %v507 = vunpack.c.l.b16 %v469
      %v508 = vunpack.c.l.b16 %v470
      %v509 = vunpack.c.l.b16 %v471
      %v510 = vunpack.c.l.b16 %v472
      %v511 = vunpack.c.l.b16 %v473
      %v512 = vunpack.c.l.b16 %v474
      %v513 = vunpack.c.l.b16 %v475
      %v514 = vunpack.c.l.b16 %v476
      %v515 = vunpack.c.l.b16 %v477
      %v516 = vunpack.c.l.b16 %v478
      %v517 = vunpack.c.l.b16 %v479
      %v518 = vunpack.c.l.b16 %v480
      %v519 = vunpack.c.l.b16 %v481
      %v520 = vunpack.c.l.b16 %v482
      %v521 = vunpack.c.l.b16 %v483
      %v522 = vunpack.c.l.b16 %v484
      %v523 = vpack.c.b16 %v508, %v507
      %v524 = vpack.c.b16 %v510, %v509
      %v525 = vpack.c.b16 %v512, %v511
      %v526 = vpack.c.b16 %v514, %v513
      %v527 = vpack.c.b16 %v516, %v515
      %v528 = vpack.c.b16 %v518, %v517
      %v529 = vpack.c.b16 %v520, %v519
      %v530 = vpack.c.b16 %v522, %v521
      %539 = vmatprep.subr.bf16.mxu0 0
      %540 = vmatpush1.bf16.msra.mxu0 %v530
      %541 = vmatprep.subr.bf16.mxu0 0
      %542 = vmatpush1.bf16.msra.mxu0 %v529
      %543 = vmatprep.subr.bf16.mxu0 0
      %544 = vmatpush1.bf16.msra.mxu0 %v528
      %545 = vmatprep.subr.bf16.mxu0 0
      %546 = vmatpush1.bf16.msra.mxu0 %v527
      %547 = vmatprep.subr.bf16.mxu0 0
      %548 = vmatpush1.bf16.msra.mxu0 %v526
      %549 = vmatprep.subr.bf16.mxu0 0
      %550 = vmatpush1.bf16.msra.mxu0 %v525
      %551 = vmatprep.subr.bf16.mxu0 0
      %552 = vmatpush1.bf16.msra.mxu0 %v524
      %553 = vmatprep.subr.bf16.mxu0 0
      %554 = vmatpush1.bf16.msra.mxu0 %v523
      %555 = vmatprep.subr.bf16.mxu0 0
      %556 = vmatpush2.bf16.msra.mxu0 0
      %557 = vmatprep.subr.bf16.mxu0 0
      %558 = vmatpush2.bf16.msra.mxu0 0
      %559 = vmatprep.subr.bf16.mxu0 0
      %560 = vmatpush2.bf16.msra.mxu0 0
      %561 = vmatprep.subr.bf16.mxu0 0
      %562 = vmatpush2.bf16.msra.mxu0 0
      %563 = vmatprep.subr.bf16.mxu0 0
      %564 = vmatpush2.bf16.msra.mxu0 0
      %565 = vmatprep.subr.bf16.mxu0 0
      %566 = vmatpush2.bf16.msra.mxu0 0
      %567 = vmatprep.subr.bf16.mxu0 0
      %568 = vmatpush2.bf16.msra.mxu0 0
      %569 = vmatprep.subr.bf16.mxu0 0
      %570 = vmatpush2.bf16.msra.mxu0 0
      %571 = vmatprep.mubr.bf16.mxu0 0
      %572 = vmatmul.mubr.bf16.gmra.mxu0 %v489
      %v573 = vpop.f32.mrf.mxu0
      %v574 = vadd.f32 0.0, %v573
      %v575 = vpop.f32.mrf.mxu0
      %v576 = vpop.f32.mrf.mxu0
      %v577 = vadd.f32 0.0, %v576
      %v578 = vpop.f32.mrf.mxu0
      %579 = vdwg.mxu0
      %v580 = vld [vmem:[%s382] sm:$0xf]
      %v581 = vld [vmem:[%s382 + $0x4] sm:$0xf]
      %v582 = vld [vmem:[%s382 + $0x8] sm:$0xf]
      %v583 = vld [vmem:[%s382 + $0xc] sm:$0xf]
      %v584 = vld [vmem:[%s382 + $0x10] sm:$0xf]
      %v585 = vld [vmem:[%s382 + $0x14] sm:$0xf]
      %v586 = vld [vmem:[%s382 + $0x18] sm:$0xf]
      %v587 = vld [vmem:[%s382 + $0x1c] sm:$0xf]
      %v588 = vld [vmem:[%s382 + $0x20] sm:$0xf]
      %v589 = vld [vmem:[%s382 + $0x24] sm:$0xf]
      %v590 = vld [vmem:[%s382 + $0x28] sm:$0xf]
      %v591 = vld [vmem:[%s382 + $0x2c] sm:$0xf]
      %v592 = vld [vmem:[%s382 + $0x30] sm:$0xf]
      %v593 = vld [vmem:[%s382 + $0x34] sm:$0xf]
      %v594 = vld [vmem:[%s382 + $0x38] sm:$0xf]
      %v595 = vld [vmem:[%s382 + $0x3c] sm:$0xf]
      %v612 = vunpack.c.l.b16 %v580
      %v613 = vunpack.c.l.b16 %v581
      %v614 = vunpack.c.l.b16 %v582
      %v615 = vunpack.c.l.b16 %v583
      %v616 = vunpack.c.l.b16 %v584
      %v617 = vunpack.c.l.b16 %v585
      %v618 = vunpack.c.l.b16 %v586
      %v619 = vunpack.c.l.b16 %v587
      %v620 = vunpack.c.l.b16 %v588
      %v621 = vunpack.c.l.b16 %v589
      %v622 = vunpack.c.l.b16 %v590
      %v623 = vunpack.c.l.b16 %v591
      %v624 = vunpack.c.l.b16 %v592
      %v625 = vunpack.c.l.b16 %v593
      %v626 = vunpack.c.l.b16 %v594
      %v627 = vunpack.c.l.b16 %v595
      %v628 = vpack.c.b16 %v613, %v612
      %v629 = vpack.c.b16 %v615, %v614
      %v630 = vpack.c.b16 %v617, %v616
      %v631 = vpack.c.b16 %v619, %v618
      %v632 = vpack.c.b16 %v621, %v620
      %v633 = vpack.c.b16 %v623, %v622
      %v634 = vpack.c.b16 %v625, %v624
      %v635 = vpack.c.b16 %v627, %v626
      %644 = vmatprep.subr.bf16.mxu0 0
      %645 = vmatpush1.bf16.msra.mxu0 %v635
      %646 = vmatprep.subr.bf16.mxu0 0
      %647 = vmatpush1.bf16.msra.mxu0 %v634
      %648 = vmatprep.subr.bf16.mxu0 0
      %649 = vmatpush1.bf16.msra.mxu0 %v633
      %650 = vmatprep.subr.bf16.mxu0 0
      %651 = vmatpush1.bf16.msra.mxu0 %v632
      %652 = vmatprep.subr.bf16.mxu0 0
      %653 = vmatpush1.bf16.msra.mxu0 %v631
      %654 = vmatprep.subr.bf16.mxu0 0
      %655 = vmatpush1.bf16.msra.mxu0 %v630
      %656 = vmatprep.subr.bf16.mxu0 0
      %657 = vmatpush1.bf16.msra.mxu0 %v629
      %658 = vmatprep.subr.bf16.mxu0 0
      %659 = vmatpush1.bf16.msra.mxu0 %v628
      %660 = vmatprep.subr.bf16.mxu0 0
      %661 = vmatpush2.bf16.msra.mxu0 0
      %662 = vmatprep.subr.bf16.mxu0 0
      %663 = vmatpush2.bf16.msra.mxu0 0
      %664 = vmatprep.subr.bf16.mxu0 0
      %665 = vmatpush2.bf16.msra.mxu0 0
      %666 = vmatprep.subr.bf16.mxu0 0
      %667 = vmatpush2.bf16.msra.mxu0 0
      %668 = vmatprep.subr.bf16.mxu0 0
      %669 = vmatpush2.bf16.msra.mxu0 0
      %670 = vmatprep.subr.bf16.mxu0 0
      %671 = vmatpush2.bf16.msra.mxu0 0
      %672 = vmatprep.subr.bf16.mxu0 0
      %673 = vmatpush2.bf16.msra.mxu0 0
      %674 = vmatprep.subr.bf16.mxu0 0
      %675 = vmatpush2.bf16.msra.mxu0 0
      %676 = vmatprep.mubr.bf16.mxu0 0
      %677 = vmatmul.mubr.bf16.gmra.mxu0 %v489
      %v678 = vpop.f32.mrf.mxu0
      %v679 = vadd.f32 0.0, %v678
      %v680 = vpop.f32.mrf.mxu0
      %v681 = vpop.f32.mrf.mxu0
      %v682 = vadd.f32 0.0, %v681
      %v683 = vpop.f32.mrf.mxu0
      %684 = vdwg.mxu0
      %v685 = vld [vmem:[%s387] sm:$0xf]
      %v686 = vld [vmem:[%s387 + $0x4] sm:$0xf]
      %v687 = vld [vmem:[%s387 + $0x8] sm:$0xf]
      %v688 = vld [vmem:[%s387 + $0xc] sm:$0xf]
      %v689 = vld [vmem:[%s387 + $0x10] sm:$0xf]
      %v690 = vld [vmem:[%s387 + $0x14] sm:$0xf]
      %v691 = vld [vmem:[%s387 + $0x18] sm:$0xf]
      %v692 = vld [vmem:[%s387 + $0x1c] sm:$0xf]
      %v693 = vld [vmem:[%s387 + $0x20] sm:$0xf]
      %v694 = vld [vmem:[%s387 + $0x24] sm:$0xf]
      %v695 = vld [vmem:[%s387 + $0x28] sm:$0xf]
      %v696 = vld [vmem:[%s387 + $0x2c] sm:$0xf]
      %v697 = vld [vmem:[%s387 + $0x30] sm:$0xf]
      %v698 = vld [vmem:[%s387 + $0x34] sm:$0xf]
      %v699 = vld [vmem:[%s387 + $0x38] sm:$0xf]
      %v700 = vld [vmem:[%s387 + $0x3c] sm:$0xf]
      %v717 = vunpack.c.l.b16 %v685
      %v718 = vunpack.c.l.b16 %v686
      %v719 = vunpack.c.l.b16 %v687
      %v720 = vunpack.c.l.b16 %v688
      %v721 = vunpack.c.l.b16 %v689
      %v722 = vunpack.c.l.b16 %v690
      %v723 = vunpack.c.l.b16 %v691
      %v724 = vunpack.c.l.b16 %v692
      %v725 = vunpack.c.l.b16 %v693
      %v726 = vunpack.c.l.b16 %v694
      %v727 = vunpack.c.l.b16 %v695
      %v728 = vunpack.c.l.b16 %v696
      %v729 = vunpack.c.l.b16 %v697
      %v730 = vunpack.c.l.b16 %v698
      %v731 = vunpack.c.l.b16 %v699
      %v732 = vunpack.c.l.b16 %v700
      %v733 = vpack.c.b16 %v718, %v717
      %v734 = vpack.c.b16 %v720, %v719
      %v735 = vpack.c.b16 %v722, %v721
      %v736 = vpack.c.b16 %v724, %v723
      %v737 = vpack.c.b16 %v726, %v725
      %v738 = vpack.c.b16 %v728, %v727
      %v739 = vpack.c.b16 %v730, %v729
      %v740 = vpack.c.b16 %v732, %v731
      %749 = vmatprep.subr.bf16.mxu0 0
      %750 = vmatpush1.bf16.msra.mxu0 %v740
      %751 = vmatprep.subr.bf16.mxu0 0
      %752 = vmatpush1.bf16.msra.mxu0 %v739
      %753 = vmatprep.subr.bf16.mxu0 0
      %754 = vmatpush1.bf16.msra.mxu0 %v738
      %755 = vmatprep.subr.bf16.mxu0 0
      %756 = vmatpush1.bf16.msra.mxu0 %v737
      %757 = vmatprep.subr.bf16.mxu0 0
      %758 = vmatpush1.bf16.msra.mxu0 %v736
      %759 = vmatprep.subr.bf16.mxu0 0
      %760 = vmatpush1.bf16.msra.mxu0 %v735
      %761 = vmatprep.subr.bf16.mxu0 0
      %762 = vmatpush1.bf16.msra.mxu0 %v734
      %763 = vmatprep.subr.bf16.mxu0 0
      %764 = vmatpush1.bf16.msra.mxu0 %v733
      %765 = vmatprep.subr.bf16.mxu0 0
      %766 = vmatpush2.bf16.msra.mxu0 0
      %767 = vmatprep.subr.bf16.mxu0 0
      %768 = vmatpush2.bf16.msra.mxu0 0
      %769 = vmatprep.subr.bf16.mxu0 0
      %770 = vmatpush2.bf16.msra.mxu0 0
      %771 = vmatprep.subr.bf16.mxu0 0
      %772 = vmatpush2.bf16.msra.mxu0 0
      %773 = vmatprep.subr.bf16.mxu0 0
      %774 = vmatpush2.bf16.msra.mxu0 0
      %775 = vmatprep.subr.bf16.mxu0 0
      %776 = vmatpush2.bf16.msra.mxu0 0
      %777 = vmatprep.subr.bf16.mxu0 0
      %778 = vmatpush2.bf16.msra.mxu0 0
      %779 = vmatprep.subr.bf16.mxu0 0
      %780 = vmatpush2.bf16.msra.mxu0 0
      %781 = vmatprep.mubr.bf16.mxu0 0
      %782 = vmatmul.mubr.bf16.gmra.mxu0 %v489
      %v783 = vpop.f32.mrf.mxu0
      %v784 = vadd.f32 0.0, %v783
      %v785 = vpop.f32.mrf.mxu0
      %v786 = vpop.f32.mrf.mxu0
      %v787 = vadd.f32 0.0, %v786
      %v788 = vpop.f32.mrf.mxu0
      %789 = vdwg.mxu0
      %v790 = vpack.c.bf16 %v577, %v574
      %v791 = vpack.c.bf16 %v682, %v679
      %vm792 = vcmask 261120
      %v794 = vsel %vm792, %v790, 0
      %v797 = vsel %vm792, %v791, 0
      %799 = vmatprep.subr.bf16.mxu0 0
      %800 = vmatpush1.bf16.xpose.msra.mxu0 0
      %801 = vmatprep.subr.bf16.mxu0 0
      %802 = vmatpush1.bf16.xpose.msra.mxu0 0
      %803 = vmatprep.subr.bf16.mxu0 0
      %804 = vmatpush1.bf16.xpose.msra.mxu0 0
      %805 = vmatprep.subr.bf16.mxu0 0
      %806 = vmatpush1.bf16.xpose.msra.mxu0 0
      %807 = vmatprep.subr.bf16.mxu0 0
      %808 = vmatpush1.bf16.xpose.msra.mxu0 0
      %809 = vmatprep.subr.bf16.mxu0 0
      %810 = vmatpush1.bf16.xpose.msra.mxu0 0
      %811 = vmatprep.subr.bf16.mxu0 0
      %812 = vmatpush1.bf16.xpose.msra.mxu0 0
      %813 = vmatprep.subr.bf16.mxu0 0
      %814 = vmatpush1.bf16.xpose.msra.mxu0 %v797
      %815 = vmatprep.subr.bf16.mxu0 0
      %816 = vmatpush2.bf16.xpose.msra.mxu0 0
      %817 = vmatprep.subr.bf16.mxu0 0
      %818 = vmatpush2.bf16.xpose.msra.mxu0 0
      %819 = vmatprep.subr.bf16.mxu0 0
      %820 = vmatpush2.bf16.xpose.msra.mxu0 0
      %821 = vmatprep.subr.bf16.mxu0 0
      %822 = vmatpush2.bf16.xpose.msra.mxu0 0
      %823 = vmatprep.subr.bf16.mxu0 0
      %824 = vmatpush2.bf16.xpose.msra.mxu0 0
      %825 = vmatprep.subr.bf16.mxu0 0
      %826 = vmatpush2.bf16.xpose.msra.mxu0 0
      %827 = vmatprep.subr.bf16.mxu0 0
      %828 = vmatpush2.bf16.xpose.msra.mxu0 0
      %829 = vmatprep.subr.bf16.mxu0 0
      %830 = vmatpush2.bf16.xpose.msra.mxu0 0
      %831 = vmatprep.mubr.bf16.mxu0 0
      %832 = vmatmul.mubr.bf16.gmra.mxu0 %v794
      %v833 = vpop.f32.mrf.mxu0
      %v834 = vadd.f32 0.0, %v833
      %v835 = vpop.f32.mrf.mxu0
      %v836 = vpop.f32.mrf.mxu0
      %v837 = vadd.f32 0.0, %v836
      %v838 = vpop.f32.mrf.mxu0
      %839 = vdwg.mxu0
      %vm840 = vcmask 130048
      %v841 = vsel %vm840, %v834, -inf
      %842 = vmax.xlane.f32.xlu0 %v841
      %v843 = vpop.xlane.xlu0 %842
      %v844 = vsel %vm840, %v837, -inf
      %845 = vmax.xlane.f32.xlu0 %v844
      %v846 = vpop.xlane.xlu0 %845
      %v847 = vsub.f32 %v834, %v843
      %v848 = vsub.f32 %v837, %v846
      %v849 = vmul.f32 %v847, 1.442695
      %v850 = vpow.pop %v849
      %v851 = vmul.f32 %v848, 1.442695
      %v852 = vpow.pop %v851
      %v853 = vsel %vm840, %v850, 0.0
      %854 = vadd.xlane.f32.xlu0 %v853
      %v855 = vpop.xlane.xlu0 %854
      %v856 = vsel %vm840, %v852, 0.0
      %857 = vadd.xlane.f32.xlu0 %v856
      %v858 = vpop.xlane.xlu0 %857
      %v859 = vrcp.pop %v855
      %v860 = vmul.f32 %v850, %v859
      %v861 = vrcp.pop %v858
      %v862 = vmul.f32 %v852, %v861
      %v863 = vpack.c.bf16 %v862, %v860
      %v864 = vpack.c.bf16 %v787, %v784
      %v866 = vsel %vm840, %v863, 0
      %868 = vmatprep.subr.bf16.mxu0 0
      %869 = vmatpush1.bf16.msra.mxu0 0
      %870 = vmatprep.subr.bf16.mxu0 0
      %871 = vmatpush1.bf16.msra.mxu0 0
      %872 = vmatprep.subr.bf16.mxu0 0
      %873 = vmatpush1.bf16.msra.mxu0 0
      %874 = vmatprep.subr.bf16.mxu0 0
      %875 = vmatpush1.bf16.msra.mxu0 0
      %876 = vmatprep.subr.bf16.mxu0 0
      %877 = vmatpush1.bf16.msra.mxu0 0
      %878 = vmatprep.subr.bf16.mxu0 0
      %879 = vmatpush1.bf16.msra.mxu0 0
      %880 = vmatprep.subr.bf16.mxu0 0
      %881 = vmatpush1.bf16.msra.mxu0 0
      %882 = vmatprep.subr.bf16.mxu0 0
      %883 = vmatpush1.bf16.msra.mxu0 %v864
      %884 = vmatprep.subr.bf16.mxu0 0
      %885 = vmatpush2.bf16.msra.mxu0 0
      %886 = vmatprep.subr.bf16.mxu0 0
      %887 = vmatpush2.bf16.msra.mxu0 0
      %888 = vmatprep.subr.bf16.mxu0 0
      %889 = vmatpush2.bf16.msra.mxu0 0
      %890 = vmatprep.subr.bf16.mxu0 0
      %891 = vmatpush2.bf16.msra.mxu0 0
      %892 = vmatprep.subr.bf16.mxu0 0
      %893 = vmatpush2.bf16.msra.mxu0 0
      %894 = vmatprep.subr.bf16.mxu0 0
      %895 = vmatpush2.bf16.msra.mxu0 0
      %896 = vmatprep.subr.bf16.mxu0 0
      %897 = vmatpush2.bf16.msra.mxu0 0
      %898 = vmatprep.subr.bf16.mxu0 0
      %899 = vmatpush2.bf16.msra.mxu0 0
      %900 = vmatprep.mubr.bf16.mxu0 0
      %901 = vmatmul.mubr.bf16.gmra.mxu0 %v866
      %v902 = vpop.f32.mrf.mxu0
      %v903 = vadd.f32 0.0, %v902
      %v904 = vpop.f32.mrf.mxu0
      %v905 = vpop.f32.mrf.mxu0
      %v906 = vadd.f32 0.0, %v905
      %v907 = vpop.f32.mrf.mxu0
      %908 = vdwg.mxu0
      %v909 = vld [vmem:[#allocation3] sm:$0xff]
      %v910 = vld [vmem:[#allocation3 + $0x8] sm:$0xff]
      %v911 = vpack.c.bf16 %v906, %v903
      %v912 = vld [vmem:[%s392] sm:$0xf]
      %v913 = vld [vmem:[%s392 + $0x4] sm:$0xf]
      %v914 = vld [vmem:[%s392 + $0x8] sm:$0xf]
      %v915 = vld [vmem:[%s392 + $0xc] sm:$0xf]
      %v920 = vunpack.c.l.b16 %v912
      %v921 = vunpack.c.l.b16 %v913
      %v922 = vunpack.c.l.b16 %v914
      %v923 = vunpack.c.l.b16 %v915
      %v924 = vpack.c.b16 %v921, %v920
      %v925 = vpack.c.b16 %v923, %v922
      %v929 = vsel %vm792, %v911, 0
      %931 = vmatprep.subr.bf16.mxu0 0
      %932 = vmatpush1.bf16.msra.mxu0 0
      %933 = vmatprep.subr.bf16.mxu0 0
      %934 = vmatpush1.bf16.msra.mxu0 0
      %935 = vmatprep.subr.bf16.mxu0 0
      %936 = vmatpush1.bf16.msra.mxu0 0
      %937 = vmatprep.subr.bf16.mxu0 0
      %938 = vmatpush1.bf16.msra.mxu0 0
      %939 = vmatprep.subr.bf16.mxu0 0
      %940 = vmatpush1.bf16.msra.mxu0 0
      %941 = vmatprep.subr.bf16.mxu0 0
      %942 = vmatpush1.bf16.msra.mxu0 0
      %943 = vmatprep.subr.bf16.mxu0 0
      %944 = vmatpush1.bf16.msra.mxu0 %v925
      %945 = vmatprep.subr.bf16.mxu0 0
      %946 = vmatpush1.bf16.msra.mxu0 %v924
      %947 = vmatprep.subr.bf16.mxu0 0
      %948 = vmatpush2.bf16.msra.mxu0 0
      %949 = vmatprep.subr.bf16.mxu0 0
      %950 = vmatpush2.bf16.msra.mxu0 0
      %951 = vmatprep.subr.bf16.mxu0 0
      %952 = vmatpush2.bf16.msra.mxu0 0
      %953 = vmatprep.subr.bf16.mxu0 0
      %954 = vmatpush2.bf16.msra.mxu0 0
      %955 = vmatprep.subr.bf16.mxu0 0
      %956 = vmatpush2.bf16.msra.mxu0 0
      %957 = vmatprep.subr.bf16.mxu0 0
      %958 = vmatpush2.bf16.msra.mxu0 0
      %959 = vmatprep.subr.bf16.mxu0 0
      %960 = vmatpush2.bf16.msra.mxu0 0
      %961 = vmatprep.subr.bf16.mxu0 0
      %962 = vmatpush2.bf16.msra.mxu0 0
      %963 = vmatprep.mubr.bf16.mxu0 0
      %964 = vmatmul.mubr.bf16.gmra.mxu0 %v929
      %v965 = vpop.f32.mrf.mxu0
      %v966 = vadd.f32 0.0, %v965
      %v967 = vpop.f32.mrf.mxu0
      %v968 = vpop.f32.mrf.mxu0
      %v969 = vadd.f32 0.0, %v968
      %v970 = vpop.f32.mrf.mxu0
      %971 = vdwg.mxu0
      %v972 = vadd.f32 %v909, %v966
      %v973 = vadd.f32 %v910, %v969
      %974 = vst [vmem:[#allocation3] sm:$0xff] %v972
      %975 = vst [vmem:[#allocation3 + $0x8] sm:$0xff] %v973
      %p976 = scmp.eq.s32.totalorder %s24, 3
      // Predicated region
      $region57: #{pretrain_vit_forward.19} parent=51 // pred_check
        %p977 = pneg %p976
      $region58: #{pretrain_vit_forward.19} parent=51 // pred_check_branch
        %979 = sbr.rel (%p977) target = $region60
      $region59: #{pretrain_vit_forward.19} parent=51 // pred_region
        %v980 = vld [vmem:[#allocation3] sm:$0xff]
        %v981 = vld [vmem:[#allocation3 + $0x8] sm:$0xff]
        %982 = vst [vmem:[%s397] sm:$0xff] %v980
        %983 = vst [vmem:[%s397 + $0x8] sm:$0xff] %v981
      $region60: #{pretrain_vit_forward.19} parent=51 // pred_fallthru
        _
      %p984 = scmp.lt.s32.totalorder %s23, 1
      %s985 = scalar_select %p984, %s23, 1
      %s986 = smul.addr %s985, 2
      %s987 = smul.addr %s986, 8
      %s988 = scalar_lea.vmem %s8, %s987
      // Predicated region
      $region61: #{pretrain_vit_forward.19} parent=51 // pred_check
        %p989 = pneg %p242
      $region62: #{pretrain_vit_forward.19} parent=51 // pred_check_branch
        %991 = sbr.rel (%p989) target = $region64
      $region63: #{pretrain_vit_forward.19} parent=51 // pred_region
        _
      $region64: #{pretrain_vit_forward.19} parent=51 // pred_fallthru
        _
    $region52: #{pretrain_vit_forward.19} parent=5 // pred_fallthru
      _
    %p992 = scmp.le.s32.totalorder 2, %s14
    // Predicated region
    $region65: #{pretrain_vit_forward.19} parent=5 // pred_check
      %p993 = pneg %p992
    $region66: #{pretrain_vit_forward.19} parent=5 // pred_check_branch
      %995 = sbr.rel (%p993) target = $region68
    $region67: #{pretrain_vit_forward.19} parent=5 // pred_region
      %s996 = ssub.s32 %s14, 2
      // Predicated region
      $region69: #{pretrain_vit_forward.19} parent=67 // pred_check
        %p997 = pneg %p248
      $region70: #{pretrain_vit_forward.19} parent=67 // pred_check_branch
        %999 = sbr.rel (%p997) target = $region72
      $region71: #{pretrain_vit_forward.19} parent=67 // pred_region
        %p1000 = scmp.lt.s32.totalorder %s25, 1
        %s1001 = scalar_select %p1000, %s25, 1
        %s1002 = smul.addr %s1001, 2
        %s1003 = smul.addr %s1002, 8
        %s1004 = scalar_lea.vmem %s8, %s1003
      $region72: #{pretrain_vit_forward.19} parent=67 // pred_fallthru
        _
    $region68: #{pretrain_vit_forward.19} parent=5 // pred_fallthru
      _
  $region6: #{pretrain_vit_forward.19} parent=0 // loop_footer
    %s18 = sadd.s32 1, %s14
  $region7: #{pretrain_vit_forward.19} parent=0 // loop_footer_branch
    %13 = sbr.rel target = $region3
  $region8: #{pretrain_vit_forward.19} parent=0 // loop_exit
    _

// kernel: pretrain_vit_forward.18
$region0: #{pretrain_vit_forward.18}
  #allocation0 [shape = 'u32[]', space=smem, size = 0x4, offset = 0x4, fixed_abs, tag = 'smem constant byte address 0x4 - core index']
  #allocation1 [shape = 'u32[144,128]{1,0:T(1,128)}', space=vmem, size = 0x12000, scoped, tag = 'internal scratch']
  %s0 = inlined_call_operand.vmem [shape: f32[32,128], index: 0, kind: input, shape index: {}]
  %s1 = inlined_call_operand.vmem [shape: f32[1,128], index: 1, kind: input, shape index: {}]
  %s2 = inlined_call_operand.vmem [shape: f32[1,128], index: 2, kind: input, shape index: {}]
  %s3 = inlined_call_operand.vmem [shape: bf16[128,512], index: 3, kind: input, shape index: {}]
  %s4 = inlined_call_operand.vmem [shape: f32[1,512], index: 4, kind: input, shape index: {}]
  %s5 = inlined_call_operand.vmem [shape: bf16[512,128], index: 5, kind: input, shape index: {}]
  %s6 = inlined_call_operand.vmem [shape: f32[1,128], index: 6, kind: input, shape index: {}]
  %s7 = inlined_call_operand.vmem [shape: f32[32,128], index: 7, kind: output, shape index: {}]
  %s8 = sld [smem:[#allocation0]]
  $region38: #{pretrain_vit_forward.18} parent=0
    _
  %s10 = ssub.s32 1, %s8
  %s11 = scalar_select 0, %s10, %s8
  // Predicated region
  $region2: #{pretrain_vit_forward.18} parent=0 // pred_check
    _
  $region3: #{pretrain_vit_forward.18} parent=0 // pred_check_branch
    %13 = sbr.rel (0) target = $region5
  $region4: #{pretrain_vit_forward.18} parent=0 // pred_region
    _
  $region5: #{pretrain_vit_forward.18} parent=0 // pred_fallthru
    _
  // Predicated region
  $region6: #{pretrain_vit_forward.18} parent=0 // pred_check
    _
  $region7: #{pretrain_vit_forward.18} parent=0 // pred_check_branch
    %15 = sbr.rel (0) target = $region9
  $region8: #{pretrain_vit_forward.18} parent=0 // pred_region
    _
  $region9: #{pretrain_vit_forward.18} parent=0 // pred_fallthru
    _
  // Predicated region
  $region10: #{pretrain_vit_forward.18} parent=0 // pred_check
    _
  $region11: #{pretrain_vit_forward.18} parent=0 // pred_check_branch
    %17 = sbr.rel (0) target = $region13
  $region12: #{pretrain_vit_forward.18} parent=0 // pred_region
    _
  $region13: #{pretrain_vit_forward.18} parent=0 // pred_fallthru
    _
  // Predicated region
  $region14: #{pretrain_vit_forward.18} parent=0 // pred_check
    _
  $region15: #{pretrain_vit_forward.18} parent=0 // pred_check_branch
    %19 = sbr.rel (0) target = $region17
  $region16: #{pretrain_vit_forward.18} parent=0 // pred_region
    _
  $region17: #{pretrain_vit_forward.18} parent=0 // pred_fallthru
    _
  // Predicated region
  $region18: #{pretrain_vit_forward.18} parent=0 // pred_check
    _
  $region19: #{pretrain_vit_forward.18} parent=0 // pred_check_branch
    %21 = sbr.rel (0) target = $region21
  $region20: #{pretrain_vit_forward.18} parent=0 // pred_region
    _
  $region21: #{pretrain_vit_forward.18} parent=0 // pred_fallthru
    _
  // Predicated region
  $region22: #{pretrain_vit_forward.18} parent=0 // pred_check
    _
  $region23: #{pretrain_vit_forward.18} parent=0 // pred_check_branch
    %23 = sbr.rel (0) target = $region25
  $region24: #{pretrain_vit_forward.18} parent=0 // pred_region
    _
  $region25: #{pretrain_vit_forward.18} parent=0 // pred_fallthru
    _
  // Predicated region
  $region26: #{pretrain_vit_forward.18} parent=0 // pred_check
    _
  $region27: #{pretrain_vit_forward.18} parent=0 // pred_check_branch
    %25 = sbr.rel (0) target = $region29
  $region28: #{pretrain_vit_forward.18} parent=0 // pred_region
    _
  $region29: #{pretrain_vit_forward.18} parent=0 // pred_fallthru
    _
  %v27 = vld [vmem:[%s0] sm:$0xff]
  %v28 = vld [vmem:[%s0 + $0x8] sm:$0xff]
  %v29 = vld [vmem:[%s0 + $0x10] sm:$0xff]
  %v30 = vld [vmem:[%s0 + $0x18] sm:$0xff]
  %31 = vadd.xlane.f32.xlu0 %v27
  %v32 = vpop.xlane.xlu0 %31
  %33 = vadd.xlane.f32.xlu0 %v28
  %v34 = vpop.xlane.xlu0 %33
  %35 = vadd.xlane.f32.xlu0 %v29
  %v36 = vpop.xlane.xlu0 %35
  %37 = vadd.xlane.f32.xlu0 %v30
  %v38 = vpop.xlane.xlu0 %37
  %v39 = vrcp.pop 128.0
  %v40 = vmul.f32 %v32, %v39
  %v41 = vmul.f32 %v34, %v39
  %v42 = vmul.f32 %v36, %v39
  %v43 = vmul.f32 %v38, %v39
  %v44 = vsub.f32 %v27, %v40
  %v45 = vsub.f32 %v28, %v41
  %v46 = vsub.f32 %v29, %v42
  %v47 = vsub.f32 %v30, %v43
  %v48 = vmul.f32 %v44, %v44
  %v49 = vmul.f32 %v45, %v45
  %v50 = vmul.f32 %v46, %v46
  %v51 = vmul.f32 %v47, %v47
  %52 = vadd.xlane.f32.xlu0 %v48
  %v53 = vpop.xlane.xlu0 %52
  %54 = vadd.xlane.f32.xlu0 %v49
  %v55 = vpop.xlane.xlu0 %54
  %56 = vadd.xlane.f32.xlu0 %v50
  %v57 = vpop.xlane.xlu0 %56
  %58 = vadd.xlane.f32.xlu0 %v51
  %v59 = vpop.xlane.xlu0 %58
  %v60 = vmul.f32 %v53, %v39
  %v61 = vmul.f32 %v55, %v39
  %v62 = vmul.f32 %v57, %v39
  %v63 = vmul.f32 %v59, %v39
  %v64 = vadd.f32 %v60, 1e-05
  %v65 = vadd.f32 %v61, 1e-05
  %v66 = vadd.f32 %v62, 1e-05
  %v67 = vadd.f32 %v63, 1e-05
  %v68 = vrsqrt.pop %v64
  %v69 = vrsqrt.pop %v65
  %v70 = vrsqrt.pop %v66
  %v71 = vrsqrt.pop %v67
  %v72 = vmul.f32 %v44, %v68
  %v73 = vmul.f32 %v45, %v69
  %v74 = vmul.f32 %v46, %v70
  %v75 = vmul.f32 %v47, %v71
  %v76 = vld [vmem:[%s1] sm:$0x1]
  %v78 = vlaneseq
  %v79 = vshrl.u32 %v78, 7
  %v80 = vsub.s32 0, %v79
  %v81 = vrot.slane %v76, %v80
  %v83 = vmul.f32 %v72, %v81
  %v84 = vmul.f32 %v73, %v81
  %v85 = vmul.f32 %v74, %v81
  %v86 = vmul.f32 %v75, %v81
  %v87 = vld [vmem:[%s2] sm:$0x1]
  %v89 = vlaneseq
  %v90 = vshrl.u32 %v89, 7
  %v91 = vsub.s32 0, %v90
  %v92 = vrot.slane %v87, %v91
  %v94 = vadd.f32 %v83, %v92
  %v95 = vadd.f32 %v84, %v92
  %v96 = vadd.f32 %v85, %v92
  %v97 = vadd.f32 %v86, %v92
  %v98 = vpack.c.bf16 %v95, %v94
  %v99 = vpack.c.bf16 %v97, %v96
  %v100 = vld [vmem:[%s3] sm:$0xff]
  %v101 = vld [vmem:[%s3 + $0x8] sm:$0xff]
  %v102 = vld [vmem:[%s3 + $0x10] sm:$0xff]
  %v103 = vld [vmem:[%s3 + $0x18] sm:$0xff]
  %v104 = vld [vmem:[%s3 + $0x20] sm:$0xff]
  %v105 = vld [vmem:[%s3 + $0x28] sm:$0xff]
  %v106 = vld [vmem:[%s3 + $0x30] sm:$0xff]
  %v107 = vld [vmem:[%s3 + $0x38] sm:$0xff]
  %v108 = vld [vmem:[%s3 + $0x40] sm:$0xff]
  %v109 = vld [vmem:[%s3 + $0x48] sm:$0xff]
  %v110 = vld [vmem:[%s3 + $0x50] sm:$0xff]
  %v111 = vld [vmem:[%s3 + $0x58] sm:$0xff]
  %v112 = vld [vmem:[%s3 + $0x60] sm:$0xff]
  %v113 = vld [vmem:[%s3 + $0x68] sm:$0xff]
  %v114 = vld [vmem:[%s3 + $0x70] sm:$0xff]
  %v115 = vld [vmem:[%s3 + $0x78] sm:$0xff]
  %v116 = vld [vmem:[%s3 + $0x80] sm:$0xff]
  %v117 = vld [vmem:[%s3 + $0x88] sm:$0xff]
  %v118 = vld [vmem:[%s3 + $0x90] sm:$0xff]
  %v119 = vld [vmem:[%s3 + $0x98] sm:$0xff]
  %v120 = vld [vmem:[%s3 + $0xa0] sm:$0xff]
  %v121 = vld [vmem:[%s3 + $0xa8] sm:$0xff]
  %v122 = vld [vmem:[%s3 + $0xb0] sm:$0xff]
  %v123 = vld [vmem:[%s3 + $0xb8] sm:$0xff]
  %v124 = vld [vmem:[%s3 + $0xc0] sm:$0xff]
  %v125 = vld [vmem:[%s3 + $0xc8] sm:$0xff]
  %v126 = vld [vmem:[%s3 + $0xd0] sm:$0xff]
  %v127 = vld [vmem:[%s3 + $0xd8] sm:$0xff]
  %v128 = vld [vmem:[%s3 + $0xe0] sm:$0xff]
  %v129 = vld [vmem:[%s3 + $0xe8] sm:$0xff]
  %v130 = vld [vmem:[%s3 + $0xf0] sm:$0xff]
  %v131 = vld [vmem:[%s3 + $0xf8] sm:$0xff]
  %v132 = vld [vmem:[%s4] sm:$0xf]
  %v134 = vlaneseq
  %v135 = vshrl.u32 %v134, 7
  %v136 = vsub.s32 0, %v135
  %v137 = vrot.slane %v132, %v136
  %v138 = vlaneseq
  %v139 = vshrl.u32 %v138, 7
  %v140 = vsub.s32 1, %v139
  %v141 = vrot.slane %v132, %v140
  %v142 = vlaneseq
  %v143 = vshrl.u32 %v142, 7
  %v144 = vsub.s32 2, %v143
  %v145 = vrot.slane %v132, %v144
  %v146 = vlaneseq
  %v147 = vshrl.u32 %v146, 7
  %v148 = vsub.s32 3, %v147
  %v149 = vrot.slane %v132, %v148
  %v186 = vunpack.c.l.b16 %v100
  %v187 = vunpack.c.h.b16 %v100
  %v188 = vunpack.c.l.b16 %v101
  %v189 = vunpack.c.h.b16 %v101
  %v190 = vunpack.c.l.b16 %v102
  %v191 = vunpack.c.h.b16 %v102
  %v192 = vunpack.c.l.b16 %v103
  %v193 = vunpack.c.h.b16 %v103
  %v194 = vunpack.c.l.b16 %v104
  %v195 = vunpack.c.h.b16 %v104
  %v196 = vunpack.c.l.b16 %v105
  %v197 = vunpack.c.h.b16 %v105
  %v198 = vunpack.c.l.b16 %v106
  %v199 = vunpack.c.h.b16 %v106
  %v200 = vunpack.c.l.b16 %v107
  %v201 = vunpack.c.h.b16 %v107
  %v202 = vunpack.c.l.b16 %v108
  %v203 = vunpack.c.h.b16 %v108
  %v204 = vunpack.c.l.b16 %v109
  %v205 = vunpack.c.h.b16 %v109
  %v206 = vunpack.c.l.b16 %v110
  %v207 = vunpack.c.h.b16 %v110
  %v208 = vunpack.c.l.b16 %v111
  %v209 = vunpack.c.h.b16 %v111
  %v210 = vunpack.c.l.b16 %v112
  %v211 = vunpack.c.h.b16 %v112
  %v212 = vunpack.c.l.b16 %v113
  %v213 = vunpack.c.h.b16 %v113
  %v214 = vunpack.c.l.b16 %v114
  %v215 = vunpack.c.h.b16 %v114
  %v216 = vunpack.c.l.b16 %v115
  %v217 = vunpack.c.h.b16 %v115
  %v218 = vunpack.c.l.b16 %v116
  %v219 = vunpack.c.h.b16 %v116
  %v220 = vunpack.c.l.b16 %v117
  %v221 = vunpack.c.h.b16 %v117
  %v222 = vunpack.c.l.b16 %v118
  %v223 = vunpack.c.h.b16 %v118
  %v224 = vunpack.c.l.b16 %v119
  %v225 = vunpack.c.h.b16 %v119
  %v226 = vunpack.c.l.b16 %v120
  %v227 = vunpack.c.h.b16 %v120
  %v228 = vunpack.c.l.b16 %v121
  %v229 = vunpack.c.h.b16 %v121
  %v230 = vunpack.c.l.b16 %v122
  %v231 = vunpack.c.h.b16 %v122
  %v232 = vunpack.c.l.b16 %v123
  %v233 = vunpack.c.h.b16 %v123
  %v234 = vunpack.c.l.b16 %v124
  %v235 = vunpack.c.h.b16 %v124
  %v236 = vunpack.c.l.b16 %v125
  %v237 = vunpack.c.h.b16 %v125
  %v238 = vunpack.c.l.b16 %v126
  %v239 = vunpack.c.h.b16 %v126
  %v240 = vunpack.c.l.b16 %v127
  %v241 = vunpack.c.h.b16 %v127
  %v242 = vunpack.c.l.b16 %v128
  %v243 = vunpack.c.h.b16 %v128
  %v244 = vunpack.c.l.b16 %v129
  %v245 = vunpack.c.h.b16 %v129
  %v246 = vunpack.c.l.b16 %v130
  %v247 = vunpack.c.h.b16 %v130
  %v248 = vunpack.c.l.b16 %v131
  %v249 = vunpack.c.h.b16 %v131
  %v250 = vpack.c.b16 %v190, %v186
  %v251 = vpack.c.b16 %v191, %v187
  %v252 = vpack.c.b16 %v192, %v188
  %v253 = vpack.c.b16 %v193, %v189
  %v254 = vpack.c.b16 %v198, %v194
  %v255 = vpack.c.b16 %v199, %v195
  %v256 = vpack.c.b16 %v200, %v196
  %v257 = vpack.c.b16 %v201, %v197
  %v258 = vpack.c.b16 %v206, %v202
  %v259 = vpack.c.b16 %v207, %v203
  %v260 = vpack.c.b16 %v208, %v204
  %v261 = vpack.c.b16 %v209, %v205
  %v262 = vpack.c.b16 %v214, %v210
  %v263 = vpack.c.b16 %v215, %v211
  %v264 = vpack.c.b16 %v216, %v212
  %v265 = vpack.c.b16 %v217, %v213
  %v266 = vpack.c.b16 %v222, %v218
  %v267 = vpack.c.b16 %v223, %v219
  %v268 = vpack.c.b16 %v224, %v220
  %v269 = vpack.c.b16 %v225, %v221
  %v270 = vpack.c.b16 %v230, %v226
  %v271 = vpack.c.b16 %v231, %v227
  %v272 = vpack.c.b16 %v232, %v228
  %v273 = vpack.c.b16 %v233, %v229
  %v274 = vpack.c.b16 %v238, %v234
  %v275 = vpack.c.b16 %v239, %v235
  %v276 = vpack.c.b16 %v240, %v236
  %v277 = vpack.c.b16 %v241, %v237
  %v278 = vpack.c.b16 %v246, %v242
  %v279 = vpack.c.b16 %v247, %v243
  %v280 = vpack.c.b16 %v248, %v244
  %v281 = vpack.c.b16 %v249, %v245
  %314 = vmatprep.subr.bf16.mxu0 %v279
  %315 = vmatpush1.bf16.msra.mxu0 %v278
  %316 = vmatprep.subr.bf16.mxu0 %v275
  %317 = vmatpush1.bf16.msra.mxu0 %v274
  %318 = vmatprep.subr.bf16.mxu0 %v271
  %319 = vmatpush1.bf16.msra.mxu0 %v270
  %320 = vmatprep.subr.bf16.mxu0 %v267
  %321 = vmatpush1.bf16.msra.mxu0 %v266
  %322 = vmatprep.subr.bf16.mxu0 %v263
  %323 = vmatpush1.bf16.msra.mxu0 %v262
  %324 = vmatprep.subr.bf16.mxu0 %v259
  %325 = vmatpush1.bf16.msra.mxu0 %v258
  %326 = vmatprep.subr.bf16.mxu0 %v255
  %327 = vmatpush1.bf16.msra.mxu0 %v254
  %328 = vmatprep.subr.bf16.mxu0 %v251
  %329 = vmatpush1.bf16.msra.mxu0 %v250
  %330 = vmatprep.subr.bf16.mxu0 0
  %331 = vmatpush2.bf16.msra.mxu0 0
  %332 = vmatprep.subr.bf16.mxu0 0
  %333 = vmatpush2.bf16.msra.mxu0 0
  %334 = vmatprep.subr.bf16.mxu0 0
  %335 = vmatpush2.bf16.msra.mxu0 0
  %336 = vmatprep.subr.bf16.mxu0 0
  %337 = vmatpush2.bf16.msra.mxu0 0
  %338 = vmatprep.subr.bf16.mxu0 0
  %339 = vmatpush2.bf16.msra.mxu0 0
  %340 = vmatprep.subr.bf16.mxu0 0
  %341 = vmatpush2.bf16.msra.mxu0 0
  %342 = vmatprep.subr.bf16.mxu0 0
  %343 = vmatpush2.bf16.msra.mxu0 0
  %344 = vmatprep.subr.bf16.mxu0 0
  %345 = vmatpush2.bf16.msra.mxu0 0
  %346 = vmatprep.mubr.bf16.mxu0 0
  %347 = vmatmul.mubr.bf16.gmra.mxu0 %v98
  %v348 = vpop.f32.mrf.mxu0
  %v349 = vadd.f32 %v137, %v348
  %v350 = vpop.f32.mrf.mxu0
  %v351 = vadd.f32 %v141, %v350
  %v352 = vpop.f32.mrf.mxu0
  %v353 = vadd.f32 %v137, %v352
  %v354 = vpop.f32.mrf.mxu0
  %v355 = vadd.f32 %v141, %v354
  %356 = vmatprep.mubr.bf16.mxu0 0
  %357 = vmatmul.mubr.bf16.gmra.mxu0 %v99
  %v358 = vpop.f32.mrf.mxu0
  %v359 = vadd.f32 %v137, %v358
  %v360 = vpop.f32.mrf.mxu0
  %v361 = vadd.f32 %v141, %v360
  %v362 = vpop.f32.mrf.mxu0
  %v363 = vadd.f32 %v137, %v362
  %v364 = vpop.f32.mrf.mxu0
  %v365 = vadd.f32 %v141, %v364
  %366 = vdwg.mxu0
  %367 = vmatprep.subr.bf16.mxu0 %v281
  %368 = vmatpush1.bf16.msra.mxu0 %v280
  %369 = vmatprep.subr.bf16.mxu0 %v277
  %370 = vmatpush1.bf16.msra.mxu0 %v276
  %371 = vmatprep.subr.bf16.mxu0 %v273
  %372 = vmatpush1.bf16.msra.mxu0 %v272
  %373 = vmatprep.subr.bf16.mxu0 %v269
  %374 = vmatpush1.bf16.msra.mxu0 %v268
  %375 = vmatprep.subr.bf16.mxu0 %v265
  %376 = vmatpush1.bf16.msra.mxu0 %v264
  %377 = vmatprep.subr.bf16.mxu0 %v261
  %378 = vmatpush1.bf16.msra.mxu0 %v260
  %379 = vmatprep.subr.bf16.mxu0 %v257
  %380 = vmatpush1.bf16.msra.mxu0 %v256
  %381 = vmatprep.subr.bf16.mxu0 %v253
  %382 = vmatpush1.bf16.msra.mxu0 %v252
  %383 = vmatprep.subr.bf16.mxu0 0
  %384 = vmatpush2.bf16.msra.mxu0 0
  %385 = vmatprep.subr.bf16.mxu0 0
  %386 = vmatpush2.bf16.msra.mxu0 0
  %387 = vmatprep.subr.bf16.mxu0 0
  %388 = vmatpush2.bf16.msra.mxu0 0
  %389 = vmatprep.subr.bf16.mxu0 0
  %390 = vmatpush2.bf16.msra.mxu0 0
  %391 = vmatprep.subr.bf16.mxu0 0
  %392 = vmatpush2.bf16.msra.mxu0 0
  %393 = vmatprep.subr.bf16.mxu0 0
  %394 = vmatpush2.bf16.msra.mxu0 0
  %395 = vmatprep.subr.bf16.mxu0 0
  %396 = vmatpush2.bf16.msra.mxu0 0
  %397 = vmatprep.subr.bf16.mxu0 0
  %398 = vmatpush2.bf16.msra.mxu0 0
  %399 = vmatprep.mubr.bf16.mxu0 0
  %400 = vmatmul.mubr.bf16.gmra.mxu0 %v98
  %v401 = vpop.f32.mrf.mxu0
  %v402 = vadd.f32 %v145, %v401
  %v403 = vpop.f32.mrf.mxu0
  %v404 = vadd.f32 %v149, %v403
  %v405 = vpop.f32.mrf.mxu0
  %v406 = vadd.f32 %v145, %v405
  %v407 = vpop.f32.mrf.mxu0
  %v408 = vadd.f32 %v149, %v407
  %409 = vmatprep.mubr.bf16.mxu0 0
  %410 = vmatmul.mubr.bf16.gmra.mxu0 %v99
  %v411 = vpop.f32.mrf.mxu0
  %v412 = vadd.f32 %v145, %v411
  %v413 = vpop.f32.mrf.mxu0
  %v414 = vadd.f32 %v149, %v413
  %v415 = vpop.f32.mrf.mxu0
  %v416 = vadd.f32 %v145, %v415
  %v417 = vpop.f32.mrf.mxu0
  %v418 = vadd.f32 %v149, %v417
  %419 = vdwg.mxu0
  %v420 = vmul.f32 %v349, 0.5
  %v421 = vmul.f32 %v351, 0.5
  %v422 = vmul.f32 %v402, 0.5
  %v423 = vmul.f32 %v404, 0.5
  %v424 = vmul.f32 %v353, 0.5
  %v425 = vmul.f32 %v355, 0.5
  %v426 = vmul.f32 %v406, 0.5
  %v427 = vmul.f32 %v408, 0.5
  %v428 = vmul.f32 %v359, 0.5
  %v429 = vmul.f32 %v361, 0.5
  %v430 = vmul.f32 %v412, 0.5
  %v431 = vmul.f32 %v414, 0.5
  %v432 = vmul.f32 %v363, 0.5
  %v433 = vmul.f32 %v365, 0.5
  %v434 = vmul.f32 %v416, 0.5
  %v435 = vmul.f32 %v418, 0.5
  %v436 = vmul.f32 %v349, 0.70710677
  %v437 = vmul.f32 %v351, 0.70710677
  %v438 = vmul.f32 %v402, 0.70710677
  %v439 = vmul.f32 %v404, 0.70710677
  %v440 = vmul.f32 %v353, 0.70710677
  %v441 = vmul.f32 %v355, 0.70710677
  %v442 = vmul.f32 %v406, 0.70710677
  %v443 = vmul.f32 %v408, 0.70710677
  %v444 = vmul.f32 %v359, 0.70710677
  %v445 = vmul.f32 %v361, 0.70710677
  %v446 = vmul.f32 %v412, 0.70710677
  %v447 = vmul.f32 %v414, 0.70710677
  %v448 = vmul.f32 %v363, 0.70710677
  %v449 = vmul.f32 %v365, 0.70710677
  %v450 = vmul.f32 %v416, 0.70710677
  %v451 = vmul.f32 %v418, 0.70710677
  %v452 = verf.f32.pop %v436
  %v453 = verf.f32.pop %v437
  %v454 = verf.f32.pop %v438
  %v455 = verf.f32.pop %v439
  %v456 = verf.f32.pop %v440
  %v457 = verf.f32.pop %v441
  %v458 = verf.f32.pop %v442
  %v459 = verf.f32.pop %v443
  %v460 = verf.f32.pop %v444
  %v461 = verf.f32.pop %v445
  %v462 = verf.f32.pop %v446
  %v463 = verf.f32.pop %v447
  %v464 = verf.f32.pop %v448
  %v465 = verf.f32.pop %v449
  %v466 = verf.f32.pop %v450
  %v467 = verf.f32.pop %v451
  %v468 = vadd.f32 %v452, 1.0
  %v469 = vadd.f32 %v453, 1.0
  %v470 = vadd.f32 %v454, 1.0
  %v471 = vadd.f32 %v455, 1.0
  %v472 = vadd.f32 %v456, 1.0
  %v473 = vadd.f32 %v457, 1.0
  %v474 = vadd.f32 %v458, 1.0
  %v475 = vadd.f32 %v459, 1.0
  %v476 = vadd.f32 %v460, 1.0
  %v477 = vadd.f32 %v461, 1.0
  %v478 = vadd.f32 %v462, 1.0
  %v479 = vadd.f32 %v463, 1.0
  %v480 = vadd.f32 %v464, 1.0
  %v481 = vadd.f32 %v465, 1.0
  %v482 = vadd.f32 %v466, 1.0
  %v483 = vadd.f32 %v467, 1.0
  %v484 = vmul.f32 %v420, %v468
  %v485 = vmul.f32 %v421, %v469
  %v486 = vmul.f32 %v422, %v470
  %v487 = vmul.f32 %v423, %v471
  %v488 = vmul.f32 %v424, %v472
  %v489 = vmul.f32 %v425, %v473
  %v490 = vmul.f32 %v426, %v474
  %v491 = vmul.f32 %v427, %v475
  %v492 = vmul.f32 %v428, %v476
  %v493 = vmul.f32 %v429, %v477
  %v494 = vmul.f32 %v430, %v478
  %v495 = vmul.f32 %v431, %v479
  %v496 = vmul.f32 %v432, %v480
  %v497 = vmul.f32 %v433, %v481
  %v498 = vmul.f32 %v434, %v482
  %v499 = vmul.f32 %v435, %v483
  %v500 = vpack.c.bf16 %v488, %v484
  %v501 = vpack.c.bf16 %v489, %v485
  %v502 = vpack.c.bf16 %v490, %v486
  %v503 = vpack.c.bf16 %v491, %v487
  %v504 = vpack.c.bf16 %v496, %v492
  %v505 = vpack.c.bf16 %v497, %v493
  %v506 = vpack.c.bf16 %v498, %v494
  %v507 = vpack.c.bf16 %v499, %v495
  %v508 = vld [vmem:[%s5] sm:$0xf]
  %v509 = vld [vmem:[%s5 + $0x4] sm:$0xf]
  %v510 = vld [vmem:[%s5 + $0x8] sm:$0xf]
  %v511 = vld [vmem:[%s5 + $0xc] sm:$0xf]
  %v512 = vld [vmem:[%s5 + $0x10] sm:$0xf]
  %v513 = vld [vmem:[%s5 + $0x14] sm:$0xf]
  %v514 = vld [vmem:[%s5 + $0x18] sm:$0xf]
  %v515 = vld [vmem:[%s5 + $0x1c] sm:$0xf]
  %v516 = vld [vmem:[%s5 + $0x20] sm:$0xf]
  %v517 = vld [vmem:[%s5 + $0x24] sm:$0xf]
  %v518 = vld [vmem:[%s5 + $0x28] sm:$0xf]
  %v519 = vld [vmem:[%s5 + $0x2c] sm:$0xf]
  %v520 = vld [vmem:[%s5 + $0x30] sm:$0xf]
  %v521 = vld [vmem:[%s5 + $0x34] sm:$0xf]
  %v522 = vld [vmem:[%s5 + $0x38] sm:$0xf]
  %v523 = vld [vmem:[%s5 + $0x3c] sm:$0xf]
  %v524 = vld [vmem:[%s5 + $0x40] sm:$0xf]
  %v525 = vld [vmem:[%s5 + $0x44] sm:$0xf]
  %v526 = vld [vmem:[%s5 + $0x48] sm:$0xf]
  %v527 = vld [vmem:[%s5 + $0x4c] sm:$0xf]
  %v528 = vld [vmem:[%s5 + $0x50] sm:$0xf]
  %v529 = vld [vmem:[%s5 + $0x54] sm:$0xf]
  %v530 = vld [vmem:[%s5 + $0x58] sm:$0xf]
  %v531 = vld [vmem:[%s5 + $0x5c] sm:$0xf]
  %v532 = vld [vmem:[%s5 + $0x60] sm:$0xf]
  %v533 = vld [vmem:[%s5 + $0x64] sm:$0xf]
  %v534 = vld [vmem:[%s5 + $0x68] sm:$0xf]
  %v535 = vld [vmem:[%s5 + $0x6c] sm:$0xf]
  %v536 = vld [vmem:[%s5 + $0x70] sm:$0xf]
  %v537 = vld [vmem:[%s5 + $0x74] sm:$0xf]
  %v538 = vld [vmem:[%s5 + $0x78] sm:$0xf]
  %v539 = vld [vmem:[%s5 + $0x7c] sm:$0xf]
  %v540 = vld [vmem:[%s5 + $0x80] sm:$0xf]
  %v541 = vld [vmem:[%s5 + $0x84] sm:$0xf]
  %v542 = vld [vmem:[%s5 + $0x88] sm:$0xf]
  %v543 = vld [vmem:[%s5 + $0x8c] sm:$0xf]
  %v544 = vld [vmem:[%s5 + $0x90] sm:$0xf]
  %v545 = vld [vmem:[%s5 + $0x94] sm:$0xf]
  %v546 = vld [vmem:[%s5 + $0x98] sm:$0xf]
  %v547 = vld [vmem:[%s5 + $0x9c] sm:$0xf]
  %v548 = vld [vmem:[%s5 + $0xa0] sm:$0xf]
  %v549 = vld [vmem:[%s5 + $0xa4] sm:$0xf]
  %v550 = vld [vmem:[%s5 + $0xa8] sm:$0xf]
  %v551 = vld [vmem:[%s5 + $0xac] sm:$0xf]
  %v552 = vld [vmem:[%s5 + $0xb0] sm:$0xf]
  %v553 = vld [vmem:[%s5 + $0xb4] sm:$0xf]
  %v554 = vld [vmem:[%s5 + $0xb8] sm:$0xf]
  %v555 = vld [vmem:[%s5 + $0xbc] sm:$0xf]
  %v556 = vld [vmem:[%s5 + $0xc0] sm:$0xf]
  %v557 = vld [vmem:[%s5 + $0xc4] sm:$0xf]
  %v558 = vld [vmem:[%s5 + $0xc8] sm:$0xf]
  %v559 = vld [vmem:[%s5 + $0xcc] sm:$0xf]
  %v560 = vld [vmem:[%s5 + $0xd0] sm:$0xf]
  %v561 = vld [vmem:[%s5 + $0xd4] sm:$0xf]
  %v562 = vld [vmem:[%s5 + $0xd8] sm:$0xf]
  %v563 = vld [vmem:[%s5 + $0xdc] sm:$0xf]
  %v564 = vld [vmem:[%s5 + $0xe0] sm:$0xf]
  %v565 = vld [vmem:[%s5 + $0xe4] sm:$0xf]
  %v566 = vld [vmem:[%s5 + $0xe8] sm:$0xf]
  %v567 = vld [vmem:[%s5 + $0xec] sm:$0xf]
  %v568 = vld [vmem:[%s5 + $0xf0] sm:$0xf]
  %v569 = vld [vmem:[%s5 + $0xf4] sm:$0xf]
  %v570 = vld [vmem:[%s5 + $0xf8] sm:$0xf]
  %v571 = vld [vmem:[%s5 + $0xfc] sm:$0xf]
  %v572 = vld [vmem:[%s6] sm:$0x1]
  %v574 = vlaneseq
  %v575 = vshrl.u32 %v574, 7
  %v576 = vsub.s32 0, %v575
  %v577 = vrot.slane %v572, %v576
  %v643 = vunpack.c.l.b16 %v508
  %v644 = vunpack.c.l.b16 %v509
  %v645 = vunpack.c.l.b16 %v510
  %v646 = vunpack.c.l.b16 %v511
  %v647 = vunpack.c.l.b16 %v512
  %v648 = vunpack.c.l.b16 %v513
  %v649 = vunpack.c.l.b16 %v514
  %v650 = vunpack.c.l.b16 %v515
  %v651 = vunpack.c.l.b16 %v516
  %v652 = vunpack.c.l.b16 %v517
  %v653 = vunpack.c.l.b16 %v518
  %v654 = vunpack.c.l.b16 %v519
  %v655 = vunpack.c.l.b16 %v520
  %v656 = vunpack.c.l.b16 %v521
  %v657 = vunpack.c.l.b16 %v522
  %v658 = vunpack.c.l.b16 %v523
  %v659 = vunpack.c.l.b16 %v524
  %v660 = vunpack.c.l.b16 %v525
  %v661 = vunpack.c.l.b16 %v526
  %v662 = vunpack.c.l.b16 %v527
  %v663 = vunpack.c.l.b16 %v528
  %v664 = vunpack.c.l.b16 %v529
  %v665 = vunpack.c.l.b16 %v530
  %v666 = vunpack.c.l.b16 %v531
  %v667 = vunpack.c.l.b16 %v532
  %v668 = vunpack.c.l.b16 %v533
  %v669 = vunpack.c.l.b16 %v534
  %v670 = vunpack.c.l.b16 %v535
  %v671 = vunpack.c.l.b16 %v536
  %v672 = vunpack.c.l.b16 %v537
  %v673 = vunpack.c.l.b16 %v538
  %v674 = vunpack.c.l.b16 %v539
  %v675 = vunpack.c.l.b16 %v540
  %v676 = vunpack.c.l.b16 %v541
  %v677 = vunpack.c.l.b16 %v542
  %v678 = vunpack.c.l.b16 %v543
  %v679 = vunpack.c.l.b16 %v544
  %v680 = vunpack.c.l.b16 %v545
  %v681 = vunpack.c.l.b16 %v546
  %v682 = vunpack.c.l.b16 %v547
  %v683 = vunpack.c.l.b16 %v548
  %v684 = vunpack.c.l.b16 %v549
  %v685 = vunpack.c.l.b16 %v550
  %v686 = vunpack.c.l.b16 %v551
  %v687 = vunpack.c.l.b16 %v552
  %v688 = vunpack.c.l.b16 %v553
  %v689 = vunpack.c.l.b16 %v554
  %v690 = vunpack.c.l.b16 %v555
  %v691 = vunpack.c.l.b16 %v556
  %v692 = vunpack.c.l.b16 %v557
  %v693 = vunpack.c.l.b16 %v558
  %v694 = vunpack.c.l.b16 %v559
  %v695 = vunpack.c.l.b16 %v560
  %v696 = vunpack.c.l.b16 %v561
  %v697 = vunpack.c.l.b16 %v562
  %v698 = vunpack.c.l.b16 %v563
  %v699 = vunpack.c.l.b16 %v564
  %v700 = vunpack.c.l.b16 %v565
  %v701 = vunpack.c.l.b16 %v566
  %v702 = vunpack.c.l.b16 %v567
  %v703 = vunpack.c.l.b16 %v568
  %v704 = vunpack.c.l.b16 %v569
  %v705 = vunpack.c.l.b16 %v570
  %v706 = vunpack.c.l.b16 %v571
  %v707 = vpack.c.b16 %v644, %v643
  %v708 = vpack.c.b16 %v646, %v645
  %v709 = vpack.c.b16 %v648, %v647
  %v710 = vpack.c.b16 %v650, %v649
  %v711 = vpack.c.b16 %v652, %v651
  %v712 = vpack.c.b16 %v654, %v653
  %v713 = vpack.c.b16 %v656, %v655
  %v714 = vpack.c.b16 %v658, %v657
  %v715 = vpack.c.b16 %v660, %v659
  %v716 = vpack.c.b16 %v662, %v661
  %v717 = vpack.c.b16 %v664, %v663
  %v718 = vpack.c.b16 %v666, %v665
  %v719 = vpack.c.b16 %v668, %v667
  %v720 = vpack.c.b16 %v670, %v669
  %v721 = vpack.c.b16 %v672, %v671
  %v722 = vpack.c.b16 %v674, %v673
  %v723 = vpack.c.b16 %v676, %v675
  %v724 = vpack.c.b16 %v678, %v677
  %v725 = vpack.c.b16 %v680, %v679
  %v726 = vpack.c.b16 %v682, %v681
  %v727 = vpack.c.b16 %v684, %v683
  %v728 = vpack.c.b16 %v686, %v685
  %v729 = vpack.c.b16 %v688, %v687
  %v730 = vpack.c.b16 %v690, %v689
  %v731 = vpack.c.b16 %v692, %v691
  %v732 = vpack.c.b16 %v694, %v693
  %v733 = vpack.c.b16 %v696, %v695
  %v734 = vpack.c.b16 %v698, %v697
  %v735 = vpack.c.b16 %v700, %v699
  %v736 = vpack.c.b16 %v702, %v701
  %v737 = vpack.c.b16 %v704, %v703
  %v738 = vpack.c.b16 %v706, %v705
  %771 = vmatprep.subr.bf16.mxu0 0
  %772 = vmatpush1.bf16.msra.mxu0 %v714
  %773 = vmatprep.subr.bf16.mxu0 0
  %774 = vmatpush1.bf16.msra.mxu0 %v713
  %775 = vmatprep.subr.bf16.mxu0 0
  %776 = vmatpush1.bf16.msra.mxu0 %v712
  %777 = vmatprep.subr.bf16.mxu0 0
  %778 = vmatpush1.bf16.msra.mxu0 %v711
  %779 = vmatprep.subr.bf16.mxu0 0
  %780 = vmatpush1.bf16.msra.mxu0 %v710
  %781 = vmatprep.subr.bf16.mxu0 0
  %782 = vmatpush1.bf16.msra.mxu0 %v709
  %783 = vmatprep.subr.bf16.mxu0 0
  %784 = vmatpush1.bf16.msra.mxu0 %v708
  %785 = vmatprep.subr.bf16.mxu0 0
  %786 = vmatpush1.bf16.msra.mxu0 %v707
  %787 = vmatprep.subr.bf16.mxu0 0
  %788 = vmatpush2.bf16.msra.mxu0 %v722
  %789 = vmatprep.subr.bf16.mxu0 0
  %790 = vmatpush2.bf16.msra.mxu0 %v721
  %791 = vmatprep.subr.bf16.mxu0 0
  %792 = vmatpush2.bf16.msra.mxu0 %v720
  %793 = vmatprep.subr.bf16.mxu0 0
  %794 = vmatpush2.bf16.msra.mxu0 %v719
  %795 = vmatprep.subr.bf16.mxu0 0
  %796 = vmatpush2.bf16.msra.mxu0 %v718
  %797 = vmatprep.subr.bf16.mxu0 0
  %798 = vmatpush2.bf16.msra.mxu0 %v717
  %799 = vmatprep.subr.bf16.mxu0 0
  %800 = vmatpush2.bf16.msra.mxu0 %v716
  %801 = vmatprep.subr.bf16.mxu0 0
  %802 = vmatpush2.bf16.msra.mxu0 %v715
  %803 = vmatprep.mubr.bf16.mxu0 %v501
  %804 = vmatmul.mubr.bf16.gmra.mxu0 %v500
  %v805 = vpop.f32.mrf.mxu0
  %v806 = vadd.f32 %v577, %v805
  %v807 = vpop.f32.mrf.mxu0
  %v808 = vpop.f32.mrf.mxu0
  %v809 = vadd.f32 %v577, %v808
  %v810 = vpop.f32.mrf.mxu0
  %811 = vmatprep.mubr.bf16.mxu0 %v505
  %812 = vmatmul.mubr.bf16.gmra.mxu0 %v504
  %v813 = vpop.f32.mrf.mxu0
  %v814 = vadd.f32 %v577, %v813
  %v815 = vpop.f32.mrf.mxu0
  %v816 = vpop.f32.mrf.mxu0
  %v817 = vadd.f32 %v577, %v816
  %v818 = vpop.f32.mrf.mxu0
  %819 = vdwg.mxu0
  %820 = vmatprep.subr.bf16.mxu0 0
  %821 = vmatpush1.bf16.msra.mxu0 %v730
  %822 = vmatprep.subr.bf16.mxu0 0
  %823 = vmatpush1.bf16.msra.mxu0 %v729
  %824 = vmatprep.subr.bf16.mxu0 0
  %825 = vmatpush1.bf16.msra.mxu0 %v728
  %826 = vmatprep.subr.bf16.mxu0 0
  %827 = vmatpush1.bf16.msra.mxu0 %v727
  %828 = vmatprep.subr.bf16.mxu0 0
  %829 = vmatpush1.bf16.msra.mxu0 %v726
  %830 = vmatprep.subr.bf16.mxu0 0
  %831 = vmatpush1.bf16.msra.mxu0 %v725
  %832 = vmatprep.subr.bf16.mxu0 0
  %833 = vmatpush1.bf16.msra.mxu0 %v724
  %834 = vmatprep.subr.bf16.mxu0 0
  %835 = vmatpush1.bf16.msra.mxu0 %v723
  %836 = vmatprep.subr.bf16.mxu0 0
  %837 = vmatpush2.bf16.msra.mxu0 %v738
  %838 = vmatprep.subr.bf16.mxu0 0
  %839 = vmatpush2.bf16.msra.mxu0 %v737
  %840 = vmatprep.subr.bf16.mxu0 0
  %841 = vmatpush2.bf16.msra.mxu0 %v736
  %842 = vmatprep.subr.bf16.mxu0 0
  %843 = vmatpush2.bf16.msra.mxu0 %v735
  %844 = vmatprep.subr.bf16.mxu0 0
  %845 = vmatpush2.bf16.msra.mxu0 %v734
  %846 = vmatprep.subr.bf16.mxu0 0
  %847 = vmatpush2.bf16.msra.mxu0 %v733
  %848 = vmatprep.subr.bf16.mxu0 0
  %849 = vmatpush2.bf16.msra.mxu0 %v732
  %850 = vmatprep.subr.bf16.mxu0 0
  %851 = vmatpush2.bf16.msra.mxu0 %v731
  %852 = vmatprep.mubr.bf16.mxu0 %v503
  %853 = vmatmul.mubr.bf16.gmra.mxu0 %v502
  %v854 = vpop.f32.mrf.mxu0
  %v855 = vadd.f32 %v806, %v854
  %v856 = vpop.f32.mrf.mxu0
  %v857 = vpop.f32.mrf.mxu0
  %v858 = vadd.f32 %v809, %v857
  %v859 = vpop.f32.mrf.mxu0
  %860 = vmatprep.mubr.bf16.mxu0 %v507
  %861 = vmatmul.mubr.bf16.gmra.mxu0 %v506
  %v862 = vpop.f32.mrf.mxu0
  %v863 = vadd.f32 %v814, %v862
  %v864 = vpop.f32.mrf.mxu0
  %v865 = vpop.f32.mrf.mxu0
  %v866 = vadd.f32 %v817, %v865
  %v867 = vpop.f32.mrf.mxu0
  %868 = vdwg.mxu0
  %v869 = vadd.f32 %v27, %v855
  %v870 = vadd.f32 %v28, %v858
  %v871 = vadd.f32 %v29, %v863
  %v872 = vadd.f32 %v30, %v866
  %873 = vst [vmem:[%s7] sm:$0xff] %v869
  %874 = vst [vmem:[%s7 + $0x8] sm:$0xff] %v870
  %875 = vst [vmem:[%s7 + $0x10] sm:$0xff] %v871
  %876 = vst [vmem:[%s7 + $0x18] sm:$0xff] %v872
  // Predicated region
  $region30: #{pretrain_vit_forward.18} parent=0 // pred_check
    _
  $region31: #{pretrain_vit_forward.18} parent=0 // pred_check_branch
    %878 = sbr.rel (0) target = $region33
  $region32: #{pretrain_vit_forward.18} parent=0 // pred_region
    _
  $region33: #{pretrain_vit_forward.18} parent=0 // pred_fallthru
    _
  // Predicated region
  $region34: #{pretrain_vit_forward.18} parent=0 // pred_check
    _
  $region35: #{pretrain_vit_forward.18} parent=0 // pred_check_branch
    %880 = sbr.rel (0) target = $region37
  $region36: #{pretrain_vit_forward.18} parent=0 // pred_region
    _
  $region37: #{pretrain_vit_forward.18} parent=0 // pred_fallthru
    _

// kernel: pretrain_vit_forward.21
$region0: #{pretrain_vit_forward.21}
  #allocation0 [shape = 'u32[]', space=smem, size = 0x4, offset = 0x4, fixed_abs, tag = 'smem constant byte address 0x4 - core index']
  #allocation1 [shape = 'u32[144,128]{1,0:T(1,128)}', space=vmem, size = 0x12000, scoped, tag = 'internal scratch']
  %s0 = inlined_call_operand.vmem [shape: f32[32,128], index: 0, kind: input, shape index: {}]
  %s1 = inlined_call_operand.vmem [shape: f32[1,128], index: 1, kind: input, shape index: {}]
  %s2 = inlined_call_operand.vmem [shape: f32[1,128], index: 2, kind: input, shape index: {}]
  %s3 = inlined_call_operand.vmem [shape: bf16[128,256], index: 3, kind: input, shape index: {}]
  %s4 = inlined_call_operand.vmem [shape: f32[1,256], index: 4, kind: input, shape index: {}]
  %s5 = inlined_call_operand.vmem [shape: f32[32,256], index: 5, kind: output, shape index: {}]
  %s6 = sld [smem:[#allocation0]]
  $region30: #{pretrain_vit_forward.21} parent=0
    _
  %s8 = ssub.s32 1, %s6
  %s9 = scalar_select 0, %s8, %s6
  // Predicated region
  $region2: #{pretrain_vit_forward.21} parent=0 // pred_check
    _
  $region3: #{pretrain_vit_forward.21} parent=0 // pred_check_branch
    %11 = sbr.rel (0) target = $region5
  $region4: #{pretrain_vit_forward.21} parent=0 // pred_region
    _
  $region5: #{pretrain_vit_forward.21} parent=0 // pred_fallthru
    _
  // Predicated region
  $region6: #{pretrain_vit_forward.21} parent=0 // pred_check
    _
  $region7: #{pretrain_vit_forward.21} parent=0 // pred_check_branch
    %13 = sbr.rel (0) target = $region9
  $region8: #{pretrain_vit_forward.21} parent=0 // pred_region
    _
  $region9: #{pretrain_vit_forward.21} parent=0 // pred_fallthru
    _
  // Predicated region
  $region10: #{pretrain_vit_forward.21} parent=0 // pred_check
    _
  $region11: #{pretrain_vit_forward.21} parent=0 // pred_check_branch
    %15 = sbr.rel (0) target = $region13
  $region12: #{pretrain_vit_forward.21} parent=0 // pred_region
    _
  $region13: #{pretrain_vit_forward.21} parent=0 // pred_fallthru
    _
  // Predicated region
  $region14: #{pretrain_vit_forward.21} parent=0 // pred_check
    _
  $region15: #{pretrain_vit_forward.21} parent=0 // pred_check_branch
    %17 = sbr.rel (0) target = $region17
  $region16: #{pretrain_vit_forward.21} parent=0 // pred_region
    _
  $region17: #{pretrain_vit_forward.21} parent=0 // pred_fallthru
    _
  // Predicated region
  $region18: #{pretrain_vit_forward.21} parent=0 // pred_check
    _
  $region19: #{pretrain_vit_forward.21} parent=0 // pred_check_branch
    %19 = sbr.rel (0) target = $region21
  $region20: #{pretrain_vit_forward.21} parent=0 // pred_region
    _
  $region21: #{pretrain_vit_forward.21} parent=0 // pred_fallthru
    _
  %v21 = vld [vmem:[%s0] sm:$0xff]
  %v22 = vld [vmem:[%s0 + $0x8] sm:$0xff]
  %v23 = vld [vmem:[%s0 + $0x10] sm:$0xff]
  %v24 = vld [vmem:[%s0 + $0x18] sm:$0xff]
  %25 = vadd.xlane.f32.xlu0 %v21
  %v26 = vpop.xlane.xlu0 %25
  %27 = vadd.xlane.f32.xlu0 %v22
  %v28 = vpop.xlane.xlu0 %27
  %29 = vadd.xlane.f32.xlu0 %v23
  %v30 = vpop.xlane.xlu0 %29
  %31 = vadd.xlane.f32.xlu0 %v24
  %v32 = vpop.xlane.xlu0 %31
  %v33 = vrcp.pop 128.0
  %v34 = vmul.f32 %v26, %v33
  %v35 = vmul.f32 %v28, %v33
  %v36 = vmul.f32 %v30, %v33
  %v37 = vmul.f32 %v32, %v33
  %v38 = vsub.f32 %v21, %v34
  %v39 = vsub.f32 %v22, %v35
  %v40 = vsub.f32 %v23, %v36
  %v41 = vsub.f32 %v24, %v37
  %v42 = vmul.f32 %v38, %v38
  %v43 = vmul.f32 %v39, %v39
  %v44 = vmul.f32 %v40, %v40
  %v45 = vmul.f32 %v41, %v41
  %46 = vadd.xlane.f32.xlu0 %v42
  %v47 = vpop.xlane.xlu0 %46
  %48 = vadd.xlane.f32.xlu0 %v43
  %v49 = vpop.xlane.xlu0 %48
  %50 = vadd.xlane.f32.xlu0 %v44
  %v51 = vpop.xlane.xlu0 %50
  %52 = vadd.xlane.f32.xlu0 %v45
  %v53 = vpop.xlane.xlu0 %52
  %v54 = vmul.f32 %v47, %v33
  %v55 = vmul.f32 %v49, %v33
  %v56 = vmul.f32 %v51, %v33
  %v57 = vmul.f32 %v53, %v33
  %v58 = vadd.f32 %v54, 1e-05
  %v59 = vadd.f32 %v55, 1e-05
  %v60 = vadd.f32 %v56, 1e-05
  %v61 = vadd.f32 %v57, 1e-05
  %v62 = vrsqrt.pop %v58
  %v63 = vrsqrt.pop %v59
  %v64 = vrsqrt.pop %v60
  %v65 = vrsqrt.pop %v61
  %v66 = vmul.f32 %v38, %v62
  %v67 = vmul.f32 %v39, %v63
  %v68 = vmul.f32 %v40, %v64
  %v69 = vmul.f32 %v41, %v65
  %v70 = vld [vmem:[%s1] sm:$0x1]
  %v72 = vlaneseq
  %v73 = vshrl.u32 %v72, 7
  %v74 = vsub.s32 0, %v73
  %v75 = vrot.slane %v70, %v74
  %v77 = vmul.f32 %v66, %v75
  %v78 = vmul.f32 %v67, %v75
  %v79 = vmul.f32 %v68, %v75
  %v80 = vmul.f32 %v69, %v75
  %v81 = vld [vmem:[%s2] sm:$0x1]
  %v83 = vlaneseq
  %v84 = vshrl.u32 %v83, 7
  %v85 = vsub.s32 0, %v84
  %v86 = vrot.slane %v81, %v85
  %v88 = vadd.f32 %v77, %v86
  %v89 = vadd.f32 %v78, %v86
  %v90 = vadd.f32 %v79, %v86
  %v91 = vadd.f32 %v80, %v86
  %v92 = vpack.c.bf16 %v89, %v88
  %v93 = vpack.c.bf16 %v91, %v90
  %v94 = vld [vmem:[%s3] sm:$0xff]
  %v95 = vld [vmem:[%s3 + $0x8] sm:$0xff]
  %v96 = vld [vmem:[%s3 + $0x10] sm:$0xff]
  %v97 = vld [vmem:[%s3 + $0x18] sm:$0xff]
  %v98 = vld [vmem:[%s3 + $0x20] sm:$0xff]
  %v99 = vld [vmem:[%s3 + $0x28] sm:$0xff]
  %v100 = vld [vmem:[%s3 + $0x30] sm:$0xff]
  %v101 = vld [vmem:[%s3 + $0x38] sm:$0xff]
  %v102 = vld [vmem:[%s3 + $0x40] sm:$0xff]
  %v103 = vld [vmem:[%s3 + $0x48] sm:$0xff]
  %v104 = vld [vmem:[%s3 + $0x50] sm:$0xff]
  %v105 = vld [vmem:[%s3 + $0x58] sm:$0xff]
  %v106 = vld [vmem:[%s3 + $0x60] sm:$0xff]
  %v107 = vld [vmem:[%s3 + $0x68] sm:$0xff]
  %v108 = vld [vmem:[%s3 + $0x70] sm:$0xff]
  %v109 = vld [vmem:[%s3 + $0x78] sm:$0xff]
  %v110 = vld [vmem:[%s4] sm:$0x3]
  %v112 = vlaneseq
  %v113 = vshrl.u32 %v112, 7
  %v114 = vsub.s32 0, %v113
  %v115 = vrot.slane %v110, %v114
  %v116 = vlaneseq
  %v117 = vshrl.u32 %v116, 7
  %v118 = vsub.s32 1, %v117
  %v119 = vrot.slane %v110, %v118
  %v138 = vunpack.c.l.b16 %v94
  %v139 = vunpack.c.h.b16 %v94
  %v140 = vunpack.c.l.b16 %v95
  %v141 = vunpack.c.h.b16 %v95
  %v142 = vunpack.c.l.b16 %v96
  %v143 = vunpack.c.h.b16 %v96
  %v144 = vunpack.c.l.b16 %v97
  %v145 = vunpack.c.h.b16 %v97
  %v146 = vunpack.c.l.b16 %v98
  %v147 = vunpack.c.h.b16 %v98
  %v148 = vunpack.c.l.b16 %v99
  %v149 = vunpack.c.h.b16 %v99
  %v150 = vunpack.c.l.b16 %v100
  %v151 = vunpack.c.h.b16 %v100
  %v152 = vunpack.c.l.b16 %v101
  %v153 = vunpack.c.h.b16 %v101
  %v154 = vunpack.c.l.b16 %v102
  %v155 = vunpack.c.h.b16 %v102
  %v156 = vunpack.c.l.b16 %v103
  %v157 = vunpack.c.h.b16 %v103
  %v158 = vunpack.c.l.b16 %v104
  %v159 = vunpack.c.h.b16 %v104
  %v160 = vunpack.c.l.b16 %v105
  %v161 = vunpack.c.h.b16 %v105
  %v162 = vunpack.c.l.b16 %v106
  %v163 = vunpack.c.h.b16 %v106
  %v164 = vunpack.c.l.b16 %v107
  %v165 = vunpack.c.h.b16 %v107
  %v166 = vunpack.c.l.b16 %v108
  %v167 = vunpack.c.h.b16 %v108
  %v168 = vunpack.c.l.b16 %v109
  %v169 = vunpack.c.h.b16 %v109
  %v170 = vpack.c.b16 %v140, %v138
  %v171 = vpack.c.b16 %v141, %v139
  %v172 = vpack.c.b16 %v144, %v142
  %v173 = vpack.c.b16 %v145, %v143
  %v174 = vpack.c.b16 %v148, %v146
  %v175 = vpack.c.b16 %v149, %v147
  %v176 = vpack.c.b16 %v152, %v150
  %v177 = vpack.c.b16 %v153, %v151
  %v178 = vpack.c.b16 %v156, %v154
  %v179 = vpack.c.b16 %v157, %v155
  %v180 = vpack.c.b16 %v160, %v158
  %v181 = vpack.c.b16 %v161, %v159
  %v182 = vpack.c.b16 %v164, %v162
  %v183 = vpack.c.b16 %v165, %v163
  %v184 = vpack.c.b16 %v168, %v166
  %v185 = vpack.c.b16 %v169, %v167
  %202 = vmatprep.subr.bf16.mxu0 %v185
  %203 = vmatpush1.bf16.msra.mxu0 %v184
  %204 = vmatprep.subr.bf16.mxu0 %v183
  %205 = vmatpush1.bf16.msra.mxu0 %v182
  %206 = vmatprep.subr.bf16.mxu0 %v181
  %207 = vmatpush1.bf16.msra.mxu0 %v180
  %208 = vmatprep.subr.bf16.mxu0 %v179
  %209 = vmatpush1.bf16.msra.mxu0 %v178
  %210 = vmatprep.subr.bf16.mxu0 %v177
  %211 = vmatpush1.bf16.msra.mxu0 %v176
  %212 = vmatprep.subr.bf16.mxu0 %v175
  %213 = vmatpush1.bf16.msra.mxu0 %v174
  %214 = vmatprep.subr.bf16.mxu0 %v173
  %215 = vmatpush1.bf16.msra.mxu0 %v172
  %216 = vmatprep.subr.bf16.mxu0 %v171
  %217 = vmatpush1.bf16.msra.mxu0 %v170
  %218 = vmatprep.subr.bf16.mxu0 0
  %219 = vmatpush2.bf16.msra.mxu0 0
  %220 = vmatprep.subr.bf16.mxu0 0
  %221 = vmatpush2.bf16.msra.mxu0 0
  %222 = vmatprep.subr.bf16.mxu0 0
  %223 = vmatpush2.bf16.msra.mxu0 0
  %224 = vmatprep.subr.bf16.mxu0 0
  %225 = vmatpush2.bf16.msra.mxu0 0
  %226 = vmatprep.subr.bf16.mxu0 0
  %227 = vmatpush2.bf16.msra.mxu0 0
  %228 = vmatprep.subr.bf16.mxu0 0
  %229 = vmatpush2.bf16.msra.mxu0 0
  %230 = vmatprep.subr.bf16.mxu0 0
  %231 = vmatpush2.bf16.msra.mxu0 0
  %232 = vmatprep.subr.bf16.mxu0 0
  %233 = vmatpush2.bf16.msra.mxu0 0
  %234 = vmatprep.mubr.bf16.mxu0 0
  %235 = vmatmul.mubr.bf16.gmra.mxu0 %v92
  %v236 = vpop.f32.mrf.mxu0
  %v237 = vadd.f32 %v115, %v236
  %v238 = vpop.f32.mrf.mxu0
  %v239 = vadd.f32 %v119, %v238
  %v240 = vpop.f32.mrf.mxu0
  %v241 = vadd.f32 %v115, %v240
  %v242 = vpop.f32.mrf.mxu0
  %v243 = vadd.f32 %v119, %v242
  %244 = vmatprep.mubr.bf16.mxu0 0
  %245 = vmatmul.mubr.bf16.gmra.mxu0 %v93
  %v246 = vpop.f32.mrf.mxu0
  %v247 = vadd.f32 %v115, %v246
  %v248 = vpop.f32.mrf.mxu0
  %v249 = vadd.f32 %v119, %v248
  %v250 = vpop.f32.mrf.mxu0
  %v251 = vadd.f32 %v115, %v250
  %v252 = vpop.f32.mrf.mxu0
  %v253 = vadd.f32 %v119, %v252
  %254 = vdwg.mxu0
  %255 = vst [vmem:[%s5] sm:$0xff] %v237
  %256 = vst [vmem:[%s5 + $0x8] sm:$0xff] %v239
  %257 = vst [vmem:[%s5 + $0x10] sm:$0xff] %v241
  %258 = vst [vmem:[%s5 + $0x18] sm:$0xff] %v243
  %259 = vst [vmem:[%s5 + $0x20] sm:$0xff] %v247
  %260 = vst [vmem:[%s5 + $0x28] sm:$0xff] %v249
  %261 = vst [vmem:[%s5 + $0x30] sm:$0xff] %v251
  %262 = vst [vmem:[%s5 + $0x38] sm:$0xff] %v253
  // Predicated region
  $region22: #{pretrain_vit_forward.21} parent=0 // pred_check
    _
  $region23: #{pretrain_vit_forward.21} parent=0 // pred_check_branch
    %264 = sbr.rel (0) target = $region25
  $region24: #{pretrain_vit_forward.21} parent=0 // pred_region
    _
  $region25: #{pretrain_vit_forward.21} parent=0 // pred_fallthru
    _
  // Predicated region
  $region26: #{pretrain_vit_forward.21} parent=0 // pred_check
    _
  $region27: #{pretrain_vit_forward.21} parent=0 // pred_check_branch
    %266 = sbr.rel (0) target = $region29
  $region28: #{pretrain_vit_forward.21} parent=0 // pred_region
    _
  $region29: #{pretrain_vit_forward.21} parent=0 // pred_fallthru
    _

</llo_original>
